<compile_context>
chip_gen: v7x
topology: tpu7x:2x2x1
jax: 0.10.0
libtpu: 0.0.40
codegen_flags: <defaults>
</compile_context>

<pallas_src>
import functools

import jax
import jax.numpy as jnp
from jax.experimental import pallas as pl
from jax.experimental.pallas import tpu as pltpu

_PAD_L = 16  # interior columns start 16-sublane aligned (bf16 tile = (16, 128))


def _round_up(x, m):
    return (x + m - 1) // m * m


def _up2_rows(x_rows):
    """Nearest x2 upsample along the leading (row) axis: row r -> rows 2r, 2r+1."""
    r = x_rows.shape[0]
    return jnp.broadcast_to(x_rows[:, None], (r, 2) + x_rows.shape[1:]).reshape(
        (2 * r,) + x_rows.shape[1:])


def _pad_lanes(v, target):
    """Zero-pad the last (lane) axis of v up to `target` channels (no-op if equal)."""
    c = v.shape[-1]
    if c == target:
        return v
    return jnp.concatenate(
        [v, jnp.zeros(v.shape[:-1] + (target - c,), v.dtype)], axis=-1)


def _decoder_block_kernel(x_body_ref, x_top_ref, x_bot_ref,
                          skip_body_ref, skip_top_ref, skip_bot_ref,
                          w1_ref, s1_ref, b1_ref, w2_ref, s2_ref, b2_ref,
                          o_ref, in_buf, mid_buf,
                          *, TH, W, CXP, CSP, C_MID_P, C_OUT_P, T):
    """One (batch image, row tile) per grid step.

    x_*_ref    : width-doubled low-res input rows (body: TH/2, halos: 1)
    skip_*_ref : skip rows                        (body: TH,   halos: 2)
    w*_ref     : (3, 3, C_pad, C_out_pad) conv weights, bf16 (zero-padded lanes)
    s*/b*      : (1, C_pad) folded BatchNorm scale / bias, f32
    in_buf     : VMEM (TH+4, W+PAD+1, CXP+CSP) bf16 staging of concat(up(x), skip)
    mid_buf    : VMEM (TH+2, W+PAD+1, C_MID_P) bf16 staging of conv1 output
    """
    t = pl.program_id(1)
    cl = _PAD_L - 1            # zero column for conv input col -1
    c0 = _PAD_L                # first interior column
    cr = _PAD_L + W            # zero column for conv input col W
    R1 = TH + 2
    C_IN_P = CXP + CSP

    # ---- stage concat(up2(x), skip) into in_buf ------------------------------
    # in_buf row i <-> concat-image row t*TH - 2 + i.  Lane layout:
    #   [0, CXP)        x channels   (zero-padded to 128-multiple)
    #   [CXP, C_IN_P)   skip channels(zero-padded to 128-multiple)
    # Both stores start on a 128-lane boundary and cover a full segment, so
    # they are unmasked; the (tiny) weights carry matching zero K-rows.
    x_top = _pad_lanes(_up2_rows(x_top_ref[0]), CXP)      # (2,  W, CXP)
    x_body = _pad_lanes(_up2_rows(x_body_ref[0]), CXP)    # (TH, W, CXP)
    x_bot = _pad_lanes(_up2_rows(x_bot_ref[0]), CXP)      # (2,  W, CXP)
    sk_top = _pad_lanes(skip_top_ref[0], CSP)              # (2,  W, CSP)
    sk_body = _pad_lanes(skip_body_ref[0], CSP)            # (TH, W, CSP)
    sk_bot = _pad_lanes(skip_bot_ref[0], CSP)               # (2,  W, CSP)

    # image top / bottom edge -> zero halo rows (pad=1 of conv1)
    x_top = jnp.where(t == 0, jnp.zeros_like(x_top), x_top)
    sk_top = jnp.where(t == 0, jnp.zeros_like(sk_top), sk_top)
    x_bot = jnp.where(t == T - 1, jnp.zeros_like(x_bot), x_bot)
    sk_bot = jnp.where(t == T - 1, jnp.zeros_like(sk_bot), sk_bot)

    in_buf[0:2, c0:c0 + W, 0:CXP] = x_top
    in_buf[2:2 + TH, c0:c0 + W, 0:CXP] = x_body
    in_buf[2 + TH:4 + TH, c0:c0 + W, 0:CXP] = x_bot
    in_buf[0:2, c0:c0 + W, CXP:] = sk_top
    in_buf[2:2 + TH, c0:c0 + W, CXP:] = sk_body
    in_buf[2 + TH:4 + TH, c0:c0 + W, CXP:] = sk_bot

    # pad=1 zero columns.  Re-zeroed every step: VMEM scratch is uninitialized
    # and per-TensorCore, so a first-iteration guard is unsafe under megacore.
    zc1 = jnp.zeros((TH + 4, 1, C_IN_P), in_buf.dtype)
    in_buf[:, cl:cl + 1, :] = zc1
    in_buf[:, cr:cr + 1, :] = zc1

    # ---- conv1 (3x3, pad=1) + BN + ReLU over TH+2 rows (incl. conv2 halo) ----
    # 9 per-(ky, kx) MXU matmuls, K = C_IN_P; no lane-concat of the patch.
    acc1 = jnp.zeros((R1 * W, C_MID_P), jnp.float32)
    for ky in range(3):
        for kx in range(3):
            patch = in_buf[ky:ky + R1, cl + kx:cl + kx + W, :].reshape(
                R1 * W, C_IN_P)
            acc1 += jnp.dot(patch, w1_ref[ky, kx],
                            preferred_element_type=jnp.float32)
    y1 = jnp.maximum(acc1 * s1_ref[...] + b1_ref[...], 0.0)

    # mid_buf row m <-> image row t*TH - 1 + m
    mid_buf[:, c0:c0 + W, :] = y1.reshape(R1, W, C_MID_P).astype(mid_buf.dtype)
    zc2 = jnp.zeros((R1, 1, C_MID_P), mid_buf.dtype)
    mid_buf[:, cl:cl + 1, :] = zc2
    mid_buf[:, cr:cr + 1, :] = zc2

    @pl.when(t == 0)           # conv2's zero-pad row above the image
    def _():
        mid_buf[0:1, :, :] = jnp.zeros((1,) + mid_buf.shape[1:], mid_buf.dtype)

    @pl.when(t == T - 1)       # conv2's zero-pad row below the image
    def _():
        mid_buf[R1 - 1:R1, :, :] = jnp.zeros((1,) + mid_buf.shape[1:], mid_buf.dtype)

    # ---- conv2 (3x3, pad=1) + BN + ReLU --------------------------------------
    acc2 = jnp.zeros((TH * W, C_OUT_P), jnp.float32)
    for ky in range(3):
        for kx in range(3):
            patch = mid_buf[ky:ky + TH, cl + kx:cl + kx + W, :].reshape(
                TH * W, C_MID_P)
            acc2 += jnp.dot(patch, w2_ref[ky, kx],
                            preferred_element_type=jnp.float32)
    y2 = jnp.maximum(acc2 * s2_ref[...] + b2_ref[...], 0.0)
    o_ref[...] = y2.reshape(1, TH, W, C_OUT_P).astype(o_ref.dtype)


def _pick_tile_rows_and_vmem(H, W, CXP, CSP, C_in_p, C_mid_p, C_out_p):
    """Largest even row-tile dividing H that fits the generation's VMEM budget."""
    try:
        cap = int(pltpu.get_tpu_info().vmem_capacity_bytes)
    except Exception:
        cap = 64 * 1024 * 1024            # conservative default (v7x-sized)
    budget = (cap * 3) // 4               # ~48 MiB on v7x, ~96 MiB on v5e/v6e
    w_buf = W + _PAD_L + 1

    def est(th):
        r1 = th + 2
        in_buf = (th + 4) * w_buf * C_in_p * 2
        mid_buf = r1 * w_buf * C_mid_p * 2
        # double-buffered pipelined blocks (inputs + output), bf16
        dma = 2 * 2 * ((th // 2 + 2) * W * CXP + (th + 4) * W * CSP
                       + th * W * C_out_p)
        wts = 2 * 2 * 9 * (C_in_p * C_mid_p + C_mid_p * C_out_p)
        acc = 4 * (r1 * W * C_mid_p + th * W * C_out_p)     # f32 accumulators
        y = acc                                             # f32 epilogue temps
        patch = 2 * (r1 * W * C_in_p + th * W * C_mid_p)    # bf16 patch slices
        return in_buf + mid_buf + dma + wts + acc + y + patch

    tile = 2
    for th in range(H, 1, -2):
        if H % th == 0 and est(th) <= budget:
            tile = th
            break
    return tile, budget


def decoder_block_forward(x_nchw, skip_nchw, params, *, tile_rows=None):
    """Pallas implementation of DecoderBlock.forward((x, skip)).  Returns NCHW bf16."""
    x = jnp.transpose(x_nchw, (0, 2, 3, 1))
    skip = jnp.transpose(skip_nchw, (0, 2, 3, 1))

    N, h_lo, w_lo, CX = x.shape
    Ns, H, W, CS = skip.shape
    assert Ns == N and H == 2 * h_lo and W == 2 * w_lo, (x.shape, skip.shape)

    # Width-doubling of the small low-res input kept in the wrapper (1/4-sized
    # tensor); H-doubling / concat / pad / halos are fused in the kernel.
    x2 = jnp.repeat(x.astype(jnp.bfloat16), 2, axis=2)           # (N, h_lo, W, CX)
    skip = skip.astype(jnp.bfloat16)

    C_in = CX + CS
    C_mid = params["w1"].shape[-1]
    C_out = params["w2"].shape[-1]
    assert params["w1"].shape == (3, 3, C_in, C_mid)
    assert params["w2"].shape == (3, 3, C_mid, C_out)

    # Lane-dense channel layout: x lanes [0,CXP), skip lanes [CXP,CXP+CSP);
    # mid / out channels padded to 128-multiples so every matmul N-dim and the
    # output store are 128-lane dense.  The (tiny) weights absorb the zeros.
    CXP = _round_up(CX, 128)
    CSP = _round_up(CS, 128)
    C_in_p = CXP + CSP
    C_mid_p = _round_up(C_mid, 128)
    C_out_p = _round_up(C_out, 128)

    w1 = jnp.zeros((3, 3, C_in_p, C_mid_p), jnp.float32)
    w1 = w1.at[:, :, :CX, :C_mid].set(params["w1"][:, :, :CX, :])
    w1 = w1.at[:, :, CXP:CXP + CS, :C_mid].set(params["w1"][:, :, CX:, :])
    w1 = w1.astype(jnp.bfloat16)
    s1 = jnp.zeros((1, C_mid_p), jnp.float32).at[:, :C_mid].set(params["s1"])
    b1 = jnp.zeros((1, C_mid_p), jnp.float32).at[:, :C_mid].set(params["b1"])

    w2 = jnp.zeros((3, 3, C_mid_p, C_out_p), jnp.float32)
    w2 = w2.at[:, :, :C_mid, :C_out].set(params["w2"])
    w2 = w2.astype(jnp.bfloat16)
    s2 = jnp.zeros((1, C_out_p), jnp.float32).at[:, :C_out].set(params["s2"])
    b2 = jnp.zeros((1, C_out_p), jnp.float32).at[:, :C_out].set(params["b2"])

    auto_tile, vmem_budget = _pick_tile_rows_and_vmem(
        H, W, CXP, CSP, C_in_p, C_mid_p, C_out_p)
    TH = auto_tile if tile_rows is None else tile_rows
    assert TH % 2 == 0 and H % TH == 0, (H, TH)
    T = H // TH
    TH_LO = TH // 2

    kern = functools.partial(
        _decoder_block_kernel,
        TH=TH, W=W, CXP=CXP, CSP=CSP,
        C_MID_P=C_mid_p, C_OUT_P=C_out_p, T=T)

    # Clamped single/double-row halo blocks (block index == row / row-pair).
    top_idx = lambda n, t: (n, jnp.maximum(t * TH_LO - 1, 0), 0, 0)
    bot_idx = lambda n, t: (n, jnp.minimum((t + 1) * TH_LO, h_lo - 1), 0, 0)

    flops = 2 * N * H * W * 9 * (C_in * C_mid + C_mid * C_out)
    bytes_accessed = ((x2.size + skip.size + N * H * W * C_out_p) * 2
                      + (w1.size + w2.size) * 2
                      + (s1.size + b1.size + s2.size + b2.size) * 4)

    w_buf = W + _PAD_L + 1
    out_nhwc = pl.pallas_call(
        kern,
        out_shape=jax.ShapeDtypeStruct((N, H, W, C_out_p), jnp.bfloat16),
        grid_spec=pltpu.PrefetchScalarGridSpec(
            num_scalar_prefetch=0,
            grid=(N, T),
            in_specs=[
                # low-res x (already width-doubled): body + 1-row halos
                pl.BlockSpec((1, TH_LO, W, CX), lambda n, t: (n, t, 0, 0)),
                pl.BlockSpec((1, 1, W, CX), top_idx),
                pl.BlockSpec((1, 1, W, CX), bot_idx),
                # skip: body + 2-row halos
                pl.BlockSpec((1, TH, W, CS), lambda n, t: (n, t, 0, 0)),
                pl.BlockSpec((1, 2, W, CS), top_idx),
                pl.BlockSpec((1, 2, W, CS), bot_idx),
                # conv1 / conv2 parameters (constant index -> fetched once)
                pl.BlockSpec((3, 3, C_in_p, C_mid_p), lambda n, t: (0, 0, 0, 0)),
                pl.BlockSpec((1, C_mid_p), lambda n, t: (0, 0)),
                pl.BlockSpec((1, C_mid_p), lambda n, t: (0, 0)),
                pl.BlockSpec((3, 3, C_mid_p, C_out_p), lambda n, t: (0, 0, 0, 0)),
                pl.BlockSpec((1, C_out_p), lambda n, t: (0, 0)),
                pl.BlockSpec((1, C_out_p), lambda n, t: (0, 0)),
            ],
            out_specs=pl.BlockSpec((1, TH, W, C_out_p), lambda n, t: (n, t, 0, 0)),
            scratch_shapes=[
                pltpu.VMEM((TH + 4, w_buf, C_in_p), jnp.bfloat16),
                pltpu.VMEM((TH + 2, w_buf, C_mid_p), jnp.bfloat16),
            ],
        ),
        compiler_params=pltpu.CompilerParams(
            dimension_semantics=("parallel", "parallel"),
            vmem_limit_bytes=int(vmem_budget),
        ),
        cost_estimate=pl.CostEstimate(
            flops=int(flops), transcendentals=0,
            bytes_accessed=int(bytes_accessed)),
    )(x2, x2, x2, skip, skip, skip, w1, s1, b1, w2, s2, b2)

    # Trim the padded output lanes; attention2 = Identity; back to NCHW.
    out = out_nhwc[..., :C_out]
    return jnp.transpose(out, (0, 3, 1, 2))


def reference_forward(x_nchw, skip_nchw, params):
    """Pure-JAX reference (lax conv, same bf16 rounding points as the kernel)."""
    x = jnp.transpose(x_nchw, (0, 2, 3, 1))
    skip = jnp.transpose(skip_nchw, (0, 2, 3, 1))
    x = jnp.repeat(jnp.repeat(x, 2, axis=1), 2, axis=2)
    x = jnp.concatenate([x, skip], axis=-1)

    def conv_bn_relu(x, w, s, b):
        y = jax.lax.conv_general_dilated(
            x.astype(jnp.bfloat16), w.astype(jnp.bfloat16),
            window_strides=(1, 1), padding="SAME",
            dimension_numbers=("NHWC", "HWIO", "NHWC"),
            preferred_element_type=jnp.float32)
        return jnp.maximum(y * s + b, 0.0)

    x = conv_bn_relu(x, params["w1"], params["s1"], params["b1"])
    x = conv_bn_relu(x, params["w2"], params["s2"], params["b2"])
    return jnp.transpose(x, (0, 3, 1, 2))


def _make_params(key, c_in, c_mid, c_out, eps=1e-5):
    """Deterministic synthetic Conv + folded-BatchNorm parameters."""
    ks = jax.random.split(key, 10)

    def folded_bn(k_gamma, k_beta, k_mean, k_var, c):
        gamma = 1.0 + 0.1 * jax.random.normal(k_gamma, (1, c), jnp.float32)
        beta = 0.1 * jax.random.normal(k_beta, (1, c), jnp.float32)
        mean = 0.1 * jax.random.normal(k_mean, (1, c), jnp.float32)
        var = 1.0 + 0.1 * jnp.abs(jax.random.normal(k_var, (1, c), jnp.float32))
        scale = gamma / jnp.sqrt(var + eps)
        bias = beta - mean * scale
        return scale, bias

    w1 = 0.1 * jax.random.normal(ks[0], (3, 3, c_in, c_mid), jnp.float32)
    w2 = 0.1 * jax.random.normal(ks[1], (3, 3, c_mid, c_out), jnp.float32)
    s1, b1 = folded_bn(ks[2], ks[3], ks[4], ks[5], c_mid)
    s2, b2 = folded_bn(ks[6], ks[7], ks[8], ks[9], c_out)
    return {"w1": w1, "s1": s1, "b1": b1, "w2": w2, "s2": s2, "b2": b2}


if __name__ == "__main__":
    key = jax.random.PRNGKey(0)
    k_x, k_skip, k_p = jax.random.split(key, 3)

    # x: (N=2, C=4, 8, 8); skip: (N=2, C=4, 16, 16)
    # after 2x upsample + concat: in_channels = 8, out_channels = 4
    x = jax.random.normal(k_x, (2, 4, 8, 8), jnp.float32)
    skip = jax.random.normal(k_skip, (2, 4, 16, 16), jnp.float32)
    params = _make_params(k_p, c_in=8, c_mid=4, c_out=4)

    # tile_rows=8 -> 2 row tiles per image: exercises interior + both edge halos.
    out = decoder_block_forward(x, skip, params, tile_rows=8)
    out = jax.block_until_ready(out)

    ref = jax.block_until_ready(reference_forward(x, skip, params))
    assert out.shape == (2, 4, 16, 16), out.shape
    out_f32 = out.astype(jnp.float32)
    err = float(jnp.max(jnp.abs(out_f32 - ref)))
    # kernel output is bf16 (perf review); allow bf16 rounding on top of conv error
    assert jnp.allclose(out_f32, ref, rtol=3e-2, atol=3e-2), err

    print("KERNEL_OK")
</pallas_src>

<mosaic_0001>
module attributes {stable_mosaic.version = 11 : i64} {
  func.func @_decoder_block_kernel(%arg0: i32, %arg1: i32, %arg2: memref<1x4x16x4xbf16, #tpu.memory_space<vmem>>, %arg3: memref<1x1x16x4xbf16, #tpu.memory_space<vmem>>, %arg4: memref<1x1x16x4xbf16, #tpu.memory_space<vmem>>, %arg5: memref<1x8x16x4xbf16, #tpu.memory_space<vmem>>, %arg6: memref<1x2x16x4xbf16, #tpu.memory_space<vmem>>, %arg7: memref<1x2x16x4xbf16, #tpu.memory_space<vmem>>, %arg8: memref<3x3x256x128xbf16, #tpu.memory_space<vmem>>, %arg9: memref<1x128xf32, #tpu.memory_space<vmem>>, %arg10: memref<1x128xf32, #tpu.memory_space<vmem>>, %arg11: memref<3x3x128x128xbf16, #tpu.memory_space<vmem>>, %arg12: memref<1x128xf32, #tpu.memory_space<vmem>>, %arg13: memref<1x128xf32, #tpu.memory_space<vmem>>, %arg14: memref<1x8x16x128xbf16, #tpu.memory_space<vmem>>, %arg15: memref<12x33x256xbf16, #tpu.memory_space<vmem>>, %arg16: memref<10x33x128xbf16, #tpu.memory_space<vmem>>) attributes {dimension_semantics = [#tpu.dimension_semantics<parallel>, #tpu.dimension_semantics<parallel>], iteration_bounds = array<i64: 2, 2>, scalar_prefetch = 0 : i64, scratch_operands = 2 : i64, tpu.core_type = #tpu.core_type<tc>, window_params = [{transform_indices = @transform_0, window_bounds = array<i64: 1, 4, 16, 4>}, {transform_indices = @transform_1, window_bounds = array<i64: 1, 1, 16, 4>}, {transform_indices = @transform_2, window_bounds = array<i64: 1, 1, 16, 4>}, {transform_indices = @transform_3, window_bounds = array<i64: 1, 8, 16, 4>}, {transform_indices = @transform_4, window_bounds = array<i64: 1, 2, 16, 4>}, {transform_indices = @transform_5, window_bounds = array<i64: 1, 2, 16, 4>}, {pipeline_mode = #tpu.pipeline_mode<synchronous>, transform_indices = @transform_6, window_bounds = array<i64: 3, 3, 256, 128>}, {pipeline_mode = #tpu.pipeline_mode<synchronous>, transform_indices = @transform_7, window_bounds = array<i64: 1, 128>}, {pipeline_mode = #tpu.pipeline_mode<synchronous>, transform_indices = @transform_8, window_bounds = array<i64: 1, 128>}, {pipeline_mode = #tpu.pipeline_mode<synchronous>, transform_indices = @transform_9, window_bounds = array<i64: 3, 3, 128, 128>}, {pipeline_mode = #tpu.pipeline_mode<synchronous>, transform_indices = @transform_10, window_bounds = array<i64: 1, 128>}, {pipeline_mode = #tpu.pipeline_mode<synchronous>, transform_indices = @transform_11, window_bounds = array<i64: 1, 128>}, {transform_indices = @transform_12, window_bounds = array<i64: 1, 8, 16, 128>}]} {
    %c0 = arith.constant 0 : index
    %c0_0 = arith.constant 0 : index
    %c0_1 = arith.constant 0 : index
    %c0_2 = arith.constant 0 : index
    %0 = vector.load %arg3[%c0, %c0_0, %c0_1, %c0_2] : memref<1x1x16x4xbf16, #tpu.memory_space<vmem>>, vector<1x1x16x4xbf16>
    %1 = vector.shape_cast %0 : vector<1x1x16x4xbf16> to vector<1x16x4xbf16>
    %2 = vector.shape_cast %1 : vector<1x16x4xbf16> to vector<1x1x16x4xbf16>
    %3 = vector.shape_cast %2 : vector<1x1x16x4xbf16> to vector<1x1x16x4xbf16>
    %4 = vector.broadcast %3 : vector<1x1x16x4xbf16> to vector<1x2x16x4xbf16>
    %5 = vector.shape_cast %4 : vector<1x2x16x4xbf16> to vector<2x16x4xbf16>
    %cst = arith.constant 0.000000e+00 : bf16
    %6 = vector.broadcast %cst : bf16 to vector<2x16x124xbf16>
    %7 = tpu.concatenate %5, %6 in 2 : vector<2x16x4xbf16>, vector<2x16x124xbf16> -> vector<2x16x128xbf16>
    %c0_3 = arith.constant 0 : index
    %c0_4 = arith.constant 0 : index
    %c0_5 = arith.constant 0 : index
    %c0_6 = arith.constant 0 : index
    %8 = vector.load %arg2[%c0_3, %c0_4, %c0_5, %c0_6] : memref<1x4x16x4xbf16, #tpu.memory_space<vmem>>, vector<1x4x16x4xbf16>
    %9 = vector.shape_cast %8 : vector<1x4x16x4xbf16> to vector<4x16x4xbf16>
    %10 = vector.shape_cast %9 : vector<4x16x4xbf16> to vector<4x1x16x4xbf16>
    %11 = vector.shape_cast %10 : vector<4x1x16x4xbf16> to vector<4x1x16x4xbf16>
    %12 = vector.broadcast %11 : vector<4x1x16x4xbf16> to vector<4x2x16x4xbf16>
    %13 = vector.shape_cast %12 : vector<4x2x16x4xbf16> to vector<8x16x4xbf16>
    %cst_7 = arith.constant 0.000000e+00 : bf16
    %14 = vector.broadcast %cst_7 : bf16 to vector<8x16x124xbf16>
    %15 = tpu.concatenate %13, %14 in 2 : vector<8x16x4xbf16>, vector<8x16x124xbf16> -> vector<8x16x128xbf16>
    %c0_8 = arith.constant 0 : index
    %c0_9 = arith.constant 0 : index
    %c0_10 = arith.constant 0 : index
    %c0_11 = arith.constant 0 : index
    %16 = vector.load %arg4[%c0_8, %c0_9, %c0_10, %c0_11] : memref<1x1x16x4xbf16, #tpu.memory_space<vmem>>, vector<1x1x16x4xbf16>
    %17 = vector.shape_cast %16 : vector<1x1x16x4xbf16> to vector<1x16x4xbf16>
    %18 = vector.shape_cast %17 : vector<1x16x4xbf16> to vector<1x1x16x4xbf16>
    %19 = vector.shape_cast %18 : vector<1x1x16x4xbf16> to vector<1x1x16x4xbf16>
    %20 = vector.broadcast %19 : vector<1x1x16x4xbf16> to vector<1x2x16x4xbf16>
    %21 = vector.shape_cast %20 : vector<1x2x16x4xbf16> to vector<2x16x4xbf16>
    %cst_12 = arith.constant 0.000000e+00 : bf16
    %22 = vector.broadcast %cst_12 : bf16 to vector<2x16x124xbf16>
    %23 = tpu.concatenate %21, %22 in 2 : vector<2x16x4xbf16>, vector<2x16x124xbf16> -> vector<2x16x128xbf16>
    %c0_13 = arith.constant 0 : index
    %c0_14 = arith.constant 0 : index
    %c0_15 = arith.constant 0 : index
    %c0_16 = arith.constant 0 : index
    %24 = vector.load %arg6[%c0_13, %c0_14, %c0_15, %c0_16] : memref<1x2x16x4xbf16, #tpu.memory_space<vmem>>, vector<1x2x16x4xbf16>
    %25 = vector.shape_cast %24 : vector<1x2x16x4xbf16> to vector<2x16x4xbf16>
    %cst_17 = arith.constant 0.000000e+00 : bf16
    %26 = vector.broadcast %cst_17 : bf16 to vector<2x16x124xbf16>
    %27 = tpu.concatenate %25, %26 in 2 : vector<2x16x4xbf16>, vector<2x16x124xbf16> -> vector<2x16x128xbf16>
    %c0_18 = arith.constant 0 : index
    %c0_19 = arith.constant 0 : index
    %c0_20 = arith.constant 0 : index
    %c0_21 = arith.constant 0 : index
    %28 = vector.load %arg5[%c0_18, %c0_19, %c0_20, %c0_21] : memref<1x8x16x4xbf16, #tpu.memory_space<vmem>>, vector<1x8x16x4xbf16>
    %29 = vector.shape_cast %28 : vector<1x8x16x4xbf16> to vector<8x16x4xbf16>
    %cst_22 = arith.constant 0.000000e+00 : bf16
    %30 = vector.broadcast %cst_22 : bf16 to vector<8x16x124xbf16>
    %31 = tpu.concatenate %29, %30 in 2 : vector<8x16x4xbf16>, vector<8x16x124xbf16> -> vector<8x16x128xbf16>
    %c0_23 = arith.constant 0 : index
    %c0_24 = arith.constant 0 : index
    %c0_25 = arith.constant 0 : index
    %c0_26 = arith.constant 0 : index
    %32 = vector.load %arg7[%c0_23, %c0_24, %c0_25, %c0_26] : memref<1x2x16x4xbf16, #tpu.memory_space<vmem>>, vector<1x2x16x4xbf16>
    %33 = vector.shape_cast %32 : vector<1x2x16x4xbf16> to vector<2x16x4xbf16>
    %cst_27 = arith.constant 0.000000e+00 : bf16
    %34 = vector.broadcast %cst_27 : bf16 to vector<2x16x124xbf16>
    %35 = tpu.concatenate %33, %34 in 2 : vector<2x16x4xbf16>, vector<2x16x124xbf16> -> vector<2x16x128xbf16>
    %c0_i32 = arith.constant 0 : i32
    %36 = arith.cmpi eq, %arg1, %c0_i32 : i32
    %cst_28 = arith.constant 0.000000e+00 : bf16
    %37 = vector.broadcast %cst_28 : bf16 to vector<2x16x128xbf16>
    %38 = arith.select %36, %37, %7 : vector<2x16x128xbf16>
    %c0_i32_29 = arith.constant 0 : i32
    %39 = arith.cmpi eq, %arg1, %c0_i32_29 : i32
    %cst_30 = arith.constant 0.000000e+00 : bf16
    %40 = vector.broadcast %cst_30 : bf16 to vector<2x16x128xbf16>
    %41 = arith.select %39, %40, %27 : vector<2x16x128xbf16>
    %c1_i32 = arith.constant 1 : i32
    %42 = arith.cmpi eq, %arg1, %c1_i32 : i32
    %cst_31 = arith.constant 0.000000e+00 : bf16
    %43 = vector.broadcast %cst_31 : bf16 to vector<2x16x128xbf16>
    %44 = arith.select %42, %43, %23 : vector<2x16x128xbf16>
    %c1_i32_32 = arith.constant 1 : i32
    %45 = arith.cmpi eq, %arg1, %c1_i32_32 : i32
    %cst_33 = arith.constant 0.000000e+00 : bf16
    %46 = vector.broadcast %cst_33 : bf16 to vector<2x16x128xbf16>
    %47 = arith.select %45, %46, %35 : vector<2x16x128xbf16>
    %c0_34 = arith.constant 0 : index
    %c16 = arith.constant 16 : index
    %c0_35 = arith.constant 0 : index
    %48 = vector.load %arg15[%c0_34, %c16, %c0_35] : memref<12x33x256xbf16, #tpu.memory_space<vmem>>, vector<2x16x128xbf16>
    tpu.vector_store %arg15[%c0_34, %c16, %c0_35], %38 {strides = array<i32>} : memref<12x33x256xbf16, #tpu.memory_space<vmem>>, vector<2x16x128xbf16>,
    %c2 = arith.constant 2 : index
    %c16_36 = arith.constant 16 : index
    %c0_37 = arith.constant 0 : index
    %49 = vector.load %arg15[%c2, %c16_36, %c0_37] : memref<12x33x256xbf16, #tpu.memory_space<vmem>>, vector<8x16x128xbf16>
    tpu.vector_store %arg15[%c2, %c16_36, %c0_37], %15 {strides = array<i32>} : memref<12x33x256xbf16, #tpu.memory_space<vmem>>, vector<8x16x128xbf16>,
    %c10 = arith.constant 10 : index
    %c16_38 = arith.constant 16 : index
    %c0_39 = arith.constant 0 : index
    %50 = vector.load %arg15[%c10, %c16_38, %c0_39] : memref<12x33x256xbf16, #tpu.memory_space<vmem>>, vector<2x16x128xbf16>
    tpu.vector_store %arg15[%c10, %c16_38, %c0_39], %44 {strides = array<i32>} : memref<12x33x256xbf16, #tpu.memory_space<vmem>>, vector<2x16x128xbf16>,
    %c0_40 = arith.constant 0 : index
    %c16_41 = arith.constant 16 : index
    %c128 = arith.constant 128 : index
    %51 = vector.load %arg15[%c0_40, %c16_41, %c128] : memref<12x33x256xbf16, #tpu.memory_space<vmem>>, vector<2x16x128xbf16>
    tpu.vector_store %arg15[%c0_40, %c16_41, %c128], %41 {strides = array<i32>} : memref<12x33x256xbf16, #tpu.memory_space<vmem>>, vector<2x16x128xbf16>,
    %c2_42 = arith.constant 2 : index
    %c16_43 = arith.constant 16 : index
    %c128_44 = arith.constant 128 : index
    %52 = vector.load %arg15[%c2_42, %c16_43, %c128_44] : memref<12x33x256xbf16, #tpu.memory_space<vmem>>, vector<8x16x128xbf16>
    tpu.vector_store %arg15[%c2_42, %c16_43, %c128_44], %31 {strides = array<i32>} : memref<12x33x256xbf16, #tpu.memory_space<vmem>>, vector<8x16x128xbf16>,
    %c10_45 = arith.constant 10 : index
    %c16_46 = arith.constant 16 : index
    %c128_47 = arith.constant 128 : index
    %53 = vector.load %arg15[%c10_45, %c16_46, %c128_47] : memref<12x33x256xbf16, #tpu.memory_space<vmem>>, vector<2x16x128xbf16>
    tpu.vector_store %arg15[%c10_45, %c16_46, %c128_47], %47 {strides = array<i32>} : memref<12x33x256xbf16, #tpu.memory_space<vmem>>, vector<2x16x128xbf16>,
    %cst_48 = arith.constant 0.000000e+00 : bf16
    %54 = vector.broadcast %cst_48 : bf16 to vector<12x1x256xbf16>
    %c0_49 = arith.constant 0 : index
    %c15 = arith.constant 15 : index
    %c0_50 = arith.constant 0 : index
    %55 = vector.load %arg15[%c0_49, %c15, %c0_50] : memref<12x33x256xbf16, #tpu.memory_space<vmem>>, vector<12x1x256xbf16>
    tpu.vector_store %arg15[%c0_49, %c15, %c0_50], %54 {strides = array<i32>} : memref<12x33x256xbf16, #tpu.memory_space<vmem>>, vector<12x1x256xbf16>,
    %c0_51 = arith.constant 0 : index
    %c32 = arith.constant 32 : index
    %c0_52 = arith.constant 0 : index
    %56 = vector.load %arg15[%c0_51, %c32, %c0_52] : memref<12x33x256xbf16, #tpu.memory_space<vmem>>, vector<12x1x256xbf16>
    tpu.vector_store %arg15[%c0_51, %c32, %c0_52], %54 {strides = array<i32>} : memref<12x33x256xbf16, #tpu.memory_space<vmem>>, vector<12x1x256xbf16>,
    %cst_53 = arith.constant 0.000000e+00 : f32
    %57 = vector.broadcast %cst_53 : f32 to vector<160x128xf32>
    %c0_54 = arith.constant 0 : index
    %c15_55 = arith.constant 15 : index
    %c0_56 = arith.constant 0 : index
    %58 = vector.load %arg15[%c0_54, %c15_55, %c0_56] : memref<12x33x256xbf16, #tpu.memory_space<vmem>>, vector<10x16x256xbf16>
    %59 = vector.shape_cast %58 : vector<10x16x256xbf16> to vector<160x256xbf16>
    %c0_57 = arith.constant 0 : index
    %c0_58 = arith.constant 0 : index
    %c0_59 = arith.constant 0 : index
    %c0_60 = arith.constant 0 : index
    %60 = vector.load %arg8[%c0_57, %c0_58, %c0_59, %c0_60] : memref<3x3x256x128xbf16, #tpu.memory_space<vmem>>, vector<1x1x256x128xbf16>
    %61 = vector.shape_cast %60 : vector<1x1x256x128xbf16> to vector<256x128xbf16>
    %cst_61 = arith.constant dense<0.000000e+00> : vector<160x128xf32>
    %62 = tpu.matmul %59, %61, %cst_61 {dimension_numbers = #tpu.dot_dimension_numbers<[1], [0], [0], [1], [0, 0, 1, 1], [], []>} : vector<160x256xbf16>, vector<256x128xbf16>, vector<160x128xf32> -> vector<160x128xf32>
    %63 = arith.addf %57, %62 : vector<160x128xf32>
    %c0_62 = arith.constant 0 : index
    %c16_63 = arith.constant 16 : index
    %c0_64 = arith.constant 0 : index
    %64 = vector.load %arg15[%c0_62, %c16_63, %c0_64] : memref<12x33x256xbf16, #tpu.memory_space<vmem>>, vector<10x16x256xbf16>
    %65 = vector.shape_cast %64 : vector<10x16x256xbf16> to vector<160x256xbf16>
    %c0_65 = arith.constant 0 : index
    %c1 = arith.constant 1 : index
    %c0_66 = arith.constant 0 : index
    %c0_67 = arith.constant 0 : index
    %66 = vector.load %arg8[%c0_65, %c1, %c0_66, %c0_67] : memref<3x3x256x128xbf16, #tpu.memory_space<vmem>>, vector<1x1x256x128xbf16>
    %67 = vector.shape_cast %66 : vector<1x1x256x128xbf16> to vector<256x128xbf16>
    %cst_68 = arith.constant dense<0.000000e+00> : vector<160x128xf32>
    %68 = tpu.matmul %65, %67, %cst_68 {dimension_numbers = #tpu.dot_dimension_numbers<[1], [0], [0], [1], [0, 0, 1, 1], [], []>} : vector<160x256xbf16>, vector<256x128xbf16>, vector<160x128xf32> -> vector<160x128xf32>
    %69 = arith.addf %63, %68 : vector<160x128xf32>
    %c0_69 = arith.constant 0 : index
    %c17 = arith.constant 17 : index
    %c0_70 = arith.constant 0 : index
    %70 = vector.load %arg15[%c0_69, %c17, %c0_70] : memref<12x33x256xbf16, #tpu.memory_space<vmem>>, vector<10x16x256xbf16>
    %71 = vector.shape_cast %70 : vector<10x16x256xbf16> to vector<160x256xbf16>
    %c0_71 = arith.constant 0 : index
    %c2_72 = arith.constant 2 : index
    %c0_73 = arith.constant 0 : index
    %c0_74 = arith.constant 0 : index
    %72 = vector.load %arg8[%c0_71, %c2_72, %c0_73, %c0_74] : memref<3x3x256x128xbf16, #tpu.memory_space<vmem>>, vector<1x1x256x128xbf16>
    %73 = vector.shape_cast %72 : vector<1x1x256x128xbf16> to vector<256x128xbf16>
    %cst_75 = arith.constant dense<0.000000e+00> : vector<160x128xf32>
    %74 = tpu.matmul %71, %73, %cst_75 {dimension_numbers = #tpu.dot_dimension_numbers<[1], [0], [0], [1], [0, 0, 1, 1], [], []>} : vector<160x256xbf16>, vector<256x128xbf16>, vector<160x128xf32> -> vector<160x128xf32>
    %75 = arith.addf %69, %74 : vector<160x128xf32>
    %c1_76 = arith.constant 1 : index
    %c15_77 = arith.constant 15 : index
    %c0_78 = arith.constant 0 : index
    %76 = vector.load %arg15[%c1_76, %c15_77, %c0_78] : memref<12x33x256xbf16, #tpu.memory_space<vmem>>, vector<10x16x256xbf16>
    %77 = vector.shape_cast %76 : vector<10x16x256xbf16> to vector<160x256xbf16>
    %c1_79 = arith.constant 1 : index
    %c0_80 = arith.constant 0 : index
    %c0_81 = arith.constant 0 : index
    %c0_82 = arith.constant 0 : index
    %78 = vector.load %arg8[%c1_79, %c0_80, %c0_81, %c0_82] : memref<3x3x256x128xbf16, #tpu.memory_space<vmem>>, vector<1x1x256x128xbf16>
    %79 = vector.shape_cast %78 : vector<1x1x256x128xbf16> to vector<256x128xbf16>
    %cst_83 = arith.constant dense<0.000000e+00> : vector<160x128xf32>
    %80 = tpu.matmul %77, %79, %cst_83 {dimension_numbers = #tpu.dot_dimension_numbers<[1], [0], [0], [1], [0, 0, 1, 1], [], []>} : vector<160x256xbf16>, vector<256x128xbf16>, vector<160x128xf32> -> vector<160x128xf32>
    %81 = arith.addf %75, %80 : vector<160x128xf32>
    %c1_84 = arith.constant 1 : index
    %c16_85 = arith.constant 16 : index
    %c0_86 = arith.constant 0 : index
    %82 = vector.load %arg15[%c1_84, %c16_85, %c0_86] : memref<12x33x256xbf16, #tpu.memory_space<vmem>>, vector<10x16x256xbf16>
    %83 = vector.shape_cast %82 : vector<10x16x256xbf16> to vector<160x256xbf16>
    %c1_87 = arith.constant 1 : index
    %c1_88 = arith.constant 1 : index
    %c0_89 = arith.constant 0 : index
    %c0_90 = arith.constant 0 : index
    %84 = vector.load %arg8[%c1_87, %c1_88, %c0_89, %c0_90] : memref<3x3x256x128xbf16, #tpu.memory_space<vmem>>, vector<1x1x256x128xbf16>
    %85 = vector.shape_cast %84 : vector<1x1x256x128xbf16> to vector<256x128xbf16>
    %cst_91 = arith.constant dense<0.000000e+00> : vector<160x128xf32>
    %86 = tpu.matmul %83, %85, %cst_91 {dimension_numbers = #tpu.dot_dimension_numbers<[1], [0], [0], [1], [0, 0, 1, 1], [], []>} : vector<160x256xbf16>, vector<256x128xbf16>, vector<160x128xf32> -> vector<160x128xf32>
    %87 = arith.addf %81, %86 : vector<160x128xf32>
    %c1_92 = arith.constant 1 : index
    %c17_93 = arith.constant 17 : index
    %c0_94 = arith.constant 0 : index
    %88 = vector.load %arg15[%c1_92, %c17_93, %c0_94] : memref<12x33x256xbf16, #tpu.memory_space<vmem>>, vector<10x16x256xbf16>
    %89 = vector.shape_cast %88 : vector<10x16x256xbf16> to vector<160x256xbf16>
    %c1_95 = arith.constant 1 : index
    %c2_96 = arith.constant 2 : index
    %c0_97 = arith.constant 0 : index
    %c0_98 = arith.constant 0 : index
    %90 = vector.load %arg8[%c1_95, %c2_96, %c0_97, %c0_98] : memref<3x3x256x128xbf16, #tpu.memory_space<vmem>>, vector<1x1x256x128xbf16>
    %91 = vector.shape_cast %90 : vector<1x1x256x128xbf16> to vector<256x128xbf16>
    %cst_99 = arith.constant dense<0.000000e+00> : vector<160x128xf32>
    %92 = tpu.matmul %89, %91, %cst_99 {dimension_numbers = #tpu.dot_dimension_numbers<[1], [0], [0], [1], [0, 0, 1, 1], [], []>} : vector<160x256xbf16>, vector<256x128xbf16>, vector<160x128xf32> -> vector<160x128xf32>
    %93 = arith.addf %87, %92 : vector<160x128xf32>
    %c2_100 = arith.constant 2 : index
    %c15_101 = arith.constant 15 : index
    %c0_102 = arith.constant 0 : index
    %94 = vector.load %arg15[%c2_100, %c15_101, %c0_102] : memref<12x33x256xbf16, #tpu.memory_space<vmem>>, vector<10x16x256xbf16>
    %95 = vector.shape_cast %94 : vector<10x16x256xbf16> to vector<160x256xbf16>
    %c2_103 = arith.constant 2 : index
    %c0_104 = arith.constant 0 : index
    %c0_105 = arith.constant 0 : index
    %c0_106 = arith.constant 0 : index
    %96 = vector.load %arg8[%c2_103, %c0_104, %c0_105, %c0_106] : memref<3x3x256x128xbf16, #tpu.memory_space<vmem>>, vector<1x1x256x128xbf16>
    %97 = vector.shape_cast %96 : vector<1x1x256x128xbf16> to vector<256x128xbf16>
    %cst_107 = arith.constant dense<0.000000e+00> : vector<160x128xf32>
    %98 = tpu.matmul %95, %97, %cst_107 {dimension_numbers = #tpu.dot_dimension_numbers<[1], [0], [0], [1], [0, 0, 1, 1], [], []>} : vector<160x256xbf16>, vector<256x128xbf16>, vector<160x128xf32> -> vector<160x128xf32>
    %99 = arith.addf %93, %98 : vector<160x128xf32>
    %c2_108 = arith.constant 2 : index
    %c16_109 = arith.constant 16 : index
    %c0_110 = arith.constant 0 : index
    %100 = vector.load %arg15[%c2_108, %c16_109, %c0_110] : memref<12x33x256xbf16, #tpu.memory_space<vmem>>, vector<10x16x256xbf16>
    %101 = vector.shape_cast %100 : vector<10x16x256xbf16> to vector<160x256xbf16>
    %c2_111 = arith.constant 2 : index
    %c1_112 = arith.constant 1 : index
    %c0_113 = arith.constant 0 : index
    %c0_114 = arith.constant 0 : index
    %102 = vector.load %arg8[%c2_111, %c1_112, %c0_113, %c0_114] : memref<3x3x256x128xbf16, #tpu.memory_space<vmem>>, vector<1x1x256x128xbf16>
    %103 = vector.shape_cast %102 : vector<1x1x256x128xbf16> to vector<256x128xbf16>
    %cst_115 = arith.constant dense<0.000000e+00> : vector<160x128xf32>
    %104 = tpu.matmul %101, %103, %cst_115 {dimension_numbers = #tpu.dot_dimension_numbers<[1], [0], [0], [1], [0, 0, 1, 1], [], []>} : vector<160x256xbf16>, vector<256x128xbf16>, vector<160x128xf32> -> vector<160x128xf32>
    %105 = arith.addf %99, %104 : vector<160x128xf32>
    %c2_116 = arith.constant 2 : index
    %c17_117 = arith.constant 17 : index
    %c0_118 = arith.constant 0 : index
    %106 = vector.load %arg15[%c2_116, %c17_117, %c0_118] : memref<12x33x256xbf16, #tpu.memory_space<vmem>>, vector<10x16x256xbf16>
    %107 = vector.shape_cast %106 : vector<10x16x256xbf16> to vector<160x256xbf16>
    %c2_119 = arith.constant 2 : index
    %c2_120 = arith.constant 2 : index
    %c0_121 = arith.constant 0 : index
    %c0_122 = arith.constant 0 : index
    %108 = vector.load %arg8[%c2_119, %c2_120, %c0_121, %c0_122] : memref<3x3x256x128xbf16, #tpu.memory_space<vmem>>, vector<1x1x256x128xbf16>
    %109 = vector.shape_cast %108 : vector<1x1x256x128xbf16> to vector<256x128xbf16>
    %cst_123 = arith.constant dense<0.000000e+00> : vector<160x128xf32>
    %110 = tpu.matmul %107, %109, %cst_123 {dimension_numbers = #tpu.dot_dimension_numbers<[1], [0], [0], [1], [0, 0, 1, 1], [], []>} : vector<160x256xbf16>, vector<256x128xbf16>, vector<160x128xf32> -> vector<160x128xf32>
    %111 = arith.addf %105, %110 : vector<160x128xf32>
    %c0_124 = arith.constant 0 : index
    %c0_125 = arith.constant 0 : index
    %112 = vector.load %arg9[%c0_124, %c0_125] : memref<1x128xf32, #tpu.memory_space<vmem>>, vector<1x128xf32>
    %113 = vector.broadcast %112 : vector<1x128xf32> to vector<160x128xf32>
    %114 = arith.mulf %111, %113 : vector<160x128xf32>
    %c0_126 = arith.constant 0 : index
    %c0_127 = arith.constant 0 : index
    %115 = vector.load %arg10[%c0_126, %c0_127] : memref<1x128xf32, #tpu.memory_space<vmem>>, vector<1x128xf32>
    %116 = vector.broadcast %115 : vector<1x128xf32> to vector<160x128xf32>
    %117 = arith.addf %114, %116 : vector<160x128xf32>
    %cst_128 = arith.constant 0.000000e+00 : f32
    %118 = vector.broadcast %cst_128 : f32 to vector<160x128xf32>
    %119 = arith.maximumf %117, %118 : vector<160x128xf32>
    %120 = vector.shape_cast %119 : vector<160x128xf32> to vector<10x16x128xf32>
    %121 = arith.truncf %120 : vector<10x16x128xf32> to vector<10x16x128xbf16>
    %c0_129 = arith.constant 0 : index
    %c16_130 = arith.constant 16 : index
    %c0_131 = arith.constant 0 : index
    %122 = vector.load %arg16[%c0_129, %c16_130, %c0_131] : memref<10x33x128xbf16, #tpu.memory_space<vmem>>, vector<10x16x128xbf16>
    tpu.vector_store %arg16[%c0_129, %c16_130, %c0_131], %121 {strides = array<i32>} : memref<10x33x128xbf16, #tpu.memory_space<vmem>>, vector<10x16x128xbf16>,
    %cst_132 = arith.constant 0.000000e+00 : bf16
    %123 = vector.broadcast %cst_132 : bf16 to vector<10x1x128xbf16>
    %c0_133 = arith.constant 0 : index
    %c15_134 = arith.constant 15 : index
    %c0_135 = arith.constant 0 : index
    %124 = vector.load %arg16[%c0_133, %c15_134, %c0_135] : memref<10x33x128xbf16, #tpu.memory_space<vmem>>, vector<10x1x128xbf16>
    tpu.vector_store %arg16[%c0_133, %c15_134, %c0_135], %123 {strides = array<i32>} : memref<10x33x128xbf16, #tpu.memory_space<vmem>>, vector<10x1x128xbf16>,
    %c0_136 = arith.constant 0 : index
    %c32_137 = arith.constant 32 : index
    %c0_138 = arith.constant 0 : index
    %125 = vector.load %arg16[%c0_136, %c32_137, %c0_138] : memref<10x33x128xbf16, #tpu.memory_space<vmem>>, vector<10x1x128xbf16>
    tpu.vector_store %arg16[%c0_136, %c32_137, %c0_138], %123 {strides = array<i32>} : memref<10x33x128xbf16, #tpu.memory_space<vmem>>, vector<10x1x128xbf16>,
    %c0_i32_139 = arith.constant 0 : i32
    %126 = arith.cmpi eq, %arg1, %c0_i32_139 : i32
    %127 = arith.extui %126 : i1 to i32
    %c0_i32_140 = arith.constant 0 : i32
    %128 = arith.cmpi ne, %127, %c0_i32_140 : i32
    scf.if %128 {
      %cst_225 = arith.constant 0.000000e+00 : bf16
      %198 = vector.broadcast %cst_225 : bf16 to vector<1x33x128xbf16>
      %c0_226 = arith.constant 0 : index
      %c0_227 = arith.constant 0 : index
      %c0_228 = arith.constant 0 : index
      %199 = vector.load %arg16[%c0_226, %c0_227, %c0_228] : memref<10x33x128xbf16, #tpu.memory_space<vmem>>, vector<1x33x128xbf16>
      tpu.vector_store %arg16[%c0_226, %c0_227, %c0_228], %198 {strides = array<i32>} : memref<10x33x128xbf16, #tpu.memory_space<vmem>>, vector<1x33x128xbf16>,
    } else {
    }
    %c1_i32_141 = arith.constant 1 : i32
    %129 = arith.cmpi eq, %arg1, %c1_i32_141 : i32
    %130 = arith.extui %129 : i1 to i32
    %c0_i32_142 = arith.constant 0 : i32
    %131 = arith.cmpi ne, %130, %c0_i32_142 : i32
    scf.if %131 {
      %cst_225 = arith.constant 0.000000e+00 : bf16
      %198 = vector.broadcast %cst_225 : bf16 to vector<1x33x128xbf16>
      %c9 = arith.constant 9 : index
      %c0_226 = arith.constant 0 : index
      %c0_227 = arith.constant 0 : index
      %199 = vector.load %arg16[%c9, %c0_226, %c0_227] : memref<10x33x128xbf16, #tpu.memory_space<vmem>>, vector<1x33x128xbf16>
      tpu.vector_store %arg16[%c9, %c0_226, %c0_227], %198 {strides = array<i32>} : memref<10x33x128xbf16, #tpu.memory_space<vmem>>, vector<1x33x128xbf16>,
    } else {
    }
    %cst_143 = arith.constant 0.000000e+00 : f32
    %132 = vector.broadcast %cst_143 : f32 to vector<128x128xf32>
    %c0_144 = arith.constant 0 : index
    %c15_145 = arith.constant 15 : index
    %c0_146 = arith.constant 0 : index
    %133 = vector.load %arg16[%c0_144, %c15_145, %c0_146] : memref<10x33x128xbf16, #tpu.memory_space<vmem>>, vector<8x16x128xbf16>
    %134 = vector.shape_cast %133 : vector<8x16x128xbf16> to vector<128x128xbf16>
    %c0_147 = arith.constant 0 : index
    %c0_148 = arith.constant 0 : index
    %c0_149 = arith.constant 0 : index
    %c0_150 = arith.constant 0 : index
    %135 = vector.load %arg11[%c0_147, %c0_148, %c0_149, %c0_150] : memref<3x3x128x128xbf16, #tpu.memory_space<vmem>>, vector<1x1x128x128xbf16>
    %136 = vector.shape_cast %135 : vector<1x1x128x128xbf16> to vector<128x128xbf16>
    %cst_151 = arith.constant dense<0.000000e+00> : vector<128x128xf32>
    %137 = tpu.matmul %134, %136, %cst_151 {dimension_numbers = #tpu.dot_dimension_numbers<[1], [0], [0], [1], [0, 0, 1, 1], [], []>} : vector<128x128xbf16>, vector<128x128xbf16>, vector<128x128xf32> -> vector<128x128xf32>
    %138 = arith.addf %132, %137 : vector<128x128xf32>
    %c0_152 = arith.constant 0 : index
    %c16_153 = arith.constant 16 : index
    %c0_154 = arith.constant 0 : index
    %139 = vector.load %arg16[%c0_152, %c16_153, %c0_154] : memref<10x33x128xbf16, #tpu.memory_space<vmem>>, vector<8x16x128xbf16>
    %140 = vector.shape_cast %139 : vector<8x16x128xbf16> to vector<128x128xbf16>
    %c0_155 = arith.constant 0 : index
    %c1_156 = arith.constant 1 : index
    %c0_157 = arith.constant 0 : index
    %c0_158 = arith.constant 0 : index
    %141 = vector.load %arg11[%c0_155, %c1_156, %c0_157, %c0_158] : memref<3x3x128x128xbf16, #tpu.memory_space<vmem>>, vector<1x1x128x128xbf16>
    %142 = vector.shape_cast %141 : vector<1x1x128x128xbf16> to vector<128x128xbf16>
    %cst_159 = arith.constant dense<0.000000e+00> : vector<128x128xf32>
    %143 = tpu.matmul %140, %142, %cst_159 {dimension_numbers = #tpu.dot_dimension_numbers<[1], [0], [0], [1], [0, 0, 1, 1], [], []>} : vector<128x128xbf16>, vector<128x128xbf16>, vector<128x128xf32> -> vector<128x128xf32>
    %144 = arith.addf %138, %143 : vector<128x128xf32>
    %c0_160 = arith.constant 0 : index
    %c17_161 = arith.constant 17 : index
    %c0_162 = arith.constant 0 : index
    %145 = vector.load %arg16[%c0_160, %c17_161, %c0_162] : memref<10x33x128xbf16, #tpu.memory_space<vmem>>, vector<8x16x128xbf16>
    %146 = vector.shape_cast %145 : vector<8x16x128xbf16> to vector<128x128xbf16>
    %c0_163 = arith.constant 0 : index
    %c2_164 = arith.constant 2 : index
    %c0_165 = arith.constant 0 : index
    %c0_166 = arith.constant 0 : index
    %147 = vector.load %arg11[%c0_163, %c2_164, %c0_165, %c0_166] : memref<3x3x128x128xbf16, #tpu.memory_space<vmem>>, vector<1x1x128x128xbf16>
    %148 = vector.shape_cast %147 : vector<1x1x128x128xbf16> to vector<128x128xbf16>
    %cst_167 = arith.constant dense<0.000000e+00> : vector<128x128xf32>
    %149 = tpu.matmul %146, %148, %cst_167 {dimension_numbers = #tpu.dot_dimension_numbers<[1], [0], [0], [1], [0, 0, 1, 1], [], []>} : vector<128x128xbf16>, vector<128x128xbf16>, vector<128x128xf32> -> vector<128x128xf32>
    %150 = arith.addf %144, %149 : vector<128x128xf32>
    %c1_168 = arith.constant 1 : index
    %c15_169 = arith.constant 15 : index
    %c0_170 = arith.constant 0 : index
    %151 = vector.load %arg16[%c1_168, %c15_169, %c0_170] : memref<10x33x128xbf16, #tpu.memory_space<vmem>>, vector<8x16x128xbf16>
    %152 = vector.shape_cast %151 : vector<8x16x128xbf16> to vector<128x128xbf16>
    %c1_171 = arith.constant 1 : index
    %c0_172 = arith.constant 0 : index
    %c0_173 = arith.constant 0 : index
    %c0_174 = arith.constant 0 : index
    %153 = vector.load %arg11[%c1_171, %c0_172, %c0_173, %c0_174] : memref<3x3x128x128xbf16, #tpu.memory_space<vmem>>, vector<1x1x128x128xbf16>
    %154 = vector.shape_cast %153 : vector<1x1x128x128xbf16> to vector<128x128xbf16>
    %cst_175 = arith.constant dense<0.000000e+00> : vector<128x128xf32>
    %155 = tpu.matmul %152, %154, %cst_175 {dimension_numbers = #tpu.dot_dimension_numbers<[1], [0], [0], [1], [0, 0, 1, 1], [], []>} : vector<128x128xbf16>, vector<128x128xbf16>, vector<128x128xf32> -> vector<128x128xf32>
    %156 = arith.addf %150, %155 : vector<128x128xf32>
    %c1_176 = arith.constant 1 : index
    %c16_177 = arith.constant 16 : index
    %c0_178 = arith.constant 0 : index
    %157 = vector.load %arg16[%c1_176, %c16_177, %c0_178] : memref<10x33x128xbf16, #tpu.memory_space<vmem>>, vector<8x16x128xbf16>
    %158 = vector.shape_cast %157 : vector<8x16x128xbf16> to vector<128x128xbf16>
    %c1_179 = arith.constant 1 : index
    %c1_180 = arith.constant 1 : index
    %c0_181 = arith.constant 0 : index
    %c0_182 = arith.constant 0 : index
    %159 = vector.load %arg11[%c1_179, %c1_180, %c0_181, %c0_182] : memref<3x3x128x128xbf16, #tpu.memory_space<vmem>>, vector<1x1x128x128xbf16>
    %160 = vector.shape_cast %159 : vector<1x1x128x128xbf16> to vector<128x128xbf16>
    %cst_183 = arith.constant dense<0.000000e+00> : vector<128x128xf32>
    %161 = tpu.matmul %158, %160, %cst_183 {dimension_numbers = #tpu.dot_dimension_numbers<[1], [0], [0], [1], [0, 0, 1, 1], [], []>} : vector<128x128xbf16>, vector<128x128xbf16>, vector<128x128xf32> -> vector<128x128xf32>
    %162 = arith.addf %156, %161 : vector<128x128xf32>
    %c1_184 = arith.constant 1 : index
    %c17_185 = arith.constant 17 : index
    %c0_186 = arith.constant 0 : index
    %163 = vector.load %arg16[%c1_184, %c17_185, %c0_186] : memref<10x33x128xbf16, #tpu.memory_space<vmem>>, vector<8x16x128xbf16>
    %164 = vector.shape_cast %163 : vector<8x16x128xbf16> to vector<128x128xbf16>
    %c1_187 = arith.constant 1 : index
    %c2_188 = arith.constant 2 : index
    %c0_189 = arith.constant 0 : index
    %c0_190 = arith.constant 0 : index
    %165 = vector.load %arg11[%c1_187, %c2_188, %c0_189, %c0_190] : memref<3x3x128x128xbf16, #tpu.memory_space<vmem>>, vector<1x1x128x128xbf16>
    %166 = vector.shape_cast %165 : vector<1x1x128x128xbf16> to vector<128x128xbf16>
    %cst_191 = arith.constant dense<0.000000e+00> : vector<128x128xf32>
    %167 = tpu.matmul %164, %166, %cst_191 {dimension_numbers = #tpu.dot_dimension_numbers<[1], [0], [0], [1], [0, 0, 1, 1], [], []>} : vector<128x128xbf16>, vector<128x128xbf16>, vector<128x128xf32> -> vector<128x128xf32>
    %168 = arith.addf %162, %167 : vector<128x128xf32>
    %c2_192 = arith.constant 2 : index
    %c15_193 = arith.constant 15 : index
    %c0_194 = arith.constant 0 : index
    %169 = vector.load %arg16[%c2_192, %c15_193, %c0_194] : memref<10x33x128xbf16, #tpu.memory_space<vmem>>, vector<8x16x128xbf16>
    %170 = vector.shape_cast %169 : vector<8x16x128xbf16> to vector<128x128xbf16>
    %c2_195 = arith.constant 2 : index
    %c0_196 = arith.constant 0 : index
    %c0_197 = arith.constant 0 : index
    %c0_198 = arith.constant 0 : index
    %171 = vector.load %arg11[%c2_195, %c0_196, %c0_197, %c0_198] : memref<3x3x128x128xbf16, #tpu.memory_space<vmem>>, vector<1x1x128x128xbf16>
    %172 = vector.shape_cast %171 : vector<1x1x128x128xbf16> to vector<128x128xbf16>
    %cst_199 = arith.constant dense<0.000000e+00> : vector<128x128xf32>
    %173 = tpu.matmul %170, %172, %cst_199 {dimension_numbers = #tpu.dot_dimension_numbers<[1], [0], [0], [1], [0, 0, 1, 1], [], []>} : vector<128x128xbf16>, vector<128x128xbf16>, vector<128x128xf32> -> vector<128x128xf32>
    %174 = arith.addf %168, %173 : vector<128x128xf32>
    %c2_200 = arith.constant 2 : index
    %c16_201 = arith.constant 16 : index
    %c0_202 = arith.constant 0 : index
    %175 = vector.load %arg16[%c2_200, %c16_201, %c0_202] : memref<10x33x128xbf16, #tpu.memory_space<vmem>>, vector<8x16x128xbf16>
    %176 = vector.shape_cast %175 : vector<8x16x128xbf16> to vector<128x128xbf16>
    %c2_203 = arith.constant 2 : index
    %c1_204 = arith.constant 1 : index
    %c0_205 = arith.constant 0 : index
    %c0_206 = arith.constant 0 : index
    %177 = vector.load %arg11[%c2_203, %c1_204, %c0_205, %c0_206] : memref<3x3x128x128xbf16, #tpu.memory_space<vmem>>, vector<1x1x128x128xbf16>
    %178 = vector.shape_cast %177 : vector<1x1x128x128xbf16> to vector<128x128xbf16>
    %cst_207 = arith.constant dense<0.000000e+00> : vector<128x128xf32>
    %179 = tpu.matmul %176, %178, %cst_207 {dimension_numbers = #tpu.dot_dimension_numbers<[1], [0], [0], [1], [0, 0, 1, 1], [], []>} : vector<128x128xbf16>, vector<128x128xbf16>, vector<128x128xf32> -> vector<128x128xf32>
    %180 = arith.addf %174, %179 : vector<128x128xf32>
    %c2_208 = arith.constant 2 : index
    %c17_209 = arith.constant 17 : index
    %c0_210 = arith.constant 0 : index
    %181 = vector.load %arg16[%c2_208, %c17_209, %c0_210] : memref<10x33x128xbf16, #tpu.memory_space<vmem>>, vector<8x16x128xbf16>
    %182 = vector.shape_cast %181 : vector<8x16x128xbf16> to vector<128x128xbf16>
    %c2_211 = arith.constant 2 : index
    %c2_212 = arith.constant 2 : index
    %c0_213 = arith.constant 0 : index
    %c0_214 = arith.constant 0 : index
    %183 = vector.load %arg11[%c2_211, %c2_212, %c0_213, %c0_214] : memref<3x3x128x128xbf16, #tpu.memory_space<vmem>>, vector<1x1x128x128xbf16>
    %184 = vector.shape_cast %183 : vector<1x1x128x128xbf16> to vector<128x128xbf16>
    %cst_215 = arith.constant dense<0.000000e+00> : vector<128x128xf32>
    %185 = tpu.matmul %182, %184, %cst_215 {dimension_numbers = #tpu.dot_dimension_numbers<[1], [0], [0], [1], [0, 0, 1, 1], [], []>} : vector<128x128xbf16>, vector<128x128xbf16>, vector<128x128xf32> -> vector<128x128xf32>
    %186 = arith.addf %180, %185 : vector<128x128xf32>
    %c0_216 = arith.constant 0 : index
    %c0_217 = arith.constant 0 : index
    %187 = vector.load %arg12[%c0_216, %c0_217] : memref<1x128xf32, #tpu.memory_space<vmem>>, vector<1x128xf32>
    %188 = vector.broadcast %187 : vector<1x128xf32> to vector<128x128xf32>
    %189 = arith.mulf %186, %188 : vector<128x128xf32>
    %c0_218 = arith.constant 0 : index
    %c0_219 = arith.constant 0 : index
    %190 = vector.load %arg13[%c0_218, %c0_219] : memref<1x128xf32, #tpu.memory_space<vmem>>, vector<1x128xf32>
    %191 = vector.broadcast %190 : vector<1x128xf32> to vector<128x128xf32>
    %192 = arith.addf %189, %191 : vector<128x128xf32>
    %cst_220 = arith.constant 0.000000e+00 : f32
    %193 = vector.broadcast %cst_220 : f32 to vector<128x128xf32>
    %194 = arith.maximumf %192, %193 : vector<128x128xf32>
    %195 = vector.shape_cast %194 : vector<128x128xf32> to vector<1x8x16x128xf32>
    %196 = arith.truncf %195 : vector<1x8x16x128xf32> to vector<1x8x16x128xbf16>
    %c0_221 = arith.constant 0 : index
    %c0_222 = arith.constant 0 : index
    %c0_223 = arith.constant 0 : index
    %c0_224 = arith.constant 0 : index
    %197 = vector.load %arg14[%c0_221, %c0_222, %c0_223, %c0_224] : memref<1x8x16x128xbf16, #tpu.memory_space<vmem>>, vector<1x8x16x128xbf16>
    tpu.vector_store %arg14[%c0_221, %c0_222, %c0_223, %c0_224], %196 {strides = array<i32>} : memref<1x8x16x128xbf16, #tpu.memory_space<vmem>>, vector<1x8x16x128xbf16>,
    return
  }
  func.func @transform_0(%arg0: i32, %arg1: i32) -> (i32, i32, i32, i32) {
    %c0_i32 = arith.constant 0 : i32
    %c0_i32_0 = arith.constant 0 : i32
    %c0_i32_1 = arith.constant 0 : i32
    return %arg0, %arg1, %c0_i32, %c0_i32_0 : i32, i32, i32, i32
  }
  func.func @transform_1(%arg0: i32, %arg1: i32) -> (i32, i32, i32, i32) {
    %c4_i32 = arith.constant 4 : i32
    %0 = arith.muli %arg1, %c4_i32 : i32
    %c1_i32 = arith.constant 1 : i32
    %1 = arith.subi %0, %c1_i32 : i32
    %c0_i32 = arith.constant 0 : i32
    %2 = arith.maxsi %1, %c0_i32 : i32
    %c0_i32_0 = arith.constant 0 : i32
    %c0_i32_1 = arith.constant 0 : i32
    %c0_i32_2 = arith.constant 0 : i32
    return %arg0, %2, %c0_i32_0, %c0_i32_1 : i32, i32, i32, i32
  }
  func.func @transform_2(%arg0: i32, %arg1: i32) -> (i32, i32, i32, i32) {
    %c1_i32 = arith.constant 1 : i32
    %0 = arith.addi %arg1, %c1_i32 : i32
    %c4_i32 = arith.constant 4 : i32
    %1 = arith.muli %0, %c4_i32 : i32
    %c7_i32 = arith.constant 7 : i32
    %2 = arith.minsi %1, %c7_i32 : i32
    %c0_i32 = arith.constant 0 : i32
    %c0_i32_0 = arith.constant 0 : i32
    %c0_i32_1 = arith.constant 0 : i32
    return %arg0, %2, %c0_i32, %c0_i32_0 : i32, i32, i32, i32
  }
  func.func @transform_3(%arg0: i32, %arg1: i32) -> (i32, i32, i32, i32) {
    %c0_i32 = arith.constant 0 : i32
    %c0_i32_0 = arith.constant 0 : i32
    %c0_i32_1 = arith.constant 0 : i32
    return %arg0, %arg1, %c0_i32, %c0_i32_0 : i32, i32, i32, i32
  }
  func.func @transform_4(%arg0: i32, %arg1: i32) -> (i32, i32, i32, i32) {
    %c4_i32 = arith.constant 4 : i32
    %0 = arith.muli %arg1, %c4_i32 : i32
    %c1_i32 = arith.constant 1 : i32
    %1 = arith.subi %0, %c1_i32 : i32
    %c0_i32 = arith.constant 0 : i32
    %2 = arith.maxsi %1, %c0_i32 : i32
    %c0_i32_0 = arith.constant 0 : i32
    %c0_i32_1 = arith.constant 0 : i32
    %c0_i32_2 = arith.constant 0 : i32
    return %arg0, %2, %c0_i32_0, %c0_i32_1 : i32, i32, i32, i32
  }
  func.func @transform_5(%arg0: i32, %arg1: i32) -> (i32, i32, i32, i32) {
    %c1_i32 = arith.constant 1 : i32
    %0 = arith.addi %arg1, %c1_i32 : i32
    %c4_i32 = arith.constant 4 : i32
    %1 = arith.muli %0, %c4_i32 : i32
    %c7_i32 = arith.constant 7 : i32
    %2 = arith.minsi %1, %c7_i32 : i32
    %c0_i32 = arith.constant 0 : i32
    %c0_i32_0 = arith.constant 0 : i32
    %c0_i32_1 = arith.constant 0 : i32
    return %arg0, %2, %c0_i32, %c0_i32_0 : i32, i32, i32, i32
  }
  func.func @transform_6(%arg0: i32, %arg1: i32) -> (i32, i32, i32, i32) {
    %c0_i32 = arith.constant 0 : i32
    %c0_i32_0 = arith.constant 0 : i32
    %c0_i32_1 = arith.constant 0 : i32
    %c0_i32_2 = arith.constant 0 : i32
    %c0_i32_3 = arith.constant 0 : i32
    return %c0_i32, %c0_i32_0, %c0_i32_1, %c0_i32_2 : i32, i32, i32, i32
  }
  func.func @transform_7(%arg0: i32, %arg1: i32) -> (i32, i32) {
    %c0_i32 = arith.constant 0 : i32
    %c0_i32_0 = arith.constant 0 : i32
    %c0_i32_1 = arith.constant 0 : i32
    return %c0_i32, %c0_i32_0 : i32, i32
  }
  func.func @transform_8(%arg0: i32, %arg1: i32) -> (i32, i32) {
    %c0_i32 = arith.constant 0 : i32
    %c0_i32_0 = arith.constant 0 : i32
    %c0_i32_1 = arith.constant 0 : i32
    return %c0_i32, %c0_i32_0 : i32, i32
  }
  func.func @transform_9(%arg0: i32, %arg1: i32) -> (i32, i32, i32, i32) {
    %c0_i32 = arith.constant 0 : i32
    %c0_i32_0 = arith.constant 0 : i32
    %c0_i32_1 = arith.constant 0 : i32
    %c0_i32_2 = arith.constant 0 : i32
    %c0_i32_3 = arith.constant 0 : i32
    return %c0_i32, %c0_i32_0, %c0_i32_1, %c0_i32_2 : i32, i32, i32, i32
  }
  func.func @transform_10(%arg0: i32, %arg1: i32) -> (i32, i32) {
    %c0_i32 = arith.constant 0 : i32
    %c0_i32_0 = arith.constant 0 : i32
    %c0_i32_1 = arith.constant 0 : i32
    return %c0_i32, %c0_i32_0 : i32, i32
  }
  func.func @transform_11(%arg0: i32, %arg1: i32) -> (i32, i32) {
    %c0_i32 = arith.constant 0 : i32
    %c0_i32_0 = arith.constant 0 : i32
    %c0_i32_1 = arith.constant 0 : i32
    return %c0_i32, %c0_i32_0 : i32, i32
  }
  func.func @transform_12(%arg0: i32, %arg1: i32) -> (i32, i32, i32, i32) {
    %c0_i32 = arith.constant 0 : i32
    %c0_i32_0 = arith.constant 0 : i32
    %c0_i32_1 = arith.constant 0 : i32
    return %arg0, %arg1, %c0_i32, %c0_i32_0 : i32, i32, i32, i32
  }
}

</mosaic_0001>

<llo_original>
// kernel: tpu_custom_call.1
$region0: #{tpu_custom_call.1}
  #allocation0 [shape = 'u32[]', space=smem, size = 0x4, offset = 0x4, fixed_abs, tag = 'smem constant byte address 0x4 - core index']
  #allocation1 [shape = 'u32[144,128]{1,0:T(1,128)}', space=vmem, size = 0x12000, scoped, tag = 'internal scratch']
  #allocation2 [shape = 'bf16[12,33,256]{2,1,0:T(8,128)(2,1)}', space=vmem, size = 0x3c000, scoped, tag = 'scratch operand']
  #allocation3 [shape = 'bf16[10,33,128]{2,1,0:T(8,128)(2,1)}', space=vmem, size = 0x19000, scoped, tag = 'scratch operand']
  %s0 = inlined_call_operand.vmem [shape: bf16[2,8,16,4], index: 0, kind: input, shape index: {}]
  %s1 = inlined_call_operand.vmem [shape: bf16[2,8,16,4], index: 1, kind: input, shape index: {}]
  %s2 = inlined_call_operand.vmem [shape: bf16[2,8,16,4], index: 2, kind: input, shape index: {}]
  %s3 = inlined_call_operand.vmem [shape: bf16[2,16,16,4], index: 3, kind: input, shape index: {}]
  %s4 = inlined_call_operand.vmem [shape: bf16[2,16,16,4], index: 4, kind: input, shape index: {}]
  %s5 = inlined_call_operand.vmem [shape: bf16[2,16,16,4], index: 5, kind: input, shape index: {}]
  %s6 = inlined_call_operand.vmem [shape: bf16[3,3,256,128], index: 6, kind: input, shape index: {}]
  %s7 = inlined_call_operand.vmem [shape: f32[1,128], index: 7, kind: input, shape index: {}]
  %s8 = inlined_call_operand.vmem [shape: f32[1,128], index: 8, kind: input, shape index: {}]
  %s9 = inlined_call_operand.hbm [shape: bf16[3,3,128,128], index: 9, kind: input, shape index: {}]
  %s10 = inlined_call_operand.vmem [shape: f32[1,128], index: 10, kind: input, shape index: {}]
  %s11 = inlined_call_operand.vmem [shape: f32[1,128], index: 11, kind: input, shape index: {}]
  %s12 = inlined_call_operand.hbm [shape: bf16[2,16,16,128], index: 12, kind: output, shape index: {}]
  %s13 = sld [smem:[#allocation0]]
  $region93: #{tpu_custom_call.1} parent=0
    _
  %s15 = ssub.s32 1, %s13
  %s16 = scalar_select 0, %s15, %s13
  $region1: #{tpu_custom_call.1} parent=0
    #allocation4 [shape = 'u8[294912]{0}', space=vmem, size = 0x48000, scoped, tag = 'input window, operand 9, single buffered']
    #allocation5 [shape = 's32[2]{0}', space=sflag, size = 0x8, scoped, tag = 'scoped memory for tpu_custom_call.1']
    #allocation6 [shape = 's32[2]{0}', space=sflag, size = 0x8, scoped, tag = 'scoped memory for tpu_custom_call.1']
    #allocation7 [shape = 'u8[65536]{0}', space=vmem, size = 0x10000, scoped, tag = 'output window, operand 0']
    %17 = vsyncpa [#allocation5], 0
    %18 = vsyncpa [#allocation6], 0
    %s19 = scalar_lea.sflag [#allocation6], 1
    %20 = vsyncpa %s19, 0
    loop: start=0, step=1, limit=6
    $region2: #{tpu_custom_call.1} parent=1 // loop_pre_header
      _
    $region3: #{tpu_custom_call.1} parent=1 // loop_header
      %s22 = sphi 0, %s26
      %p23 = scmp.ge.s32.totalorder %s22, 6
      %s29 = sphi 0, %s41
      %s30 = sphi 0, %s37
      %s31 = sphi 0, %s29
      %s32 = sphi 0, %s30
      %s33 = sphi 0, %s31
      %s34 = sphi 0, %s32
      %s46 = sphi 0, %s48
      %s49 = sphi 0, %s46
      %s50 = sphi 0, %s49
      %s66 = sphi 0, %s50
      %s82 = sphi 0, %s84
      %s85 = sphi 0, %s82
      %s86 = sphi 0, %s85
      %s102 = sphi 0, %s86
      %s118 = sphi 0, %s120
      %s121 = sphi 0, %s118
      %s122 = sphi 0, %s121
      %s138 = sphi 0, %s122
      %s146 = sphi 0, %s148
      %s149 = sphi 0, %s146
      %s150 = sphi 0, %s149
      %s166 = sphi 0, %s150
      %s182 = sphi 0, %s184
      %s185 = sphi 0, %s182
      %s186 = sphi 0, %s185
      %s202 = sphi 0, %s186
      %s218 = sphi 0, %s220
      %s221 = sphi 0, %s218
      %s222 = sphi 0, %s221
      %s238 = sphi 0, %s222
      %s242 = sphi 0, %s242
      %s244 = sphi 0, %s242
      %s245 = sphi 0, %s244
      %s259 = sphi 0, %s245
      %s263 = sphi 0, %s263
      %s265 = sphi 0, %s263
      %s266 = sphi 0, %s265
      %s280 = sphi 0, %s266
      %s284 = sphi 0, %s284
      %s286 = sphi 0, %s284
      %s287 = sphi 0, %s286
      %s301 = sphi 0, %s287
      %s305 = sphi 0, %s305
      %s307 = sphi 0, %s305
      %s308 = sphi 0, %s307
      %s322 = sphi 0, %s308
      %s326 = sphi 0, %s326
      %s328 = sphi 0, %s326
      %s329 = sphi 0, %s328
      %s343 = sphi 0, %s329
      %s347 = sphi 0, %s347
      %s349 = sphi 0, %s347
      %s350 = sphi 0, %s349
      %s364 = sphi 0, %s350
      %s372 = sphi 0, %s374
      %s375 = sphi 0, %s372
      %s376 = sphi 0, %s375
      %s392 = sphi 0, %s376
    $region4: #{tpu_custom_call.1} parent=1 // loop_header_branch
      %25 = sbr.rel (%p23) target = $region8
    $region5: #{tpu_custom_call.1} parent=1 // loop_body
      %s27 = ssub.s32 %s22, 1
      %s28 = ssub.s32 %s22, 2
      %s35 = sadd.s32 1, %s30
      %p36 = scmp.ge.s32.totalorder %s35, 2
      %s37 = scalar_select %p36, 0, %s35
      %s38 = sadd.s32 1, %s29
      %s39 = scalar_select %p36, %s38, %s29
      %p40 = scmp.ge.s32.totalorder %s39, 2
      %s41 = scalar_select %p40, 0, %s39
      %s42 = ssub.s32 %s29, %s41
      %s43 = ssub.s32 %s30, %s37
      %s44 = sor.u32 %s42, %s43
      %p45 = scmp.eq.s32.totalorder %s44, 0
      %s47 = sadd.s32 %s46, 1
      %s48 = scalar_select %p45, %s46, %s47
      %p51 = pneg %p45
      %p52 = scmp.eq.s32.totalorder %s22, 3
      %p53 = por %p51, %p52
      %p54 = scmp.ne.s32.totalorder %s46, %s49
      %p55 = scmp.eq.s32.totalorder %s22, 0
      %p56 = por %p54, %p55
      %p57 = scmp.ne.s32.totalorder %s46, %s49
      %p58 = scmp.eq.s32.totalorder %s27, 3
      %p59 = por %p57, %p58
      %p60 = scmp.ne.s32.totalorder %s49, %s50
      %p61 = scmp.eq.s32.totalorder %s27, 0
      %p62 = por %p60, %p61
      %p63 = scmp.ne.s32.totalorder %s49, %s50
      %p64 = scmp.eq.s32.totalorder %s28, 3
      %p65 = por %p63, %p64
      %p67 = scmp.ne.s32.totalorder %s50, %s66
      %p68 = scmp.eq.s32.totalorder %s28, 0
      %p69 = por %p67, %p68
      %s70 = smul.u32 %s30, 4
      %s71 = ssub.s32 %s70, 1
      %p72 = scmp.gt.s32.totalorder %s71, 0
      %s73 = scalar_select %p72, %s71, 0
      %s74 = smul.u32 %s37, 4
      %s75 = ssub.s32 %s74, 1
      %p76 = scmp.gt.s32.totalorder %s75, 0
      %s77 = scalar_select %p76, %s75, 0
      %s78 = ssub.s32 %s29, %s41
      %s79 = ssub.s32 %s73, %s77
      %s80 = sor.u32 %s78, %s79
      %p81 = scmp.eq.s32.totalorder %s80, 0
      %s83 = sadd.s32 %s82, 1
      %s84 = scalar_select %p81, %s82, %s83
      %p87 = pneg %p81
      %p88 = scmp.eq.s32.totalorder %s22, 3
      %p89 = por %p87, %p88
      %p90 = scmp.ne.s32.totalorder %s82, %s85
      %p91 = scmp.eq.s32.totalorder %s22, 0
      %p92 = por %p90, %p91
      %p93 = scmp.ne.s32.totalorder %s82, %s85
      %p94 = scmp.eq.s32.totalorder %s27, 3
      %p95 = por %p93, %p94
      %p96 = scmp.ne.s32.totalorder %s85, %s86
      %p97 = scmp.eq.s32.totalorder %s27, 0
      %p98 = por %p96, %p97
      %p99 = scmp.ne.s32.totalorder %s85, %s86
      %p100 = scmp.eq.s32.totalorder %s28, 3
      %p101 = por %p99, %p100
      %p103 = scmp.ne.s32.totalorder %s86, %s102
      %p104 = scmp.eq.s32.totalorder %s28, 0
      %p105 = por %p103, %p104
      %s106 = sadd.s32 %s30, 1
      %s107 = smul.u32 %s106, 4
      %p108 = scmp.lt.s32.totalorder %s107, 7
      %s109 = scalar_select %p108, %s107, 7
      %s110 = sadd.s32 %s37, 1
      %s111 = smul.u32 %s110, 4
      %p112 = scmp.lt.s32.totalorder %s111, 7
      %s113 = scalar_select %p112, %s111, 7
      %s114 = ssub.s32 %s29, %s41
      %s115 = ssub.s32 %s109, %s113
      %s116 = sor.u32 %s114, %s115
      %p117 = scmp.eq.s32.totalorder %s116, 0
      %s119 = sadd.s32 %s118, 1
      %s120 = scalar_select %p117, %s118, %s119
      %p123 = pneg %p117
      %p124 = scmp.eq.s32.totalorder %s22, 3
      %p125 = por %p123, %p124
      %p126 = scmp.ne.s32.totalorder %s118, %s121
      %p127 = scmp.eq.s32.totalorder %s22, 0
      %p128 = por %p126, %p127
      %p129 = scmp.ne.s32.totalorder %s118, %s121
      %p130 = scmp.eq.s32.totalorder %s27, 3
      %p131 = por %p129, %p130
      %p132 = scmp.ne.s32.totalorder %s121, %s122
      %p133 = scmp.eq.s32.totalorder %s27, 0
      %p134 = por %p132, %p133
      %p135 = scmp.ne.s32.totalorder %s121, %s122
      %p136 = scmp.eq.s32.totalorder %s28, 3
      %p137 = por %p135, %p136
      %p139 = scmp.ne.s32.totalorder %s122, %s138
      %p140 = scmp.eq.s32.totalorder %s28, 0
      %p141 = por %p139, %p140
      %s142 = ssub.s32 %s29, %s41
      %s143 = ssub.s32 %s30, %s37
      %s144 = sor.u32 %s142, %s143
      %p145 = scmp.eq.s32.totalorder %s144, 0
      %s147 = sadd.s32 %s146, 1
      %s148 = scalar_select %p145, %s146, %s147
      %p151 = pneg %p145
      %p152 = scmp.eq.s32.totalorder %s22, 3
      %p153 = por %p151, %p152
      %p154 = scmp.ne.s32.totalorder %s146, %s149
      %p155 = scmp.eq.s32.totalorder %s22, 0
      %p156 = por %p154, %p155
      %p157 = scmp.ne.s32.totalorder %s146, %s149
      %p158 = scmp.eq.s32.totalorder %s27, 3
      %p159 = por %p157, %p158
      %p160 = scmp.ne.s32.totalorder %s149, %s150
      %p161 = scmp.eq.s32.totalorder %s27, 0
      %p162 = por %p160, %p161
      %p163 = scmp.ne.s32.totalorder %s149, %s150
      %p164 = scmp.eq.s32.totalorder %s28, 3
      %p165 = por %p163, %p164
      %p167 = scmp.ne.s32.totalorder %s150, %s166
      %p168 = scmp.eq.s32.totalorder %s28, 0
      %p169 = por %p167, %p168
      %s170 = smul.u32 %s30, 4
      %s171 = ssub.s32 %s170, 1
      %p172 = scmp.gt.s32.totalorder %s171, 0
      %s173 = scalar_select %p172, %s171, 0
      %s174 = smul.u32 %s37, 4
      %s175 = ssub.s32 %s174, 1
      %p176 = scmp.gt.s32.totalorder %s175, 0
      %s177 = scalar_select %p176, %s175, 0
      %s178 = ssub.s32 %s29, %s41
      %s179 = ssub.s32 %s173, %s177
      %s180 = sor.u32 %s178, %s179
      %p181 = scmp.eq.s32.totalorder %s180, 0
      %s183 = sadd.s32 %s182, 1
      %s184 = scalar_select %p181, %s182, %s183
      %p187 = pneg %p181
      %p188 = scmp.eq.s32.totalorder %s22, 3
      %p189 = por %p187, %p188
      %p190 = scmp.ne.s32.totalorder %s182, %s185
      %p191 = scmp.eq.s32.totalorder %s22, 0
      %p192 = por %p190, %p191
      %p193 = scmp.ne.s32.totalorder %s182, %s185
      %p194 = scmp.eq.s32.totalorder %s27, 3
      %p195 = por %p193, %p194
      %p196 = scmp.ne.s32.totalorder %s185, %s186
      %p197 = scmp.eq.s32.totalorder %s27, 0
      %p198 = por %p196, %p197
      %p199 = scmp.ne.s32.totalorder %s185, %s186
      %p200 = scmp.eq.s32.totalorder %s28, 3
      %p201 = por %p199, %p200
      %p203 = scmp.ne.s32.totalorder %s186, %s202
      %p204 = scmp.eq.s32.totalorder %s28, 0
      %p205 = por %p203, %p204
      %s206 = sadd.s32 %s30, 1
      %s207 = smul.u32 %s206, 4
      %p208 = scmp.lt.s32.totalorder %s207, 7
      %s209 = scalar_select %p208, %s207, 7
      %s210 = sadd.s32 %s37, 1
      %s211 = smul.u32 %s210, 4
      %p212 = scmp.lt.s32.totalorder %s211, 7
      %s213 = scalar_select %p212, %s211, 7
      %s214 = ssub.s32 %s29, %s41
      %s215 = ssub.s32 %s209, %s213
      %s216 = sor.u32 %s214, %s215
      %p217 = scmp.eq.s32.totalorder %s216, 0
      %s219 = sadd.s32 %s218, 1
      %s220 = scalar_select %p217, %s218, %s219
      %p223 = pneg %p217
      %p224 = scmp.eq.s32.totalorder %s22, 3
      %p225 = por %p223, %p224
      %p226 = scmp.ne.s32.totalorder %s218, %s221
      %p227 = scmp.eq.s32.totalorder %s22, 0
      %p228 = por %p226, %p227
      %p229 = scmp.ne.s32.totalorder %s218, %s221
      %p230 = scmp.eq.s32.totalorder %s27, 3
      %p231 = por %p229, %p230
      %p232 = scmp.ne.s32.totalorder %s221, %s222
      %p233 = scmp.eq.s32.totalorder %s27, 0
      %p234 = por %p232, %p233
      %p235 = scmp.ne.s32.totalorder %s221, %s222
      %p236 = scmp.eq.s32.totalorder %s28, 3
      %p237 = por %p235, %p236
      %p239 = scmp.ne.s32.totalorder %s222, %s238
      %p240 = scmp.eq.s32.totalorder %s28, 0
      %p241 = por %p239, %p240
      %s243 = sadd.s32 %s242, 1
      %p246 = scmp.eq.s32.totalorder %s22, 3
      %p247 = scmp.ne.s32.totalorder %s242, %s244
      %p248 = scmp.eq.s32.totalorder %s22, 0
      %p249 = por %p247, %p248
      %p250 = scmp.ne.s32.totalorder %s242, %s244
      %p251 = scmp.eq.s32.totalorder %s27, 3
      %p252 = por %p250, %p251
      %p253 = scmp.ne.s32.totalorder %s244, %s245
      %p254 = scmp.eq.s32.totalorder %s27, 0
      %p255 = por %p253, %p254
      %p256 = scmp.ne.s32.totalorder %s244, %s245
      %p257 = scmp.eq.s32.totalorder %s28, 3
      %p258 = por %p256, %p257
      %p260 = scmp.ne.s32.totalorder %s245, %s259
      %p261 = scmp.eq.s32.totalorder %s28, 0
      %p262 = por %p260, %p261
      %s264 = sadd.s32 %s263, 1
      %p267 = scmp.eq.s32.totalorder %s22, 3
      %p268 = scmp.ne.s32.totalorder %s263, %s265
      %p269 = scmp.eq.s32.totalorder %s22, 0
      %p270 = por %p268, %p269
      %p271 = scmp.ne.s32.totalorder %s263, %s265
      %p272 = scmp.eq.s32.totalorder %s27, 3
      %p273 = por %p271, %p272
      %p274 = scmp.ne.s32.totalorder %s265, %s266
      %p275 = scmp.eq.s32.totalorder %s27, 0
      %p276 = por %p274, %p275
      %p277 = scmp.ne.s32.totalorder %s265, %s266
      %p278 = scmp.eq.s32.totalorder %s28, 3
      %p279 = por %p277, %p278
      %p281 = scmp.ne.s32.totalorder %s266, %s280
      %p282 = scmp.eq.s32.totalorder %s28, 0
      %p283 = por %p281, %p282
      %s285 = sadd.s32 %s284, 1
      %p288 = scmp.eq.s32.totalorder %s22, 3
      %p289 = scmp.ne.s32.totalorder %s284, %s286
      %p290 = scmp.eq.s32.totalorder %s22, 0
      %p291 = por %p289, %p290
      %p292 = scmp.ne.s32.totalorder %s284, %s286
      %p293 = scmp.eq.s32.totalorder %s27, 3
      %p294 = por %p292, %p293
      %p295 = scmp.ne.s32.totalorder %s286, %s287
      %p296 = scmp.eq.s32.totalorder %s27, 0
      %p297 = por %p295, %p296
      %p298 = scmp.ne.s32.totalorder %s286, %s287
      %p299 = scmp.eq.s32.totalorder %s28, 3
      %p300 = por %p298, %p299
      %p302 = scmp.ne.s32.totalorder %s287, %s301
      %p303 = scmp.eq.s32.totalorder %s28, 0
      %p304 = por %p302, %p303
      %s306 = sadd.s32 %s305, 1
      %p309 = scmp.eq.s32.totalorder %s22, 3
      %p310 = scmp.ne.s32.totalorder %s305, %s307
      %p311 = scmp.eq.s32.totalorder %s22, 0
      %p312 = por %p310, %p311
      %p313 = scmp.ne.s32.totalorder %s305, %s307
      %p314 = scmp.eq.s32.totalorder %s27, 3
      %p315 = por %p313, %p314
      %p316 = scmp.ne.s32.totalorder %s307, %s308
      %p317 = scmp.eq.s32.totalorder %s27, 0
      %p318 = por %p316, %p317
      %p319 = scmp.ne.s32.totalorder %s307, %s308
      %p320 = scmp.eq.s32.totalorder %s28, 3
      %p321 = por %p319, %p320
      %p323 = scmp.ne.s32.totalorder %s308, %s322
      %p324 = scmp.eq.s32.totalorder %s28, 0
      %p325 = por %p323, %p324
      %s327 = sadd.s32 %s326, 1
      %p330 = scmp.eq.s32.totalorder %s22, 3
      %p331 = scmp.ne.s32.totalorder %s326, %s328
      %p332 = scmp.eq.s32.totalorder %s22, 0
      %p333 = por %p331, %p332
      %p334 = scmp.ne.s32.totalorder %s326, %s328
      %p335 = scmp.eq.s32.totalorder %s27, 3
      %p336 = por %p334, %p335
      %p337 = scmp.ne.s32.totalorder %s328, %s329
      %p338 = scmp.eq.s32.totalorder %s27, 0
      %p339 = por %p337, %p338
      %p340 = scmp.ne.s32.totalorder %s328, %s329
      %p341 = scmp.eq.s32.totalorder %s28, 3
      %p342 = por %p340, %p341
      %p344 = scmp.ne.s32.totalorder %s329, %s343
      %p345 = scmp.eq.s32.totalorder %s28, 0
      %p346 = por %p344, %p345
      %s348 = sadd.s32 %s347, 1
      %p351 = scmp.eq.s32.totalorder %s22, 3
      %p352 = scmp.ne.s32.totalorder %s347, %s349
      %p353 = scmp.eq.s32.totalorder %s22, 0
      %p354 = por %p352, %p353
      %p355 = scmp.ne.s32.totalorder %s347, %s349
      %p356 = scmp.eq.s32.totalorder %s27, 3
      %p357 = por %p355, %p356
      %p358 = scmp.ne.s32.totalorder %s349, %s350
      %p359 = scmp.eq.s32.totalorder %s27, 0
      %p360 = por %p358, %p359
      %p361 = scmp.ne.s32.totalorder %s349, %s350
      %p362 = scmp.eq.s32.totalorder %s28, 3
      %p363 = por %p361, %p362
      %p365 = scmp.ne.s32.totalorder %s350, %s364
      %p366 = scmp.eq.s32.totalorder %s28, 0
      %p367 = por %p365, %p366
      %s368 = ssub.s32 %s29, %s41
      %s369 = ssub.s32 %s30, %s37
      %s370 = sor.u32 %s368, %s369
      %p371 = scmp.eq.s32.totalorder %s370, 0
      %s373 = sadd.s32 %s372, 1
      %s374 = scalar_select %p371, %s372, %s373
      %p377 = pneg %p371
      %p378 = scmp.eq.s32.totalorder %s22, 3
      %p379 = por %p377, %p378
      %p380 = scmp.ne.s32.totalorder %s372, %s375
      %p381 = scmp.eq.s32.totalorder %s22, 0
      %p382 = por %p380, %p381
      %p383 = scmp.ne.s32.totalorder %s372, %s375
      %p384 = scmp.eq.s32.totalorder %s27, 3
      %p385 = por %p383, %p384
      %p386 = scmp.ne.s32.totalorder %s375, %s376
      %p387 = scmp.eq.s32.totalorder %s27, 0
      %p388 = por %p386, %p387
      %p389 = scmp.ne.s32.totalorder %s375, %s376
      %p390 = scmp.eq.s32.totalorder %s28, 3
      %p391 = por %p389, %p390
      %p393 = scmp.ne.s32.totalorder %s376, %s392
      %p394 = scmp.eq.s32.totalorder %s28, 0
      %p395 = por %p393, %p394
      %p396 = scmp.le.s32.totalorder 1, %s22
      %p397 = scmp.lt.s32.totalorder %s22, 5
      %p398 = pnand %p396, %p397
      %p399 = pneg %p398
      // Predicated region
      $region9: #{tpu_custom_call.1} parent=5 // pred_check
        _
      $region10: #{tpu_custom_call.1} parent=5 // pred_check_branch
        %401 = sbr.rel (%p398) target = $region12
      $region11: #{tpu_custom_call.1} parent=5 // pred_region
        %s402 = ssub.s32 %s22, 1
        // Predicated region
        $region13: #{tpu_custom_call.1} parent=11 // pred_check
          %p403 = pneg %p255
        $region14: #{tpu_custom_call.1} parent=11 // pred_check_branch
          %405 = sbr.rel (%p403) target = $region16
        $region15: #{tpu_custom_call.1} parent=11 // pred_region
          _
        $region16: #{tpu_custom_call.1} parent=11 // pred_fallthru
          _
        // Predicated region
        $region17: #{tpu_custom_call.1} parent=11 // pred_check
          %p406 = pneg %p276
        $region18: #{tpu_custom_call.1} parent=11 // pred_check_branch
          %408 = sbr.rel (%p406) target = $region20
        $region19: #{tpu_custom_call.1} parent=11 // pred_region
          _
        $region20: #{tpu_custom_call.1} parent=11 // pred_fallthru
          _
        // Predicated region
        $region21: #{tpu_custom_call.1} parent=11 // pred_check
          %p409 = pneg %p297
        $region22: #{tpu_custom_call.1} parent=11 // pred_check_branch
          %411 = sbr.rel (%p409) target = $region24
        $region23: #{tpu_custom_call.1} parent=11 // pred_region
          _
        $region24: #{tpu_custom_call.1} parent=11 // pred_fallthru
          _
        // Predicated region
        $region25: #{tpu_custom_call.1} parent=11 // pred_check
          %p412 = pneg %p318
        $region26: #{tpu_custom_call.1} parent=11 // pred_check_branch
          %414 = sbr.rel (%p412) target = $region28
        $region27: #{tpu_custom_call.1} parent=11 // pred_region
          %s416 = ssub.s32 9216, 9216
          %417 = vsyncadd [#allocation5], %s416
          %s418 = sshll.u32 [#allocation4], 4
          %s419 = int_to_ptr.vmem [resolvable:$true] %s418
          %424 = dma.hbm_to_vmem [thread:$0]  %s9, 9216, %s419, [#allocation5], 64, 64, 4
        $region28: #{tpu_custom_call.1} parent=11 // pred_fallthru
          _
        // Predicated region
        $region29: #{tpu_custom_call.1} parent=11 // pred_check
          %p425 = pneg %p339
        $region30: #{tpu_custom_call.1} parent=11 // pred_check_branch
          %427 = sbr.rel (%p425) target = $region32
        $region31: #{tpu_custom_call.1} parent=11 // pred_region
          _
        $region32: #{tpu_custom_call.1} parent=11 // pred_fallthru
          _
        // Predicated region
        $region33: #{tpu_custom_call.1} parent=11 // pred_check
          %p428 = pneg %p360
        $region34: #{tpu_custom_call.1} parent=11 // pred_check_branch
          %430 = sbr.rel (%p428) target = $region36
        $region35: #{tpu_custom_call.1} parent=11 // pred_region
          _
        $region36: #{tpu_custom_call.1} parent=11 // pred_fallthru
          _
      $region12: #{tpu_custom_call.1} parent=5 // pred_fallthru
        _
      %p431 = scmp.lt.s32.totalorder %s22, 4
      // Predicated region
      $region37: #{tpu_custom_call.1} parent=5 // pred_check
        %p432 = pneg %p431
      $region38: #{tpu_custom_call.1} parent=5 // pred_check_branch
        %434 = sbr.rel (%p432) target = $region40
      $region39: #{tpu_custom_call.1} parent=5 // pred_region
        // Predicated region
        $region41: #{tpu_custom_call.1} parent=39 // pred_check
          %p435 = pneg %p56
        $region42: #{tpu_custom_call.1} parent=39 // pred_check_branch
          %437 = sbr.rel (%p435) target = $region44
        $region43: #{tpu_custom_call.1} parent=39 // pred_region
          %s438 = smul.u32 4, %s30
          %p439 = scmp.lt.s32.totalorder %s29, 1
          %s440 = scalar_select %p439, %s29, 1
          %p441 = scmp.lt.s32.totalorder %s438, 7
          %s442 = scalar_select %p441, %s438, 7
          %s443 = smul.addr %s442, 2
          %s444 = smul.addr %s440, 16
          %s445 = sadd.s32 %s443, %s444
          %s446 = smul.addr %s445, 4
          %s447 = scalar_lea.vmem %s0, %s446
          %s448 = smul.u32 4, %s30
        $region44: #{tpu_custom_call.1} parent=39 // pred_fallthru
          _
        // Predicated region
        $region45: #{tpu_custom_call.1} parent=39 // pred_check
          %p449 = pneg %p92
        $region46: #{tpu_custom_call.1} parent=39 // pred_check_branch
          %451 = sbr.rel (%p449) target = $region48
        $region47: #{tpu_custom_call.1} parent=39 // pred_region
          %s452 = smul.u32 %s30, 4
          %s453 = ssub.s32 %s452, 1
          %p454 = scmp.gt.s32.totalorder %s453, 0
          %s455 = scalar_select %p454, %s453, 0
          %p456 = scmp.lt.s32.totalorder %s29, 1
          %s457 = scalar_select %p456, %s29, 1
          %p458 = scmp.lt.s32.totalorder %s455, 7
          %s459 = scalar_select %p458, %s455, 7
          %s460 = smul.addr %s459, 2
          %s461 = smul.addr %s457, 16
          %s462 = sadd.s32 %s460, %s461
          %s463 = smul.addr %s462, 4
          %s464 = scalar_lea.vmem %s1, %s463
          %s465 = smul.u32 %s30, 4
          %s466 = ssub.s32 %s465, 1
          %p467 = scmp.gt.s32.totalorder %s466, 0
          %s468 = scalar_select %p467, %s466, 0
        $region48: #{tpu_custom_call.1} parent=39 // pred_fallthru
          _
        // Predicated region
        $region49: #{tpu_custom_call.1} parent=39 // pred_check
          %p469 = pneg %p128
        $region50: #{tpu_custom_call.1} parent=39 // pred_check_branch
          %471 = sbr.rel (%p469) target = $region52
        $region51: #{tpu_custom_call.1} parent=39 // pred_region
          %s472 = sadd.s32 %s30, 1
          %s473 = smul.u32 %s472, 4
          %p474 = scmp.lt.s32.totalorder %s473, 7
          %s475 = scalar_select %p474, %s473, 7
          %p476 = scmp.lt.s32.totalorder %s29, 1
          %s477 = scalar_select %p476, %s29, 1
          %p478 = scmp.lt.s32.totalorder %s475, 7
          %s479 = scalar_select %p478, %s475, 7
          %s480 = smul.addr %s479, 2
          %s481 = smul.addr %s477, 16
          %s482 = sadd.s32 %s480, %s481
          %s483 = smul.addr %s482, 4
          %s484 = scalar_lea.vmem %s2, %s483
          %s485 = sadd.s32 %s30, 1
          %s486 = smul.u32 %s485, 4
          %p487 = scmp.lt.s32.totalorder %s486, 7
          %s488 = scalar_select %p487, %s486, 7
        $region52: #{tpu_custom_call.1} parent=39 // pred_fallthru
          _
        // Predicated region
        $region53: #{tpu_custom_call.1} parent=39 // pred_check
          %p489 = pneg %p156
        $region54: #{tpu_custom_call.1} parent=39 // pred_check_branch
          %491 = sbr.rel (%p489) target = $region56
        $region55: #{tpu_custom_call.1} parent=39 // pred_region
          %s492 = smul.u32 8, %s30
          %p493 = scmp.lt.s32.totalorder %s29, 1
          %s494 = scalar_select %p493, %s29, 1
          %p495 = scmp.lt.s32.totalorder %s492, 15
          %s496 = scalar_select %p495, %s492, 15
          %s497 = smul.addr %s496, 2
          %s498 = smul.addr %s494, 32
          %s499 = sadd.s32 %s497, %s498
          %s500 = smul.addr %s499, 4
          %s501 = scalar_lea.vmem %s3, %s500
          %s502 = smul.u32 8, %s30
        $region56: #{tpu_custom_call.1} parent=39 // pred_fallthru
          _
        // Predicated region
        $region57: #{tpu_custom_call.1} parent=39 // pred_check
          %p503 = pneg %p192
        $region58: #{tpu_custom_call.1} parent=39 // pred_check_branch
          %505 = sbr.rel (%p503) target = $region60
        $region59: #{tpu_custom_call.1} parent=39 // pred_region
          %s506 = smul.u32 %s30, 4
          %s507 = ssub.s32 %s506, 1
          %p508 = scmp.gt.s32.totalorder %s507, 0
          %s509 = scalar_select %p508, %s507, 0
          %s510 = smul.u32 2, %s509
          %p511 = scmp.lt.s32.totalorder %s29, 1
          %s512 = scalar_select %p511, %s29, 1
          %p513 = scmp.lt.s32.totalorder %s510, 15
          %s514 = scalar_select %p513, %s510, 15
          %s515 = smul.addr %s514, 2
          %s516 = smul.addr %s512, 32
          %s517 = sadd.s32 %s515, %s516
          %s518 = smul.addr %s517, 4
          %s519 = scalar_lea.vmem %s4, %s518
          %s520 = smul.u32 %s30, 4
          %s521 = ssub.s32 %s520, 1
          %p522 = scmp.gt.s32.totalorder %s521, 0
          %s523 = scalar_select %p522, %s521, 0
          %s524 = smul.u32 2, %s523
        $region60: #{tpu_custom_call.1} parent=39 // pred_fallthru
          _
        // Predicated region
        $region61: #{tpu_custom_call.1} parent=39 // pred_check
          %p525 = pneg %p228
        $region62: #{tpu_custom_call.1} parent=39 // pred_check_branch
          %527 = sbr.rel (%p525) target = $region64
        $region63: #{tpu_custom_call.1} parent=39 // pred_region
          %s528 = sadd.s32 %s30, 1
          %s529 = smul.u32 %s528, 4
          %p530 = scmp.lt.s32.totalorder %s529, 7
          %s531 = scalar_select %p530, %s529, 7
          %s532 = smul.u32 2, %s531
          %p533 = scmp.lt.s32.totalorder %s29, 1
          %s534 = scalar_select %p533, %s29, 1
          %p535 = scmp.lt.s32.totalorder %s532, 15
          %s536 = scalar_select %p535, %s532, 15
          %s537 = smul.addr %s536, 2
          %s538 = smul.addr %s534, 32
          %s539 = sadd.s32 %s537, %s538
          %s540 = smul.addr %s539, 4
          %s541 = scalar_lea.vmem %s5, %s540
          %s542 = sadd.s32 %s30, 1
          %s543 = smul.u32 %s542, 4
          %p544 = scmp.lt.s32.totalorder %s543, 7
          %s545 = scalar_select %p544, %s543, 7
          %s546 = smul.u32 2, %s545
        $region64: #{tpu_custom_call.1} parent=39 // pred_fallthru
          _
      $region40: #{tpu_custom_call.1} parent=5 // pred_fallthru
        _
      %p547 = scmp.le.s32.totalorder 1, %s22
      %p548 = scmp.lt.s32.totalorder %s22, 5
      %p549 = pnand %p547, %p548
      %p550 = pneg %p549
      // Predicated region
      $region65: #{tpu_custom_call.1} parent=5 // pred_check
        _
      $region66: #{tpu_custom_call.1} parent=5 // pred_check_branch
        %552 = sbr.rel (%p549) target = $region68
      $region67: #{tpu_custom_call.1} parent=5 // pred_region
        %s553 = ssub.s32 %s22, 1
        // Predicated region
        $region69: #{tpu_custom_call.1} parent=67 // pred_check
          %p554 = pneg %p318
        $region70: #{tpu_custom_call.1} parent=67 // pred_check_branch
          %556 = sbr.rel (%p554) target = $region72
        $region71: #{tpu_custom_call.1} parent=67 // pred_region
          %557 = dma.done [#allocation5], 9216
        $region72: #{tpu_custom_call.1} parent=67 // pred_fallthru
          _
        %s558 = smul.u32 4, %s32
        %p559 = scmp.lt.s32.totalorder %s31, 1
        %s560 = scalar_select %p559, %s31, 1
        %p561 = scmp.lt.s32.totalorder %s558, 7
        %s562 = scalar_select %p561, %s558, 7
        %s563 = smul.addr %s562, 2
        %s564 = smul.addr %s560, 16
        %s565 = sadd.s32 %s563, %s564
        %s566 = smul.addr %s565, 4
        %s567 = scalar_lea.vmem %s0, %s566
        %p568 = pneg %p62
        %p569 = pneg %p59
        %s570 = smul.u32 %s32, 4
        %s571 = ssub.s32 %s570, 1
        %p572 = scmp.gt.s32.totalorder %s571, 0
        %s573 = scalar_select %p572, %s571, 0
        %p574 = scmp.lt.s32.totalorder %s31, 1
        %s575 = scalar_select %p574, %s31, 1
        %p576 = scmp.lt.s32.totalorder %s573, 7
        %s577 = scalar_select %p576, %s573, 7
        %s578 = smul.addr %s577, 2
        %s579 = smul.addr %s575, 16
        %s580 = sadd.s32 %s578, %s579
        %s581 = smul.addr %s580, 4
        %s582 = scalar_lea.vmem %s1, %s581
        %p583 = pneg %p98
        %p584 = pneg %p95
        %s585 = sadd.s32 %s32, 1
        %s586 = smul.u32 %s585, 4
        %p587 = scmp.lt.s32.totalorder %s586, 7
        %s588 = scalar_select %p587, %s586, 7
        %p589 = scmp.lt.s32.totalorder %s31, 1
        %s590 = scalar_select %p589, %s31, 1
        %p591 = scmp.lt.s32.totalorder %s588, 7
        %s592 = scalar_select %p591, %s588, 7
        %s593 = smul.addr %s592, 2
        %s594 = smul.addr %s590, 16
        %s595 = sadd.s32 %s593, %s594
        %s596 = smul.addr %s595, 4
        %s597 = scalar_lea.vmem %s2, %s596
        %p598 = pneg %p134
        %p599 = pneg %p131
        %s600 = smul.u32 8, %s32
        %p601 = scmp.lt.s32.totalorder %s31, 1
        %s602 = scalar_select %p601, %s31, 1
        %p603 = scmp.lt.s32.totalorder %s600, 15
        %s604 = scalar_select %p603, %s600, 15
        %s605 = smul.addr %s604, 2
        %s606 = smul.addr %s602, 32
        %s607 = sadd.s32 %s605, %s606
        %s608 = smul.addr %s607, 4
        %s609 = scalar_lea.vmem %s3, %s608
        %p610 = pneg %p162
        %p611 = pneg %p159
        %s612 = smul.u32 %s32, 4
        %s613 = ssub.s32 %s612, 1
        %p614 = scmp.gt.s32.totalorder %s613, 0
        %s615 = scalar_select %p614, %s613, 0
        %s616 = smul.u32 2, %s615
        %p617 = scmp.lt.s32.totalorder %s31, 1
        %s618 = scalar_select %p617, %s31, 1
        %p619 = scmp.lt.s32.totalorder %s616, 15
        %s620 = scalar_select %p619, %s616, 15
        %s621 = smul.addr %s620, 2
        %s622 = smul.addr %s618, 32
        %s623 = sadd.s32 %s621, %s622
        %s624 = smul.addr %s623, 4
        %s625 = scalar_lea.vmem %s4, %s624
        %p626 = pneg %p198
        %p627 = pneg %p195
        %s628 = sadd.s32 %s32, 1
        %s629 = smul.u32 %s628, 4
        %p630 = scmp.lt.s32.totalorder %s629, 7
        %s631 = scalar_select %p630, %s629, 7
        %s632 = smul.u32 2, %s631
        %p633 = scmp.lt.s32.totalorder %s31, 1
        %s634 = scalar_select %p633, %s31, 1
        %p635 = scmp.lt.s32.totalorder %s632, 15
        %s636 = scalar_select %p635, %s632, 15
        %s637 = smul.addr %s636, 2
        %s638 = smul.addr %s634, 32
        %s639 = sadd.s32 %s637, %s638
        %s640 = smul.addr %s639, 4
        %s641 = scalar_lea.vmem %s5, %s640
        %p642 = pneg %p234
        %p643 = pneg %p231
        %p644 = pneg %p255
        %p645 = pneg %p252
        %p646 = pneg %p276
        %p647 = pneg %p273
        %p648 = pneg %p297
        %p649 = pneg %p294
        %p650 = pneg %p318
        %p651 = pneg %p315
        %p652 = pneg %p339
        %p653 = pneg %p336
        %p654 = pneg %p360
        %p655 = pneg %p357
        %p656 = pneg %p388
        %p657 = pneg %p385
        %s658 = sand.u32 %s375, 1
        %s659 = scalar_lea.sflag [#allocation6], %s658
        %s660 = sand.u32 %s375, 1
        %s661 = smul.addr %s660, 64
        %s662 = scalar_lea.vmem [#allocation7], %s661
        %s663 = smul.u32 4, %s32
        %p664 = scmp.lt.s32.totalorder %s31, 1
        %s665 = scalar_select %p664, %s31, 1
        %p666 = scmp.lt.s32.totalorder %s663, 7
        %s667 = scalar_select %p666, %s663, 7
        %s668 = smul.addr %s667, 2
        %s669 = smul.addr %s665, 16
        %s670 = sadd.s32 %s668, %s669
        %s671 = smul.addr %s670, 4
        %s672 = scalar_lea.vmem %s0, %s671
        %s673 = smul.u32 4, %s32
        %s674 = smul.u32 %s32, 4
        %s675 = ssub.s32 %s674, 1
        %p676 = scmp.gt.s32.totalorder %s675, 0
        %s677 = scalar_select %p676, %s675, 0
        %p678 = scmp.lt.s32.totalorder %s31, 1
        %s679 = scalar_select %p678, %s31, 1
        %p680 = scmp.lt.s32.totalorder %s677, 7
        %s681 = scalar_select %p680, %s677, 7
        %s682 = smul.addr %s681, 2
        %s683 = smul.addr %s679, 16
        %s684 = sadd.s32 %s682, %s683
        %s685 = smul.addr %s684, 4
        %s686 = scalar_lea.vmem %s1, %s685
        %s687 = smul.u32 %s32, 4
        %s688 = ssub.s32 %s687, 1
        %p689 = scmp.gt.s32.totalorder %s688, 0
        %s690 = scalar_select %p689, %s688, 0
        %s691 = sadd.s32 %s32, 1
        %s692 = smul.u32 %s691, 4
        %p693 = scmp.lt.s32.totalorder %s692, 7
        %s694 = scalar_select %p693, %s692, 7
        %p695 = scmp.lt.s32.totalorder %s31, 1
        %s696 = scalar_select %p695, %s31, 1
        %p697 = scmp.lt.s32.totalorder %s694, 7
        %s698 = scalar_select %p697, %s694, 7
        %s699 = smul.addr %s698, 2
        %s700 = smul.addr %s696, 16
        %s701 = sadd.s32 %s699, %s700
        %s702 = smul.addr %s701, 4
        %s703 = scalar_lea.vmem %s2, %s702
        %s704 = sadd.s32 %s32, 1
        %s705 = smul.u32 %s704, 4
        %p706 = scmp.lt.s32.totalorder %s705, 7
        %s707 = scalar_select %p706, %s705, 7
        %s708 = smul.u32 8, %s32
        %p709 = scmp.lt.s32.totalorder %s31, 1
        %s710 = scalar_select %p709, %s31, 1
        %p711 = scmp.lt.s32.totalorder %s708, 15
        %s712 = scalar_select %p711, %s708, 15
        %s713 = smul.addr %s712, 2
        %s714 = smul.addr %s710, 32
        %s715 = sadd.s32 %s713, %s714
        %s716 = smul.addr %s715, 4
        %s717 = scalar_lea.vmem %s3, %s716
        %s718 = smul.u32 8, %s32
        %s719 = smul.u32 %s32, 4
        %s720 = ssub.s32 %s719, 1
        %p721 = scmp.gt.s32.totalorder %s720, 0
        %s722 = scalar_select %p721, %s720, 0
        %s723 = smul.u32 2, %s722
        %p724 = scmp.lt.s32.totalorder %s31, 1
        %s725 = scalar_select %p724, %s31, 1
        %p726 = scmp.lt.s32.totalorder %s723, 15
        %s727 = scalar_select %p726, %s723, 15
        %s728 = smul.addr %s727, 2
        %s729 = smul.addr %s725, 32
        %s730 = sadd.s32 %s728, %s729
        %s731 = smul.addr %s730, 4
        %s732 = scalar_lea.vmem %s4, %s731
        %s733 = smul.u32 %s32, 4
        %s734 = ssub.s32 %s733, 1
        %p735 = scmp.gt.s32.totalorder %s734, 0
        %s736 = scalar_select %p735, %s734, 0
        %s737 = smul.u32 2, %s736
        %s738 = sadd.s32 %s32, 1
        %s739 = smul.u32 %s738, 4
        %p740 = scmp.lt.s32.totalorder %s739, 7
        %s741 = scalar_select %p740, %s739, 7
        %s742 = smul.u32 2, %s741
        %p743 = scmp.lt.s32.totalorder %s31, 1
        %s744 = scalar_select %p743, %s31, 1
        %p745 = scmp.lt.s32.totalorder %s742, 15
        %s746 = scalar_select %p745, %s742, 15
        %s747 = smul.addr %s746, 2
        %s748 = smul.addr %s744, 32
        %s749 = sadd.s32 %s747, %s748
        %s750 = smul.addr %s749, 4
        %s751 = scalar_lea.vmem %s5, %s750
        %s752 = sadd.s32 %s32, 1
        %s753 = smul.u32 %s752, 4
        %p754 = scmp.lt.s32.totalorder %s753, 7
        %s755 = scalar_select %p754, %s753, 7
        %s756 = smul.u32 2, %s755
        %s757 = smul.u32 8, %s32
        %v759 = vld [vmem:[%s686] sm:$0xf]
        %v760 = vld [vmem:[%s686 + $0x4] sm:$0xf]
        %v763 = vunpack.c.l.b16 %v759
        %v764 = vunpack.c.l.b16 %v760
        %v765 = vpack.c.b16 %v764, %v763
        %vm766 = vcmask 31744
        %v769 = vsel %vm766, %v765, 0
        %v771 = vld [vmem:[%s672] sm:$0xf]
        %v772 = vld [vmem:[%s672 + $0x4] sm:$0xf]
        %v773 = vld [vmem:[%s672 + $0x8] sm:$0xf]
        %v774 = vld [vmem:[%s672 + $0xc] sm:$0xf]
        %v775 = vld [vmem:[%s672 + $0x10] sm:$0xf]
        %v776 = vld [vmem:[%s672 + $0x14] sm:$0xf]
        %v777 = vld [vmem:[%s672 + $0x18] sm:$0xf]
        %v778 = vld [vmem:[%s672 + $0x1c] sm:$0xf]
        %v787 = vunpack.c.l.b16 %v771
        %v788 = vunpack.c.l.b16 %v772
        %v789 = vunpack.c.l.b16 %v773
        %v790 = vunpack.c.l.b16 %v774
        %v791 = vunpack.c.l.b16 %v775
        %v792 = vunpack.c.l.b16 %v776
        %v793 = vunpack.c.l.b16 %v777
        %v794 = vunpack.c.l.b16 %v778
        %v795 = vpack.c.b16 %v788, %v787
        %v796 = vpack.c.b16 %v790, %v789
        %v797 = vpack.c.b16 %v792, %v791
        %v798 = vpack.c.b16 %v794, %v793
        %v800 = vsel %vm766, %v795, 0
        %v802 = vsel %vm766, %v796, 0
        %v804 = vsel %vm766, %v797, 0
        %v806 = vsel %vm766, %v798, 0
        %v807 = vld [vmem:[%s703] sm:$0xf]
        %v808 = vld [vmem:[%s703 + $0x4] sm:$0xf]
        %v811 = vunpack.c.l.b16 %v807
        %v812 = vunpack.c.l.b16 %v808
        %v813 = vpack.c.b16 %v812, %v811
        %v815 = vsel %vm766, %v813, 0
        %v817 = vld [vmem:[%s732] sm:$0xf]
        %v818 = vld [vmem:[%s732 + $0x4] sm:$0xf]
        %v819 = vld [vmem:[%s732 + $0x8] sm:$0xf]
        %v820 = vld [vmem:[%s732 + $0xc] sm:$0xf]
        %v825 = vunpack.c.l.b16 %v817
        %v826 = vunpack.c.l.b16 %v818
        %v827 = vunpack.c.l.b16 %v819
        %v828 = vunpack.c.l.b16 %v820
        %v829 = vpack.c.b16 %v826, %v825
        %v830 = vpack.c.b16 %v828, %v827
        %v832 = vsel %vm766, %v829, 0
        %v835 = vsel %vm766, %v830, 0
        %v837 = vld [vmem:[%s717] sm:$0xf]
        %v838 = vld [vmem:[%s717 + $0x4] sm:$0xf]
        %v839 = vld [vmem:[%s717 + $0x8] sm:$0xf]
        %v840 = vld [vmem:[%s717 + $0xc] sm:$0xf]
        %v841 = vld [vmem:[%s717 + $0x10] sm:$0xf]
        %v842 = vld [vmem:[%s717 + $0x14] sm:$0xf]
        %v843 = vld [vmem:[%s717 + $0x18] sm:$0xf]
        %v844 = vld [vmem:[%s717 + $0x1c] sm:$0xf]
        %v845 = vld [vmem:[%s717 + $0x20] sm:$0xf]
        %v846 = vld [vmem:[%s717 + $0x24] sm:$0xf]
        %v847 = vld [vmem:[%s717 + $0x28] sm:$0xf]
        %v848 = vld [vmem:[%s717 + $0x2c] sm:$0xf]
        %v849 = vld [vmem:[%s717 + $0x30] sm:$0xf]
        %v850 = vld [vmem:[%s717 + $0x34] sm:$0xf]
        %v851 = vld [vmem:[%s717 + $0x38] sm:$0xf]
        %v852 = vld [vmem:[%s717 + $0x3c] sm:$0xf]
        %v869 = vunpack.c.l.b16 %v837
        %v870 = vunpack.c.l.b16 %v838
        %v871 = vunpack.c.l.b16 %v839
        %v872 = vunpack.c.l.b16 %v840
        %v873 = vunpack.c.l.b16 %v841
        %v874 = vunpack.c.l.b16 %v842
        %v875 = vunpack.c.l.b16 %v843
        %v876 = vunpack.c.l.b16 %v844
        %v877 = vunpack.c.l.b16 %v845
        %v878 = vunpack.c.l.b16 %v846
        %v879 = vunpack.c.l.b16 %v847
        %v880 = vunpack.c.l.b16 %v848
        %v881 = vunpack.c.l.b16 %v849
        %v882 = vunpack.c.l.b16 %v850
        %v883 = vunpack.c.l.b16 %v851
        %v884 = vunpack.c.l.b16 %v852
        %v885 = vpack.c.b16 %v870, %v869
        %v886 = vpack.c.b16 %v872, %v871
        %v887 = vpack.c.b16 %v874, %v873
        %v888 = vpack.c.b16 %v876, %v875
        %v889 = vpack.c.b16 %v878, %v877
        %v890 = vpack.c.b16 %v880, %v879
        %v891 = vpack.c.b16 %v882, %v881
        %v892 = vpack.c.b16 %v884, %v883
        %v894 = vsel %vm766, %v885, 0
        %v896 = vsel %vm766, %v886, 0
        %v898 = vsel %vm766, %v887, 0
        %v900 = vsel %vm766, %v888, 0
        %v902 = vsel %vm766, %v889, 0
        %v904 = vsel %vm766, %v890, 0
        %v906 = vsel %vm766, %v891, 0
        %v908 = vsel %vm766, %v892, 0
        %v909 = vld [vmem:[%s751] sm:$0xf]
        %v910 = vld [vmem:[%s751 + $0x4] sm:$0xf]
        %v911 = vld [vmem:[%s751 + $0x8] sm:$0xf]
        %v912 = vld [vmem:[%s751 + $0xc] sm:$0xf]
        %v917 = vunpack.c.l.b16 %v909
        %v918 = vunpack.c.l.b16 %v910
        %v919 = vunpack.c.l.b16 %v911
        %v920 = vunpack.c.l.b16 %v912
        %v921 = vpack.c.b16 %v918, %v917
        %v922 = vpack.c.b16 %v920, %v919
        %v924 = vsel %vm766, %v921, 0
        %v927 = vsel %vm766, %v922, 0
        %p929 = scmp.eq.s32.totalorder %s32, 0
        %s930 = scalar_select %p929, 1, 0
        %v931 = vstv %s930
        %vm932 = vcmp.eq.s32.totalorder %v931, 1
        %v933 = vsel %vm932, 0, %v769
        %v934 = vsel %vm932, 0, %v832
        %v935 = vsel %vm932, 0, %v835
        %p936 = scmp.eq.s32.totalorder %s32, 1
        %s937 = scalar_select %p936, 1, 0
        %v938 = vstv %s937
        %vm939 = vcmp.eq.s32.totalorder %v938, 1
        %v940 = vsel %vm939, 0, %v815
        %v941 = vsel %vm939, 0, %v924
        %v942 = vsel %vm939, 0, %v927
        %v944 = vunpack.c.l.b16 %v933
        %v945 = vunpack.c.h.b16 %v933
        %v946 = vpack.c.b16 %v944, %v944
        %v947 = vpack.c.b16 %v945, %v945
        %950 = vst [vmem:[#allocation2 + $0x10] sm:$0xf] %v946
        %951 = vst [vmem:[#allocation2 + $0x18] sm:$0xf] %v947
        %952 = vst [vmem:[#allocation2 + $0x38] sm:$0xf] %v946
        %953 = vst [vmem:[#allocation2 + $0x40] sm:$0xf] %v947
        %v958 = vunpack.c.l.b16 %v800
        %v959 = vunpack.c.h.b16 %v800
        %v960 = vunpack.c.l.b16 %v802
        %v961 = vunpack.c.h.b16 %v802
        %v962 = vunpack.c.l.b16 %v804
        %v963 = vunpack.c.h.b16 %v804
        %v964 = vunpack.c.l.b16 %v806
        %v965 = vunpack.c.h.b16 %v806
        %v966 = vpack.c.b16 %v958, %v958
        %v967 = vpack.c.b16 %v959, %v959
        %v968 = vpack.c.b16 %v960, %v960
        %v969 = vpack.c.b16 %v961, %v961
        %v970 = vpack.c.b16 %v962, %v962
        %v971 = vpack.c.b16 %v963, %v963
        %v972 = vpack.c.b16 %v964, %v964
        %v973 = vpack.c.b16 %v965, %v965
        %s982 = scalar_lea.vmem [#allocation2], 80
        %983 = vst [vmem:[%s982 + $0x10] sm:$0xf] %v966
        %984 = vst [vmem:[%s982 + $0x18] sm:$0xf] %v967
        %985 = vst [vmem:[%s982 + $0x38] sm:$0xf] %v966
        %986 = vst [vmem:[%s982 + $0x40] sm:$0xf] %v967
        %987 = vst [vmem:[%s982 + $0x60] sm:$0xf] %v968
        %988 = vst [vmem:[%s982 + $0x68] sm:$0xf] %v969
        %989 = vst [vmem:[%s982 + $0x88] sm:$0xf] %v968
        %990 = vst [vmem:[%s982 + $0x90] sm:$0xf] %v969
        %991 = vst [vmem:[%s982 + $0xb0] sm:$0xf] %v970
        %992 = vst [vmem:[%s982 + $0xb8] sm:$0xf] %v971
        %993 = vst [vmem:[%s982 + $0xd8] sm:$0xf] %v970
        %994 = vst [vmem:[%s982 + $0xe0] sm:$0xf] %v971
        %995 = vst [vmem:[%s982 + $0x100] sm:$0xf] %v972
        %996 = vst [vmem:[%s982 + $0x108] sm:$0xf] %v973
        %997 = vst [vmem:[%s982 + $0x128] sm:$0xf] %v972
        %998 = vst [vmem:[%s982 + $0x130] sm:$0xf] %v973
        %v1000 = vunpack.c.l.b16 %v940
        %v1001 = vunpack.c.h.b16 %v940
        %v1002 = vpack.c.b16 %v1000, %v1000
        %v1003 = vpack.c.b16 %v1001, %v1001
        %s1006 = scalar_lea.vmem [#allocation2], 400
        %1007 = vst [vmem:[%s1006 + $0x10] sm:$0xf] %v1002
        %1008 = vst [vmem:[%s1006 + $0x18] sm:$0xf] %v1003
        %1009 = vst [vmem:[%s1006 + $0x38] sm:$0xf] %v1002
        %1010 = vst [vmem:[%s1006 + $0x40] sm:$0xf] %v1003
        %v1013 = vunpack.c.l.b16 %v934
        %v1014 = vunpack.c.h.b16 %v934
        %v1015 = vunpack.c.l.b16 %v935
        %v1016 = vunpack.c.h.b16 %v935
        %v1017 = vpack.c.b16 %v1013, %v1013
        %v1018 = vpack.c.b16 %v1014, %v1014
        %v1019 = vpack.c.b16 %v1015, %v1015
        %v1020 = vpack.c.b16 %v1016, %v1016
        %1025 = vst [vmem:[#allocation2 + $0x14] sm:$0xf] %v1017
        %1026 = vst [vmem:[#allocation2 + $0x1c] sm:$0xf] %v1018
        %1027 = vst [vmem:[#allocation2 + $0x3c] sm:$0xf] %v1019
        %1028 = vst [vmem:[#allocation2 + $0x44] sm:$0xf] %v1020
        %v1037 = vunpack.c.l.b16 %v894
        %v1038 = vunpack.c.h.b16 %v894
        %v1039 = vunpack.c.l.b16 %v896
        %v1040 = vunpack.c.h.b16 %v896
        %v1041 = vunpack.c.l.b16 %v898
        %v1042 = vunpack.c.h.b16 %v898
        %v1043 = vunpack.c.l.b16 %v900
        %v1044 = vunpack.c.h.b16 %v900
        %v1045 = vunpack.c.l.b16 %v902
        %v1046 = vunpack.c.h.b16 %v902
        %v1047 = vunpack.c.l.b16 %v904
        %v1048 = vunpack.c.h.b16 %v904
        %v1049 = vunpack.c.l.b16 %v906
        %v1050 = vunpack.c.h.b16 %v906
        %v1051 = vunpack.c.l.b16 %v908
        %v1052 = vunpack.c.h.b16 %v908
        %v1053 = vpack.c.b16 %v1037, %v1037
        %v1054 = vpack.c.b16 %v1038, %v1038
        %v1055 = vpack.c.b16 %v1039, %v1039
        %v1056 = vpack.c.b16 %v1040, %v1040
        %v1057 = vpack.c.b16 %v1041, %v1041
        %v1058 = vpack.c.b16 %v1042, %v1042
        %v1059 = vpack.c.b16 %v1043, %v1043
        %v1060 = vpack.c.b16 %v1044, %v1044
        %v1061 = vpack.c.b16 %v1045, %v1045
        %v1062 = vpack.c.b16 %v1046, %v1046
        %v1063 = vpack.c.b16 %v1047, %v1047
        %v1064 = vpack.c.b16 %v1048, %v1048
        %v1065 = vpack.c.b16 %v1049, %v1049
        %v1066 = vpack.c.b16 %v1050, %v1050
        %v1067 = vpack.c.b16 %v1051, %v1051
        %v1068 = vpack.c.b16 %v1052, %v1052
        %1085 = vst [vmem:[%s982 + $0x14] sm:$0xf] %v1053
        %1086 = vst [vmem:[%s982 + $0x1c] sm:$0xf] %v1054
        %1087 = vst [vmem:[%s982 + $0x3c] sm:$0xf] %v1055
        %1088 = vst [vmem:[%s982 + $0x44] sm:$0xf] %v1056
        %1089 = vst [vmem:[%s982 + $0x64] sm:$0xf] %v1057
        %1090 = vst [vmem:[%s982 + $0x6c] sm:$0xf] %v1058
        %1091 = vst [vmem:[%s982 + $0x8c] sm:$0xf] %v1059
        %1092 = vst [vmem:[%s982 + $0x94] sm:$0xf] %v1060
        %1093 = vst [vmem:[%s982 + $0xb4] sm:$0xf] %v1061
        %1094 = vst [vmem:[%s982 + $0xbc] sm:$0xf] %v1062
        %1095 = vst [vmem:[%s982 + $0xdc] sm:$0xf] %v1063
        %1096 = vst [vmem:[%s982 + $0xe4] sm:$0xf] %v1064
        %1097 = vst [vmem:[%s982 + $0x104] sm:$0xf] %v1065
        %1098 = vst [vmem:[%s982 + $0x10c] sm:$0xf] %v1066
        %1099 = vst [vmem:[%s982 + $0x12c] sm:$0xf] %v1067
        %1100 = vst [vmem:[%s982 + $0x134] sm:$0xf] %v1068
        %v1103 = vunpack.c.l.b16 %v941
        %v1104 = vunpack.c.h.b16 %v941
        %v1105 = vunpack.c.l.b16 %v942
        %v1106 = vunpack.c.h.b16 %v942
        %v1107 = vpack.c.b16 %v1103, %v1103
        %v1108 = vpack.c.b16 %v1104, %v1104
        %v1109 = vpack.c.b16 %v1105, %v1105
        %v1110 = vpack.c.b16 %v1106, %v1106
        %1115 = vst [vmem:[%s1006 + $0x14] sm:$0xf] %v1107
        %1116 = vst [vmem:[%s1006 + $0x1c] sm:$0xf] %v1108
        %1117 = vst [vmem:[%s1006 + $0x3c] sm:$0xf] %v1109
        %1118 = vst [vmem:[%s1006 + $0x44] sm:$0xf] %v1110
        %vm1119 = vcmask 1043459
        %vm1120 = vsmask.f32 7950
        %vm1121 = vmand %vm1119, %vm1120
        %vm1122 = vcmask 1047559
        %vm1123 = vsmask.f32 7966
        %vm1124 = vmand %vm1122, %vm1123
        %vm1125 = vmor %vm1124, %vm1121
        %v1126 = vld [vmem:[#allocation2 + $0x8] sm:$0x88]
        %v1127 = vsel %vm1125, 0, %v1126
        %1128 = vst [vmem:[#allocation2 + $0x8] sm:$0x88] %v1127
        %v1129 = vld [vmem:[#allocation2 + $0x30] sm:$0x88]
        %v1130 = vsel %vm1125, 0, %v1129
        %1131 = vst [vmem:[#allocation2 + $0x30] sm:$0x88] %v1130
        %v1132 = vld [vmem:[#allocation2 + $0x58] sm:$0x88]
        %v1133 = vsel %vm1125, 0, %v1132
        %1134 = vst [vmem:[#allocation2 + $0x58] sm:$0x88] %v1133
        %v1135 = vld [vmem:[#allocation2 + $0x80] sm:$0x88]
        %v1136 = vsel %vm1125, 0, %v1135
        %1137 = vst [vmem:[#allocation2 + $0x80] sm:$0x88] %v1136
        %v1138 = vld [vmem:[#allocation2 + $0xa8] sm:$0x88]
        %v1139 = vsel %vm1125, 0, %v1138
        %1140 = vst [vmem:[#allocation2 + $0xa8] sm:$0x88] %v1139
        %v1141 = vld [vmem:[#allocation2 + $0xd0] sm:$0x88]
        %v1142 = vsel %vm1125, 0, %v1141
        %1143 = vst [vmem:[#allocation2 + $0xd0] sm:$0x88] %v1142
        %v1144 = vld [vmem:[#allocation2 + $0xf8] sm:$0x88]
        %v1145 = vsel %vm1125, 0, %v1144
        %1146 = vst [vmem:[#allocation2 + $0xf8] sm:$0x88] %v1145
        %v1147 = vld [vmem:[#allocation2 + $0x120] sm:$0x88]
        %v1148 = vsel %vm1125, 0, %v1147
        %1149 = vst [vmem:[#allocation2 + $0x120] sm:$0x88] %v1148
        %v1150 = vld [vmem:[#allocation2 + $0x148] sm:$0x88]
        %v1151 = vsel %vm1125, 0, %v1150
        %1152 = vst [vmem:[#allocation2 + $0x148] sm:$0x88] %v1151
        %v1153 = vld [vmem:[#allocation2 + $0x170] sm:$0x88]
        %v1154 = vsel %vm1125, 0, %v1153
        %1155 = vst [vmem:[#allocation2 + $0x170] sm:$0x88] %v1154
        %v1156 = vld [vmem:[#allocation2 + $0x198] sm:$0x88]
        %v1157 = vsel %vm1125, 0, %v1156
        %1158 = vst [vmem:[#allocation2 + $0x198] sm:$0x88] %v1157
        %v1159 = vld [vmem:[#allocation2 + $0x1c0] sm:$0x88]
        %v1160 = vsel %vm1125, 0, %v1159
        %1161 = vst [vmem:[#allocation2 + $0x1c0] sm:$0x88] %v1160
        %vm1162 = vcmask 1040384
        %vm1163 = vsmask.f32 256
        %vm1164 = vmand %vm1162, %vm1163
        %vm1165 = vcmask 1044484
        %vm1166 = vsmask.f32 4352
        %vm1167 = vmand %vm1165, %vm1166
        %vm1168 = vmor %vm1167, %vm1164
        %v1169 = vld [vmem:[#allocation2 + $0x20] sm:$0x11]
        %v1170 = vsel %vm1168, 0, %v1169
        %1171 = vst [vmem:[#allocation2 + $0x20] sm:$0x11] %v1170
        %v1172 = vld [vmem:[#allocation2 + $0x48] sm:$0x11]
        %v1173 = vsel %vm1168, 0, %v1172
        %1174 = vst [vmem:[#allocation2 + $0x48] sm:$0x11] %v1173
        %v1175 = vld [vmem:[#allocation2 + $0x70] sm:$0x11]
        %v1176 = vsel %vm1168, 0, %v1175
        %1177 = vst [vmem:[#allocation2 + $0x70] sm:$0x11] %v1176
        %v1178 = vld [vmem:[#allocation2 + $0x98] sm:$0x11]
        %v1179 = vsel %vm1168, 0, %v1178
        %1180 = vst [vmem:[#allocation2 + $0x98] sm:$0x11] %v1179
        %v1181 = vld [vmem:[#allocation2 + $0xc0] sm:$0x11]
        %v1182 = vsel %vm1168, 0, %v1181
        %1183 = vst [vmem:[#allocation2 + $0xc0] sm:$0x11] %v1182
        %v1184 = vld [vmem:[#allocation2 + $0xe8] sm:$0x11]
        %v1185 = vsel %vm1168, 0, %v1184
        %1186 = vst [vmem:[#allocation2 + $0xe8] sm:$0x11] %v1185
        %v1187 = vld [vmem:[#allocation2 + $0x110] sm:$0x11]
        %v1188 = vsel %vm1168, 0, %v1187
        %1189 = vst [vmem:[#allocation2 + $0x110] sm:$0x11] %v1188
        %v1190 = vld [vmem:[#allocation2 + $0x138] sm:$0x11]
        %v1191 = vsel %vm1168, 0, %v1190
        %1192 = vst [vmem:[#allocation2 + $0x138] sm:$0x11] %v1191
        %v1193 = vld [vmem:[#allocation2 + $0x160] sm:$0x11]
        %v1194 = vsel %vm1168, 0, %v1193
        %1195 = vst [vmem:[#allocation2 + $0x160] sm:$0x11] %v1194
        %v1196 = vld [vmem:[#allocation2 + $0x188] sm:$0x11]
        %v1197 = vsel %vm1168, 0, %v1196
        %1198 = vst [vmem:[#allocation2 + $0x188] sm:$0x11] %v1197
        %v1199 = vld [vmem:[#allocation2 + $0x1b0] sm:$0x11]
        %v1200 = vsel %vm1168, 0, %v1199
        %1201 = vst [vmem:[#allocation2 + $0x1b0] sm:$0x11] %v1200
        %v1202 = vld [vmem:[#allocation2 + $0x1d8] sm:$0x11]
        %v1203 = vsel %vm1168, 0, %v1202
        %1204 = vst [vmem:[#allocation2 + $0x1d8] sm:$0x11] %v1203
        %v1205 = vld [vmem:[#allocation2 + $0x8] sm:$0x88]
        %v1206 = vld [vmem:[#allocation2 + $0x10] sm:$0xff]
        %v1207 = vld [vmem:[#allocation2 + $0x18] sm:$0xff]
        %v1208 = vld [vmem:[#allocation2 + $0x30] sm:$0x88]
        %v1209 = vld [vmem:[#allocation2 + $0x38] sm:$0xff]
        %v1210 = vld [vmem:[#allocation2 + $0x40] sm:$0xff]
        %v1211 = vld [vmem:[#allocation2 + $0x58] sm:$0x88]
        %v1212 = vld [vmem:[#allocation2 + $0x60] sm:$0xff]
        %v1213 = vld [vmem:[#allocation2 + $0x68] sm:$0xff]
        %v1214 = vld [vmem:[#allocation2 + $0x80] sm:$0x88]
        %v1215 = vld [vmem:[#allocation2 + $0x88] sm:$0xff]
        %v1216 = vld [vmem:[#allocation2 + $0x90] sm:$0xff]
        %v1217 = vld [vmem:[#allocation2 + $0xa8] sm:$0x88]
        %v1218 = vld [vmem:[#allocation2 + $0xb0] sm:$0xff]
        %v1219 = vld [vmem:[#allocation2 + $0xb8] sm:$0xff]
        %v1220 = vld [vmem:[#allocation2 + $0xd0] sm:$0x88]
        %v1221 = vld [vmem:[#allocation2 + $0xd8] sm:$0xff]
        %v1222 = vld [vmem:[#allocation2 + $0xe0] sm:$0xff]
        %v1223 = vld [vmem:[#allocation2 + $0xf8] sm:$0x88]
        %v1224 = vld [vmem:[#allocation2 + $0x100] sm:$0xff]
        %v1225 = vld [vmem:[#allocation2 + $0x108] sm:$0xff]
        %v1226 = vld [vmem:[#allocation2 + $0x120] sm:$0x88]
        %v1227 = vld [vmem:[#allocation2 + $0x128] sm:$0xff]
        %v1228 = vld [vmem:[#allocation2 + $0x130] sm:$0xff]
        %v1229 = vld [vmem:[#allocation2 + $0x148] sm:$0x88]
        %v1230 = vld [vmem:[#allocation2 + $0x150] sm:$0xff]
        %v1231 = vld [vmem:[#allocation2 + $0x158] sm:$0xff]
        %v1232 = vld [vmem:[#allocation2 + $0x170] sm:$0x88]
        %v1233 = vld [vmem:[#allocation2 + $0x178] sm:$0xff]
        %v1234 = vld [vmem:[#allocation2 + $0x180] sm:$0xff]
        %vm1235 = vsmask.f32 4368
        %vm1236 = vmor %vm1163, %vm1235
        %v1238 = vshrl.u32 %v1205, 16
        %v1240 = vrot.slane %v1238, 7
        %v1241 = vrot.slane %v1240, 4
        %v1243 = vshrl.u32 %v1206, 16
        %v1245 = vrot.slane %v1243, 7
        %v1246 = vshll.u32 %v1206, 16
        %v1248 = vor.u32 %v1245, %v1246
        %v1249 = vsel %vm1236, %v1241, %v1248
        %v1250 = vrot.slane %v1245, 4
        %v1252 = vshrl.u32 %v1207, 16
        %v1254 = vrot.slane %v1252, 7
        %v1255 = vshll.u32 %v1207, 16
        %v1257 = vor.u32 %v1254, %v1255
        %v1258 = vsel %vm1236, %v1250, %v1257
        %v1260 = vshrl.u32 %v1208, 16
        %v1262 = vrot.slane %v1260, 7
        %v1263 = vrot.slane %v1262, 4
        %v1265 = vshrl.u32 %v1209, 16
        %v1267 = vrot.slane %v1265, 7
        %v1268 = vshll.u32 %v1209, 16
        %v1270 = vor.u32 %v1267, %v1268
        %v1271 = vsel %vm1236, %v1263, %v1270
        %v1272 = vrot.slane %v1267, 4
        %v1274 = vshrl.u32 %v1210, 16
        %v1276 = vrot.slane %v1274, 7
        %v1277 = vshll.u32 %v1210, 16
        %v1279 = vor.u32 %v1276, %v1277
        %v1280 = vsel %vm1236, %v1272, %v1279
        %v1282 = vshrl.u32 %v1211, 16
        %v1284 = vrot.slane %v1282, 7
        %v1285 = vrot.slane %v1284, 4
        %v1287 = vshrl.u32 %v1212, 16
        %v1289 = vrot.slane %v1287, 7
        %v1290 = vshll.u32 %v1212, 16
        %v1292 = vor.u32 %v1289, %v1290
        %v1293 = vsel %vm1236, %v1285, %v1292
        %v1294 = vrot.slane %v1289, 4
        %v1296 = vshrl.u32 %v1213, 16
        %v1298 = vrot.slane %v1296, 7
        %v1299 = vshll.u32 %v1213, 16
        %v1301 = vor.u32 %v1298, %v1299
        %v1302 = vsel %vm1236, %v1294, %v1301
        %v1304 = vshrl.u32 %v1214, 16
        %v1306 = vrot.slane %v1304, 7
        %v1307 = vrot.slane %v1306, 4
        %v1309 = vshrl.u32 %v1215, 16
        %v1311 = vrot.slane %v1309, 7
        %v1312 = vshll.u32 %v1215, 16
        %v1314 = vor.u32 %v1311, %v1312
        %v1315 = vsel %vm1236, %v1307, %v1314
        %v1316 = vrot.slane %v1311, 4
        %v1318 = vshrl.u32 %v1216, 16
        %v1320 = vrot.slane %v1318, 7
        %v1321 = vshll.u32 %v1216, 16
        %v1323 = vor.u32 %v1320, %v1321
        %v1324 = vsel %vm1236, %v1316, %v1323
        %v1326 = vshrl.u32 %v1217, 16
        %v1328 = vrot.slane %v1326, 7
        %v1329 = vrot.slane %v1328, 4
        %v1331 = vshrl.u32 %v1218, 16
        %v1333 = vrot.slane %v1331, 7
        %v1334 = vshll.u32 %v1218, 16
        %v1336 = vor.u32 %v1333, %v1334
        %v1337 = vsel %vm1236, %v1329, %v1336
        %v1338 = vrot.slane %v1333, 4
        %v1340 = vshrl.u32 %v1219, 16
        %v1342 = vrot.slane %v1340, 7
        %v1343 = vshll.u32 %v1219, 16
        %v1345 = vor.u32 %v1342, %v1343
        %v1346 = vsel %vm1236, %v1338, %v1345
        %v1348 = vshrl.u32 %v1220, 16
        %v1350 = vrot.slane %v1348, 7
        %v1351 = vrot.slane %v1350, 4
        %v1353 = vshrl.u32 %v1221, 16
        %v1355 = vrot.slane %v1353, 7
        %v1356 = vshll.u32 %v1221, 16
        %v1358 = vor.u32 %v1355, %v1356
        %v1359 = vsel %vm1236, %v1351, %v1358
        %v1360 = vrot.slane %v1355, 4
        %v1362 = vshrl.u32 %v1222, 16
        %v1364 = vrot.slane %v1362, 7
        %v1365 = vshll.u32 %v1222, 16
        %v1367 = vor.u32 %v1364, %v1365
        %v1368 = vsel %vm1236, %v1360, %v1367
        %v1370 = vshrl.u32 %v1223, 16
        %v1372 = vrot.slane %v1370, 7
        %v1373 = vrot.slane %v1372, 4
        %v1375 = vshrl.u32 %v1224, 16
        %v1377 = vrot.slane %v1375, 7
        %v1378 = vshll.u32 %v1224, 16
        %v1380 = vor.u32 %v1377, %v1378
        %v1381 = vsel %vm1236, %v1373, %v1380
        %v1382 = vrot.slane %v1377, 4
        %v1384 = vshrl.u32 %v1225, 16
        %v1386 = vrot.slane %v1384, 7
        %v1387 = vshll.u32 %v1225, 16
        %v1389 = vor.u32 %v1386, %v1387
        %v1390 = vsel %vm1236, %v1382, %v1389
        %v1392 = vshrl.u32 %v1226, 16
        %v1394 = vrot.slane %v1392, 7
        %v1395 = vrot.slane %v1394, 4
        %v1397 = vshrl.u32 %v1227, 16
        %v1399 = vrot.slane %v1397, 7
        %v1400 = vshll.u32 %v1227, 16
        %v1402 = vor.u32 %v1399, %v1400
        %v1403 = vsel %vm1236, %v1395, %v1402
        %v1404 = vrot.slane %v1399, 4
        %v1406 = vshrl.u32 %v1228, 16
        %v1408 = vrot.slane %v1406, 7
        %v1409 = vshll.u32 %v1228, 16
        %v1411 = vor.u32 %v1408, %v1409
        %v1412 = vsel %vm1236, %v1404, %v1411
        %v1414 = vshrl.u32 %v1229, 16
        %v1416 = vrot.slane %v1414, 7
        %v1417 = vrot.slane %v1416, 4
        %v1419 = vshrl.u32 %v1230, 16
        %v1421 = vrot.slane %v1419, 7
        %v1422 = vshll.u32 %v1230, 16
        %v1424 = vor.u32 %v1421, %v1422
        %v1425 = vsel %vm1236, %v1417, %v1424
        %v1426 = vrot.slane %v1421, 4
        %v1428 = vshrl.u32 %v1231, 16
        %v1430 = vrot.slane %v1428, 7
        %v1431 = vshll.u32 %v1231, 16
        %v1433 = vor.u32 %v1430, %v1431
        %v1434 = vsel %vm1236, %v1426, %v1433
        %v1436 = vshrl.u32 %v1232, 16
        %v1438 = vrot.slane %v1436, 7
        %v1439 = vrot.slane %v1438, 4
        %v1441 = vshrl.u32 %v1233, 16
        %v1443 = vrot.slane %v1441, 7
        %v1444 = vshll.u32 %v1233, 16
        %v1446 = vor.u32 %v1443, %v1444
        %v1447 = vsel %vm1236, %v1439, %v1446
        %v1448 = vrot.slane %v1443, 4
        %v1450 = vshrl.u32 %v1234, 16
        %v1452 = vrot.slane %v1450, 7
        %v1453 = vshll.u32 %v1234, 16
        %v1455 = vor.u32 %v1452, %v1453
        %v1456 = vsel %vm1236, %v1448, %v1455
        %v1457 = vld [vmem:[%s6] sm:$0xf]
        %v1458 = vld [vmem:[%s6 + $0x4] sm:$0xf]
        %v1459 = vld [vmem:[%s6 + $0x8] sm:$0xf]
        %v1460 = vld [vmem:[%s6 + $0xc] sm:$0xf]
        %v1461 = vld [vmem:[%s6 + $0x10] sm:$0xf]
        %v1462 = vld [vmem:[%s6 + $0x14] sm:$0xf]
        %v1463 = vld [vmem:[%s6 + $0x18] sm:$0xf]
        %v1464 = vld [vmem:[%s6 + $0x1c] sm:$0xf]
        %v1465 = vld [vmem:[%s6 + $0x20] sm:$0xf]
        %v1466 = vld [vmem:[%s6 + $0x24] sm:$0xf]
        %v1467 = vld [vmem:[%s6 + $0x28] sm:$0xf]
        %v1468 = vld [vmem:[%s6 + $0x2c] sm:$0xf]
        %v1469 = vld [vmem:[%s6 + $0x30] sm:$0xf]
        %v1470 = vld [vmem:[%s6 + $0x34] sm:$0xf]
        %v1471 = vld [vmem:[%s6 + $0x38] sm:$0xf]
        %v1472 = vld [vmem:[%s6 + $0x3c] sm:$0xf]
        %v1473 = vld [vmem:[%s6 + $0x40] sm:$0xf]
        %v1474 = vld [vmem:[%s6 + $0x44] sm:$0xf]
        %v1475 = vld [vmem:[%s6 + $0x48] sm:$0xf]
        %v1476 = vld [vmem:[%s6 + $0x4c] sm:$0xf]
        %v1477 = vld [vmem:[%s6 + $0x50] sm:$0xf]
        %v1478 = vld [vmem:[%s6 + $0x54] sm:$0xf]
        %v1479 = vld [vmem:[%s6 + $0x58] sm:$0xf]
        %v1480 = vld [vmem:[%s6 + $0x5c] sm:$0xf]
        %v1481 = vld [vmem:[%s6 + $0x60] sm:$0xf]
        %v1482 = vld [vmem:[%s6 + $0x64] sm:$0xf]
        %v1483 = vld [vmem:[%s6 + $0x68] sm:$0xf]
        %v1484 = vld [vmem:[%s6 + $0x6c] sm:$0xf]
        %v1485 = vld [vmem:[%s6 + $0x70] sm:$0xf]
        %v1486 = vld [vmem:[%s6 + $0x74] sm:$0xf]
        %v1487 = vld [vmem:[%s6 + $0x78] sm:$0xf]
        %v1488 = vld [vmem:[%s6 + $0x7c] sm:$0xf]
        %s1489 = scalar_lea.vmem %s6, 128
        %v1490 = vld [vmem:[%s1489] sm:$0xf]
        %v1491 = vld [vmem:[%s1489 + $0x4] sm:$0xf]
        %v1492 = vld [vmem:[%s1489 + $0x8] sm:$0xf]
        %v1493 = vld [vmem:[%s1489 + $0xc] sm:$0xf]
        %v1494 = vld [vmem:[%s1489 + $0x10] sm:$0xf]
        %v1495 = vld [vmem:[%s1489 + $0x14] sm:$0xf]
        %v1496 = vld [vmem:[%s1489 + $0x18] sm:$0xf]
        %v1497 = vld [vmem:[%s1489 + $0x1c] sm:$0xf]
        %v1498 = vld [vmem:[%s1489 + $0x20] sm:$0xf]
        %v1499 = vld [vmem:[%s1489 + $0x24] sm:$0xf]
        %v1500 = vld [vmem:[%s1489 + $0x28] sm:$0xf]
        %v1501 = vld [vmem:[%s1489 + $0x2c] sm:$0xf]
        %v1502 = vld [vmem:[%s1489 + $0x30] sm:$0xf]
        %v1503 = vld [vmem:[%s1489 + $0x34] sm:$0xf]
        %v1504 = vld [vmem:[%s1489 + $0x38] sm:$0xf]
        %v1505 = vld [vmem:[%s1489 + $0x3c] sm:$0xf]
        %v1506 = vld [vmem:[%s1489 + $0x40] sm:$0xf]
        %v1507 = vld [vmem:[%s1489 + $0x44] sm:$0xf]
        %v1508 = vld [vmem:[%s1489 + $0x48] sm:$0xf]
        %v1509 = vld [vmem:[%s1489 + $0x4c] sm:$0xf]
        %v1510 = vld [vmem:[%s1489 + $0x50] sm:$0xf]
        %v1511 = vld [vmem:[%s1489 + $0x54] sm:$0xf]
        %v1512 = vld [vmem:[%s1489 + $0x58] sm:$0xf]
        %v1513 = vld [vmem:[%s1489 + $0x5c] sm:$0xf]
        %v1514 = vld [vmem:[%s1489 + $0x60] sm:$0xf]
        %v1515 = vld [vmem:[%s1489 + $0x64] sm:$0xf]
        %v1516 = vld [vmem:[%s1489 + $0x68] sm:$0xf]
        %v1517 = vld [vmem:[%s1489 + $0x6c] sm:$0xf]
        %v1518 = vld [vmem:[%s1489 + $0x70] sm:$0xf]
        %v1519 = vld [vmem:[%s1489 + $0x74] sm:$0xf]
        %v1520 = vld [vmem:[%s1489 + $0x78] sm:$0xf]
        %v1521 = vld [vmem:[%s1489 + $0x7c] sm:$0xf]
        %v1542 = vunpack.c.l.b16 %v1206
        %v1543 = vunpack.c.h.b16 %v1206
        %v1544 = vunpack.c.l.b16 %v1207
        %v1545 = vunpack.c.h.b16 %v1207
        %v1546 = vunpack.c.l.b16 %v1209
        %v1547 = vunpack.c.h.b16 %v1209
        %v1548 = vunpack.c.l.b16 %v1210
        %v1549 = vunpack.c.h.b16 %v1210
        %v1550 = vunpack.c.l.b16 %v1212
        %v1551 = vunpack.c.h.b16 %v1212
        %v1552 = vunpack.c.l.b16 %v1213
        %v1553 = vunpack.c.h.b16 %v1213
        %v1554 = vunpack.c.l.b16 %v1215
        %v1555 = vunpack.c.h.b16 %v1215
        %v1556 = vunpack.c.l.b16 %v1216
        %v1557 = vunpack.c.h.b16 %v1216
        %v1558 = vunpack.c.l.b16 %v1218
        %v1559 = vunpack.c.h.b16 %v1218
        %v1560 = vunpack.c.l.b16 %v1219
        %v1561 = vunpack.c.h.b16 %v1219
        %v1562 = vunpack.c.l.b16 %v1221
        %v1563 = vunpack.c.h.b16 %v1221
        %v1564 = vunpack.c.l.b16 %v1222
        %v1565 = vunpack.c.h.b16 %v1222
        %v1566 = vunpack.c.l.b16 %v1224
        %v1567 = vunpack.c.h.b16 %v1224
        %v1568 = vunpack.c.l.b16 %v1225
        %v1569 = vunpack.c.h.b16 %v1225
        %v1570 = vunpack.c.l.b16 %v1227
        %v1571 = vunpack.c.h.b16 %v1227
        %v1572 = vunpack.c.l.b16 %v1228
        %v1573 = vunpack.c.h.b16 %v1228
        %v1574 = vunpack.c.l.b16 %v1230
        %v1575 = vunpack.c.h.b16 %v1230
        %v1576 = vunpack.c.l.b16 %v1231
        %v1577 = vunpack.c.h.b16 %v1231
        %v1578 = vunpack.c.l.b16 %v1233
        %v1579 = vunpack.c.h.b16 %v1233
        %v1580 = vunpack.c.l.b16 %v1234
        %v1581 = vunpack.c.h.b16 %v1234
        %v1582 = vpack.c.b16 %v1544, %v1542
        %v1583 = vpack.c.b16 %v1545, %v1543
        %v1584 = vpack.c.b16 %v1548, %v1546
        %v1585 = vpack.c.b16 %v1549, %v1547
        %v1586 = vpack.c.b16 %v1552, %v1550
        %v1587 = vpack.c.b16 %v1553, %v1551
        %v1588 = vpack.c.b16 %v1556, %v1554
        %v1589 = vpack.c.b16 %v1557, %v1555
        %v1590 = vpack.c.b16 %v1560, %v1558
        %v1591 = vpack.c.b16 %v1561, %v1559
        %v1592 = vpack.c.b16 %v1564, %v1562
        %v1593 = vpack.c.b16 %v1565, %v1563
        %v1594 = vpack.c.b16 %v1568, %v1566
        %v1595 = vpack.c.b16 %v1569, %v1567
        %v1596 = vpack.c.b16 %v1572, %v1570
        %v1597 = vpack.c.b16 %v1573, %v1571
        %v1598 = vpack.c.b16 %v1576, %v1574
        %v1599 = vpack.c.b16 %v1577, %v1575
        %v1600 = vpack.c.b16 %v1580, %v1578
        %v1601 = vpack.c.b16 %v1581, %v1579
        %v1654 = vunpack.c.l.b16 %v1490
        %v1655 = vunpack.c.l.b16 %v1491
        %v1656 = vunpack.c.l.b16 %v1492
        %v1657 = vunpack.c.l.b16 %v1493
        %v1658 = vunpack.c.l.b16 %v1494
        %v1659 = vunpack.c.l.b16 %v1495
        %v1660 = vunpack.c.l.b16 %v1496
        %v1661 = vunpack.c.l.b16 %v1497
        %v1662 = vunpack.c.l.b16 %v1498
        %v1663 = vunpack.c.l.b16 %v1499
        %v1664 = vunpack.c.l.b16 %v1500
        %v1665 = vunpack.c.l.b16 %v1501
        %v1666 = vunpack.c.l.b16 %v1502
        %v1667 = vunpack.c.l.b16 %v1503
        %v1668 = vunpack.c.l.b16 %v1504
        %v1669 = vunpack.c.l.b16 %v1505
        %v1670 = vunpack.c.l.b16 %v1506
        %v1671 = vunpack.c.l.b16 %v1507
        %v1672 = vunpack.c.l.b16 %v1508
        %v1673 = vunpack.c.l.b16 %v1509
        %v1674 = vunpack.c.l.b16 %v1510
        %v1675 = vunpack.c.l.b16 %v1511
        %v1676 = vunpack.c.l.b16 %v1512
        %v1677 = vunpack.c.l.b16 %v1513
        %v1678 = vunpack.c.l.b16 %v1514
        %v1679 = vunpack.c.l.b16 %v1515
        %v1680 = vunpack.c.l.b16 %v1516
        %v1681 = vunpack.c.l.b16 %v1517
        %v1682 = vunpack.c.l.b16 %v1518
        %v1683 = vunpack.c.l.b16 %v1519
        %v1684 = vunpack.c.l.b16 %v1520
        %v1685 = vunpack.c.l.b16 %v1521
        %v1686 = vpack.c.b16 %v1655, %v1654
        %v1687 = vpack.c.b16 %v1657, %v1656
        %v1688 = vpack.c.b16 %v1659, %v1658
        %v1689 = vpack.c.b16 %v1661, %v1660
        %v1690 = vpack.c.b16 %v1663, %v1662
        %v1691 = vpack.c.b16 %v1665, %v1664
        %v1692 = vpack.c.b16 %v1667, %v1666
        %v1693 = vpack.c.b16 %v1669, %v1668
        %v1694 = vpack.c.b16 %v1671, %v1670
        %v1695 = vpack.c.b16 %v1673, %v1672
        %v1696 = vpack.c.b16 %v1675, %v1674
        %v1697 = vpack.c.b16 %v1677, %v1676
        %v1698 = vpack.c.b16 %v1679, %v1678
        %v1699 = vpack.c.b16 %v1681, %v1680
        %v1700 = vpack.c.b16 %v1683, %v1682
        %v1701 = vpack.c.b16 %v1685, %v1684
        %1718 = vmatprep.subr.bf16.mxu0 0
        %1719 = vmatpush1.bf16.msra.mxu0 %v1686
        %1720 = vmatprep.subr.bf16.mxu0 0
        %1721 = vmatpush1.bf16.msra.mxu0 %v1687
        %1722 = vmatprep.subr.bf16.mxu0 0
        %1723 = vmatpush1.bf16.msra.mxu0 %v1688
        %1724 = vmatprep.subr.bf16.mxu0 0
        %1725 = vmatpush1.bf16.msra.mxu0 %v1689
        %1726 = vmatprep.subr.bf16.mxu0 0
        %1727 = vmatpush1.bf16.msra.mxu0 %v1690
        %1728 = vmatprep.subr.bf16.mxu0 0
        %1729 = vmatpush1.bf16.msra.mxu0 %v1691
        %1730 = vmatprep.subr.bf16.mxu0 0
        %1731 = vmatpush1.bf16.msra.mxu0 %v1692
        %1732 = vmatprep.subr.bf16.mxu0 0
        %1733 = vmatpush1.bf16.msra.mxu0 %v1693
        %1734 = vmatprep.subr.bf16.mxu0 0
        %1735 = vmatpush1.bf16.msra.mxu0 %v1694
        %1736 = vmatprep.subr.bf16.mxu0 0
        %1737 = vmatpush1.bf16.msra.mxu0 %v1695
        %1738 = vmatprep.subr.bf16.mxu0 0
        %1739 = vmatpush1.bf16.msra.mxu0 %v1696
        %1740 = vmatprep.subr.bf16.mxu0 0
        %1741 = vmatpush1.bf16.msra.mxu0 %v1697
        %1742 = vmatprep.subr.bf16.mxu0 0
        %1743 = vmatpush1.bf16.msra.mxu0 %v1698
        %1744 = vmatprep.subr.bf16.mxu0 0
        %1745 = vmatpush1.bf16.msra.mxu0 %v1699
        %1746 = vmatprep.subr.bf16.mxu0 0
        %1747 = vmatpush1.bf16.msra.mxu0 %v1700
        %1748 = vmatprep.subr.bf16.mxu0 0
        %1749 = vmatpush1.bf16.msra.mxu0 %v1701
        %1750 = vmatprep.mubr.bf16.mxu0 %v1583
        %1751 = vmatmul.mubr.bf16.gmra.mrb[0].mxu0 %v1582
        %v1752 = vpop.f32.mrb[0].mxu0
        %v1753 = vadd.f32 0.0, %v1752
        %v1754 = vpop.f32.mrb[0].mxu0
        %v1755 = vpop.f32.mrb[0].mxu0
        %v1756 = vadd.f32 0.0, %v1755
        %v1757 = vpop.f32.mrb[0].mxu0
        %1758 = vmatprep.mubr.bf16.mxu0 %v1585
        %1759 = vmatmul.mubr.bf16.gmra.mrb[0].mxu0 %v1584
        %v1760 = vpop.f32.mrb[0].mxu0
        %v1761 = vadd.f32 0.0, %v1760
        %v1762 = vpop.f32.mrb[0].mxu0
        %v1763 = vpop.f32.mrb[0].mxu0
        %v1764 = vadd.f32 0.0, %v1763
        %v1765 = vpop.f32.mrb[0].mxu0
        %1766 = vmatprep.mubr.bf16.mxu0 %v1587
        %1767 = vmatmul.mubr.bf16.gmra.mrb[0].mxu0 %v1586
        %v1768 = vpop.f32.mrb[0].mxu0
        %v1769 = vadd.f32 0.0, %v1768
        %v1770 = vpop.f32.mrb[0].mxu0
        %v1771 = vpop.f32.mrb[0].mxu0
        %v1772 = vadd.f32 0.0, %v1771
        %v1773 = vpop.f32.mrb[0].mxu0
        %1774 = vmatprep.mubr.bf16.mxu0 %v1589
        %1775 = vmatmul.mubr.bf16.gmra.mrb[0].mxu0 %v1588
        %v1776 = vpop.f32.mrb[0].mxu0
        %v1777 = vadd.f32 0.0, %v1776
        %v1778 = vpop.f32.mrb[0].mxu0
        %v1779 = vpop.f32.mrb[0].mxu0
        %v1780 = vadd.f32 0.0, %v1779
        %v1781 = vpop.f32.mrb[0].mxu0
        %1782 = vmatprep.mubr.bf16.mxu0 %v1591
        %1783 = vmatmul.mubr.bf16.gmra.mrb[0].mxu0 %v1590
        %v1784 = vpop.f32.mrb[0].mxu0
        %v1785 = vadd.f32 0.0, %v1784
        %v1786 = vpop.f32.mrb[0].mxu0
        %v1787 = vpop.f32.mrb[0].mxu0
        %v1788 = vadd.f32 0.0, %v1787
        %v1789 = vpop.f32.mrb[0].mxu0
        %1790 = vmatprep.mubr.bf16.mxu0 %v1593
        %1791 = vmatmul.mubr.bf16.gmra.mrb[0].mxu0 %v1592
        %v1792 = vpop.f32.mrb[0].mxu0
        %v1793 = vadd.f32 0.0, %v1792
        %v1794 = vpop.f32.mrb[0].mxu0
        %v1795 = vpop.f32.mrb[0].mxu0
        %v1796 = vadd.f32 0.0, %v1795
        %v1797 = vpop.f32.mrb[0].mxu0
        %1798 = vmatprep.mubr.bf16.mxu0 %v1595
        %1799 = vmatmul.mubr.bf16.gmra.mrb[0].mxu0 %v1594
        %v1800 = vpop.f32.mrb[0].mxu0
        %v1801 = vadd.f32 0.0, %v1800
        %v1802 = vpop.f32.mrb[0].mxu0
        %v1803 = vpop.f32.mrb[0].mxu0
        %v1804 = vadd.f32 0.0, %v1803
        %v1805 = vpop.f32.mrb[0].mxu0
        %1806 = vmatprep.mubr.bf16.mxu0 %v1597
        %1807 = vmatmul.mubr.bf16.gmra.mrb[0].mxu0 %v1596
        %v1808 = vpop.f32.mrb[0].mxu0
        %v1809 = vadd.f32 0.0, %v1808
        %v1810 = vpop.f32.mrb[0].mxu0
        %v1811 = vpop.f32.mrb[0].mxu0
        %v1812 = vadd.f32 0.0, %v1811
        %v1813 = vpop.f32.mrb[0].mxu0
        %1814 = vmatprep.mubr.bf16.mxu0 %v1599
        %1815 = vmatmul.mubr.bf16.gmra.mrb[0].mxu0 %v1598
        %v1816 = vpop.f32.mrb[0].mxu0
        %v1817 = vadd.f32 0.0, %v1816
        %v1818 = vpop.f32.mrb[0].mxu0
        %v1819 = vpop.f32.mrb[0].mxu0
        %v1820 = vadd.f32 0.0, %v1819
        %v1821 = vpop.f32.mrb[0].mxu0
        %1822 = vmatprep.mubr.bf16.mxu0 %v1601
        %1823 = vmatmul.mubr.bf16.gmra.mrb[0].mxu0 %v1600
        %v1824 = vpop.f32.mrb[0].mxu0
        %v1825 = vadd.f32 0.0, %v1824
        %v1826 = vpop.f32.mrb[0].mxu0
        %v1827 = vpop.f32.mrb[0].mxu0
        %v1828 = vadd.f32 0.0, %v1827
        %v1829 = vpop.f32.mrb[0].mxu0
        %1830 = vdwg.mxu0
        %v1831 = vunpack.c.l.b16 %v1249
        %v1832 = vunpack.c.h.b16 %v1249
        %v1833 = vunpack.c.l.b16 %v1258
        %v1834 = vunpack.c.h.b16 %v1258
        %v1835 = vunpack.c.l.b16 %v1271
        %v1836 = vunpack.c.h.b16 %v1271
        %v1837 = vunpack.c.l.b16 %v1280
        %v1838 = vunpack.c.h.b16 %v1280
        %v1839 = vunpack.c.l.b16 %v1293
        %v1840 = vunpack.c.h.b16 %v1293
        %v1841 = vunpack.c.l.b16 %v1302
        %v1842 = vunpack.c.h.b16 %v1302
        %v1843 = vunpack.c.l.b16 %v1315
        %v1844 = vunpack.c.h.b16 %v1315
        %v1845 = vunpack.c.l.b16 %v1324
        %v1846 = vunpack.c.h.b16 %v1324
        %v1847 = vunpack.c.l.b16 %v1337
        %v1848 = vunpack.c.h.b16 %v1337
        %v1849 = vunpack.c.l.b16 %v1346
        %v1850 = vunpack.c.h.b16 %v1346
        %v1851 = vunpack.c.l.b16 %v1359
        %v1852 = vunpack.c.h.b16 %v1359
        %v1853 = vunpack.c.l.b16 %v1368
        %v1854 = vunpack.c.h.b16 %v1368
        %v1855 = vunpack.c.l.b16 %v1381
        %v1856 = vunpack.c.h.b16 %v1381
        %v1857 = vunpack.c.l.b16 %v1390
        %v1858 = vunpack.c.h.b16 %v1390
        %v1859 = vunpack.c.l.b16 %v1403
        %v1860 = vunpack.c.h.b16 %v1403
        %v1861 = vunpack.c.l.b16 %v1412
        %v1862 = vunpack.c.h.b16 %v1412
        %v1863 = vunpack.c.l.b16 %v1425
        %v1864 = vunpack.c.h.b16 %v1425
        %v1865 = vunpack.c.l.b16 %v1434
        %v1866 = vunpack.c.h.b16 %v1434
        %v1867 = vunpack.c.l.b16 %v1447
        %v1868 = vunpack.c.h.b16 %v1447
        %v1869 = vunpack.c.l.b16 %v1456
        %v1870 = vunpack.c.h.b16 %v1456
        %v1871 = vpack.c.b16 %v1833, %v1831
        %v1872 = vpack.c.b16 %v1834, %v1832
        %v1873 = vpack.c.b16 %v1837, %v1835
        %v1874 = vpack.c.b16 %v1838, %v1836
        %v1875 = vpack.c.b16 %v1841, %v1839
        %v1876 = vpack.c.b16 %v1842, %v1840
        %v1877 = vpack.c.b16 %v1845, %v1843
        %v1878 = vpack.c.b16 %v1846, %v1844
        %v1879 = vpack.c.b16 %v1849, %v1847
        %v1880 = vpack.c.b16 %v1850, %v1848
        %v1881 = vpack.c.b16 %v1853, %v1851
        %v1882 = vpack.c.b16 %v1854, %v1852
        %v1883 = vpack.c.b16 %v1857, %v1855
        %v1884 = vpack.c.b16 %v1858, %v1856
        %v1885 = vpack.c.b16 %v1861, %v1859
        %v1886 = vpack.c.b16 %v1862, %v1860
        %v1887 = vpack.c.b16 %v1865, %v1863
        %v1888 = vpack.c.b16 %v1866, %v1864
        %v1889 = vpack.c.b16 %v1869, %v1867
        %v1890 = vpack.c.b16 %v1870, %v1868
        %v1943 = vunpack.c.l.b16 %v1457
        %v1944 = vunpack.c.l.b16 %v1458
        %v1945 = vunpack.c.l.b16 %v1459
        %v1946 = vunpack.c.l.b16 %v1460
        %v1947 = vunpack.c.l.b16 %v1461
        %v1948 = vunpack.c.l.b16 %v1462
        %v1949 = vunpack.c.l.b16 %v1463
        %v1950 = vunpack.c.l.b16 %v1464
        %v1951 = vunpack.c.l.b16 %v1465
        %v1952 = vunpack.c.l.b16 %v1466
        %v1953 = vunpack.c.l.b16 %v1467
        %v1954 = vunpack.c.l.b16 %v1468
        %v1955 = vunpack.c.l.b16 %v1469
        %v1956 = vunpack.c.l.b16 %v1470
        %v1957 = vunpack.c.l.b16 %v1471
        %v1958 = vunpack.c.l.b16 %v1472
        %v1959 = vunpack.c.l.b16 %v1473
        %v1960 = vunpack.c.l.b16 %v1474
        %v1961 = vunpack.c.l.b16 %v1475
        %v1962 = vunpack.c.l.b16 %v1476
        %v1963 = vunpack.c.l.b16 %v1477
        %v1964 = vunpack.c.l.b16 %v1478
        %v1965 = vunpack.c.l.b16 %v1479
        %v1966 = vunpack.c.l.b16 %v1480
        %v1967 = vunpack.c.l.b16 %v1481
        %v1968 = vunpack.c.l.b16 %v1482
        %v1969 = vunpack.c.l.b16 %v1483
        %v1970 = vunpack.c.l.b16 %v1484
        %v1971 = vunpack.c.l.b16 %v1485
        %v1972 = vunpack.c.l.b16 %v1486
        %v1973 = vunpack.c.l.b16 %v1487
        %v1974 = vunpack.c.l.b16 %v1488
        %v1975 = vpack.c.b16 %v1944, %v1943
        %v1976 = vpack.c.b16 %v1946, %v1945
        %v1977 = vpack.c.b16 %v1948, %v1947
        %v1978 = vpack.c.b16 %v1950, %v1949
        %v1979 = vpack.c.b16 %v1952, %v1951
        %v1980 = vpack.c.b16 %v1954, %v1953
        %v1981 = vpack.c.b16 %v1956, %v1955
        %v1982 = vpack.c.b16 %v1958, %v1957
        %v1983 = vpack.c.b16 %v1960, %v1959
        %v1984 = vpack.c.b16 %v1962, %v1961
        %v1985 = vpack.c.b16 %v1964, %v1963
        %v1986 = vpack.c.b16 %v1966, %v1965
        %v1987 = vpack.c.b16 %v1968, %v1967
        %v1988 = vpack.c.b16 %v1970, %v1969
        %v1989 = vpack.c.b16 %v1972, %v1971
        %v1990 = vpack.c.b16 %v1974, %v1973
        %2007 = vmatprep.subr.bf16.mxu0 0
        %2008 = vmatpush1.bf16.msra.mxu0 %v1975
        %2009 = vmatprep.subr.bf16.mxu0 0
        %2010 = vmatpush1.bf16.msra.mxu0 %v1976
        %2011 = vmatprep.subr.bf16.mxu0 0
        %2012 = vmatpush1.bf16.msra.mxu0 %v1977
        %2013 = vmatprep.subr.bf16.mxu0 0
        %2014 = vmatpush1.bf16.msra.mxu0 %v1978
        %2015 = vmatprep.subr.bf16.mxu0 0
        %2016 = vmatpush1.bf16.msra.mxu0 %v1979
        %2017 = vmatprep.subr.bf16.mxu0 0
        %2018 = vmatpush1.bf16.msra.mxu0 %v1980
        %2019 = vmatprep.subr.bf16.mxu0 0
        %2020 = vmatpush1.bf16.msra.mxu0 %v1981
        %2021 = vmatprep.subr.bf16.mxu0 0
        %2022 = vmatpush1.bf16.msra.mxu0 %v1982
        %2023 = vmatprep.subr.bf16.mxu0 0
        %2024 = vmatpush1.bf16.msra.mxu0 %v1983
        %2025 = vmatprep.subr.bf16.mxu0 0
        %2026 = vmatpush1.bf16.msra.mxu0 %v1984
        %2027 = vmatprep.subr.bf16.mxu0 0
        %2028 = vmatpush1.bf16.msra.mxu0 %v1985
        %2029 = vmatprep.subr.bf16.mxu0 0
        %2030 = vmatpush1.bf16.msra.mxu0 %v1986
        %2031 = vmatprep.subr.bf16.mxu0 0
        %2032 = vmatpush1.bf16.msra.mxu0 %v1987
        %2033 = vmatprep.subr.bf16.mxu0 0
        %2034 = vmatpush1.bf16.msra.mxu0 %v1988
        %2035 = vmatprep.subr.bf16.mxu0 0
        %2036 = vmatpush1.bf16.msra.mxu0 %v1989
        %2037 = vmatprep.subr.bf16.mxu0 0
        %2038 = vmatpush1.bf16.msra.mxu0 %v1990
        %2039 = vmatprep.mubr.bf16.mxu0 %v1872
        %2040 = vmatmul.mubr.bf16.gmra.mrb[0].mxu0 %v1871
        %v2041 = vpop.f32.mrb[0].mxu0
        %v2042 = vadd.f32 %v1753, %v2041
        %v2043 = vpop.f32.mrb[0].mxu0
        %v2044 = vpop.f32.mrb[0].mxu0
        %v2045 = vadd.f32 %v1756, %v2044
        %v2046 = vpop.f32.mrb[0].mxu0
        %2047 = vmatprep.mubr.bf16.mxu0 %v1874
        %2048 = vmatmul.mubr.bf16.gmra.mrb[0].mxu0 %v1873
        %v2049 = vpop.f32.mrb[0].mxu0
        %v2050 = vadd.f32 %v1761, %v2049
        %v2051 = vpop.f32.mrb[0].mxu0
        %v2052 = vpop.f32.mrb[0].mxu0
        %v2053 = vadd.f32 %v1764, %v2052
        %v2054 = vpop.f32.mrb[0].mxu0
        %2055 = vmatprep.mubr.bf16.mxu0 %v1876
        %2056 = vmatmul.mubr.bf16.gmra.mrb[0].mxu0 %v1875
        %v2057 = vpop.f32.mrb[0].mxu0
        %v2058 = vadd.f32 %v1769, %v2057
        %v2059 = vpop.f32.mrb[0].mxu0
        %v2060 = vpop.f32.mrb[0].mxu0
        %v2061 = vadd.f32 %v1772, %v2060
        %v2062 = vpop.f32.mrb[0].mxu0
        %2063 = vmatprep.mubr.bf16.mxu0 %v1878
        %2064 = vmatmul.mubr.bf16.gmra.mrb[0].mxu0 %v1877
        %v2065 = vpop.f32.mrb[0].mxu0
        %v2066 = vadd.f32 %v1777, %v2065
        %v2067 = vpop.f32.mrb[0].mxu0
        %v2068 = vpop.f32.mrb[0].mxu0
        %v2069 = vadd.f32 %v1780, %v2068
        %v2070 = vpop.f32.mrb[0].mxu0
        %2071 = vmatprep.mubr.bf16.mxu0 %v1880
        %2072 = vmatmul.mubr.bf16.gmra.mrb[0].mxu0 %v1879
        %v2073 = vpop.f32.mrb[0].mxu0
        %v2074 = vadd.f32 %v1785, %v2073
        %v2075 = vpop.f32.mrb[0].mxu0
        %v2076 = vpop.f32.mrb[0].mxu0
        %v2077 = vadd.f32 %v1788, %v2076
        %v2078 = vpop.f32.mrb[0].mxu0
        %2079 = vmatprep.mubr.bf16.mxu0 %v1882
        %2080 = vmatmul.mubr.bf16.gmra.mrb[0].mxu0 %v1881
        %v2081 = vpop.f32.mrb[0].mxu0
        %v2082 = vadd.f32 %v1793, %v2081
        %v2083 = vpop.f32.mrb[0].mxu0
        %v2084 = vpop.f32.mrb[0].mxu0
        %v2085 = vadd.f32 %v1796, %v2084
        %v2086 = vpop.f32.mrb[0].mxu0
        %2087 = vmatprep.mubr.bf16.mxu0 %v1884
        %2088 = vmatmul.mubr.bf16.gmra.mrb[0].mxu0 %v1883
        %v2089 = vpop.f32.mrb[0].mxu0
        %v2090 = vadd.f32 %v1801, %v2089
        %v2091 = vpop.f32.mrb[0].mxu0
        %v2092 = vpop.f32.mrb[0].mxu0
        %v2093 = vadd.f32 %v1804, %v2092
        %v2094 = vpop.f32.mrb[0].mxu0
        %2095 = vmatprep.mubr.bf16.mxu0 %v1886
        %2096 = vmatmul.mubr.bf16.gmra.mrb[0].mxu0 %v1885
        %v2097 = vpop.f32.mrb[0].mxu0
        %v2098 = vadd.f32 %v1809, %v2097
        %v2099 = vpop.f32.mrb[0].mxu0
        %v2100 = vpop.f32.mrb[0].mxu0
        %v2101 = vadd.f32 %v1812, %v2100
        %v2102 = vpop.f32.mrb[0].mxu0
        %2103 = vmatprep.mubr.bf16.mxu0 %v1888
        %2104 = vmatmul.mubr.bf16.gmra.mrb[0].mxu0 %v1887
        %v2105 = vpop.f32.mrb[0].mxu0
        %v2106 = vadd.f32 %v1817, %v2105
        %v2107 = vpop.f32.mrb[0].mxu0
        %v2108 = vpop.f32.mrb[0].mxu0
        %v2109 = vadd.f32 %v1820, %v2108
        %v2110 = vpop.f32.mrb[0].mxu0
        %2111 = vmatprep.mubr.bf16.mxu0 %v1890
        %2112 = vmatmul.mubr.bf16.gmra.mrb[0].mxu0 %v1889
        %v2113 = vpop.f32.mrb[0].mxu0
        %v2114 = vadd.f32 %v1825, %v2113
        %v2115 = vpop.f32.mrb[0].mxu0
        %v2116 = vpop.f32.mrb[0].mxu0
        %v2117 = vadd.f32 %v1828, %v2116
        %v2118 = vpop.f32.mrb[0].mxu0
        %2119 = vdwg.mxu0
        %v2120 = vld [vmem:[#allocation2 + $0x10] sm:$0xff]
        %v2121 = vld [vmem:[#allocation2 + $0x18] sm:$0xff]
        %v2122 = vld [vmem:[#allocation2 + $0x20] sm:$0x11]
        %v2123 = vld [vmem:[#allocation2 + $0x38] sm:$0xff]
        %v2124 = vld [vmem:[#allocation2 + $0x40] sm:$0xff]
        %v2125 = vld [vmem:[#allocation2 + $0x48] sm:$0x11]
        %v2126 = vld [vmem:[#allocation2 + $0x60] sm:$0xff]
        %v2127 = vld [vmem:[#allocation2 + $0x68] sm:$0xff]
        %v2128 = vld [vmem:[#allocation2 + $0x70] sm:$0x11]
        %v2129 = vld [vmem:[#allocation2 + $0x88] sm:$0xff]
        %v2130 = vld [vmem:[#allocation2 + $0x90] sm:$0xff]
        %v2131 = vld [vmem:[#allocation2 + $0x98] sm:$0x11]
        %v2132 = vld [vmem:[#allocation2 + $0xb0] sm:$0xff]
        %v2133 = vld [vmem:[#allocation2 + $0xb8] sm:$0xff]
        %v2134 = vld [vmem:[#allocation2 + $0xc0] sm:$0x11]
        %v2135 = vld [vmem:[#allocation2 + $0xd8] sm:$0xff]
        %v2136 = vld [vmem:[#allocation2 + $0xe0] sm:$0xff]
        %v2137 = vld [vmem:[#allocation2 + $0xe8] sm:$0x11]
        %v2138 = vld [vmem:[#allocation2 + $0x100] sm:$0xff]
        %v2139 = vld [vmem:[#allocation2 + $0x108] sm:$0xff]
        %v2140 = vld [vmem:[#allocation2 + $0x110] sm:$0x11]
        %v2141 = vld [vmem:[#allocation2 + $0x128] sm:$0xff]
        %v2142 = vld [vmem:[#allocation2 + $0x130] sm:$0xff]
        %v2143 = vld [vmem:[#allocation2 + $0x138] sm:$0x11]
        %v2144 = vld [vmem:[#allocation2 + $0x150] sm:$0xff]
        %v2145 = vld [vmem:[#allocation2 + $0x158] sm:$0xff]
        %v2146 = vld [vmem:[#allocation2 + $0x160] sm:$0x11]
        %v2147 = vld [vmem:[#allocation2 + $0x178] sm:$0xff]
        %v2148 = vld [vmem:[#allocation2 + $0x180] sm:$0xff]
        %v2149 = vld [vmem:[#allocation2 + $0x188] sm:$0x11]
        %vm2150 = vsmask.f32 3328
        %vm2151 = vsmask.f32 7440
        %vm2152 = vmor %vm2150, %vm2151
        %v2154 = vshrl.u32 %v2120, 16
        %v2156 = vrot.slane %v2154, 4
        %v2157 = vshll.u32 %v2120, 16
        %v2159 = vrot.slane %v2157, 5
        %v2160 = vor.u32 %v2156, %v2159
        %v2161 = vrot.slane %v2160, 4
        %v2163 = vshll.u32 %v2121, 16
        %v2165 = vrot.slane %v2163, 5
        %v2166 = vsel %vm2152, %v2161, %v2165
        %v2167 = vshrl.u32 %v2121, 16
        %v2169 = vrot.slane %v2167, 4
        %v2170 = vor.u32 %v2169, %v2165
        %v2171 = vrot.slane %v2170, 4
        %v2173 = vshll.u32 %v2122, 16
        %v2175 = vrot.slane %v2173, 5
        %v2176 = vsel %vm2152, %v2171, %v2175
        %v2178 = vshrl.u32 %v2123, 16
        %v2180 = vrot.slane %v2178, 4
        %v2181 = vshll.u32 %v2123, 16
        %v2183 = vrot.slane %v2181, 5
        %v2184 = vor.u32 %v2180, %v2183
        %v2185 = vrot.slane %v2184, 4
        %v2187 = vshll.u32 %v2124, 16
        %v2189 = vrot.slane %v2187, 5
        %v2190 = vsel %vm2152, %v2185, %v2189
        %v2191 = vshrl.u32 %v2124, 16
        %v2193 = vrot.slane %v2191, 4
        %v2194 = vor.u32 %v2193, %v2189
        %v2195 = vrot.slane %v2194, 4
        %v2197 = vshll.u32 %v2125, 16
        %v2199 = vrot.slane %v2197, 5
        %v2200 = vsel %vm2152, %v2195, %v2199
        %v2202 = vshrl.u32 %v2126, 16
        %v2204 = vrot.slane %v2202, 4
        %v2205 = vshll.u32 %v2126, 16
        %v2207 = vrot.slane %v2205, 5
        %v2208 = vor.u32 %v2204, %v2207
        %v2209 = vrot.slane %v2208, 4
        %v2211 = vshll.u32 %v2127, 16
        %v2213 = vrot.slane %v2211, 5
        %v2214 = vsel %vm2152, %v2209, %v2213
        %v2215 = vshrl.u32 %v2127, 16
        %v2217 = vrot.slane %v2215, 4
        %v2218 = vor.u32 %v2217, %v2213
        %v2219 = vrot.slane %v2218, 4
        %v2221 = vshll.u32 %v2128, 16
        %v2223 = vrot.slane %v2221, 5
        %v2224 = vsel %vm2152, %v2219, %v2223
        %v2226 = vshrl.u32 %v2129, 16
        %v2228 = vrot.slane %v2226, 4
        %v2229 = vshll.u32 %v2129, 16
        %v2231 = vrot.slane %v2229, 5
        %v2232 = vor.u32 %v2228, %v2231
        %v2233 = vrot.slane %v2232, 4
        %v2235 = vshll.u32 %v2130, 16
        %v2237 = vrot.slane %v2235, 5
        %v2238 = vsel %vm2152, %v2233, %v2237
        %v2239 = vshrl.u32 %v2130, 16
        %v2241 = vrot.slane %v2239, 4
        %v2242 = vor.u32 %v2241, %v2237
        %v2243 = vrot.slane %v2242, 4
        %v2245 = vshll.u32 %v2131, 16
        %v2247 = vrot.slane %v2245, 5
        %v2248 = vsel %vm2152, %v2243, %v2247
        %v2250 = vshrl.u32 %v2132, 16
        %v2252 = vrot.slane %v2250, 4
        %v2253 = vshll.u32 %v2132, 16
        %v2255 = vrot.slane %v2253, 5
        %v2256 = vor.u32 %v2252, %v2255
        %v2257 = vrot.slane %v2256, 4
        %v2259 = vshll.u32 %v2133, 16
        %v2261 = vrot.slane %v2259, 5
        %v2262 = vsel %vm2152, %v2257, %v2261
        %v2263 = vshrl.u32 %v2133, 16
        %v2265 = vrot.slane %v2263, 4
        %v2266 = vor.u32 %v2265, %v2261
        %v2267 = vrot.slane %v2266, 4
        %v2269 = vshll.u32 %v2134, 16
        %v2271 = vrot.slane %v2269, 5
        %v2272 = vsel %vm2152, %v2267, %v2271
        %v2274 = vshrl.u32 %v2135, 16
        %v2276 = vrot.slane %v2274, 4
        %v2277 = vshll.u32 %v2135, 16
        %v2279 = vrot.slane %v2277, 5
        %v2280 = vor.u32 %v2276, %v2279
        %v2281 = vrot.slane %v2280, 4
        %v2283 = vshll.u32 %v2136, 16
        %v2285 = vrot.slane %v2283, 5
        %v2286 = vsel %vm2152, %v2281, %v2285
        %v2287 = vshrl.u32 %v2136, 16
        %v2289 = vrot.slane %v2287, 4
        %v2290 = vor.u32 %v2289, %v2285
        %v2291 = vrot.slane %v2290, 4
        %v2293 = vshll.u32 %v2137, 16
        %v2295 = vrot.slane %v2293, 5
        %v2296 = vsel %vm2152, %v2291, %v2295
        %v2298 = vshrl.u32 %v2138, 16
        %v2300 = vrot.slane %v2298, 4
        %v2301 = vshll.u32 %v2138, 16
        %v2303 = vrot.slane %v2301, 5
        %v2304 = vor.u32 %v2300, %v2303
        %v2305 = vrot.slane %v2304, 4
        %v2307 = vshll.u32 %v2139, 16
        %v2309 = vrot.slane %v2307, 5
        %v2310 = vsel %vm2152, %v2305, %v2309
        %v2311 = vshrl.u32 %v2139, 16
        %v2313 = vrot.slane %v2311, 4
        %v2314 = vor.u32 %v2313, %v2309
        %v2315 = vrot.slane %v2314, 4
        %v2317 = vshll.u32 %v2140, 16
        %v2319 = vrot.slane %v2317, 5
        %v2320 = vsel %vm2152, %v2315, %v2319
        %v2322 = vshrl.u32 %v2141, 16
        %v2324 = vrot.slane %v2322, 4
        %v2325 = vshll.u32 %v2141, 16
        %v2327 = vrot.slane %v2325, 5
        %v2328 = vor.u32 %v2324, %v2327
        %v2329 = vrot.slane %v2328, 4
        %v2331 = vshll.u32 %v2142, 16
        %v2333 = vrot.slane %v2331, 5
        %v2334 = vsel %vm2152, %v2329, %v2333
        %v2335 = vshrl.u32 %v2142, 16
        %v2337 = vrot.slane %v2335, 4
        %v2338 = vor.u32 %v2337, %v2333
        %v2339 = vrot.slane %v2338, 4
        %v2341 = vshll.u32 %v2143, 16
        %v2343 = vrot.slane %v2341, 5
        %v2344 = vsel %vm2152, %v2339, %v2343
        %v2346 = vshrl.u32 %v2144, 16
        %v2348 = vrot.slane %v2346, 4
        %v2349 = vshll.u32 %v2144, 16
        %v2351 = vrot.slane %v2349, 5
        %v2352 = vor.u32 %v2348, %v2351
        %v2353 = vrot.slane %v2352, 4
        %v2355 = vshll.u32 %v2145, 16
        %v2357 = vrot.slane %v2355, 5
        %v2358 = vsel %vm2152, %v2353, %v2357
        %v2359 = vshrl.u32 %v2145, 16
        %v2361 = vrot.slane %v2359, 4
        %v2362 = vor.u32 %v2361, %v2357
        %v2363 = vrot.slane %v2362, 4
        %v2365 = vshll.u32 %v2146, 16
        %v2367 = vrot.slane %v2365, 5
        %v2368 = vsel %vm2152, %v2363, %v2367
        %v2370 = vshrl.u32 %v2147, 16
        %v2372 = vrot.slane %v2370, 4
        %v2373 = vshll.u32 %v2147, 16
        %v2375 = vrot.slane %v2373, 5
        %v2376 = vor.u32 %v2372, %v2375
        %v2377 = vrot.slane %v2376, 4
        %v2379 = vshll.u32 %v2148, 16
        %v2381 = vrot.slane %v2379, 5
        %v2382 = vsel %vm2152, %v2377, %v2381
        %v2383 = vshrl.u32 %v2148, 16
        %v2385 = vrot.slane %v2383, 4
        %v2386 = vor.u32 %v2385, %v2381
        %v2387 = vrot.slane %v2386, 4
        %v2389 = vshll.u32 %v2149, 16
        %v2391 = vrot.slane %v2389, 5
        %v2392 = vsel %vm2152, %v2387, %v2391
        %s2393 = scalar_lea.vmem %s6, 256
        %v2394 = vld [vmem:[%s2393] sm:$0xf]
        %v2395 = vld [vmem:[%s2393 + $0x4] sm:$0xf]
        %v2396 = vld [vmem:[%s2393 + $0x8] sm:$0xf]
        %v2397 = vld [vmem:[%s2393 + $0xc] sm:$0xf]
        %v2398 = vld [vmem:[%s2393 + $0x10] sm:$0xf]
        %v2399 = vld [vmem:[%s2393 + $0x14] sm:$0xf]
        %v2400 = vld [vmem:[%s2393 + $0x18] sm:$0xf]
        %v2401 = vld [vmem:[%s2393 + $0x1c] sm:$0xf]
        %v2402 = vld [vmem:[%s2393 + $0x20] sm:$0xf]
        %v2403 = vld [vmem:[%s2393 + $0x24] sm:$0xf]
        %v2404 = vld [vmem:[%s2393 + $0x28] sm:$0xf]
        %v2405 = vld [vmem:[%s2393 + $0x2c] sm:$0xf]
        %v2406 = vld [vmem:[%s2393 + $0x30] sm:$0xf]
        %v2407 = vld [vmem:[%s2393 + $0x34] sm:$0xf]
        %v2408 = vld [vmem:[%s2393 + $0x38] sm:$0xf]
        %v2409 = vld [vmem:[%s2393 + $0x3c] sm:$0xf]
        %v2410 = vld [vmem:[%s2393 + $0x40] sm:$0xf]
        %v2411 = vld [vmem:[%s2393 + $0x44] sm:$0xf]
        %v2412 = vld [vmem:[%s2393 + $0x48] sm:$0xf]
        %v2413 = vld [vmem:[%s2393 + $0x4c] sm:$0xf]
        %v2414 = vld [vmem:[%s2393 + $0x50] sm:$0xf]
        %v2415 = vld [vmem:[%s2393 + $0x54] sm:$0xf]
        %v2416 = vld [vmem:[%s2393 + $0x58] sm:$0xf]
        %v2417 = vld [vmem:[%s2393 + $0x5c] sm:$0xf]
        %v2418 = vld [vmem:[%s2393 + $0x60] sm:$0xf]
        %v2419 = vld [vmem:[%s2393 + $0x64] sm:$0xf]
        %v2420 = vld [vmem:[%s2393 + $0x68] sm:$0xf]
        %v2421 = vld [vmem:[%s2393 + $0x6c] sm:$0xf]
        %v2422 = vld [vmem:[%s2393 + $0x70] sm:$0xf]
        %v2423 = vld [vmem:[%s2393 + $0x74] sm:$0xf]
        %v2424 = vld [vmem:[%s2393 + $0x78] sm:$0xf]
        %v2425 = vld [vmem:[%s2393 + $0x7c] sm:$0xf]
        %v2426 = vunpack.c.l.b16 %v2166
        %v2427 = vunpack.c.h.b16 %v2166
        %v2428 = vunpack.c.l.b16 %v2176
        %v2429 = vunpack.c.h.b16 %v2176
        %v2430 = vunpack.c.l.b16 %v2190
        %v2431 = vunpack.c.h.b16 %v2190
        %v2432 = vunpack.c.l.b16 %v2200
        %v2433 = vunpack.c.h.b16 %v2200
        %v2434 = vunpack.c.l.b16 %v2214
        %v2435 = vunpack.c.h.b16 %v2214
        %v2436 = vunpack.c.l.b16 %v2224
        %v2437 = vunpack.c.h.b16 %v2224
        %v2438 = vunpack.c.l.b16 %v2238
        %v2439 = vunpack.c.h.b16 %v2238
        %v2440 = vunpack.c.l.b16 %v2248
        %v2441 = vunpack.c.h.b16 %v2248
        %v2442 = vunpack.c.l.b16 %v2262
        %v2443 = vunpack.c.h.b16 %v2262
        %v2444 = vunpack.c.l.b16 %v2272
        %v2445 = vunpack.c.h.b16 %v2272
        %v2446 = vunpack.c.l.b16 %v2286
        %v2447 = vunpack.c.h.b16 %v2286
        %v2448 = vunpack.c.l.b16 %v2296
        %v2449 = vunpack.c.h.b16 %v2296
        %v2450 = vunpack.c.l.b16 %v2310
        %v2451 = vunpack.c.h.b16 %v2310
        %v2452 = vunpack.c.l.b16 %v2320
        %v2453 = vunpack.c.h.b16 %v2320
        %v2454 = vunpack.c.l.b16 %v2334
        %v2455 = vunpack.c.h.b16 %v2334
        %v2456 = vunpack.c.l.b16 %v2344
        %v2457 = vunpack.c.h.b16 %v2344
        %v2458 = vunpack.c.l.b16 %v2358
        %v2459 = vunpack.c.h.b16 %v2358
        %v2460 = vunpack.c.l.b16 %v2368
        %v2461 = vunpack.c.h.b16 %v2368
        %v2462 = vunpack.c.l.b16 %v2382
        %v2463 = vunpack.c.h.b16 %v2382
        %v2464 = vunpack.c.l.b16 %v2392
        %v2465 = vunpack.c.h.b16 %v2392
        %v2466 = vpack.c.b16 %v2428, %v2426
        %v2467 = vpack.c.b16 %v2429, %v2427
        %v2468 = vpack.c.b16 %v2432, %v2430
        %v2469 = vpack.c.b16 %v2433, %v2431
        %v2470 = vpack.c.b16 %v2436, %v2434
        %v2471 = vpack.c.b16 %v2437, %v2435
        %v2472 = vpack.c.b16 %v2440, %v2438
        %v2473 = vpack.c.b16 %v2441, %v2439
        %v2474 = vpack.c.b16 %v2444, %v2442
        %v2475 = vpack.c.b16 %v2445, %v2443
        %v2476 = vpack.c.b16 %v2448, %v2446
        %v2477 = vpack.c.b16 %v2449, %v2447
        %v2478 = vpack.c.b16 %v2452, %v2450
        %v2479 = vpack.c.b16 %v2453, %v2451
        %v2480 = vpack.c.b16 %v2456, %v2454
        %v2481 = vpack.c.b16 %v2457, %v2455
        %v2482 = vpack.c.b16 %v2460, %v2458
        %v2483 = vpack.c.b16 %v2461, %v2459
        %v2484 = vpack.c.b16 %v2464, %v2462
        %v2485 = vpack.c.b16 %v2465, %v2463
        %v2538 = vunpack.c.l.b16 %v2394
        %v2539 = vunpack.c.l.b16 %v2395
        %v2540 = vunpack.c.l.b16 %v2396
        %v2541 = vunpack.c.l.b16 %v2397
        %v2542 = vunpack.c.l.b16 %v2398
        %v2543 = vunpack.c.l.b16 %v2399
        %v2544 = vunpack.c.l.b16 %v2400
        %v2545 = vunpack.c.l.b16 %v2401
        %v2546 = vunpack.c.l.b16 %v2402
        %v2547 = vunpack.c.l.b16 %v2403
        %v2548 = vunpack.c.l.b16 %v2404
        %v2549 = vunpack.c.l.b16 %v2405
        %v2550 = vunpack.c.l.b16 %v2406
        %v2551 = vunpack.c.l.b16 %v2407
        %v2552 = vunpack.c.l.b16 %v2408
        %v2553 = vunpack.c.l.b16 %v2409
        %v2554 = vunpack.c.l.b16 %v2410
        %v2555 = vunpack.c.l.b16 %v2411
        %v2556 = vunpack.c.l.b16 %v2412
        %v2557 = vunpack.c.l.b16 %v2413
        %v2558 = vunpack.c.l.b16 %v2414
        %v2559 = vunpack.c.l.b16 %v2415
        %v2560 = vunpack.c.l.b16 %v2416
        %v2561 = vunpack.c.l.b16 %v2417
        %v2562 = vunpack.c.l.b16 %v2418
        %v2563 = vunpack.c.l.b16 %v2419
        %v2564 = vunpack.c.l.b16 %v2420
        %v2565 = vunpack.c.l.b16 %v2421
        %v2566 = vunpack.c.l.b16 %v2422
        %v2567 = vunpack.c.l.b16 %v2423
        %v2568 = vunpack.c.l.b16 %v2424
        %v2569 = vunpack.c.l.b16 %v2425
        %v2570 = vpack.c.b16 %v2539, %v2538
        %v2571 = vpack.c.b16 %v2541, %v2540
        %v2572 = vpack.c.b16 %v2543, %v2542
        %v2573 = vpack.c.b16 %v2545, %v2544
        %v2574 = vpack.c.b16 %v2547, %v2546
        %v2575 = vpack.c.b16 %v2549, %v2548
        %v2576 = vpack.c.b16 %v2551, %v2550
        %v2577 = vpack.c.b16 %v2553, %v2552
        %v2578 = vpack.c.b16 %v2555, %v2554
        %v2579 = vpack.c.b16 %v2557, %v2556
        %v2580 = vpack.c.b16 %v2559, %v2558
        %v2581 = vpack.c.b16 %v2561, %v2560
        %v2582 = vpack.c.b16 %v2563, %v2562
        %v2583 = vpack.c.b16 %v2565, %v2564
        %v2584 = vpack.c.b16 %v2567, %v2566
        %v2585 = vpack.c.b16 %v2569, %v2568
        %2602 = vmatprep.subr.bf16.mxu0 0
        %2603 = vmatpush1.bf16.msra.mxu0 %v2570
        %2604 = vmatprep.subr.bf16.mxu0 0
        %2605 = vmatpush1.bf16.msra.mxu0 %v2571
        %2606 = vmatprep.subr.bf16.mxu0 0
        %2607 = vmatpush1.bf16.msra.mxu0 %v2572
        %2608 = vmatprep.subr.bf16.mxu0 0
        %2609 = vmatpush1.bf16.msra.mxu0 %v2573
        %2610 = vmatprep.subr.bf16.mxu0 0
        %2611 = vmatpush1.bf16.msra.mxu0 %v2574
        %2612 = vmatprep.subr.bf16.mxu0 0
        %2613 = vmatpush1.bf16.msra.mxu0 %v2575
        %2614 = vmatprep.subr.bf16.mxu0 0
        %2615 = vmatpush1.bf16.msra.mxu0 %v2576
        %2616 = vmatprep.subr.bf16.mxu0 0
        %2617 = vmatpush1.bf16.msra.mxu0 %v2577
        %2618 = vmatprep.subr.bf16.mxu0 0
        %2619 = vmatpush1.bf16.msra.mxu0 %v2578
        %2620 = vmatprep.subr.bf16.mxu0 0
        %2621 = vmatpush1.bf16.msra.mxu0 %v2579
        %2622 = vmatprep.subr.bf16.mxu0 0
        %2623 = vmatpush1.bf16.msra.mxu0 %v2580
        %2624 = vmatprep.subr.bf16.mxu0 0
        %2625 = vmatpush1.bf16.msra.mxu0 %v2581
        %2626 = vmatprep.subr.bf16.mxu0 0
        %2627 = vmatpush1.bf16.msra.mxu0 %v2582
        %2628 = vmatprep.subr.bf16.mxu0 0
        %2629 = vmatpush1.bf16.msra.mxu0 %v2583
        %2630 = vmatprep.subr.bf16.mxu0 0
        %2631 = vmatpush1.bf16.msra.mxu0 %v2584
        %2632 = vmatprep.subr.bf16.mxu0 0
        %2633 = vmatpush1.bf16.msra.mxu0 %v2585
        %2634 = vmatprep.mubr.bf16.mxu0 %v2467
        %2635 = vmatmul.mubr.bf16.gmra.mrb[0].mxu0 %v2466
        %v2636 = vpop.f32.mrb[0].mxu0
        %v2637 = vadd.f32 0.0, %v2636
        %v2638 = vpop.f32.mrb[0].mxu0
        %v2639 = vpop.f32.mrb[0].mxu0
        %v2640 = vadd.f32 0.0, %v2639
        %v2641 = vpop.f32.mrb[0].mxu0
        %2642 = vmatprep.mubr.bf16.mxu0 %v2469
        %2643 = vmatmul.mubr.bf16.gmra.mrb[0].mxu0 %v2468
        %v2644 = vpop.f32.mrb[0].mxu0
        %v2645 = vadd.f32 0.0, %v2644
        %v2646 = vpop.f32.mrb[0].mxu0
        %v2647 = vpop.f32.mrb[0].mxu0
        %v2648 = vadd.f32 0.0, %v2647
        %v2649 = vpop.f32.mrb[0].mxu0
        %2650 = vmatprep.mubr.bf16.mxu0 %v2471
        %2651 = vmatmul.mubr.bf16.gmra.mrb[0].mxu0 %v2470
        %v2652 = vpop.f32.mrb[0].mxu0
        %v2653 = vadd.f32 0.0, %v2652
        %v2654 = vpop.f32.mrb[0].mxu0
        %v2655 = vpop.f32.mrb[0].mxu0
        %v2656 = vadd.f32 0.0, %v2655
        %v2657 = vpop.f32.mrb[0].mxu0
        %2658 = vmatprep.mubr.bf16.mxu0 %v2473
        %2659 = vmatmul.mubr.bf16.gmra.mrb[0].mxu0 %v2472
        %v2660 = vpop.f32.mrb[0].mxu0
        %v2661 = vadd.f32 0.0, %v2660
        %v2662 = vpop.f32.mrb[0].mxu0
        %v2663 = vpop.f32.mrb[0].mxu0
        %v2664 = vadd.f32 0.0, %v2663
        %v2665 = vpop.f32.mrb[0].mxu0
        %2666 = vmatprep.mubr.bf16.mxu0 %v2475
        %2667 = vmatmul.mubr.bf16.gmra.mrb[0].mxu0 %v2474
        %v2668 = vpop.f32.mrb[0].mxu0
        %v2669 = vadd.f32 0.0, %v2668
        %v2670 = vpop.f32.mrb[0].mxu0
        %v2671 = vpop.f32.mrb[0].mxu0
        %v2672 = vadd.f32 0.0, %v2671
        %v2673 = vpop.f32.mrb[0].mxu0
        %2674 = vmatprep.mubr.bf16.mxu0 %v2477
        %2675 = vmatmul.mubr.bf16.gmra.mrb[0].mxu0 %v2476
        %v2676 = vpop.f32.mrb[0].mxu0
        %v2677 = vadd.f32 0.0, %v2676
        %v2678 = vpop.f32.mrb[0].mxu0
        %v2679 = vpop.f32.mrb[0].mxu0
        %v2680 = vadd.f32 0.0, %v2679
        %v2681 = vpop.f32.mrb[0].mxu0
        %2682 = vmatprep.mubr.bf16.mxu0 %v2479
        %2683 = vmatmul.mubr.bf16.gmra.mrb[0].mxu0 %v2478
        %v2684 = vpop.f32.mrb[0].mxu0
        %v2685 = vadd.f32 0.0, %v2684
        %v2686 = vpop.f32.mrb[0].mxu0
        %v2687 = vpop.f32.mrb[0].mxu0
        %v2688 = vadd.f32 0.0, %v2687
        %v2689 = vpop.f32.mrb[0].mxu0
        %2690 = vmatprep.mubr.bf16.mxu0 %v2481
        %2691 = vmatmul.mubr.bf16.gmra.mrb[0].mxu0 %v2480
        %v2692 = vpop.f32.mrb[0].mxu0
        %v2693 = vadd.f32 0.0, %v2692
        %v2694 = vpop.f32.mrb[0].mxu0
        %v2695 = vpop.f32.mrb[0].mxu0
        %v2696 = vadd.f32 0.0, %v2695
        %v2697 = vpop.f32.mrb[0].mxu0
        %2698 = vmatprep.mubr.bf16.mxu0 %v2483
        %2699 = vmatmul.mubr.bf16.gmra.mrb[0].mxu0 %v2482
        %v2700 = vpop.f32.mrb[0].mxu0
        %v2701 = vadd.f32 0.0, %v2700
        %v2702 = vpop.f32.mrb[0].mxu0
        %v2703 = vpop.f32.mrb[0].mxu0
        %v2704 = vadd.f32 0.0, %v2703
        %v2705 = vpop.f32.mrb[0].mxu0
        %2706 = vmatprep.mubr.bf16.mxu0 %v2485
        %2707 = vmatmul.mubr.bf16.gmra.mrb[0].mxu0 %v2484
        %v2708 = vpop.f32.mrb[0].mxu0
        %v2709 = vadd.f32 0.0, %v2708
        %v2710 = vpop.f32.mrb[0].mxu0
        %v2711 = vpop.f32.mrb[0].mxu0
        %v2712 = vadd.f32 0.0, %v2711
        %v2713 = vpop.f32.mrb[0].mxu0
        %2714 = vdwg.mxu0
        %v2715 = vadd.f32 %v2042, %v2637
        %v2716 = vadd.f32 %v2045, %v2640
        %v2717 = vadd.f32 %v2050, %v2645
        %v2718 = vadd.f32 %v2053, %v2648
        %v2719 = vadd.f32 %v2058, %v2653
        %v2720 = vadd.f32 %v2061, %v2656
        %v2721 = vadd.f32 %v2066, %v2661
        %v2722 = vadd.f32 %v2069, %v2664
        %v2723 = vadd.f32 %v2074, %v2669
        %v2724 = vadd.f32 %v2077, %v2672
        %v2725 = vadd.f32 %v2082, %v2677
        %v2726 = vadd.f32 %v2085, %v2680
        %v2727 = vadd.f32 %v2090, %v2685
        %v2728 = vadd.f32 %v2093, %v2688
        %v2729 = vadd.f32 %v2098, %v2693
        %v2730 = vadd.f32 %v2101, %v2696
        %v2731 = vadd.f32 %v2106, %v2701
        %v2732 = vadd.f32 %v2109, %v2704
        %v2733 = vadd.f32 %v2114, %v2709
        %v2734 = vadd.f32 %v2117, %v2712
        %s2735 = scalar_lea.vmem [#allocation2], 40
        %v2736 = vld [vmem:[%s2735 + $0x8] sm:$0x88]
        %v2737 = vld [vmem:[%s2735 + $0x10] sm:$0xff]
        %v2738 = vld [vmem:[%s2735 + $0x18] sm:$0xff]
        %v2739 = vld [vmem:[%s2735 + $0x30] sm:$0x88]
        %v2740 = vld [vmem:[%s2735 + $0x38] sm:$0xff]
        %v2741 = vld [vmem:[%s2735 + $0x40] sm:$0xff]
        %v2742 = vld [vmem:[%s2735 + $0x58] sm:$0x88]
        %v2743 = vld [vmem:[%s2735 + $0x60] sm:$0xff]
        %v2744 = vld [vmem:[%s2735 + $0x68] sm:$0xff]
        %v2745 = vld [vmem:[%s2735 + $0x80] sm:$0x88]
        %v2746 = vld [vmem:[%s2735 + $0x88] sm:$0xff]
        %v2747 = vld [vmem:[%s2735 + $0x90] sm:$0xff]
        %v2748 = vld [vmem:[%s2735 + $0xa8] sm:$0x88]
        %v2749 = vld [vmem:[%s2735 + $0xb0] sm:$0xff]
        %v2750 = vld [vmem:[%s2735 + $0xb8] sm:$0xff]
        %v2751 = vld [vmem:[%s2735 + $0xd0] sm:$0x88]
        %v2752 = vld [vmem:[%s2735 + $0xd8] sm:$0xff]
        %v2753 = vld [vmem:[%s2735 + $0xe0] sm:$0xff]
        %v2754 = vld [vmem:[%s2735 + $0xf8] sm:$0x88]
        %v2755 = vld [vmem:[%s2735 + $0x100] sm:$0xff]
        %v2756 = vld [vmem:[%s2735 + $0x108] sm:$0xff]
        %v2757 = vld [vmem:[%s2735 + $0x120] sm:$0x88]
        %v2758 = vld [vmem:[%s2735 + $0x128] sm:$0xff]
        %v2759 = vld [vmem:[%s2735 + $0x130] sm:$0xff]
        %v2760 = vld [vmem:[%s2735 + $0x148] sm:$0x88]
        %v2761 = vld [vmem:[%s2735 + $0x150] sm:$0xff]
        %v2762 = vld [vmem:[%s2735 + $0x158] sm:$0xff]
        %v2763 = vld [vmem:[%s2735 + $0x170] sm:$0x88]
        %v2764 = vld [vmem:[%s2735 + $0x178] sm:$0xff]
        %v2765 = vld [vmem:[%s2735 + $0x180] sm:$0xff]
        %v2767 = vshrl.u32 %v2736, 16
        %v2769 = vrot.slane %v2767, 7
        %v2770 = vrot.slane %v2769, 4
        %v2772 = vshrl.u32 %v2737, 16
        %v2774 = vrot.slane %v2772, 7
        %v2775 = vshll.u32 %v2737, 16
        %v2777 = vor.u32 %v2774, %v2775
        %v2778 = vsel %vm1236, %v2770, %v2777
        %v2779 = vrot.slane %v2774, 4
        %v2781 = vshrl.u32 %v2738, 16
        %v2783 = vrot.slane %v2781, 7
        %v2784 = vshll.u32 %v2738, 16
        %v2786 = vor.u32 %v2783, %v2784
        %v2787 = vsel %vm1236, %v2779, %v2786
        %v2789 = vshrl.u32 %v2739, 16
        %v2791 = vrot.slane %v2789, 7
        %v2792 = vrot.slane %v2791, 4
        %v2794 = vshrl.u32 %v2740, 16
        %v2796 = vrot.slane %v2794, 7
        %v2797 = vshll.u32 %v2740, 16
        %v2799 = vor.u32 %v2796, %v2797
        %v2800 = vsel %vm1236, %v2792, %v2799
        %v2801 = vrot.slane %v2796, 4
        %v2803 = vshrl.u32 %v2741, 16
        %v2805 = vrot.slane %v2803, 7
        %v2806 = vshll.u32 %v2741, 16
        %v2808 = vor.u32 %v2805, %v2806
        %v2809 = vsel %vm1236, %v2801, %v2808
        %v2811 = vshrl.u32 %v2742, 16
        %v2813 = vrot.slane %v2811, 7
        %v2814 = vrot.slane %v2813, 4
        %v2816 = vshrl.u32 %v2743, 16
        %v2818 = vrot.slane %v2816, 7
        %v2819 = vshll.u32 %v2743, 16
        %v2821 = vor.u32 %v2818, %v2819
        %v2822 = vsel %vm1236, %v2814, %v2821
        %v2823 = vrot.slane %v2818, 4
        %v2825 = vshrl.u32 %v2744, 16
        %v2827 = vrot.slane %v2825, 7
        %v2828 = vshll.u32 %v2744, 16
        %v2830 = vor.u32 %v2827, %v2828
        %v2831 = vsel %vm1236, %v2823, %v2830
        %v2833 = vshrl.u32 %v2745, 16
        %v2835 = vrot.slane %v2833, 7
        %v2836 = vrot.slane %v2835, 4
        %v2838 = vshrl.u32 %v2746, 16
        %v2840 = vrot.slane %v2838, 7
        %v2841 = vshll.u32 %v2746, 16
        %v2843 = vor.u32 %v2840, %v2841
        %v2844 = vsel %vm1236, %v2836, %v2843
        %v2845 = vrot.slane %v2840, 4
        %v2847 = vshrl.u32 %v2747, 16
        %v2849 = vrot.slane %v2847, 7
        %v2850 = vshll.u32 %v2747, 16
        %v2852 = vor.u32 %v2849, %v2850
        %v2853 = vsel %vm1236, %v2845, %v2852
        %v2855 = vshrl.u32 %v2748, 16
        %v2857 = vrot.slane %v2855, 7
        %v2858 = vrot.slane %v2857, 4
        %v2860 = vshrl.u32 %v2749, 16
        %v2862 = vrot.slane %v2860, 7
        %v2863 = vshll.u32 %v2749, 16
        %v2865 = vor.u32 %v2862, %v2863
        %v2866 = vsel %vm1236, %v2858, %v2865
        %v2867 = vrot.slane %v2862, 4
        %v2869 = vshrl.u32 %v2750, 16
        %v2871 = vrot.slane %v2869, 7
        %v2872 = vshll.u32 %v2750, 16
        %v2874 = vor.u32 %v2871, %v2872
        %v2875 = vsel %vm1236, %v2867, %v2874
        %v2877 = vshrl.u32 %v2751, 16
        %v2879 = vrot.slane %v2877, 7
        %v2880 = vrot.slane %v2879, 4
        %v2882 = vshrl.u32 %v2752, 16
        %v2884 = vrot.slane %v2882, 7
        %v2885 = vshll.u32 %v2752, 16
        %v2887 = vor.u32 %v2884, %v2885
        %v2888 = vsel %vm1236, %v2880, %v2887
        %v2889 = vrot.slane %v2884, 4
        %v2891 = vshrl.u32 %v2753, 16
        %v2893 = vrot.slane %v2891, 7
        %v2894 = vshll.u32 %v2753, 16
        %v2896 = vor.u32 %v2893, %v2894
        %v2897 = vsel %vm1236, %v2889, %v2896
        %v2899 = vshrl.u32 %v2754, 16
        %v2901 = vrot.slane %v2899, 7
        %v2902 = vrot.slane %v2901, 4
        %v2904 = vshrl.u32 %v2755, 16
        %v2906 = vrot.slane %v2904, 7
        %v2907 = vshll.u32 %v2755, 16
        %v2909 = vor.u32 %v2906, %v2907
        %v2910 = vsel %vm1236, %v2902, %v2909
        %v2911 = vrot.slane %v2906, 4
        %v2913 = vshrl.u32 %v2756, 16
        %v2915 = vrot.slane %v2913, 7
        %v2916 = vshll.u32 %v2756, 16
        %v2918 = vor.u32 %v2915, %v2916
        %v2919 = vsel %vm1236, %v2911, %v2918
        %v2921 = vshrl.u32 %v2757, 16
        %v2923 = vrot.slane %v2921, 7
        %v2924 = vrot.slane %v2923, 4
        %v2926 = vshrl.u32 %v2758, 16
        %v2928 = vrot.slane %v2926, 7
        %v2929 = vshll.u32 %v2758, 16
        %v2931 = vor.u32 %v2928, %v2929
        %v2932 = vsel %vm1236, %v2924, %v2931
        %v2933 = vrot.slane %v2928, 4
        %v2935 = vshrl.u32 %v2759, 16
        %v2937 = vrot.slane %v2935, 7
        %v2938 = vshll.u32 %v2759, 16
        %v2940 = vor.u32 %v2937, %v2938
        %v2941 = vsel %vm1236, %v2933, %v2940
        %v2943 = vshrl.u32 %v2760, 16
        %v2945 = vrot.slane %v2943, 7
        %v2946 = vrot.slane %v2945, 4
        %v2948 = vshrl.u32 %v2761, 16
        %v2950 = vrot.slane %v2948, 7
        %v2951 = vshll.u32 %v2761, 16
        %v2953 = vor.u32 %v2950, %v2951
        %v2954 = vsel %vm1236, %v2946, %v2953
        %v2955 = vrot.slane %v2950, 4
        %v2957 = vshrl.u32 %v2762, 16
        %v2959 = vrot.slane %v2957, 7
        %v2960 = vshll.u32 %v2762, 16
        %v2962 = vor.u32 %v2959, %v2960
        %v2963 = vsel %vm1236, %v2955, %v2962
        %v2965 = vshrl.u32 %v2763, 16
        %v2967 = vrot.slane %v2965, 7
        %v2968 = vrot.slane %v2967, 4
        %v2970 = vshrl.u32 %v2764, 16
        %v2972 = vrot.slane %v2970, 7
        %v2973 = vshll.u32 %v2764, 16
        %v2975 = vor.u32 %v2972, %v2973
        %v2976 = vsel %vm1236, %v2968, %v2975
        %v2977 = vrot.slane %v2972, 4
        %v2979 = vshrl.u32 %v2765, 16
        %v2981 = vrot.slane %v2979, 7
        %v2982 = vshll.u32 %v2765, 16
        %v2984 = vor.u32 %v2981, %v2982
        %v2985 = vsel %vm1236, %v2977, %v2984
        %s2986 = scalar_lea.vmem %s6, 384
        %v2987 = vld [vmem:[%s2986] sm:$0xf]
        %v2988 = vld [vmem:[%s2986 + $0x4] sm:$0xf]
        %v2989 = vld [vmem:[%s2986 + $0x8] sm:$0xf]
        %v2990 = vld [vmem:[%s2986 + $0xc] sm:$0xf]
        %v2991 = vld [vmem:[%s2986 + $0x10] sm:$0xf]
        %v2992 = vld [vmem:[%s2986 + $0x14] sm:$0xf]
        %v2993 = vld [vmem:[%s2986 + $0x18] sm:$0xf]
        %v2994 = vld [vmem:[%s2986 + $0x1c] sm:$0xf]
        %v2995 = vld [vmem:[%s2986 + $0x20] sm:$0xf]
        %v2996 = vld [vmem:[%s2986 + $0x24] sm:$0xf]
        %v2997 = vld [vmem:[%s2986 + $0x28] sm:$0xf]
        %v2998 = vld [vmem:[%s2986 + $0x2c] sm:$0xf]
        %v2999 = vld [vmem:[%s2986 + $0x30] sm:$0xf]
        %v3000 = vld [vmem:[%s2986 + $0x34] sm:$0xf]
        %v3001 = vld [vmem:[%s2986 + $0x38] sm:$0xf]
        %v3002 = vld [vmem:[%s2986 + $0x3c] sm:$0xf]
        %v3003 = vld [vmem:[%s2986 + $0x40] sm:$0xf]
        %v3004 = vld [vmem:[%s2986 + $0x44] sm:$0xf]
        %v3005 = vld [vmem:[%s2986 + $0x48] sm:$0xf]
        %v3006 = vld [vmem:[%s2986 + $0x4c] sm:$0xf]
        %v3007 = vld [vmem:[%s2986 + $0x50] sm:$0xf]
        %v3008 = vld [vmem:[%s2986 + $0x54] sm:$0xf]
        %v3009 = vld [vmem:[%s2986 + $0x58] sm:$0xf]
        %v3010 = vld [vmem:[%s2986 + $0x5c] sm:$0xf]
        %v3011 = vld [vmem:[%s2986 + $0x60] sm:$0xf]
        %v3012 = vld [vmem:[%s2986 + $0x64] sm:$0xf]
        %v3013 = vld [vmem:[%s2986 + $0x68] sm:$0xf]
        %v3014 = vld [vmem:[%s2986 + $0x6c] sm:$0xf]
        %v3015 = vld [vmem:[%s2986 + $0x70] sm:$0xf]
        %v3016 = vld [vmem:[%s2986 + $0x74] sm:$0xf]
        %v3017 = vld [vmem:[%s2986 + $0x78] sm:$0xf]
        %v3018 = vld [vmem:[%s2986 + $0x7c] sm:$0xf]
        %v3019 = vunpack.c.l.b16 %v2778
        %v3020 = vunpack.c.h.b16 %v2778
        %v3021 = vunpack.c.l.b16 %v2787
        %v3022 = vunpack.c.h.b16 %v2787
        %v3023 = vunpack.c.l.b16 %v2800
        %v3024 = vunpack.c.h.b16 %v2800
        %v3025 = vunpack.c.l.b16 %v2809
        %v3026 = vunpack.c.h.b16 %v2809
        %v3027 = vunpack.c.l.b16 %v2822
        %v3028 = vunpack.c.h.b16 %v2822
        %v3029 = vunpack.c.l.b16 %v2831
        %v3030 = vunpack.c.h.b16 %v2831
        %v3031 = vunpack.c.l.b16 %v2844
        %v3032 = vunpack.c.h.b16 %v2844
        %v3033 = vunpack.c.l.b16 %v2853
        %v3034 = vunpack.c.h.b16 %v2853
        %v3035 = vunpack.c.l.b16 %v2866
        %v3036 = vunpack.c.h.b16 %v2866
        %v3037 = vunpack.c.l.b16 %v2875
        %v3038 = vunpack.c.h.b16 %v2875
        %v3039 = vunpack.c.l.b16 %v2888
        %v3040 = vunpack.c.h.b16 %v2888
        %v3041 = vunpack.c.l.b16 %v2897
        %v3042 = vunpack.c.h.b16 %v2897
        %v3043 = vunpack.c.l.b16 %v2910
        %v3044 = vunpack.c.h.b16 %v2910
        %v3045 = vunpack.c.l.b16 %v2919
        %v3046 = vunpack.c.h.b16 %v2919
        %v3047 = vunpack.c.l.b16 %v2932
        %v3048 = vunpack.c.h.b16 %v2932
        %v3049 = vunpack.c.l.b16 %v2941
        %v3050 = vunpack.c.h.b16 %v2941
        %v3051 = vunpack.c.l.b16 %v2954
        %v3052 = vunpack.c.h.b16 %v2954
        %v3053 = vunpack.c.l.b16 %v2963
        %v3054 = vunpack.c.h.b16 %v2963
        %v3055 = vunpack.c.l.b16 %v2976
        %v3056 = vunpack.c.h.b16 %v2976
        %v3057 = vunpack.c.l.b16 %v2985
        %v3058 = vunpack.c.h.b16 %v2985
        %v3059 = vpack.c.b16 %v3021, %v3019
        %v3060 = vpack.c.b16 %v3022, %v3020
        %v3061 = vpack.c.b16 %v3025, %v3023
        %v3062 = vpack.c.b16 %v3026, %v3024
        %v3063 = vpack.c.b16 %v3029, %v3027
        %v3064 = vpack.c.b16 %v3030, %v3028
        %v3065 = vpack.c.b16 %v3033, %v3031
        %v3066 = vpack.c.b16 %v3034, %v3032
        %v3067 = vpack.c.b16 %v3037, %v3035
        %v3068 = vpack.c.b16 %v3038, %v3036
        %v3069 = vpack.c.b16 %v3041, %v3039
        %v3070 = vpack.c.b16 %v3042, %v3040
        %v3071 = vpack.c.b16 %v3045, %v3043
        %v3072 = vpack.c.b16 %v3046, %v3044
        %v3073 = vpack.c.b16 %v3049, %v3047
        %v3074 = vpack.c.b16 %v3050, %v3048
        %v3075 = vpack.c.b16 %v3053, %v3051
        %v3076 = vpack.c.b16 %v3054, %v3052
        %v3077 = vpack.c.b16 %v3057, %v3055
        %v3078 = vpack.c.b16 %v3058, %v3056
        %v3131 = vunpack.c.l.b16 %v2987
        %v3132 = vunpack.c.l.b16 %v2988
        %v3133 = vunpack.c.l.b16 %v2989
        %v3134 = vunpack.c.l.b16 %v2990
        %v3135 = vunpack.c.l.b16 %v2991
        %v3136 = vunpack.c.l.b16 %v2992
        %v3137 = vunpack.c.l.b16 %v2993
        %v3138 = vunpack.c.l.b16 %v2994
        %v3139 = vunpack.c.l.b16 %v2995
        %v3140 = vunpack.c.l.b16 %v2996
        %v3141 = vunpack.c.l.b16 %v2997
        %v3142 = vunpack.c.l.b16 %v2998
        %v3143 = vunpack.c.l.b16 %v2999
        %v3144 = vunpack.c.l.b16 %v3000
        %v3145 = vunpack.c.l.b16 %v3001
        %v3146 = vunpack.c.l.b16 %v3002
        %v3147 = vunpack.c.l.b16 %v3003
        %v3148 = vunpack.c.l.b16 %v3004
        %v3149 = vunpack.c.l.b16 %v3005
        %v3150 = vunpack.c.l.b16 %v3006
        %v3151 = vunpack.c.l.b16 %v3007
        %v3152 = vunpack.c.l.b16 %v3008
        %v3153 = vunpack.c.l.b16 %v3009
        %v3154 = vunpack.c.l.b16 %v3010
        %v3155 = vunpack.c.l.b16 %v3011
        %v3156 = vunpack.c.l.b16 %v3012
        %v3157 = vunpack.c.l.b16 %v3013
        %v3158 = vunpack.c.l.b16 %v3014
        %v3159 = vunpack.c.l.b16 %v3015
        %v3160 = vunpack.c.l.b16 %v3016
        %v3161 = vunpack.c.l.b16 %v3017
        %v3162 = vunpack.c.l.b16 %v3018
        %v3163 = vpack.c.b16 %v3132, %v3131
        %v3164 = vpack.c.b16 %v3134, %v3133
        %v3165 = vpack.c.b16 %v3136, %v3135
        %v3166 = vpack.c.b16 %v3138, %v3137
        %v3167 = vpack.c.b16 %v3140, %v3139
        %v3168 = vpack.c.b16 %v3142, %v3141
        %v3169 = vpack.c.b16 %v3144, %v3143
        %v3170 = vpack.c.b16 %v3146, %v3145
        %v3171 = vpack.c.b16 %v3148, %v3147
        %v3172 = vpack.c.b16 %v3150, %v3149
        %v3173 = vpack.c.b16 %v3152, %v3151
        %v3174 = vpack.c.b16 %v3154, %v3153
        %v3175 = vpack.c.b16 %v3156, %v3155
        %v3176 = vpack.c.b16 %v3158, %v3157
        %v3177 = vpack.c.b16 %v3160, %v3159
        %v3178 = vpack.c.b16 %v3162, %v3161
        %3195 = vmatprep.subr.bf16.mxu0 0
        %3196 = vmatpush1.bf16.msra.mxu0 %v3163
        %3197 = vmatprep.subr.bf16.mxu0 0
        %3198 = vmatpush1.bf16.msra.mxu0 %v3164
        %3199 = vmatprep.subr.bf16.mxu0 0
        %3200 = vmatpush1.bf16.msra.mxu0 %v3165
        %3201 = vmatprep.subr.bf16.mxu0 0
        %3202 = vmatpush1.bf16.msra.mxu0 %v3166
        %3203 = vmatprep.subr.bf16.mxu0 0
        %3204 = vmatpush1.bf16.msra.mxu0 %v3167
        %3205 = vmatprep.subr.bf16.mxu0 0
        %3206 = vmatpush1.bf16.msra.mxu0 %v3168
        %3207 = vmatprep.subr.bf16.mxu0 0
        %3208 = vmatpush1.bf16.msra.mxu0 %v3169
        %3209 = vmatprep.subr.bf16.mxu0 0
        %3210 = vmatpush1.bf16.msra.mxu0 %v3170
        %3211 = vmatprep.subr.bf16.mxu0 0
        %3212 = vmatpush1.bf16.msra.mxu0 %v3171
        %3213 = vmatprep.subr.bf16.mxu0 0
        %3214 = vmatpush1.bf16.msra.mxu0 %v3172
        %3215 = vmatprep.subr.bf16.mxu0 0
        %3216 = vmatpush1.bf16.msra.mxu0 %v3173
        %3217 = vmatprep.subr.bf16.mxu0 0
        %3218 = vmatpush1.bf16.msra.mxu0 %v3174
        %3219 = vmatprep.subr.bf16.mxu0 0
        %3220 = vmatpush1.bf16.msra.mxu0 %v3175
        %3221 = vmatprep.subr.bf16.mxu0 0
        %3222 = vmatpush1.bf16.msra.mxu0 %v3176
        %3223 = vmatprep.subr.bf16.mxu0 0
        %3224 = vmatpush1.bf16.msra.mxu0 %v3177
        %3225 = vmatprep.subr.bf16.mxu0 0
        %3226 = vmatpush1.bf16.msra.mxu0 %v3178
        %3227 = vmatprep.mubr.bf16.mxu0 %v3060
        %3228 = vmatmul.mubr.bf16.gmra.mrb[0].mxu0 %v3059
        %v3229 = vpop.f32.mrb[0].mxu0
        %v3230 = vadd.f32 0.0, %v3229
        %v3231 = vpop.f32.mrb[0].mxu0
        %v3232 = vpop.f32.mrb[0].mxu0
        %v3233 = vadd.f32 0.0, %v3232
        %v3234 = vpop.f32.mrb[0].mxu0
        %3235 = vmatprep.mubr.bf16.mxu0 %v3062
        %3236 = vmatmul.mubr.bf16.gmra.mrb[0].mxu0 %v3061
        %v3237 = vpop.f32.mrb[0].mxu0
        %v3238 = vadd.f32 0.0, %v3237
        %v3239 = vpop.f32.mrb[0].mxu0
        %v3240 = vpop.f32.mrb[0].mxu0
        %v3241 = vadd.f32 0.0, %v3240
        %v3242 = vpop.f32.mrb[0].mxu0
        %3243 = vmatprep.mubr.bf16.mxu0 %v3064
        %3244 = vmatmul.mubr.bf16.gmra.mrb[0].mxu0 %v3063
        %v3245 = vpop.f32.mrb[0].mxu0
        %v3246 = vadd.f32 0.0, %v3245
        %v3247 = vpop.f32.mrb[0].mxu0
        %v3248 = vpop.f32.mrb[0].mxu0
        %v3249 = vadd.f32 0.0, %v3248
        %v3250 = vpop.f32.mrb[0].mxu0
        %3251 = vmatprep.mubr.bf16.mxu0 %v3066
        %3252 = vmatmul.mubr.bf16.gmra.mrb[0].mxu0 %v3065
        %v3253 = vpop.f32.mrb[0].mxu0
        %v3254 = vadd.f32 0.0, %v3253
        %v3255 = vpop.f32.mrb[0].mxu0
        %v3256 = vpop.f32.mrb[0].mxu0
        %v3257 = vadd.f32 0.0, %v3256
        %v3258 = vpop.f32.mrb[0].mxu0
        %3259 = vmatprep.mubr.bf16.mxu0 %v3068
        %3260 = vmatmul.mubr.bf16.gmra.mrb[0].mxu0 %v3067
        %v3261 = vpop.f32.mrb[0].mxu0
        %v3262 = vadd.f32 0.0, %v3261
        %v3263 = vpop.f32.mrb[0].mxu0
        %v3264 = vpop.f32.mrb[0].mxu0
        %v3265 = vadd.f32 0.0, %v3264
        %v3266 = vpop.f32.mrb[0].mxu0
        %3267 = vmatprep.mubr.bf16.mxu0 %v3070
        %3268 = vmatmul.mubr.bf16.gmra.mrb[0].mxu0 %v3069
        %v3269 = vpop.f32.mrb[0].mxu0
        %v3270 = vadd.f32 0.0, %v3269
        %v3271 = vpop.f32.mrb[0].mxu0
        %v3272 = vpop.f32.mrb[0].mxu0
        %v3273 = vadd.f32 0.0, %v3272
        %v3274 = vpop.f32.mrb[0].mxu0
        %3275 = vmatprep.mubr.bf16.mxu0 %v3072
        %3276 = vmatmul.mubr.bf16.gmra.mrb[0].mxu0 %v3071
        %v3277 = vpop.f32.mrb[0].mxu0
        %v3278 = vadd.f32 0.0, %v3277
        %v3279 = vpop.f32.mrb[0].mxu0
        %v3280 = vpop.f32.mrb[0].mxu0
        %v3281 = vadd.f32 0.0, %v3280
        %v3282 = vpop.f32.mrb[0].mxu0
        %3283 = vmatprep.mubr.bf16.mxu0 %v3074
        %3284 = vmatmul.mubr.bf16.gmra.mrb[0].mxu0 %v3073
        %v3285 = vpop.f32.mrb[0].mxu0
        %v3286 = vadd.f32 0.0, %v3285
        %v3287 = vpop.f32.mrb[0].mxu0
        %v3288 = vpop.f32.mrb[0].mxu0
        %v3289 = vadd.f32 0.0, %v3288
        %v3290 = vpop.f32.mrb[0].mxu0
        %3291 = vmatprep.mubr.bf16.mxu0 %v3076
        %3292 = vmatmul.mubr.bf16.gmra.mrb[0].mxu0 %v3075
        %v3293 = vpop.f32.mrb[0].mxu0
        %v3294 = vadd.f32 0.0, %v3293
        %v3295 = vpop.f32.mrb[0].mxu0
        %v3296 = vpop.f32.mrb[0].mxu0
        %v3297 = vadd.f32 0.0, %v3296
        %v3298 = vpop.f32.mrb[0].mxu0
        %3299 = vmatprep.mubr.bf16.mxu0 %v3078
        %3300 = vmatmul.mubr.bf16.gmra.mrb[0].mxu0 %v3077
        %v3301 = vpop.f32.mrb[0].mxu0
        %v3302 = vadd.f32 0.0, %v3301
        %v3303 = vpop.f32.mrb[0].mxu0
        %v3304 = vpop.f32.mrb[0].mxu0
        %v3305 = vadd.f32 0.0, %v3304
        %v3306 = vpop.f32.mrb[0].mxu0
        %3307 = vdwg.mxu0
        %v3308 = vadd.f32 %v2715, %v3230
        %v3309 = vadd.f32 %v2716, %v3233
        %v3310 = vadd.f32 %v2717, %v3238
        %v3311 = vadd.f32 %v2718, %v3241
        %v3312 = vadd.f32 %v2719, %v3246
        %v3313 = vadd.f32 %v2720, %v3249
        %v3314 = vadd.f32 %v2721, %v3254
        %v3315 = vadd.f32 %v2722, %v3257
        %v3316 = vadd.f32 %v2723, %v3262
        %v3317 = vadd.f32 %v2724, %v3265
        %v3318 = vadd.f32 %v2725, %v3270
        %v3319 = vadd.f32 %v2726, %v3273
        %v3320 = vadd.f32 %v2727, %v3278
        %v3321 = vadd.f32 %v2728, %v3281
        %v3322 = vadd.f32 %v2729, %v3286
        %v3323 = vadd.f32 %v2730, %v3289
        %v3324 = vadd.f32 %v2731, %v3294
        %v3325 = vadd.f32 %v2732, %v3297
        %v3326 = vadd.f32 %v2733, %v3302
        %v3327 = vadd.f32 %v2734, %v3305
        %s3328 = scalar_lea.vmem %s6, 512
        %v3329 = vld [vmem:[%s3328] sm:$0xf]
        %v3330 = vld [vmem:[%s3328 + $0x4] sm:$0xf]
        %v3331 = vld [vmem:[%s3328 + $0x8] sm:$0xf]
        %v3332 = vld [vmem:[%s3328 + $0xc] sm:$0xf]
        %v3333 = vld [vmem:[%s3328 + $0x10] sm:$0xf]
        %v3334 = vld [vmem:[%s3328 + $0x14] sm:$0xf]
        %v3335 = vld [vmem:[%s3328 + $0x18] sm:$0xf]
        %v3336 = vld [vmem:[%s3328 + $0x1c] sm:$0xf]
        %v3337 = vld [vmem:[%s3328 + $0x20] sm:$0xf]
        %v3338 = vld [vmem:[%s3328 + $0x24] sm:$0xf]
        %v3339 = vld [vmem:[%s3328 + $0x28] sm:$0xf]
        %v3340 = vld [vmem:[%s3328 + $0x2c] sm:$0xf]
        %v3341 = vld [vmem:[%s3328 + $0x30] sm:$0xf]
        %v3342 = vld [vmem:[%s3328 + $0x34] sm:$0xf]
        %v3343 = vld [vmem:[%s3328 + $0x38] sm:$0xf]
        %v3344 = vld [vmem:[%s3328 + $0x3c] sm:$0xf]
        %v3345 = vld [vmem:[%s3328 + $0x40] sm:$0xf]
        %v3346 = vld [vmem:[%s3328 + $0x44] sm:$0xf]
        %v3347 = vld [vmem:[%s3328 + $0x48] sm:$0xf]
        %v3348 = vld [vmem:[%s3328 + $0x4c] sm:$0xf]
        %v3349 = vld [vmem:[%s3328 + $0x50] sm:$0xf]
        %v3350 = vld [vmem:[%s3328 + $0x54] sm:$0xf]
        %v3351 = vld [vmem:[%s3328 + $0x58] sm:$0xf]
        %v3352 = vld [vmem:[%s3328 + $0x5c] sm:$0xf]
        %v3353 = vld [vmem:[%s3328 + $0x60] sm:$0xf]
        %v3354 = vld [vmem:[%s3328 + $0x64] sm:$0xf]
        %v3355 = vld [vmem:[%s3328 + $0x68] sm:$0xf]
        %v3356 = vld [vmem:[%s3328 + $0x6c] sm:$0xf]
        %v3357 = vld [vmem:[%s3328 + $0x70] sm:$0xf]
        %v3358 = vld [vmem:[%s3328 + $0x74] sm:$0xf]
        %v3359 = vld [vmem:[%s3328 + $0x78] sm:$0xf]
        %v3360 = vld [vmem:[%s3328 + $0x7c] sm:$0xf]
        %v3381 = vunpack.c.l.b16 %v2737
        %v3382 = vunpack.c.h.b16 %v2737
        %v3383 = vunpack.c.l.b16 %v2738
        %v3384 = vunpack.c.h.b16 %v2738
        %v3385 = vunpack.c.l.b16 %v2740
        %v3386 = vunpack.c.h.b16 %v2740
        %v3387 = vunpack.c.l.b16 %v2741
        %v3388 = vunpack.c.h.b16 %v2741
        %v3389 = vunpack.c.l.b16 %v2743
        %v3390 = vunpack.c.h.b16 %v2743
        %v3391 = vunpack.c.l.b16 %v2744
        %v3392 = vunpack.c.h.b16 %v2744
        %v3393 = vunpack.c.l.b16 %v2746
        %v3394 = vunpack.c.h.b16 %v2746
        %v3395 = vunpack.c.l.b16 %v2747
        %v3396 = vunpack.c.h.b16 %v2747
        %v3397 = vunpack.c.l.b16 %v2749
        %v3398 = vunpack.c.h.b16 %v2749
        %v3399 = vunpack.c.l.b16 %v2750
        %v3400 = vunpack.c.h.b16 %v2750
        %v3401 = vunpack.c.l.b16 %v2752
        %v3402 = vunpack.c.h.b16 %v2752
        %v3403 = vunpack.c.l.b16 %v2753
        %v3404 = vunpack.c.h.b16 %v2753
        %v3405 = vunpack.c.l.b16 %v2755
        %v3406 = vunpack.c.h.b16 %v2755
        %v3407 = vunpack.c.l.b16 %v2756
        %v3408 = vunpack.c.h.b16 %v2756
        %v3409 = vunpack.c.l.b16 %v2758
        %v3410 = vunpack.c.h.b16 %v2758
        %v3411 = vunpack.c.l.b16 %v2759
        %v3412 = vunpack.c.h.b16 %v2759
        %v3413 = vunpack.c.l.b16 %v2761
        %v3414 = vunpack.c.h.b16 %v2761
        %v3415 = vunpack.c.l.b16 %v2762
        %v3416 = vunpack.c.h.b16 %v2762
        %v3417 = vunpack.c.l.b16 %v2764
        %v3418 = vunpack.c.h.b16 %v2764
        %v3419 = vunpack.c.l.b16 %v2765
        %v3420 = vunpack.c.h.b16 %v2765
        %v3421 = vpack.c.b16 %v3383, %v3381
        %v3422 = vpack.c.b16 %v3384, %v3382
        %v3423 = vpack.c.b16 %v3387, %v3385
        %v3424 = vpack.c.b16 %v3388, %v3386
        %v3425 = vpack.c.b16 %v3391, %v3389
        %v3426 = vpack.c.b16 %v3392, %v3390
        %v3427 = vpack.c.b16 %v3395, %v3393
        %v3428 = vpack.c.b16 %v3396, %v3394
        %v3429 = vpack.c.b16 %v3399, %v3397
        %v3430 = vpack.c.b16 %v3400, %v3398
        %v3431 = vpack.c.b16 %v3403, %v3401
        %v3432 = vpack.c.b16 %v3404, %v3402
        %v3433 = vpack.c.b16 %v3407, %v3405
        %v3434 = vpack.c.b16 %v3408, %v3406
        %v3435 = vpack.c.b16 %v3411, %v3409
        %v3436 = vpack.c.b16 %v3412, %v3410
        %v3437 = vpack.c.b16 %v3415, %v3413
        %v3438 = vpack.c.b16 %v3416, %v3414
        %v3439 = vpack.c.b16 %v3419, %v3417
        %v3440 = vpack.c.b16 %v3420, %v3418
        %v3493 = vunpack.c.l.b16 %v3329
        %v3494 = vunpack.c.l.b16 %v3330
        %v3495 = vunpack.c.l.b16 %v3331
        %v3496 = vunpack.c.l.b16 %v3332
        %v3497 = vunpack.c.l.b16 %v3333
        %v3498 = vunpack.c.l.b16 %v3334
        %v3499 = vunpack.c.l.b16 %v3335
        %v3500 = vunpack.c.l.b16 %v3336
        %v3501 = vunpack.c.l.b16 %v3337
        %v3502 = vunpack.c.l.b16 %v3338
        %v3503 = vunpack.c.l.b16 %v3339
        %v3504 = vunpack.c.l.b16 %v3340
        %v3505 = vunpack.c.l.b16 %v3341
        %v3506 = vunpack.c.l.b16 %v3342
        %v3507 = vunpack.c.l.b16 %v3343
        %v3508 = vunpack.c.l.b16 %v3344
        %v3509 = vunpack.c.l.b16 %v3345
        %v3510 = vunpack.c.l.b16 %v3346
        %v3511 = vunpack.c.l.b16 %v3347
        %v3512 = vunpack.c.l.b16 %v3348
        %v3513 = vunpack.c.l.b16 %v3349
        %v3514 = vunpack.c.l.b16 %v3350
        %v3515 = vunpack.c.l.b16 %v3351
        %v3516 = vunpack.c.l.b16 %v3352
        %v3517 = vunpack.c.l.b16 %v3353
        %v3518 = vunpack.c.l.b16 %v3354
        %v3519 = vunpack.c.l.b16 %v3355
        %v3520 = vunpack.c.l.b16 %v3356
        %v3521 = vunpack.c.l.b16 %v3357
        %v3522 = vunpack.c.l.b16 %v3358
        %v3523 = vunpack.c.l.b16 %v3359
        %v3524 = vunpack.c.l.b16 %v3360
        %v3525 = vpack.c.b16 %v3494, %v3493
        %v3526 = vpack.c.b16 %v3496, %v3495
        %v3527 = vpack.c.b16 %v3498, %v3497
        %v3528 = vpack.c.b16 %v3500, %v3499
        %v3529 = vpack.c.b16 %v3502, %v3501
        %v3530 = vpack.c.b16 %v3504, %v3503
        %v3531 = vpack.c.b16 %v3506, %v3505
        %v3532 = vpack.c.b16 %v3508, %v3507
        %v3533 = vpack.c.b16 %v3510, %v3509
        %v3534 = vpack.c.b16 %v3512, %v3511
        %v3535 = vpack.c.b16 %v3514, %v3513
        %v3536 = vpack.c.b16 %v3516, %v3515
        %v3537 = vpack.c.b16 %v3518, %v3517
        %v3538 = vpack.c.b16 %v3520, %v3519
        %v3539 = vpack.c.b16 %v3522, %v3521
        %v3540 = vpack.c.b16 %v3524, %v3523
        %3557 = vmatprep.subr.bf16.mxu0 0
        %3558 = vmatpush1.bf16.msra.mxu0 %v3525
        %3559 = vmatprep.subr.bf16.mxu0 0
        %3560 = vmatpush1.bf16.msra.mxu0 %v3526
        %3561 = vmatprep.subr.bf16.mxu0 0
        %3562 = vmatpush1.bf16.msra.mxu0 %v3527
        %3563 = vmatprep.subr.bf16.mxu0 0
        %3564 = vmatpush1.bf16.msra.mxu0 %v3528
        %3565 = vmatprep.subr.bf16.mxu0 0
        %3566 = vmatpush1.bf16.msra.mxu0 %v3529
        %3567 = vmatprep.subr.bf16.mxu0 0
        %3568 = vmatpush1.bf16.msra.mxu0 %v3530
        %3569 = vmatprep.subr.bf16.mxu0 0
        %3570 = vmatpush1.bf16.msra.mxu0 %v3531
        %3571 = vmatprep.subr.bf16.mxu0 0
        %3572 = vmatpush1.bf16.msra.mxu0 %v3532
        %3573 = vmatprep.subr.bf16.mxu0 0
        %3574 = vmatpush1.bf16.msra.mxu0 %v3533
        %3575 = vmatprep.subr.bf16.mxu0 0
        %3576 = vmatpush1.bf16.msra.mxu0 %v3534
        %3577 = vmatprep.subr.bf16.mxu0 0
        %3578 = vmatpush1.bf16.msra.mxu0 %v3535
        %3579 = vmatprep.subr.bf16.mxu0 0
        %3580 = vmatpush1.bf16.msra.mxu0 %v3536
        %3581 = vmatprep.subr.bf16.mxu0 0
        %3582 = vmatpush1.bf16.msra.mxu0 %v3537
        %3583 = vmatprep.subr.bf16.mxu0 0
        %3584 = vmatpush1.bf16.msra.mxu0 %v3538
        %3585 = vmatprep.subr.bf16.mxu0 0
        %3586 = vmatpush1.bf16.msra.mxu0 %v3539
        %3587 = vmatprep.subr.bf16.mxu0 0
        %3588 = vmatpush1.bf16.msra.mxu0 %v3540
        %3589 = vmatprep.mubr.bf16.mxu0 %v3422
        %3590 = vmatmul.mubr.bf16.gmra.mrb[0].mxu0 %v3421
        %v3591 = vpop.f32.mrb[0].mxu0
        %v3592 = vadd.f32 0.0, %v3591
        %v3593 = vpop.f32.mrb[0].mxu0
        %v3594 = vpop.f32.mrb[0].mxu0
        %v3595 = vadd.f32 0.0, %v3594
        %v3596 = vpop.f32.mrb[0].mxu0
        %3597 = vmatprep.mubr.bf16.mxu0 %v3424
        %3598 = vmatmul.mubr.bf16.gmra.mrb[0].mxu0 %v3423
        %v3599 = vpop.f32.mrb[0].mxu0
        %v3600 = vadd.f32 0.0, %v3599
        %v3601 = vpop.f32.mrb[0].mxu0
        %v3602 = vpop.f32.mrb[0].mxu0
        %v3603 = vadd.f32 0.0, %v3602
        %v3604 = vpop.f32.mrb[0].mxu0
        %3605 = vmatprep.mubr.bf16.mxu0 %v3426
        %3606 = vmatmul.mubr.bf16.gmra.mrb[0].mxu0 %v3425
        %v3607 = vpop.f32.mrb[0].mxu0
        %v3608 = vadd.f32 0.0, %v3607
        %v3609 = vpop.f32.mrb[0].mxu0
        %v3610 = vpop.f32.mrb[0].mxu0
        %v3611 = vadd.f32 0.0, %v3610
        %v3612 = vpop.f32.mrb[0].mxu0
        %3613 = vmatprep.mubr.bf16.mxu0 %v3428
        %3614 = vmatmul.mubr.bf16.gmra.mrb[0].mxu0 %v3427
        %v3615 = vpop.f32.mrb[0].mxu0
        %v3616 = vadd.f32 0.0, %v3615
        %v3617 = vpop.f32.mrb[0].mxu0
        %v3618 = vpop.f32.mrb[0].mxu0
        %v3619 = vadd.f32 0.0, %v3618
        %v3620 = vpop.f32.mrb[0].mxu0
        %3621 = vmatprep.mubr.bf16.mxu0 %v3430
        %3622 = vmatmul.mubr.bf16.gmra.mrb[0].mxu0 %v3429
        %v3623 = vpop.f32.mrb[0].mxu0
        %v3624 = vadd.f32 0.0, %v3623
        %v3625 = vpop.f32.mrb[0].mxu0
        %v3626 = vpop.f32.mrb[0].mxu0
        %v3627 = vadd.f32 0.0, %v3626
        %v3628 = vpop.f32.mrb[0].mxu0
        %3629 = vmatprep.mubr.bf16.mxu0 %v3432
        %3630 = vmatmul.mubr.bf16.gmra.mrb[0].mxu0 %v3431
        %v3631 = vpop.f32.mrb[0].mxu0
        %v3632 = vadd.f32 0.0, %v3631
        %v3633 = vpop.f32.mrb[0].mxu0
        %v3634 = vpop.f32.mrb[0].mxu0
        %v3635 = vadd.f32 0.0, %v3634
        %v3636 = vpop.f32.mrb[0].mxu0
        %3637 = vmatprep.mubr.bf16.mxu0 %v3434
        %3638 = vmatmul.mubr.bf16.gmra.mrb[0].mxu0 %v3433
        %v3639 = vpop.f32.mrb[0].mxu0
        %v3640 = vadd.f32 0.0, %v3639
        %v3641 = vpop.f32.mrb[0].mxu0
        %v3642 = vpop.f32.mrb[0].mxu0
        %v3643 = vadd.f32 0.0, %v3642
        %v3644 = vpop.f32.mrb[0].mxu0
        %3645 = vmatprep.mubr.bf16.mxu0 %v3436
        %3646 = vmatmul.mubr.bf16.gmra.mrb[0].mxu0 %v3435
        %v3647 = vpop.f32.mrb[0].mxu0
        %v3648 = vadd.f32 0.0, %v3647
        %v3649 = vpop.f32.mrb[0].mxu0
        %v3650 = vpop.f32.mrb[0].mxu0
        %v3651 = vadd.f32 0.0, %v3650
        %v3652 = vpop.f32.mrb[0].mxu0
        %3653 = vmatprep.mubr.bf16.mxu0 %v3438
        %3654 = vmatmul.mubr.bf16.gmra.mrb[0].mxu0 %v3437
        %v3655 = vpop.f32.mrb[0].mxu0
        %v3656 = vadd.f32 0.0, %v3655
        %v3657 = vpop.f32.mrb[0].mxu0
        %v3658 = vpop.f32.mrb[0].mxu0
        %v3659 = vadd.f32 0.0, %v3658
        %v3660 = vpop.f32.mrb[0].mxu0
        %3661 = vmatprep.mubr.bf16.mxu0 %v3440
        %3662 = vmatmul.mubr.bf16.gmra.mrb[0].mxu0 %v3439
        %v3663 = vpop.f32.mrb[0].mxu0
        %v3664 = vadd.f32 0.0, %v3663
        %v3665 = vpop.f32.mrb[0].mxu0
        %v3666 = vpop.f32.mrb[0].mxu0
        %v3667 = vadd.f32 0.0, %v3666
        %v3668 = vpop.f32.mrb[0].mxu0
        %3669 = vdwg.mxu0
        %v3670 = vadd.f32 %v3308, %v3592
        %v3671 = vadd.f32 %v3309, %v3595
        %v3672 = vadd.f32 %v3310, %v3600
        %v3673 = vadd.f32 %v3311, %v3603
        %v3674 = vadd.f32 %v3312, %v3608
        %v3675 = vadd.f32 %v3313, %v3611
        %v3676 = vadd.f32 %v3314, %v3616
        %v3677 = vadd.f32 %v3315, %v3619
        %v3678 = vadd.f32 %v3316, %v3624
        %v3679 = vadd.f32 %v3317, %v3627
        %v3680 = vadd.f32 %v3318, %v3632
        %v3681 = vadd.f32 %v3319, %v3635
        %v3682 = vadd.f32 %v3320, %v3640
        %v3683 = vadd.f32 %v3321, %v3643
        %v3684 = vadd.f32 %v3322, %v3648
        %v3685 = vadd.f32 %v3323, %v3651
        %v3686 = vadd.f32 %v3324, %v3656
        %v3687 = vadd.f32 %v3325, %v3659
        %v3688 = vadd.f32 %v3326, %v3664
        %v3689 = vadd.f32 %v3327, %v3667
        %v3690 = vld [vmem:[%s2735 + $0x10] sm:$0xff]
        %v3691 = vld [vmem:[%s2735 + $0x18] sm:$0xff]
        %v3692 = vld [vmem:[%s2735 + $0x20] sm:$0x11]
        %v3693 = vld [vmem:[%s2735 + $0x38] sm:$0xff]
        %v3694 = vld [vmem:[%s2735 + $0x40] sm:$0xff]
        %v3695 = vld [vmem:[%s2735 + $0x48] sm:$0x11]
        %v3696 = vld [vmem:[%s2735 + $0x60] sm:$0xff]
        %v3697 = vld [vmem:[%s2735 + $0x68] sm:$0xff]
        %v3698 = vld [vmem:[%s2735 + $0x70] sm:$0x11]
        %v3699 = vld [vmem:[%s2735 + $0x88] sm:$0xff]
        %v3700 = vld [vmem:[%s2735 + $0x90] sm:$0xff]
        %v3701 = vld [vmem:[%s2735 + $0x98] sm:$0x11]
        %v3702 = vld [vmem:[%s2735 + $0xb0] sm:$0xff]
        %v3703 = vld [vmem:[%s2735 + $0xb8] sm:$0xff]
        %v3704 = vld [vmem:[%s2735 + $0xc0] sm:$0x11]
        %v3705 = vld [vmem:[%s2735 + $0xd8] sm:$0xff]
        %v3706 = vld [vmem:[%s2735 + $0xe0] sm:$0xff]
        %v3707 = vld [vmem:[%s2735 + $0xe8] sm:$0x11]
        %v3708 = vld [vmem:[%s2735 + $0x100] sm:$0xff]
        %v3709 = vld [vmem:[%s2735 + $0x108] sm:$0xff]
        %v3710 = vld [vmem:[%s2735 + $0x110] sm:$0x11]
        %v3711 = vld [vmem:[%s2735 + $0x128] sm:$0xff]
        %v3712 = vld [vmem:[%s2735 + $0x130] sm:$0xff]
        %v3713 = vld [vmem:[%s2735 + $0x138] sm:$0x11]
        %v3714 = vld [vmem:[%s2735 + $0x150] sm:$0xff]
        %v3715 = vld [vmem:[%s2735 + $0x158] sm:$0xff]
        %v3716 = vld [vmem:[%s2735 + $0x160] sm:$0x11]
        %v3717 = vld [vmem:[%s2735 + $0x178] sm:$0xff]
        %v3718 = vld [vmem:[%s2735 + $0x180] sm:$0xff]
        %v3719 = vld [vmem:[%s2735 + $0x188] sm:$0x11]
        %v3721 = vshrl.u32 %v3690, 16
        %v3723 = vrot.slane %v3721, 4
        %v3724 = vshll.u32 %v3690, 16
        %v3726 = vrot.slane %v3724, 5
        %v3727 = vor.u32 %v3723, %v3726
        %v3728 = vrot.slane %v3727, 4
        %v3730 = vshll.u32 %v3691, 16
        %v3732 = vrot.slane %v3730, 5
        %v3733 = vsel %vm2152, %v3728, %v3732
        %v3734 = vshrl.u32 %v3691, 16
        %v3736 = vrot.slane %v3734, 4
        %v3737 = vor.u32 %v3736, %v3732
        %v3738 = vrot.slane %v3737, 4
        %v3740 = vshll.u32 %v3692, 16
        %v3742 = vrot.slane %v3740, 5
        %v3743 = vsel %vm2152, %v3738, %v3742
        %v3745 = vshrl.u32 %v3693, 16
        %v3747 = vrot.slane %v3745, 4
        %v3748 = vshll.u32 %v3693, 16
        %v3750 = vrot.slane %v3748, 5
        %v3751 = vor.u32 %v3747, %v3750
        %v3752 = vrot.slane %v3751, 4
        %v3754 = vshll.u32 %v3694, 16
        %v3756 = vrot.slane %v3754, 5
        %v3757 = vsel %vm2152, %v3752, %v3756
        %v3758 = vshrl.u32 %v3694, 16
        %v3760 = vrot.slane %v3758, 4
        %v3761 = vor.u32 %v3760, %v3756
        %v3762 = vrot.slane %v3761, 4
        %v3764 = vshll.u32 %v3695, 16
        %v3766 = vrot.slane %v3764, 5
        %v3767 = vsel %vm2152, %v3762, %v3766
        %v3769 = vshrl.u32 %v3696, 16
        %v3771 = vrot.slane %v3769, 4
        %v3772 = vshll.u32 %v3696, 16
        %v3774 = vrot.slane %v3772, 5
        %v3775 = vor.u32 %v3771, %v3774
        %v3776 = vrot.slane %v3775, 4
        %v3778 = vshll.u32 %v3697, 16
        %v3780 = vrot.slane %v3778, 5
        %v3781 = vsel %vm2152, %v3776, %v3780
        %v3782 = vshrl.u32 %v3697, 16
        %v3784 = vrot.slane %v3782, 4
        %v3785 = vor.u32 %v3784, %v3780
        %v3786 = vrot.slane %v3785, 4
        %v3788 = vshll.u32 %v3698, 16
        %v3790 = vrot.slane %v3788, 5
        %v3791 = vsel %vm2152, %v3786, %v3790
        %v3793 = vshrl.u32 %v3699, 16
        %v3795 = vrot.slane %v3793, 4
        %v3796 = vshll.u32 %v3699, 16
        %v3798 = vrot.slane %v3796, 5
        %v3799 = vor.u32 %v3795, %v3798
        %v3800 = vrot.slane %v3799, 4
        %v3802 = vshll.u32 %v3700, 16
        %v3804 = vrot.slane %v3802, 5
        %v3805 = vsel %vm2152, %v3800, %v3804
        %v3806 = vshrl.u32 %v3700, 16
        %v3808 = vrot.slane %v3806, 4
        %v3809 = vor.u32 %v3808, %v3804
        %v3810 = vrot.slane %v3809, 4
        %v3812 = vshll.u32 %v3701, 16
        %v3814 = vrot.slane %v3812, 5
        %v3815 = vsel %vm2152, %v3810, %v3814
        %v3817 = vshrl.u32 %v3702, 16
        %v3819 = vrot.slane %v3817, 4
        %v3820 = vshll.u32 %v3702, 16
        %v3822 = vrot.slane %v3820, 5
        %v3823 = vor.u32 %v3819, %v3822
        %v3824 = vrot.slane %v3823, 4
        %v3826 = vshll.u32 %v3703, 16
        %v3828 = vrot.slane %v3826, 5
        %v3829 = vsel %vm2152, %v3824, %v3828
        %v3830 = vshrl.u32 %v3703, 16
        %v3832 = vrot.slane %v3830, 4
        %v3833 = vor.u32 %v3832, %v3828
        %v3834 = vrot.slane %v3833, 4
        %v3836 = vshll.u32 %v3704, 16
        %v3838 = vrot.slane %v3836, 5
        %v3839 = vsel %vm2152, %v3834, %v3838
        %v3841 = vshrl.u32 %v3705, 16
        %v3843 = vrot.slane %v3841, 4
        %v3844 = vshll.u32 %v3705, 16
        %v3846 = vrot.slane %v3844, 5
        %v3847 = vor.u32 %v3843, %v3846
        %v3848 = vrot.slane %v3847, 4
        %v3850 = vshll.u32 %v3706, 16
        %v3852 = vrot.slane %v3850, 5
        %v3853 = vsel %vm2152, %v3848, %v3852
        %v3854 = vshrl.u32 %v3706, 16
        %v3856 = vrot.slane %v3854, 4
        %v3857 = vor.u32 %v3856, %v3852
        %v3858 = vrot.slane %v3857, 4
        %v3860 = vshll.u32 %v3707, 16
        %v3862 = vrot.slane %v3860, 5
        %v3863 = vsel %vm2152, %v3858, %v3862
        %v3865 = vshrl.u32 %v3708, 16
        %v3867 = vrot.slane %v3865, 4
        %v3868 = vshll.u32 %v3708, 16
        %v3870 = vrot.slane %v3868, 5
        %v3871 = vor.u32 %v3867, %v3870
        %v3872 = vrot.slane %v3871, 4
        %v3874 = vshll.u32 %v3709, 16
        %v3876 = vrot.slane %v3874, 5
        %v3877 = vsel %vm2152, %v3872, %v3876
        %v3878 = vshrl.u32 %v3709, 16
        %v3880 = vrot.slane %v3878, 4
        %v3881 = vor.u32 %v3880, %v3876
        %v3882 = vrot.slane %v3881, 4
        %v3884 = vshll.u32 %v3710, 16
        %v3886 = vrot.slane %v3884, 5
        %v3887 = vsel %vm2152, %v3882, %v3886
        %v3889 = vshrl.u32 %v3711, 16
        %v3891 = vrot.slane %v3889, 4
        %v3892 = vshll.u32 %v3711, 16
        %v3894 = vrot.slane %v3892, 5
        %v3895 = vor.u32 %v3891, %v3894
        %v3896 = vrot.slane %v3895, 4
        %v3898 = vshll.u32 %v3712, 16
        %v3900 = vrot.slane %v3898, 5
        %v3901 = vsel %vm2152, %v3896, %v3900
        %v3902 = vshrl.u32 %v3712, 16
        %v3904 = vrot.slane %v3902, 4
        %v3905 = vor.u32 %v3904, %v3900
        %v3906 = vrot.slane %v3905, 4
        %v3908 = vshll.u32 %v3713, 16
        %v3910 = vrot.slane %v3908, 5
        %v3911 = vsel %vm2152, %v3906, %v3910
        %v3913 = vshrl.u32 %v3714, 16
        %v3915 = vrot.slane %v3913, 4
        %v3916 = vshll.u32 %v3714, 16
        %v3918 = vrot.slane %v3916, 5
        %v3919 = vor.u32 %v3915, %v3918
        %v3920 = vrot.slane %v3919, 4
        %v3922 = vshll.u32 %v3715, 16
        %v3924 = vrot.slane %v3922, 5
        %v3925 = vsel %vm2152, %v3920, %v3924
        %v3926 = vshrl.u32 %v3715, 16
        %v3928 = vrot.slane %v3926, 4
        %v3929 = vor.u32 %v3928, %v3924
        %v3930 = vrot.slane %v3929, 4
        %v3932 = vshll.u32 %v3716, 16
        %v3934 = vrot.slane %v3932, 5
        %v3935 = vsel %vm2152, %v3930, %v3934
        %v3937 = vshrl.u32 %v3717, 16
        %v3939 = vrot.slane %v3937, 4
        %v3940 = vshll.u32 %v3717, 16
        %v3942 = vrot.slane %v3940, 5
        %v3943 = vor.u32 %v3939, %v3942
        %v3944 = vrot.slane %v3943, 4
        %v3946 = vshll.u32 %v3718, 16
        %v3948 = vrot.slane %v3946, 5
        %v3949 = vsel %vm2152, %v3944, %v3948
        %v3950 = vshrl.u32 %v3718, 16
        %v3952 = vrot.slane %v3950, 4
        %v3953 = vor.u32 %v3952, %v3948
        %v3954 = vrot.slane %v3953, 4
        %v3956 = vshll.u32 %v3719, 16
        %v3958 = vrot.slane %v3956, 5
        %v3959 = vsel %vm2152, %v3954, %v3958
        %s3960 = scalar_lea.vmem %s6, 640
        %v3961 = vld [vmem:[%s3960] sm:$0xf]
        %v3962 = vld [vmem:[%s3960 + $0x4] sm:$0xf]
        %v3963 = vld [vmem:[%s3960 + $0x8] sm:$0xf]
        %v3964 = vld [vmem:[%s3960 + $0xc] sm:$0xf]
        %v3965 = vld [vmem:[%s3960 + $0x10] sm:$0xf]
        %v3966 = vld [vmem:[%s3960 + $0x14] sm:$0xf]
        %v3967 = vld [vmem:[%s3960 + $0x18] sm:$0xf]
        %v3968 = vld [vmem:[%s3960 + $0x1c] sm:$0xf]
        %v3969 = vld [vmem:[%s3960 + $0x20] sm:$0xf]
        %v3970 = vld [vmem:[%s3960 + $0x24] sm:$0xf]
        %v3971 = vld [vmem:[%s3960 + $0x28] sm:$0xf]
        %v3972 = vld [vmem:[%s3960 + $0x2c] sm:$0xf]
        %v3973 = vld [vmem:[%s3960 + $0x30] sm:$0xf]
        %v3974 = vld [vmem:[%s3960 + $0x34] sm:$0xf]
        %v3975 = vld [vmem:[%s3960 + $0x38] sm:$0xf]
        %v3976 = vld [vmem:[%s3960 + $0x3c] sm:$0xf]
        %v3977 = vld [vmem:[%s3960 + $0x40] sm:$0xf]
        %v3978 = vld [vmem:[%s3960 + $0x44] sm:$0xf]
        %v3979 = vld [vmem:[%s3960 + $0x48] sm:$0xf]
        %v3980 = vld [vmem:[%s3960 + $0x4c] sm:$0xf]
        %v3981 = vld [vmem:[%s3960 + $0x50] sm:$0xf]
        %v3982 = vld [vmem:[%s3960 + $0x54] sm:$0xf]
        %v3983 = vld [vmem:[%s3960 + $0x58] sm:$0xf]
        %v3984 = vld [vmem:[%s3960 + $0x5c] sm:$0xf]
        %v3985 = vld [vmem:[%s3960 + $0x60] sm:$0xf]
        %v3986 = vld [vmem:[%s3960 + $0x64] sm:$0xf]
        %v3987 = vld [vmem:[%s3960 + $0x68] sm:$0xf]
        %v3988 = vld [vmem:[%s3960 + $0x6c] sm:$0xf]
        %v3989 = vld [vmem:[%s3960 + $0x70] sm:$0xf]
        %v3990 = vld [vmem:[%s3960 + $0x74] sm:$0xf]
        %v3991 = vld [vmem:[%s3960 + $0x78] sm:$0xf]
        %v3992 = vld [vmem:[%s3960 + $0x7c] sm:$0xf]
        %v3993 = vunpack.c.l.b16 %v3733
        %v3994 = vunpack.c.h.b16 %v3733
        %v3995 = vunpack.c.l.b16 %v3743
        %v3996 = vunpack.c.h.b16 %v3743
        %v3997 = vunpack.c.l.b16 %v3757
        %v3998 = vunpack.c.h.b16 %v3757
        %v3999 = vunpack.c.l.b16 %v3767
        %v4000 = vunpack.c.h.b16 %v3767
        %v4001 = vunpack.c.l.b16 %v3781
        %v4002 = vunpack.c.h.b16 %v3781
        %v4003 = vunpack.c.l.b16 %v3791
        %v4004 = vunpack.c.h.b16 %v3791
        %v4005 = vunpack.c.l.b16 %v3805
        %v4006 = vunpack.c.h.b16 %v3805
        %v4007 = vunpack.c.l.b16 %v3815
        %v4008 = vunpack.c.h.b16 %v3815
        %v4009 = vunpack.c.l.b16 %v3829
        %v4010 = vunpack.c.h.b16 %v3829
        %v4011 = vunpack.c.l.b16 %v3839
        %v4012 = vunpack.c.h.b16 %v3839
        %v4013 = vunpack.c.l.b16 %v3853
        %v4014 = vunpack.c.h.b16 %v3853
        %v4015 = vunpack.c.l.b16 %v3863
        %v4016 = vunpack.c.h.b16 %v3863
        %v4017 = vunpack.c.l.b16 %v3877
        %v4018 = vunpack.c.h.b16 %v3877
        %v4019 = vunpack.c.l.b16 %v3887
        %v4020 = vunpack.c.h.b16 %v3887
        %v4021 = vunpack.c.l.b16 %v3901
        %v4022 = vunpack.c.h.b16 %v3901
        %v4023 = vunpack.c.l.b16 %v3911
        %v4024 = vunpack.c.h.b16 %v3911
        %v4025 = vunpack.c.l.b16 %v3925
        %v4026 = vunpack.c.h.b16 %v3925
        %v4027 = vunpack.c.l.b16 %v3935
        %v4028 = vunpack.c.h.b16 %v3935
        %v4029 = vunpack.c.l.b16 %v3949
        %v4030 = vunpack.c.h.b16 %v3949
        %v4031 = vunpack.c.l.b16 %v3959
        %v4032 = vunpack.c.h.b16 %v3959
        %v4033 = vpack.c.b16 %v3995, %v3993
        %v4034 = vpack.c.b16 %v3996, %v3994
        %v4035 = vpack.c.b16 %v3999, %v3997
        %v4036 = vpack.c.b16 %v4000, %v3998
        %v4037 = vpack.c.b16 %v4003, %v4001
        %v4038 = vpack.c.b16 %v4004, %v4002
        %v4039 = vpack.c.b16 %v4007, %v4005
        %v4040 = vpack.c.b16 %v4008, %v4006
        %v4041 = vpack.c.b16 %v4011, %v4009
        %v4042 = vpack.c.b16 %v4012, %v4010
        %v4043 = vpack.c.b16 %v4015, %v4013
        %v4044 = vpack.c.b16 %v4016, %v4014
        %v4045 = vpack.c.b16 %v4019, %v4017
        %v4046 = vpack.c.b16 %v4020, %v4018
        %v4047 = vpack.c.b16 %v4023, %v4021
        %v4048 = vpack.c.b16 %v4024, %v4022
        %v4049 = vpack.c.b16 %v4027, %v4025
        %v4050 = vpack.c.b16 %v4028, %v4026
        %v4051 = vpack.c.b16 %v4031, %v4029
        %v4052 = vpack.c.b16 %v4032, %v4030
        %v4105 = vunpack.c.l.b16 %v3961
        %v4106 = vunpack.c.l.b16 %v3962
        %v4107 = vunpack.c.l.b16 %v3963
        %v4108 = vunpack.c.l.b16 %v3964
        %v4109 = vunpack.c.l.b16 %v3965
        %v4110 = vunpack.c.l.b16 %v3966
        %v4111 = vunpack.c.l.b16 %v3967
        %v4112 = vunpack.c.l.b16 %v3968
        %v4113 = vunpack.c.l.b16 %v3969
        %v4114 = vunpack.c.l.b16 %v3970
        %v4115 = vunpack.c.l.b16 %v3971
        %v4116 = vunpack.c.l.b16 %v3972
        %v4117 = vunpack.c.l.b16 %v3973
        %v4118 = vunpack.c.l.b16 %v3974
        %v4119 = vunpack.c.l.b16 %v3975
        %v4120 = vunpack.c.l.b16 %v3976
        %v4121 = vunpack.c.l.b16 %v3977
        %v4122 = vunpack.c.l.b16 %v3978
        %v4123 = vunpack.c.l.b16 %v3979
        %v4124 = vunpack.c.l.b16 %v3980
        %v4125 = vunpack.c.l.b16 %v3981
        %v4126 = vunpack.c.l.b16 %v3982
        %v4127 = vunpack.c.l.b16 %v3983
        %v4128 = vunpack.c.l.b16 %v3984
        %v4129 = vunpack.c.l.b16 %v3985
        %v4130 = vunpack.c.l.b16 %v3986
        %v4131 = vunpack.c.l.b16 %v3987
        %v4132 = vunpack.c.l.b16 %v3988
        %v4133 = vunpack.c.l.b16 %v3989
        %v4134 = vunpack.c.l.b16 %v3990
        %v4135 = vunpack.c.l.b16 %v3991
        %v4136 = vunpack.c.l.b16 %v3992
        %v4137 = vpack.c.b16 %v4106, %v4105
        %v4138 = vpack.c.b16 %v4108, %v4107
        %v4139 = vpack.c.b16 %v4110, %v4109
        %v4140 = vpack.c.b16 %v4112, %v4111
        %v4141 = vpack.c.b16 %v4114, %v4113
        %v4142 = vpack.c.b16 %v4116, %v4115
        %v4143 = vpack.c.b16 %v4118, %v4117
        %v4144 = vpack.c.b16 %v4120, %v4119
        %v4145 = vpack.c.b16 %v4122, %v4121
        %v4146 = vpack.c.b16 %v4124, %v4123
        %v4147 = vpack.c.b16 %v4126, %v4125
        %v4148 = vpack.c.b16 %v4128, %v4127
        %v4149 = vpack.c.b16 %v4130, %v4129
        %v4150 = vpack.c.b16 %v4132, %v4131
        %v4151 = vpack.c.b16 %v4134, %v4133
        %v4152 = vpack.c.b16 %v4136, %v4135
        %4169 = vmatprep.subr.bf16.mxu0 0
        %4170 = vmatpush1.bf16.msra.mxu0 %v4137
        %4171 = vmatprep.subr.bf16.mxu0 0
        %4172 = vmatpush1.bf16.msra.mxu0 %v4138
        %4173 = vmatprep.subr.bf16.mxu0 0
        %4174 = vmatpush1.bf16.msra.mxu0 %v4139
        %4175 = vmatprep.subr.bf16.mxu0 0
        %4176 = vmatpush1.bf16.msra.mxu0 %v4140
        %4177 = vmatprep.subr.bf16.mxu0 0
        %4178 = vmatpush1.bf16.msra.mxu0 %v4141
        %4179 = vmatprep.subr.bf16.mxu0 0
        %4180 = vmatpush1.bf16.msra.mxu0 %v4142
        %4181 = vmatprep.subr.bf16.mxu0 0
        %4182 = vmatpush1.bf16.msra.mxu0 %v4143
        %4183 = vmatprep.subr.bf16.mxu0 0
        %4184 = vmatpush1.bf16.msra.mxu0 %v4144
        %4185 = vmatprep.subr.bf16.mxu0 0
        %4186 = vmatpush1.bf16.msra.mxu0 %v4145
        %4187 = vmatprep.subr.bf16.mxu0 0
        %4188 = vmatpush1.bf16.msra.mxu0 %v4146
        %4189 = vmatprep.subr.bf16.mxu0 0
        %4190 = vmatpush1.bf16.msra.mxu0 %v4147
        %4191 = vmatprep.subr.bf16.mxu0 0
        %4192 = vmatpush1.bf16.msra.mxu0 %v4148
        %4193 = vmatprep.subr.bf16.mxu0 0
        %4194 = vmatpush1.bf16.msra.mxu0 %v4149
        %4195 = vmatprep.subr.bf16.mxu0 0
        %4196 = vmatpush1.bf16.msra.mxu0 %v4150
        %4197 = vmatprep.subr.bf16.mxu0 0
        %4198 = vmatpush1.bf16.msra.mxu0 %v4151
        %4199 = vmatprep.subr.bf16.mxu0 0
        %4200 = vmatpush1.bf16.msra.mxu0 %v4152
        %4201 = vmatprep.mubr.bf16.mxu0 %v4034
        %4202 = vmatmul.mubr.bf16.gmra.mrb[0].mxu0 %v4033
        %v4203 = vpop.f32.mrb[0].mxu0
        %v4204 = vadd.f32 0.0, %v4203
        %v4205 = vpop.f32.mrb[0].mxu0
        %v4206 = vpop.f32.mrb[0].mxu0
        %v4207 = vadd.f32 0.0, %v4206
        %v4208 = vpop.f32.mrb[0].mxu0
        %4209 = vmatprep.mubr.bf16.mxu0 %v4036
        %4210 = vmatmul.mubr.bf16.gmra.mrb[0].mxu0 %v4035
        %v4211 = vpop.f32.mrb[0].mxu0
        %v4212 = vadd.f32 0.0, %v4211
        %v4213 = vpop.f32.mrb[0].mxu0
        %v4214 = vpop.f32.mrb[0].mxu0
        %v4215 = vadd.f32 0.0, %v4214
        %v4216 = vpop.f32.mrb[0].mxu0
        %4217 = vmatprep.mubr.bf16.mxu0 %v4038
        %4218 = vmatmul.mubr.bf16.gmra.mrb[0].mxu0 %v4037
        %v4219 = vpop.f32.mrb[0].mxu0
        %v4220 = vadd.f32 0.0, %v4219
        %v4221 = vpop.f32.mrb[0].mxu0
        %v4222 = vpop.f32.mrb[0].mxu0
        %v4223 = vadd.f32 0.0, %v4222
        %v4224 = vpop.f32.mrb[0].mxu0
        %4225 = vmatprep.mubr.bf16.mxu0 %v4040
        %4226 = vmatmul.mubr.bf16.gmra.mrb[0].mxu0 %v4039
        %v4227 = vpop.f32.mrb[0].mxu0
        %v4228 = vadd.f32 0.0, %v4227
        %v4229 = vpop.f32.mrb[0].mxu0
        %v4230 = vpop.f32.mrb[0].mxu0
        %v4231 = vadd.f32 0.0, %v4230
        %v4232 = vpop.f32.mrb[0].mxu0
        %4233 = vmatprep.mubr.bf16.mxu0 %v4042
        %4234 = vmatmul.mubr.bf16.gmra.mrb[0].mxu0 %v4041
        %v4235 = vpop.f32.mrb[0].mxu0
        %v4236 = vadd.f32 0.0, %v4235
        %v4237 = vpop.f32.mrb[0].mxu0
        %v4238 = vpop.f32.mrb[0].mxu0
        %v4239 = vadd.f32 0.0, %v4238
        %v4240 = vpop.f32.mrb[0].mxu0
        %4241 = vmatprep.mubr.bf16.mxu0 %v4044
        %4242 = vmatmul.mubr.bf16.gmra.mrb[0].mxu0 %v4043
        %v4243 = vpop.f32.mrb[0].mxu0
        %v4244 = vadd.f32 0.0, %v4243
        %v4245 = vpop.f32.mrb[0].mxu0
        %v4246 = vpop.f32.mrb[0].mxu0
        %v4247 = vadd.f32 0.0, %v4246
        %v4248 = vpop.f32.mrb[0].mxu0
        %4249 = vmatprep.mubr.bf16.mxu0 %v4046
        %4250 = vmatmul.mubr.bf16.gmra.mrb[0].mxu0 %v4045
        %v4251 = vpop.f32.mrb[0].mxu0
        %v4252 = vadd.f32 0.0, %v4251
        %v4253 = vpop.f32.mrb[0].mxu0
        %v4254 = vpop.f32.mrb[0].mxu0
        %v4255 = vadd.f32 0.0, %v4254
        %v4256 = vpop.f32.mrb[0].mxu0
        %4257 = vmatprep.mubr.bf16.mxu0 %v4048
        %4258 = vmatmul.mubr.bf16.gmra.mrb[0].mxu0 %v4047
        %v4259 = vpop.f32.mrb[0].mxu0
        %v4260 = vadd.f32 0.0, %v4259
        %v4261 = vpop.f32.mrb[0].mxu0
        %v4262 = vpop.f32.mrb[0].mxu0
        %v4263 = vadd.f32 0.0, %v4262
        %v4264 = vpop.f32.mrb[0].mxu0
        %4265 = vmatprep.mubr.bf16.mxu0 %v4050
        %4266 = vmatmul.mubr.bf16.gmra.mrb[0].mxu0 %v4049
        %v4267 = vpop.f32.mrb[0].mxu0
        %v4268 = vadd.f32 0.0, %v4267
        %v4269 = vpop.f32.mrb[0].mxu0
        %v4270 = vpop.f32.mrb[0].mxu0
        %v4271 = vadd.f32 0.0, %v4270
        %v4272 = vpop.f32.mrb[0].mxu0
        %4273 = vmatprep.mubr.bf16.mxu0 %v4052
        %4274 = vmatmul.mubr.bf16.gmra.mrb[0].mxu0 %v4051
        %v4275 = vpop.f32.mrb[0].mxu0
        %v4276 = vadd.f32 0.0, %v4275
        %v4277 = vpop.f32.mrb[0].mxu0
        %v4278 = vpop.f32.mrb[0].mxu0
        %v4279 = vadd.f32 0.0, %v4278
        %v4280 = vpop.f32.mrb[0].mxu0
        %4281 = vdwg.mxu0
        %v4282 = vadd.f32 %v3670, %v4204
        %v4283 = vadd.f32 %v3671, %v4207
        %v4284 = vadd.f32 %v3672, %v4212
        %v4285 = vadd.f32 %v3673, %v4215
        %v4286 = vadd.f32 %v3674, %v4220
        %v4287 = vadd.f32 %v3675, %v4223
        %v4288 = vadd.f32 %v3676, %v4228
        %v4289 = vadd.f32 %v3677, %v4231
        %v4290 = vadd.f32 %v3678, %v4236
        %v4291 = vadd.f32 %v3679, %v4239
        %v4292 = vadd.f32 %v3680, %v4244
        %v4293 = vadd.f32 %v3681, %v4247
        %v4294 = vadd.f32 %v3682, %v4252
        %v4295 = vadd.f32 %v3683, %v4255
        %v4296 = vadd.f32 %v3684, %v4260
        %v4297 = vadd.f32 %v3685, %v4263
        %v4298 = vadd.f32 %v3686, %v4268
        %v4299 = vadd.f32 %v3687, %v4271
        %v4300 = vadd.f32 %v3688, %v4276
        %v4301 = vadd.f32 %v3689, %v4279
        %v4302 = vld [vmem:[%s982 + $0x8] sm:$0x88]
        %v4303 = vld [vmem:[%s982 + $0x10] sm:$0xff]
        %v4304 = vld [vmem:[%s982 + $0x18] sm:$0xff]
        %v4305 = vld [vmem:[%s982 + $0x30] sm:$0x88]
        %v4306 = vld [vmem:[%s982 + $0x38] sm:$0xff]
        %v4307 = vld [vmem:[%s982 + $0x40] sm:$0xff]
        %v4308 = vld [vmem:[%s982 + $0x58] sm:$0x88]
        %v4309 = vld [vmem:[%s982 + $0x60] sm:$0xff]
        %v4310 = vld [vmem:[%s982 + $0x68] sm:$0xff]
        %v4311 = vld [vmem:[%s982 + $0x80] sm:$0x88]
        %v4312 = vld [vmem:[%s982 + $0x88] sm:$0xff]
        %v4313 = vld [vmem:[%s982 + $0x90] sm:$0xff]
        %v4314 = vld [vmem:[%s982 + $0xa8] sm:$0x88]
        %v4315 = vld [vmem:[%s982 + $0xb0] sm:$0xff]
        %v4316 = vld [vmem:[%s982 + $0xb8] sm:$0xff]
        %v4317 = vld [vmem:[%s982 + $0xd0] sm:$0x88]
        %v4318 = vld [vmem:[%s982 + $0xd8] sm:$0xff]
        %v4319 = vld [vmem:[%s982 + $0xe0] sm:$0xff]
        %v4320 = vld [vmem:[%s982 + $0xf8] sm:$0x88]
        %v4321 = vld [vmem:[%s982 + $0x100] sm:$0xff]
        %v4322 = vld [vmem:[%s982 + $0x108] sm:$0xff]
        %v4323 = vld [vmem:[%s982 + $0x120] sm:$0x88]
        %v4324 = vld [vmem:[%s982 + $0x128] sm:$0xff]
        %v4325 = vld [vmem:[%s982 + $0x130] sm:$0xff]
        %v4326 = vld [vmem:[%s982 + $0x148] sm:$0x88]
        %v4327 = vld [vmem:[%s982 + $0x150] sm:$0xff]
        %v4328 = vld [vmem:[%s982 + $0x158] sm:$0xff]
        %v4329 = vld [vmem:[%s982 + $0x170] sm:$0x88]
        %v4330 = vld [vmem:[%s982 + $0x178] sm:$0xff]
        %v4331 = vld [vmem:[%s982 + $0x180] sm:$0xff]
        %v4333 = vshrl.u32 %v4302, 16
        %v4335 = vrot.slane %v4333, 7
        %v4336 = vrot.slane %v4335, 4
        %v4338 = vshrl.u32 %v4303, 16
        %v4340 = vrot.slane %v4338, 7
        %v4341 = vshll.u32 %v4303, 16
        %v4343 = vor.u32 %v4340, %v4341
        %v4344 = vsel %vm1236, %v4336, %v4343
        %v4345 = vrot.slane %v4340, 4
        %v4347 = vshrl.u32 %v4304, 16
        %v4349 = vrot.slane %v4347, 7
        %v4350 = vshll.u32 %v4304, 16
        %v4352 = vor.u32 %v4349, %v4350
        %v4353 = vsel %vm1236, %v4345, %v4352
        %v4355 = vshrl.u32 %v4305, 16
        %v4357 = vrot.slane %v4355, 7
        %v4358 = vrot.slane %v4357, 4
        %v4360 = vshrl.u32 %v4306, 16
        %v4362 = vrot.slane %v4360, 7
        %v4363 = vshll.u32 %v4306, 16
        %v4365 = vor.u32 %v4362, %v4363
        %v4366 = vsel %vm1236, %v4358, %v4365
        %v4367 = vrot.slane %v4362, 4
        %v4369 = vshrl.u32 %v4307, 16
        %v4371 = vrot.slane %v4369, 7
        %v4372 = vshll.u32 %v4307, 16
        %v4374 = vor.u32 %v4371, %v4372
        %v4375 = vsel %vm1236, %v4367, %v4374
        %v4377 = vshrl.u32 %v4308, 16
        %v4379 = vrot.slane %v4377, 7
        %v4380 = vrot.slane %v4379, 4
        %v4382 = vshrl.u32 %v4309, 16
        %v4384 = vrot.slane %v4382, 7
        %v4385 = vshll.u32 %v4309, 16
        %v4387 = vor.u32 %v4384, %v4385
        %v4388 = vsel %vm1236, %v4380, %v4387
        %v4389 = vrot.slane %v4384, 4
        %v4391 = vshrl.u32 %v4310, 16
        %v4393 = vrot.slane %v4391, 7
        %v4394 = vshll.u32 %v4310, 16
        %v4396 = vor.u32 %v4393, %v4394
        %v4397 = vsel %vm1236, %v4389, %v4396
        %v4399 = vshrl.u32 %v4311, 16
        %v4401 = vrot.slane %v4399, 7
        %v4402 = vrot.slane %v4401, 4
        %v4404 = vshrl.u32 %v4312, 16
        %v4406 = vrot.slane %v4404, 7
        %v4407 = vshll.u32 %v4312, 16
        %v4409 = vor.u32 %v4406, %v4407
        %v4410 = vsel %vm1236, %v4402, %v4409
        %v4411 = vrot.slane %v4406, 4
        %v4413 = vshrl.u32 %v4313, 16
        %v4415 = vrot.slane %v4413, 7
        %v4416 = vshll.u32 %v4313, 16
        %v4418 = vor.u32 %v4415, %v4416
        %v4419 = vsel %vm1236, %v4411, %v4418
        %v4421 = vshrl.u32 %v4314, 16
        %v4423 = vrot.slane %v4421, 7
        %v4424 = vrot.slane %v4423, 4
        %v4426 = vshrl.u32 %v4315, 16
        %v4428 = vrot.slane %v4426, 7
        %v4429 = vshll.u32 %v4315, 16
        %v4431 = vor.u32 %v4428, %v4429
        %v4432 = vsel %vm1236, %v4424, %v4431
        %v4433 = vrot.slane %v4428, 4
        %v4435 = vshrl.u32 %v4316, 16
        %v4437 = vrot.slane %v4435, 7
        %v4438 = vshll.u32 %v4316, 16
        %v4440 = vor.u32 %v4437, %v4438
        %v4441 = vsel %vm1236, %v4433, %v4440
        %v4443 = vshrl.u32 %v4317, 16
        %v4445 = vrot.slane %v4443, 7
        %v4446 = vrot.slane %v4445, 4
        %v4448 = vshrl.u32 %v4318, 16
        %v4450 = vrot.slane %v4448, 7
        %v4451 = vshll.u32 %v4318, 16
        %v4453 = vor.u32 %v4450, %v4451
        %v4454 = vsel %vm1236, %v4446, %v4453
        %v4455 = vrot.slane %v4450, 4
        %v4457 = vshrl.u32 %v4319, 16
        %v4459 = vrot.slane %v4457, 7
        %v4460 = vshll.u32 %v4319, 16
        %v4462 = vor.u32 %v4459, %v4460
        %v4463 = vsel %vm1236, %v4455, %v4462
        %v4465 = vshrl.u32 %v4320, 16
        %v4467 = vrot.slane %v4465, 7
        %v4468 = vrot.slane %v4467, 4
        %v4470 = vshrl.u32 %v4321, 16
        %v4472 = vrot.slane %v4470, 7
        %v4473 = vshll.u32 %v4321, 16
        %v4475 = vor.u32 %v4472, %v4473
        %v4476 = vsel %vm1236, %v4468, %v4475
        %v4477 = vrot.slane %v4472, 4
        %v4479 = vshrl.u32 %v4322, 16
        %v4481 = vrot.slane %v4479, 7
        %v4482 = vshll.u32 %v4322, 16
        %v4484 = vor.u32 %v4481, %v4482
        %v4485 = vsel %vm1236, %v4477, %v4484
        %v4487 = vshrl.u32 %v4323, 16
        %v4489 = vrot.slane %v4487, 7
        %v4490 = vrot.slane %v4489, 4
        %v4492 = vshrl.u32 %v4324, 16
        %v4494 = vrot.slane %v4492, 7
        %v4495 = vshll.u32 %v4324, 16
        %v4497 = vor.u32 %v4494, %v4495
        %v4498 = vsel %vm1236, %v4490, %v4497
        %v4499 = vrot.slane %v4494, 4
        %v4501 = vshrl.u32 %v4325, 16
        %v4503 = vrot.slane %v4501, 7
        %v4504 = vshll.u32 %v4325, 16
        %v4506 = vor.u32 %v4503, %v4504
        %v4507 = vsel %vm1236, %v4499, %v4506
        %v4509 = vshrl.u32 %v4326, 16
        %v4511 = vrot.slane %v4509, 7
        %v4512 = vrot.slane %v4511, 4
        %v4514 = vshrl.u32 %v4327, 16
        %v4516 = vrot.slane %v4514, 7
        %v4517 = vshll.u32 %v4327, 16
        %v4519 = vor.u32 %v4516, %v4517
        %v4520 = vsel %vm1236, %v4512, %v4519
        %v4521 = vrot.slane %v4516, 4
        %v4523 = vshrl.u32 %v4328, 16
        %v4525 = vrot.slane %v4523, 7
        %v4526 = vshll.u32 %v4328, 16
        %v4528 = vor.u32 %v4525, %v4526
        %v4529 = vsel %vm1236, %v4521, %v4528
        %v4531 = vshrl.u32 %v4329, 16
        %v4533 = vrot.slane %v4531, 7
        %v4534 = vrot.slane %v4533, 4
        %v4536 = vshrl.u32 %v4330, 16
        %v4538 = vrot.slane %v4536, 7
        %v4539 = vshll.u32 %v4330, 16
        %v4541 = vor.u32 %v4538, %v4539
        %v4542 = vsel %vm1236, %v4534, %v4541
        %v4543 = vrot.slane %v4538, 4
        %v4545 = vshrl.u32 %v4331, 16
        %v4547 = vrot.slane %v4545, 7
        %v4548 = vshll.u32 %v4331, 16
        %v4550 = vor.u32 %v4547, %v4548
        %v4551 = vsel %vm1236, %v4543, %v4550
        %s4552 = scalar_lea.vmem %s6, 768
        %v4553 = vld [vmem:[%s4552] sm:$0xf]
        %v4554 = vld [vmem:[%s4552 + $0x4] sm:$0xf]
        %v4555 = vld [vmem:[%s4552 + $0x8] sm:$0xf]
        %v4556 = vld [vmem:[%s4552 + $0xc] sm:$0xf]
        %v4557 = vld [vmem:[%s4552 + $0x10] sm:$0xf]
        %v4558 = vld [vmem:[%s4552 + $0x14] sm:$0xf]
        %v4559 = vld [vmem:[%s4552 + $0x18] sm:$0xf]
        %v4560 = vld [vmem:[%s4552 + $0x1c] sm:$0xf]
        %v4561 = vld [vmem:[%s4552 + $0x20] sm:$0xf]
        %v4562 = vld [vmem:[%s4552 + $0x24] sm:$0xf]
        %v4563 = vld [vmem:[%s4552 + $0x28] sm:$0xf]
        %v4564 = vld [vmem:[%s4552 + $0x2c] sm:$0xf]
        %v4565 = vld [vmem:[%s4552 + $0x30] sm:$0xf]
        %v4566 = vld [vmem:[%s4552 + $0x34] sm:$0xf]
        %v4567 = vld [vmem:[%s4552 + $0x38] sm:$0xf]
        %v4568 = vld [vmem:[%s4552 + $0x3c] sm:$0xf]
        %v4569 = vld [vmem:[%s4552 + $0x40] sm:$0xf]
        %v4570 = vld [vmem:[%s4552 + $0x44] sm:$0xf]
        %v4571 = vld [vmem:[%s4552 + $0x48] sm:$0xf]
        %v4572 = vld [vmem:[%s4552 + $0x4c] sm:$0xf]
        %v4573 = vld [vmem:[%s4552 + $0x50] sm:$0xf]
        %v4574 = vld [vmem:[%s4552 + $0x54] sm:$0xf]
        %v4575 = vld [vmem:[%s4552 + $0x58] sm:$0xf]
        %v4576 = vld [vmem:[%s4552 + $0x5c] sm:$0xf]
        %v4577 = vld [vmem:[%s4552 + $0x60] sm:$0xf]
        %v4578 = vld [vmem:[%s4552 + $0x64] sm:$0xf]
        %v4579 = vld [vmem:[%s4552 + $0x68] sm:$0xf]
        %v4580 = vld [vmem:[%s4552 + $0x6c] sm:$0xf]
        %v4581 = vld [vmem:[%s4552 + $0x70] sm:$0xf]
        %v4582 = vld [vmem:[%s4552 + $0x74] sm:$0xf]
        %v4583 = vld [vmem:[%s4552 + $0x78] sm:$0xf]
        %v4584 = vld [vmem:[%s4552 + $0x7c] sm:$0xf]
        %v4585 = vunpack.c.l.b16 %v4344
        %v4586 = vunpack.c.h.b16 %v4344
        %v4587 = vunpack.c.l.b16 %v4353
        %v4588 = vunpack.c.h.b16 %v4353
        %v4589 = vunpack.c.l.b16 %v4366
        %v4590 = vunpack.c.h.b16 %v4366
        %v4591 = vunpack.c.l.b16 %v4375
        %v4592 = vunpack.c.h.b16 %v4375
        %v4593 = vunpack.c.l.b16 %v4388
        %v4594 = vunpack.c.h.b16 %v4388
        %v4595 = vunpack.c.l.b16 %v4397
        %v4596 = vunpack.c.h.b16 %v4397
        %v4597 = vunpack.c.l.b16 %v4410
        %v4598 = vunpack.c.h.b16 %v4410
        %v4599 = vunpack.c.l.b16 %v4419
        %v4600 = vunpack.c.h.b16 %v4419
        %v4601 = vunpack.c.l.b16 %v4432
        %v4602 = vunpack.c.h.b16 %v4432
        %v4603 = vunpack.c.l.b16 %v4441
        %v4604 = vunpack.c.h.b16 %v4441
        %v4605 = vunpack.c.l.b16 %v4454
        %v4606 = vunpack.c.h.b16 %v4454
        %v4607 = vunpack.c.l.b16 %v4463
        %v4608 = vunpack.c.h.b16 %v4463
        %v4609 = vunpack.c.l.b16 %v4476
        %v4610 = vunpack.c.h.b16 %v4476
        %v4611 = vunpack.c.l.b16 %v4485
        %v4612 = vunpack.c.h.b16 %v4485
        %v4613 = vunpack.c.l.b16 %v4498
        %v4614 = vunpack.c.h.b16 %v4498
        %v4615 = vunpack.c.l.b16 %v4507
        %v4616 = vunpack.c.h.b16 %v4507
        %v4617 = vunpack.c.l.b16 %v4520
        %v4618 = vunpack.c.h.b16 %v4520
        %v4619 = vunpack.c.l.b16 %v4529
        %v4620 = vunpack.c.h.b16 %v4529
        %v4621 = vunpack.c.l.b16 %v4542
        %v4622 = vunpack.c.h.b16 %v4542
        %v4623 = vunpack.c.l.b16 %v4551
        %v4624 = vunpack.c.h.b16 %v4551
        %v4625 = vpack.c.b16 %v4587, %v4585
        %v4626 = vpack.c.b16 %v4588, %v4586
        %v4627 = vpack.c.b16 %v4591, %v4589
        %v4628 = vpack.c.b16 %v4592, %v4590
        %v4629 = vpack.c.b16 %v4595, %v4593
        %v4630 = vpack.c.b16 %v4596, %v4594
        %v4631 = vpack.c.b16 %v4599, %v4597
        %v4632 = vpack.c.b16 %v4600, %v4598
        %v4633 = vpack.c.b16 %v4603, %v4601
        %v4634 = vpack.c.b16 %v4604, %v4602
        %v4635 = vpack.c.b16 %v4607, %v4605
        %v4636 = vpack.c.b16 %v4608, %v4606
        %v4637 = vpack.c.b16 %v4611, %v4609
        %v4638 = vpack.c.b16 %v4612, %v4610
        %v4639 = vpack.c.b16 %v4615, %v4613
        %v4640 = vpack.c.b16 %v4616, %v4614
        %v4641 = vpack.c.b16 %v4619, %v4617
        %v4642 = vpack.c.b16 %v4620, %v4618
        %v4643 = vpack.c.b16 %v4623, %v4621
        %v4644 = vpack.c.b16 %v4624, %v4622
        %v4697 = vunpack.c.l.b16 %v4553
        %v4698 = vunpack.c.l.b16 %v4554
        %v4699 = vunpack.c.l.b16 %v4555
        %v4700 = vunpack.c.l.b16 %v4556
        %v4701 = vunpack.c.l.b16 %v4557
        %v4702 = vunpack.c.l.b16 %v4558
        %v4703 = vunpack.c.l.b16 %v4559
        %v4704 = vunpack.c.l.b16 %v4560
        %v4705 = vunpack.c.l.b16 %v4561
        %v4706 = vunpack.c.l.b16 %v4562
        %v4707 = vunpack.c.l.b16 %v4563
        %v4708 = vunpack.c.l.b16 %v4564
        %v4709 = vunpack.c.l.b16 %v4565
        %v4710 = vunpack.c.l.b16 %v4566
        %v4711 = vunpack.c.l.b16 %v4567
        %v4712 = vunpack.c.l.b16 %v4568
        %v4713 = vunpack.c.l.b16 %v4569
        %v4714 = vunpack.c.l.b16 %v4570
        %v4715 = vunpack.c.l.b16 %v4571
        %v4716 = vunpack.c.l.b16 %v4572
        %v4717 = vunpack.c.l.b16 %v4573
        %v4718 = vunpack.c.l.b16 %v4574
        %v4719 = vunpack.c.l.b16 %v4575
        %v4720 = vunpack.c.l.b16 %v4576
        %v4721 = vunpack.c.l.b16 %v4577
        %v4722 = vunpack.c.l.b16 %v4578
        %v4723 = vunpack.c.l.b16 %v4579
        %v4724 = vunpack.c.l.b16 %v4580
        %v4725 = vunpack.c.l.b16 %v4581
        %v4726 = vunpack.c.l.b16 %v4582
        %v4727 = vunpack.c.l.b16 %v4583
        %v4728 = vunpack.c.l.b16 %v4584
        %v4729 = vpack.c.b16 %v4698, %v4697
        %v4730 = vpack.c.b16 %v4700, %v4699
        %v4731 = vpack.c.b16 %v4702, %v4701
        %v4732 = vpack.c.b16 %v4704, %v4703
        %v4733 = vpack.c.b16 %v4706, %v4705
        %v4734 = vpack.c.b16 %v4708, %v4707
        %v4735 = vpack.c.b16 %v4710, %v4709
        %v4736 = vpack.c.b16 %v4712, %v4711
        %v4737 = vpack.c.b16 %v4714, %v4713
        %v4738 = vpack.c.b16 %v4716, %v4715
        %v4739 = vpack.c.b16 %v4718, %v4717
        %v4740 = vpack.c.b16 %v4720, %v4719
        %v4741 = vpack.c.b16 %v4722, %v4721
        %v4742 = vpack.c.b16 %v4724, %v4723
        %v4743 = vpack.c.b16 %v4726, %v4725
        %v4744 = vpack.c.b16 %v4728, %v4727
        %4761 = vmatprep.subr.bf16.mxu0 0
        %4762 = vmatpush1.bf16.msra.mxu0 %v4729
        %4763 = vmatprep.subr.bf16.mxu0 0
        %4764 = vmatpush1.bf16.msra.mxu0 %v4730
        %4765 = vmatprep.subr.bf16.mxu0 0
        %4766 = vmatpush1.bf16.msra.mxu0 %v4731
        %4767 = vmatprep.subr.bf16.mxu0 0
        %4768 = vmatpush1.bf16.msra.mxu0 %v4732
        %4769 = vmatprep.subr.bf16.mxu0 0
        %4770 = vmatpush1.bf16.msra.mxu0 %v4733
        %4771 = vmatprep.subr.bf16.mxu0 0
        %4772 = vmatpush1.bf16.msra.mxu0 %v4734
        %4773 = vmatprep.subr.bf16.mxu0 0
        %4774 = vmatpush1.bf16.msra.mxu0 %v4735
        %4775 = vmatprep.subr.bf16.mxu0 0
        %4776 = vmatpush1.bf16.msra.mxu0 %v4736
        %4777 = vmatprep.subr.bf16.mxu0 0
        %4778 = vmatpush1.bf16.msra.mxu0 %v4737
        %4779 = vmatprep.subr.bf16.mxu0 0
        %4780 = vmatpush1.bf16.msra.mxu0 %v4738
        %4781 = vmatprep.subr.bf16.mxu0 0
        %4782 = vmatpush1.bf16.msra.mxu0 %v4739
        %4783 = vmatprep.subr.bf16.mxu0 0
        %4784 = vmatpush1.bf16.msra.mxu0 %v4740
        %4785 = vmatprep.subr.bf16.mxu0 0
        %4786 = vmatpush1.bf16.msra.mxu0 %v4741
        %4787 = vmatprep.subr.bf16.mxu0 0
        %4788 = vmatpush1.bf16.msra.mxu0 %v4742
        %4789 = vmatprep.subr.bf16.mxu0 0
        %4790 = vmatpush1.bf16.msra.mxu0 %v4743
        %4791 = vmatprep.subr.bf16.mxu0 0
        %4792 = vmatpush1.bf16.msra.mxu0 %v4744
        %4793 = vmatprep.mubr.bf16.mxu0 %v4626
        %4794 = vmatmul.mubr.bf16.gmra.mrb[0].mxu0 %v4625
        %v4795 = vpop.f32.mrb[0].mxu0
        %v4796 = vadd.f32 0.0, %v4795
        %v4797 = vpop.f32.mrb[0].mxu0
        %v4798 = vpop.f32.mrb[0].mxu0
        %v4799 = vadd.f32 0.0, %v4798
        %v4800 = vpop.f32.mrb[0].mxu0
        %4801 = vmatprep.mubr.bf16.mxu0 %v4628
        %4802 = vmatmul.mubr.bf16.gmra.mrb[0].mxu0 %v4627
        %v4803 = vpop.f32.mrb[0].mxu0
        %v4804 = vadd.f32 0.0, %v4803
        %v4805 = vpop.f32.mrb[0].mxu0
        %v4806 = vpop.f32.mrb[0].mxu0
        %v4807 = vadd.f32 0.0, %v4806
        %v4808 = vpop.f32.mrb[0].mxu0
        %4809 = vmatprep.mubr.bf16.mxu0 %v4630
        %4810 = vmatmul.mubr.bf16.gmra.mrb[0].mxu0 %v4629
        %v4811 = vpop.f32.mrb[0].mxu0
        %v4812 = vadd.f32 0.0, %v4811
        %v4813 = vpop.f32.mrb[0].mxu0
        %v4814 = vpop.f32.mrb[0].mxu0
        %v4815 = vadd.f32 0.0, %v4814
        %v4816 = vpop.f32.mrb[0].mxu0
        %4817 = vmatprep.mubr.bf16.mxu0 %v4632
        %4818 = vmatmul.mubr.bf16.gmra.mrb[0].mxu0 %v4631
        %v4819 = vpop.f32.mrb[0].mxu0
        %v4820 = vadd.f32 0.0, %v4819
        %v4821 = vpop.f32.mrb[0].mxu0
        %v4822 = vpop.f32.mrb[0].mxu0
        %v4823 = vadd.f32 0.0, %v4822
        %v4824 = vpop.f32.mrb[0].mxu0
        %4825 = vmatprep.mubr.bf16.mxu0 %v4634
        %4826 = vmatmul.mubr.bf16.gmra.mrb[0].mxu0 %v4633
        %v4827 = vpop.f32.mrb[0].mxu0
        %v4828 = vadd.f32 0.0, %v4827
        %v4829 = vpop.f32.mrb[0].mxu0
        %v4830 = vpop.f32.mrb[0].mxu0
        %v4831 = vadd.f32 0.0, %v4830
        %v4832 = vpop.f32.mrb[0].mxu0
        %4833 = vmatprep.mubr.bf16.mxu0 %v4636
        %4834 = vmatmul.mubr.bf16.gmra.mrb[0].mxu0 %v4635
        %v4835 = vpop.f32.mrb[0].mxu0
        %v4836 = vadd.f32 0.0, %v4835
        %v4837 = vpop.f32.mrb[0].mxu0
        %v4838 = vpop.f32.mrb[0].mxu0
        %v4839 = vadd.f32 0.0, %v4838
        %v4840 = vpop.f32.mrb[0].mxu0
        %4841 = vmatprep.mubr.bf16.mxu0 %v4638
        %4842 = vmatmul.mubr.bf16.gmra.mrb[0].mxu0 %v4637
        %v4843 = vpop.f32.mrb[0].mxu0
        %v4844 = vadd.f32 0.0, %v4843
        %v4845 = vpop.f32.mrb[0].mxu0
        %v4846 = vpop.f32.mrb[0].mxu0
        %v4847 = vadd.f32 0.0, %v4846
        %v4848 = vpop.f32.mrb[0].mxu0
        %4849 = vmatprep.mubr.bf16.mxu0 %v4640
        %4850 = vmatmul.mubr.bf16.gmra.mrb[0].mxu0 %v4639
        %v4851 = vpop.f32.mrb[0].mxu0
        %v4852 = vadd.f32 0.0, %v4851
        %v4853 = vpop.f32.mrb[0].mxu0
        %v4854 = vpop.f32.mrb[0].mxu0
        %v4855 = vadd.f32 0.0, %v4854
        %v4856 = vpop.f32.mrb[0].mxu0
        %4857 = vmatprep.mubr.bf16.mxu0 %v4642
        %4858 = vmatmul.mubr.bf16.gmra.mrb[0].mxu0 %v4641
        %v4859 = vpop.f32.mrb[0].mxu0
        %v4860 = vadd.f32 0.0, %v4859
        %v4861 = vpop.f32.mrb[0].mxu0
        %v4862 = vpop.f32.mrb[0].mxu0
        %v4863 = vadd.f32 0.0, %v4862
        %v4864 = vpop.f32.mrb[0].mxu0
        %4865 = vmatprep.mubr.bf16.mxu0 %v4644
        %4866 = vmatmul.mubr.bf16.gmra.mrb[0].mxu0 %v4643
        %v4867 = vpop.f32.mrb[0].mxu0
        %v4868 = vadd.f32 0.0, %v4867
        %v4869 = vpop.f32.mrb[0].mxu0
        %v4870 = vpop.f32.mrb[0].mxu0
        %v4871 = vadd.f32 0.0, %v4870
        %v4872 = vpop.f32.mrb[0].mxu0
        %4873 = vdwg.mxu0
        %v4874 = vadd.f32 %v4282, %v4796
        %v4875 = vadd.f32 %v4283, %v4799
        %v4876 = vadd.f32 %v4284, %v4804
        %v4877 = vadd.f32 %v4285, %v4807
        %v4878 = vadd.f32 %v4286, %v4812
        %v4879 = vadd.f32 %v4287, %v4815
        %v4880 = vadd.f32 %v4288, %v4820
        %v4881 = vadd.f32 %v4289, %v4823
        %v4882 = vadd.f32 %v4290, %v4828
        %v4883 = vadd.f32 %v4291, %v4831
        %v4884 = vadd.f32 %v4292, %v4836
        %v4885 = vadd.f32 %v4293, %v4839
        %v4886 = vadd.f32 %v4294, %v4844
        %v4887 = vadd.f32 %v4295, %v4847
        %v4888 = vadd.f32 %v4296, %v4852
        %v4889 = vadd.f32 %v4297, %v4855
        %v4890 = vadd.f32 %v4298, %v4860
        %v4891 = vadd.f32 %v4299, %v4863
        %v4892 = vadd.f32 %v4300, %v4868
        %v4893 = vadd.f32 %v4301, %v4871
        %s4894 = scalar_lea.vmem %s6, 896
        %v4895 = vld [vmem:[%s4894] sm:$0xf]
        %v4896 = vld [vmem:[%s4894 + $0x4] sm:$0xf]
        %v4897 = vld [vmem:[%s4894 + $0x8] sm:$0xf]
        %v4898 = vld [vmem:[%s4894 + $0xc] sm:$0xf]
        %v4899 = vld [vmem:[%s4894 + $0x10] sm:$0xf]
        %v4900 = vld [vmem:[%s4894 + $0x14] sm:$0xf]
        %v4901 = vld [vmem:[%s4894 + $0x18] sm:$0xf]
        %v4902 = vld [vmem:[%s4894 + $0x1c] sm:$0xf]
        %v4903 = vld [vmem:[%s4894 + $0x20] sm:$0xf]
        %v4904 = vld [vmem:[%s4894 + $0x24] sm:$0xf]
        %v4905 = vld [vmem:[%s4894 + $0x28] sm:$0xf]
        %v4906 = vld [vmem:[%s4894 + $0x2c] sm:$0xf]
        %v4907 = vld [vmem:[%s4894 + $0x30] sm:$0xf]
        %v4908 = vld [vmem:[%s4894 + $0x34] sm:$0xf]
        %v4909 = vld [vmem:[%s4894 + $0x38] sm:$0xf]
        %v4910 = vld [vmem:[%s4894 + $0x3c] sm:$0xf]
        %v4911 = vld [vmem:[%s4894 + $0x40] sm:$0xf]
        %v4912 = vld [vmem:[%s4894 + $0x44] sm:$0xf]
        %v4913 = vld [vmem:[%s4894 + $0x48] sm:$0xf]
        %v4914 = vld [vmem:[%s4894 + $0x4c] sm:$0xf]
        %v4915 = vld [vmem:[%s4894 + $0x50] sm:$0xf]
        %v4916 = vld [vmem:[%s4894 + $0x54] sm:$0xf]
        %v4917 = vld [vmem:[%s4894 + $0x58] sm:$0xf]
        %v4918 = vld [vmem:[%s4894 + $0x5c] sm:$0xf]
        %v4919 = vld [vmem:[%s4894 + $0x60] sm:$0xf]
        %v4920 = vld [vmem:[%s4894 + $0x64] sm:$0xf]
        %v4921 = vld [vmem:[%s4894 + $0x68] sm:$0xf]
        %v4922 = vld [vmem:[%s4894 + $0x6c] sm:$0xf]
        %v4923 = vld [vmem:[%s4894 + $0x70] sm:$0xf]
        %v4924 = vld [vmem:[%s4894 + $0x74] sm:$0xf]
        %v4925 = vld [vmem:[%s4894 + $0x78] sm:$0xf]
        %v4926 = vld [vmem:[%s4894 + $0x7c] sm:$0xf]
        %v4947 = vunpack.c.l.b16 %v4303
        %v4948 = vunpack.c.h.b16 %v4303
        %v4949 = vunpack.c.l.b16 %v4304
        %v4950 = vunpack.c.h.b16 %v4304
        %v4951 = vunpack.c.l.b16 %v4306
        %v4952 = vunpack.c.h.b16 %v4306
        %v4953 = vunpack.c.l.b16 %v4307
        %v4954 = vunpack.c.h.b16 %v4307
        %v4955 = vunpack.c.l.b16 %v4309
        %v4956 = vunpack.c.h.b16 %v4309
        %v4957 = vunpack.c.l.b16 %v4310
        %v4958 = vunpack.c.h.b16 %v4310
        %v4959 = vunpack.c.l.b16 %v4312
        %v4960 = vunpack.c.h.b16 %v4312
        %v4961 = vunpack.c.l.b16 %v4313
        %v4962 = vunpack.c.h.b16 %v4313
        %v4963 = vunpack.c.l.b16 %v4315
        %v4964 = vunpack.c.h.b16 %v4315
        %v4965 = vunpack.c.l.b16 %v4316
        %v4966 = vunpack.c.h.b16 %v4316
        %v4967 = vunpack.c.l.b16 %v4318
        %v4968 = vunpack.c.h.b16 %v4318
        %v4969 = vunpack.c.l.b16 %v4319
        %v4970 = vunpack.c.h.b16 %v4319
        %v4971 = vunpack.c.l.b16 %v4321
        %v4972 = vunpack.c.h.b16 %v4321
        %v4973 = vunpack.c.l.b16 %v4322
        %v4974 = vunpack.c.h.b16 %v4322
        %v4975 = vunpack.c.l.b16 %v4324
        %v4976 = vunpack.c.h.b16 %v4324
        %v4977 = vunpack.c.l.b16 %v4325
        %v4978 = vunpack.c.h.b16 %v4325
        %v4979 = vunpack.c.l.b16 %v4327
        %v4980 = vunpack.c.h.b16 %v4327
        %v4981 = vunpack.c.l.b16 %v4328
        %v4982 = vunpack.c.h.b16 %v4328
        %v4983 = vunpack.c.l.b16 %v4330
        %v4984 = vunpack.c.h.b16 %v4330
        %v4985 = vunpack.c.l.b16 %v4331
        %v4986 = vunpack.c.h.b16 %v4331
        %v4987 = vpack.c.b16 %v4949, %v4947
        %v4988 = vpack.c.b16 %v4950, %v4948
        %v4989 = vpack.c.b16 %v4953, %v4951
        %v4990 = vpack.c.b16 %v4954, %v4952
        %v4991 = vpack.c.b16 %v4957, %v4955
        %v4992 = vpack.c.b16 %v4958, %v4956
        %v4993 = vpack.c.b16 %v4961, %v4959
        %v4994 = vpack.c.b16 %v4962, %v4960
        %v4995 = vpack.c.b16 %v4965, %v4963
        %v4996 = vpack.c.b16 %v4966, %v4964
        %v4997 = vpack.c.b16 %v4969, %v4967
        %v4998 = vpack.c.b16 %v4970, %v4968
        %v4999 = vpack.c.b16 %v4973, %v4971
        %v5000 = vpack.c.b16 %v4974, %v4972
        %v5001 = vpack.c.b16 %v4977, %v4975
        %v5002 = vpack.c.b16 %v4978, %v4976
        %v5003 = vpack.c.b16 %v4981, %v4979
        %v5004 = vpack.c.b16 %v4982, %v4980
        %v5005 = vpack.c.b16 %v4985, %v4983
        %v5006 = vpack.c.b16 %v4986, %v4984
        %v5059 = vunpack.c.l.b16 %v4895
        %v5060 = vunpack.c.l.b16 %v4896
        %v5061 = vunpack.c.l.b16 %v4897
        %v5062 = vunpack.c.l.b16 %v4898
        %v5063 = vunpack.c.l.b16 %v4899
        %v5064 = vunpack.c.l.b16 %v4900
        %v5065 = vunpack.c.l.b16 %v4901
        %v5066 = vunpack.c.l.b16 %v4902
        %v5067 = vunpack.c.l.b16 %v4903
        %v5068 = vunpack.c.l.b16 %v4904
        %v5069 = vunpack.c.l.b16 %v4905
        %v5070 = vunpack.c.l.b16 %v4906
        %v5071 = vunpack.c.l.b16 %v4907
        %v5072 = vunpack.c.l.b16 %v4908
        %v5073 = vunpack.c.l.b16 %v4909
        %v5074 = vunpack.c.l.b16 %v4910
        %v5075 = vunpack.c.l.b16 %v4911
        %v5076 = vunpack.c.l.b16 %v4912
        %v5077 = vunpack.c.l.b16 %v4913
        %v5078 = vunpack.c.l.b16 %v4914
        %v5079 = vunpack.c.l.b16 %v4915
        %v5080 = vunpack.c.l.b16 %v4916
        %v5081 = vunpack.c.l.b16 %v4917
        %v5082 = vunpack.c.l.b16 %v4918
        %v5083 = vunpack.c.l.b16 %v4919
        %v5084 = vunpack.c.l.b16 %v4920
        %v5085 = vunpack.c.l.b16 %v4921
        %v5086 = vunpack.c.l.b16 %v4922
        %v5087 = vunpack.c.l.b16 %v4923
        %v5088 = vunpack.c.l.b16 %v4924
        %v5089 = vunpack.c.l.b16 %v4925
        %v5090 = vunpack.c.l.b16 %v4926
        %v5091 = vpack.c.b16 %v5060, %v5059
        %v5092 = vpack.c.b16 %v5062, %v5061
        %v5093 = vpack.c.b16 %v5064, %v5063
        %v5094 = vpack.c.b16 %v5066, %v5065
        %v5095 = vpack.c.b16 %v5068, %v5067
        %v5096 = vpack.c.b16 %v5070, %v5069
        %v5097 = vpack.c.b16 %v5072, %v5071
        %v5098 = vpack.c.b16 %v5074, %v5073
        %v5099 = vpack.c.b16 %v5076, %v5075
        %v5100 = vpack.c.b16 %v5078, %v5077
        %v5101 = vpack.c.b16 %v5080, %v5079
        %v5102 = vpack.c.b16 %v5082, %v5081
        %v5103 = vpack.c.b16 %v5084, %v5083
        %v5104 = vpack.c.b16 %v5086, %v5085
        %v5105 = vpack.c.b16 %v5088, %v5087
        %v5106 = vpack.c.b16 %v5090, %v5089
        %5123 = vmatprep.subr.bf16.mxu0 0
        %5124 = vmatpush1.bf16.msra.mxu0 %v5091
        %5125 = vmatprep.subr.bf16.mxu0 0
        %5126 = vmatpush1.bf16.msra.mxu0 %v5092
        %5127 = vmatprep.subr.bf16.mxu0 0
        %5128 = vmatpush1.bf16.msra.mxu0 %v5093
        %5129 = vmatprep.subr.bf16.mxu0 0
        %5130 = vmatpush1.bf16.msra.mxu0 %v5094
        %5131 = vmatprep.subr.bf16.mxu0 0
        %5132 = vmatpush1.bf16.msra.mxu0 %v5095
        %5133 = vmatprep.subr.bf16.mxu0 0
        %5134 = vmatpush1.bf16.msra.mxu0 %v5096
        %5135 = vmatprep.subr.bf16.mxu0 0
        %5136 = vmatpush1.bf16.msra.mxu0 %v5097
        %5137 = vmatprep.subr.bf16.mxu0 0
        %5138 = vmatpush1.bf16.msra.mxu0 %v5098
        %5139 = vmatprep.subr.bf16.mxu0 0
        %5140 = vmatpush1.bf16.msra.mxu0 %v5099
        %5141 = vmatprep.subr.bf16.mxu0 0
        %5142 = vmatpush1.bf16.msra.mxu0 %v5100
        %5143 = vmatprep.subr.bf16.mxu0 0
        %5144 = vmatpush1.bf16.msra.mxu0 %v5101
        %5145 = vmatprep.subr.bf16.mxu0 0
        %5146 = vmatpush1.bf16.msra.mxu0 %v5102
        %5147 = vmatprep.subr.bf16.mxu0 0
        %5148 = vmatpush1.bf16.msra.mxu0 %v5103
        %5149 = vmatprep.subr.bf16.mxu0 0
        %5150 = vmatpush1.bf16.msra.mxu0 %v5104
        %5151 = vmatprep.subr.bf16.mxu0 0
        %5152 = vmatpush1.bf16.msra.mxu0 %v5105
        %5153 = vmatprep.subr.bf16.mxu0 0
        %5154 = vmatpush1.bf16.msra.mxu0 %v5106
        %5155 = vmatprep.mubr.bf16.mxu0 %v4988
        %5156 = vmatmul.mubr.bf16.gmra.mrb[0].mxu0 %v4987
        %v5157 = vpop.f32.mrb[0].mxu0
        %v5158 = vadd.f32 0.0, %v5157
        %v5159 = vpop.f32.mrb[0].mxu0
        %v5160 = vpop.f32.mrb[0].mxu0
        %v5161 = vadd.f32 0.0, %v5160
        %v5162 = vpop.f32.mrb[0].mxu0
        %5163 = vmatprep.mubr.bf16.mxu0 %v4990
        %5164 = vmatmul.mubr.bf16.gmra.mrb[0].mxu0 %v4989
        %v5165 = vpop.f32.mrb[0].mxu0
        %v5166 = vadd.f32 0.0, %v5165
        %v5167 = vpop.f32.mrb[0].mxu0
        %v5168 = vpop.f32.mrb[0].mxu0
        %v5169 = vadd.f32 0.0, %v5168
        %v5170 = vpop.f32.mrb[0].mxu0
        %5171 = vmatprep.mubr.bf16.mxu0 %v4992
        %5172 = vmatmul.mubr.bf16.gmra.mrb[0].mxu0 %v4991
        %v5173 = vpop.f32.mrb[0].mxu0
        %v5174 = vadd.f32 0.0, %v5173
        %v5175 = vpop.f32.mrb[0].mxu0
        %v5176 = vpop.f32.mrb[0].mxu0
        %v5177 = vadd.f32 0.0, %v5176
        %v5178 = vpop.f32.mrb[0].mxu0
        %5179 = vmatprep.mubr.bf16.mxu0 %v4994
        %5180 = vmatmul.mubr.bf16.gmra.mrb[0].mxu0 %v4993
        %v5181 = vpop.f32.mrb[0].mxu0
        %v5182 = vadd.f32 0.0, %v5181
        %v5183 = vpop.f32.mrb[0].mxu0
        %v5184 = vpop.f32.mrb[0].mxu0
        %v5185 = vadd.f32 0.0, %v5184
        %v5186 = vpop.f32.mrb[0].mxu0
        %5187 = vmatprep.mubr.bf16.mxu0 %v4996
        %5188 = vmatmul.mubr.bf16.gmra.mrb[0].mxu0 %v4995
        %v5189 = vpop.f32.mrb[0].mxu0
        %v5190 = vadd.f32 0.0, %v5189
        %v5191 = vpop.f32.mrb[0].mxu0
        %v5192 = vpop.f32.mrb[0].mxu0
        %v5193 = vadd.f32 0.0, %v5192
        %v5194 = vpop.f32.mrb[0].mxu0
        %5195 = vmatprep.mubr.bf16.mxu0 %v4998
        %5196 = vmatmul.mubr.bf16.gmra.mrb[0].mxu0 %v4997
        %v5197 = vpop.f32.mrb[0].mxu0
        %v5198 = vadd.f32 0.0, %v5197
        %v5199 = vpop.f32.mrb[0].mxu0
        %v5200 = vpop.f32.mrb[0].mxu0
        %v5201 = vadd.f32 0.0, %v5200
        %v5202 = vpop.f32.mrb[0].mxu0
        %5203 = vmatprep.mubr.bf16.mxu0 %v5000
        %5204 = vmatmul.mubr.bf16.gmra.mrb[0].mxu0 %v4999
        %v5205 = vpop.f32.mrb[0].mxu0
        %v5206 = vadd.f32 0.0, %v5205
        %v5207 = vpop.f32.mrb[0].mxu0
        %v5208 = vpop.f32.mrb[0].mxu0
        %v5209 = vadd.f32 0.0, %v5208
        %v5210 = vpop.f32.mrb[0].mxu0
        %5211 = vmatprep.mubr.bf16.mxu0 %v5002
        %5212 = vmatmul.mubr.bf16.gmra.mrb[0].mxu0 %v5001
        %v5213 = vpop.f32.mrb[0].mxu0
        %v5214 = vadd.f32 0.0, %v5213
        %v5215 = vpop.f32.mrb[0].mxu0
        %v5216 = vpop.f32.mrb[0].mxu0
        %v5217 = vadd.f32 0.0, %v5216
        %v5218 = vpop.f32.mrb[0].mxu0
        %5219 = vmatprep.mubr.bf16.mxu0 %v5004
        %5220 = vmatmul.mubr.bf16.gmra.mrb[0].mxu0 %v5003
        %v5221 = vpop.f32.mrb[0].mxu0
        %v5222 = vadd.f32 0.0, %v5221
        %v5223 = vpop.f32.mrb[0].mxu0
        %v5224 = vpop.f32.mrb[0].mxu0
        %v5225 = vadd.f32 0.0, %v5224
        %v5226 = vpop.f32.mrb[0].mxu0
        %5227 = vmatprep.mubr.bf16.mxu0 %v5006
        %5228 = vmatmul.mubr.bf16.gmra.mrb[0].mxu0 %v5005
        %v5229 = vpop.f32.mrb[0].mxu0
        %v5230 = vadd.f32 0.0, %v5229
        %v5231 = vpop.f32.mrb[0].mxu0
        %v5232 = vpop.f32.mrb[0].mxu0
        %v5233 = vadd.f32 0.0, %v5232
        %v5234 = vpop.f32.mrb[0].mxu0
        %5235 = vdwg.mxu0
        %v5236 = vadd.f32 %v4874, %v5158
        %v5237 = vadd.f32 %v4875, %v5161
        %v5238 = vadd.f32 %v4876, %v5166
        %v5239 = vadd.f32 %v4877, %v5169
        %v5240 = vadd.f32 %v4878, %v5174
        %v5241 = vadd.f32 %v4879, %v5177
        %v5242 = vadd.f32 %v4880, %v5182
        %v5243 = vadd.f32 %v4881, %v5185
        %v5244 = vadd.f32 %v4882, %v5190
        %v5245 = vadd.f32 %v4883, %v5193
        %v5246 = vadd.f32 %v4884, %v5198
        %v5247 = vadd.f32 %v4885, %v5201
        %v5248 = vadd.f32 %v4886, %v5206
        %v5249 = vadd.f32 %v4887, %v5209
        %v5250 = vadd.f32 %v4888, %v5214
        %v5251 = vadd.f32 %v4889, %v5217
        %v5252 = vadd.f32 %v4890, %v5222
        %v5253 = vadd.f32 %v4891, %v5225
        %v5254 = vadd.f32 %v4892, %v5230
        %v5255 = vadd.f32 %v4893, %v5233
        %v5256 = vld [vmem:[%s982 + $0x10] sm:$0xff]
        %v5257 = vld [vmem:[%s982 + $0x18] sm:$0xff]
        %v5258 = vld [vmem:[%s982 + $0x20] sm:$0x11]
        %v5259 = vld [vmem:[%s982 + $0x38] sm:$0xff]
        %v5260 = vld [vmem:[%s982 + $0x40] sm:$0xff]
        %v5261 = vld [vmem:[%s982 + $0x48] sm:$0x11]
        %v5262 = vld [vmem:[%s982 + $0x60] sm:$0xff]
        %v5263 = vld [vmem:[%s982 + $0x68] sm:$0xff]
        %v5264 = vld [vmem:[%s982 + $0x70] sm:$0x11]
        %v5265 = vld [vmem:[%s982 + $0x88] sm:$0xff]
        %v5266 = vld [vmem:[%s982 + $0x90] sm:$0xff]
        %v5267 = vld [vmem:[%s982 + $0x98] sm:$0x11]
        %v5268 = vld [vmem:[%s982 + $0xb0] sm:$0xff]
        %v5269 = vld [vmem:[%s982 + $0xb8] sm:$0xff]
        %v5270 = vld [vmem:[%s982 + $0xc0] sm:$0x11]
        %v5271 = vld [vmem:[%s982 + $0xd8] sm:$0xff]
        %v5272 = vld [vmem:[%s982 + $0xe0] sm:$0xff]
        %v5273 = vld [vmem:[%s982 + $0xe8] sm:$0x11]
        %v5274 = vld [vmem:[%s982 + $0x100] sm:$0xff]
        %v5275 = vld [vmem:[%s982 + $0x108] sm:$0xff]
        %v5276 = vld [vmem:[%s982 + $0x110] sm:$0x11]
        %v5277 = vld [vmem:[%s982 + $0x128] sm:$0xff]
        %v5278 = vld [vmem:[%s982 + $0x130] sm:$0xff]
        %v5279 = vld [vmem:[%s982 + $0x138] sm:$0x11]
        %v5280 = vld [vmem:[%s982 + $0x150] sm:$0xff]
        %v5281 = vld [vmem:[%s982 + $0x158] sm:$0xff]
        %v5282 = vld [vmem:[%s982 + $0x160] sm:$0x11]
        %v5283 = vld [vmem:[%s982 + $0x178] sm:$0xff]
        %v5284 = vld [vmem:[%s982 + $0x180] sm:$0xff]
        %v5285 = vld [vmem:[%s982 + $0x188] sm:$0x11]
        %v5287 = vshrl.u32 %v5256, 16
        %v5289 = vrot.slane %v5287, 4
        %v5290 = vshll.u32 %v5256, 16
        %v5292 = vrot.slane %v5290, 5
        %v5293 = vor.u32 %v5289, %v5292
        %v5294 = vrot.slane %v5293, 4
        %v5296 = vshll.u32 %v5257, 16
        %v5298 = vrot.slane %v5296, 5
        %v5299 = vsel %vm2152, %v5294, %v5298
        %v5300 = vshrl.u32 %v5257, 16
        %v5302 = vrot.slane %v5300, 4
        %v5303 = vor.u32 %v5302, %v5298
        %v5304 = vrot.slane %v5303, 4
        %v5306 = vshll.u32 %v5258, 16
        %v5308 = vrot.slane %v5306, 5
        %v5309 = vsel %vm2152, %v5304, %v5308
        %v5311 = vshrl.u32 %v5259, 16
        %v5313 = vrot.slane %v5311, 4
        %v5314 = vshll.u32 %v5259, 16
        %v5316 = vrot.slane %v5314, 5
        %v5317 = vor.u32 %v5313, %v5316
        %v5318 = vrot.slane %v5317, 4
        %v5320 = vshll.u32 %v5260, 16
        %v5322 = vrot.slane %v5320, 5
        %v5323 = vsel %vm2152, %v5318, %v5322
        %v5324 = vshrl.u32 %v5260, 16
        %v5326 = vrot.slane %v5324, 4
        %v5327 = vor.u32 %v5326, %v5322
        %v5328 = vrot.slane %v5327, 4
        %v5330 = vshll.u32 %v5261, 16
        %v5332 = vrot.slane %v5330, 5
        %v5333 = vsel %vm2152, %v5328, %v5332
        %v5335 = vshrl.u32 %v5262, 16
        %v5337 = vrot.slane %v5335, 4
        %v5338 = vshll.u32 %v5262, 16
        %v5340 = vrot.slane %v5338, 5
        %v5341 = vor.u32 %v5337, %v5340
        %v5342 = vrot.slane %v5341, 4
        %v5344 = vshll.u32 %v5263, 16
        %v5346 = vrot.slane %v5344, 5
        %v5347 = vsel %vm2152, %v5342, %v5346
        %v5348 = vshrl.u32 %v5263, 16
        %v5350 = vrot.slane %v5348, 4
        %v5351 = vor.u32 %v5350, %v5346
        %v5352 = vrot.slane %v5351, 4
        %v5354 = vshll.u32 %v5264, 16
        %v5356 = vrot.slane %v5354, 5
        %v5357 = vsel %vm2152, %v5352, %v5356
        %v5359 = vshrl.u32 %v5265, 16
        %v5361 = vrot.slane %v5359, 4
        %v5362 = vshll.u32 %v5265, 16
        %v5364 = vrot.slane %v5362, 5
        %v5365 = vor.u32 %v5361, %v5364
        %v5366 = vrot.slane %v5365, 4
        %v5368 = vshll.u32 %v5266, 16
        %v5370 = vrot.slane %v5368, 5
        %v5371 = vsel %vm2152, %v5366, %v5370
        %v5372 = vshrl.u32 %v5266, 16
        %v5374 = vrot.slane %v5372, 4
        %v5375 = vor.u32 %v5374, %v5370
        %v5376 = vrot.slane %v5375, 4
        %v5378 = vshll.u32 %v5267, 16
        %v5380 = vrot.slane %v5378, 5
        %v5381 = vsel %vm2152, %v5376, %v5380
        %v5383 = vshrl.u32 %v5268, 16
        %v5385 = vrot.slane %v5383, 4
        %v5386 = vshll.u32 %v5268, 16
        %v5388 = vrot.slane %v5386, 5
        %v5389 = vor.u32 %v5385, %v5388
        %v5390 = vrot.slane %v5389, 4
        %v5392 = vshll.u32 %v5269, 16
        %v5394 = vrot.slane %v5392, 5
        %v5395 = vsel %vm2152, %v5390, %v5394
        %v5396 = vshrl.u32 %v5269, 16
        %v5398 = vrot.slane %v5396, 4
        %v5399 = vor.u32 %v5398, %v5394
        %v5400 = vrot.slane %v5399, 4
        %v5402 = vshll.u32 %v5270, 16
        %v5404 = vrot.slane %v5402, 5
        %v5405 = vsel %vm2152, %v5400, %v5404
        %v5407 = vshrl.u32 %v5271, 16
        %v5409 = vrot.slane %v5407, 4
        %v5410 = vshll.u32 %v5271, 16
        %v5412 = vrot.slane %v5410, 5
        %v5413 = vor.u32 %v5409, %v5412
        %v5414 = vrot.slane %v5413, 4
        %v5416 = vshll.u32 %v5272, 16
        %v5418 = vrot.slane %v5416, 5
        %v5419 = vsel %vm2152, %v5414, %v5418
        %v5420 = vshrl.u32 %v5272, 16
        %v5422 = vrot.slane %v5420, 4
        %v5423 = vor.u32 %v5422, %v5418
        %v5424 = vrot.slane %v5423, 4
        %v5426 = vshll.u32 %v5273, 16
        %v5428 = vrot.slane %v5426, 5
        %v5429 = vsel %vm2152, %v5424, %v5428
        %v5431 = vshrl.u32 %v5274, 16
        %v5433 = vrot.slane %v5431, 4
        %v5434 = vshll.u32 %v5274, 16
        %v5436 = vrot.slane %v5434, 5
        %v5437 = vor.u32 %v5433, %v5436
        %v5438 = vrot.slane %v5437, 4
        %v5440 = vshll.u32 %v5275, 16
        %v5442 = vrot.slane %v5440, 5
        %v5443 = vsel %vm2152, %v5438, %v5442
        %v5444 = vshrl.u32 %v5275, 16
        %v5446 = vrot.slane %v5444, 4
        %v5447 = vor.u32 %v5446, %v5442
        %v5448 = vrot.slane %v5447, 4
        %v5450 = vshll.u32 %v5276, 16
        %v5452 = vrot.slane %v5450, 5
        %v5453 = vsel %vm2152, %v5448, %v5452
        %v5455 = vshrl.u32 %v5277, 16
        %v5457 = vrot.slane %v5455, 4
        %v5458 = vshll.u32 %v5277, 16
        %v5460 = vrot.slane %v5458, 5
        %v5461 = vor.u32 %v5457, %v5460
        %v5462 = vrot.slane %v5461, 4
        %v5464 = vshll.u32 %v5278, 16
        %v5466 = vrot.slane %v5464, 5
        %v5467 = vsel %vm2152, %v5462, %v5466
        %v5468 = vshrl.u32 %v5278, 16
        %v5470 = vrot.slane %v5468, 4
        %v5471 = vor.u32 %v5470, %v5466
        %v5472 = vrot.slane %v5471, 4
        %v5474 = vshll.u32 %v5279, 16
        %v5476 = vrot.slane %v5474, 5
        %v5477 = vsel %vm2152, %v5472, %v5476
        %v5479 = vshrl.u32 %v5280, 16
        %v5481 = vrot.slane %v5479, 4
        %v5482 = vshll.u32 %v5280, 16
        %v5484 = vrot.slane %v5482, 5
        %v5485 = vor.u32 %v5481, %v5484
        %v5486 = vrot.slane %v5485, 4
        %v5488 = vshll.u32 %v5281, 16
        %v5490 = vrot.slane %v5488, 5
        %v5491 = vsel %vm2152, %v5486, %v5490
        %v5492 = vshrl.u32 %v5281, 16
        %v5494 = vrot.slane %v5492, 4
        %v5495 = vor.u32 %v5494, %v5490
        %v5496 = vrot.slane %v5495, 4
        %v5498 = vshll.u32 %v5282, 16
        %v5500 = vrot.slane %v5498, 5
        %v5501 = vsel %vm2152, %v5496, %v5500
        %v5503 = vshrl.u32 %v5283, 16
        %v5505 = vrot.slane %v5503, 4
        %v5506 = vshll.u32 %v5283, 16
        %v5508 = vrot.slane %v5506, 5
        %v5509 = vor.u32 %v5505, %v5508
        %v5510 = vrot.slane %v5509, 4
        %v5512 = vshll.u32 %v5284, 16
        %v5514 = vrot.slane %v5512, 5
        %v5515 = vsel %vm2152, %v5510, %v5514
        %v5516 = vshrl.u32 %v5284, 16
        %v5518 = vrot.slane %v5516, 4
        %v5519 = vor.u32 %v5518, %v5514
        %v5520 = vrot.slane %v5519, 4
        %v5522 = vshll.u32 %v5285, 16
        %v5524 = vrot.slane %v5522, 5
        %v5525 = vsel %vm2152, %v5520, %v5524
        %s5526 = scalar_lea.vmem %s6, 1024
        %v5527 = vld [vmem:[%s5526] sm:$0xf]
        %v5528 = vld [vmem:[%s5526 + $0x4] sm:$0xf]
        %v5529 = vld [vmem:[%s5526 + $0x8] sm:$0xf]
        %v5530 = vld [vmem:[%s5526 + $0xc] sm:$0xf]
        %v5531 = vld [vmem:[%s5526 + $0x10] sm:$0xf]
        %v5532 = vld [vmem:[%s5526 + $0x14] sm:$0xf]
        %v5533 = vld [vmem:[%s5526 + $0x18] sm:$0xf]
        %v5534 = vld [vmem:[%s5526 + $0x1c] sm:$0xf]
        %v5535 = vld [vmem:[%s5526 + $0x20] sm:$0xf]
        %v5536 = vld [vmem:[%s5526 + $0x24] sm:$0xf]
        %v5537 = vld [vmem:[%s5526 + $0x28] sm:$0xf]
        %v5538 = vld [vmem:[%s5526 + $0x2c] sm:$0xf]
        %v5539 = vld [vmem:[%s5526 + $0x30] sm:$0xf]
        %v5540 = vld [vmem:[%s5526 + $0x34] sm:$0xf]
        %v5541 = vld [vmem:[%s5526 + $0x38] sm:$0xf]
        %v5542 = vld [vmem:[%s5526 + $0x3c] sm:$0xf]
        %v5543 = vld [vmem:[%s5526 + $0x40] sm:$0xf]
        %v5544 = vld [vmem:[%s5526 + $0x44] sm:$0xf]
        %v5545 = vld [vmem:[%s5526 + $0x48] sm:$0xf]
        %v5546 = vld [vmem:[%s5526 + $0x4c] sm:$0xf]
        %v5547 = vld [vmem:[%s5526 + $0x50] sm:$0xf]
        %v5548 = vld [vmem:[%s5526 + $0x54] sm:$0xf]
        %v5549 = vld [vmem:[%s5526 + $0x58] sm:$0xf]
        %v5550 = vld [vmem:[%s5526 + $0x5c] sm:$0xf]
        %v5551 = vld [vmem:[%s5526 + $0x60] sm:$0xf]
        %v5552 = vld [vmem:[%s5526 + $0x64] sm:$0xf]
        %v5553 = vld [vmem:[%s5526 + $0x68] sm:$0xf]
        %v5554 = vld [vmem:[%s5526 + $0x6c] sm:$0xf]
        %v5555 = vld [vmem:[%s5526 + $0x70] sm:$0xf]
        %v5556 = vld [vmem:[%s5526 + $0x74] sm:$0xf]
        %v5557 = vld [vmem:[%s5526 + $0x78] sm:$0xf]
        %v5558 = vld [vmem:[%s5526 + $0x7c] sm:$0xf]
        %v5559 = vunpack.c.l.b16 %v5299
        %v5560 = vunpack.c.h.b16 %v5299
        %v5561 = vunpack.c.l.b16 %v5309
        %v5562 = vunpack.c.h.b16 %v5309
        %v5563 = vunpack.c.l.b16 %v5323
        %v5564 = vunpack.c.h.b16 %v5323
        %v5565 = vunpack.c.l.b16 %v5333
        %v5566 = vunpack.c.h.b16 %v5333
        %v5567 = vunpack.c.l.b16 %v5347
        %v5568 = vunpack.c.h.b16 %v5347
        %v5569 = vunpack.c.l.b16 %v5357
        %v5570 = vunpack.c.h.b16 %v5357
        %v5571 = vunpack.c.l.b16 %v5371
        %v5572 = vunpack.c.h.b16 %v5371
        %v5573 = vunpack.c.l.b16 %v5381
        %v5574 = vunpack.c.h.b16 %v5381
        %v5575 = vunpack.c.l.b16 %v5395
        %v5576 = vunpack.c.h.b16 %v5395
        %v5577 = vunpack.c.l.b16 %v5405
        %v5578 = vunpack.c.h.b16 %v5405
        %v5579 = vunpack.c.l.b16 %v5419
        %v5580 = vunpack.c.h.b16 %v5419
        %v5581 = vunpack.c.l.b16 %v5429
        %v5582 = vunpack.c.h.b16 %v5429
        %v5583 = vunpack.c.l.b16 %v5443
        %v5584 = vunpack.c.h.b16 %v5443
        %v5585 = vunpack.c.l.b16 %v5453
        %v5586 = vunpack.c.h.b16 %v5453
        %v5587 = vunpack.c.l.b16 %v5467
        %v5588 = vunpack.c.h.b16 %v5467
        %v5589 = vunpack.c.l.b16 %v5477
        %v5590 = vunpack.c.h.b16 %v5477
        %v5591 = vunpack.c.l.b16 %v5491
        %v5592 = vunpack.c.h.b16 %v5491
        %v5593 = vunpack.c.l.b16 %v5501
        %v5594 = vunpack.c.h.b16 %v5501
        %v5595 = vunpack.c.l.b16 %v5515
        %v5596 = vunpack.c.h.b16 %v5515
        %v5597 = vunpack.c.l.b16 %v5525
        %v5598 = vunpack.c.h.b16 %v5525
        %v5599 = vpack.c.b16 %v5561, %v5559
        %v5600 = vpack.c.b16 %v5562, %v5560
        %v5601 = vpack.c.b16 %v5565, %v5563
        %v5602 = vpack.c.b16 %v5566, %v5564
        %v5603 = vpack.c.b16 %v5569, %v5567
        %v5604 = vpack.c.b16 %v5570, %v5568
        %v5605 = vpack.c.b16 %v5573, %v5571
        %v5606 = vpack.c.b16 %v5574, %v5572
        %v5607 = vpack.c.b16 %v5577, %v5575
        %v5608 = vpack.c.b16 %v5578, %v5576
        %v5609 = vpack.c.b16 %v5581, %v5579
        %v5610 = vpack.c.b16 %v5582, %v5580
        %v5611 = vpack.c.b16 %v5585, %v5583
        %v5612 = vpack.c.b16 %v5586, %v5584
        %v5613 = vpack.c.b16 %v5589, %v5587
        %v5614 = vpack.c.b16 %v5590, %v5588
        %v5615 = vpack.c.b16 %v5593, %v5591
        %v5616 = vpack.c.b16 %v5594, %v5592
        %v5617 = vpack.c.b16 %v5597, %v5595
        %v5618 = vpack.c.b16 %v5598, %v5596
        %v5671 = vunpack.c.l.b16 %v5527
        %v5672 = vunpack.c.l.b16 %v5528
        %v5673 = vunpack.c.l.b16 %v5529
        %v5674 = vunpack.c.l.b16 %v5530
        %v5675 = vunpack.c.l.b16 %v5531
        %v5676 = vunpack.c.l.b16 %v5532
        %v5677 = vunpack.c.l.b16 %v5533
        %v5678 = vunpack.c.l.b16 %v5534
        %v5679 = vunpack.c.l.b16 %v5535
        %v5680 = vunpack.c.l.b16 %v5536
        %v5681 = vunpack.c.l.b16 %v5537
        %v5682 = vunpack.c.l.b16 %v5538
        %v5683 = vunpack.c.l.b16 %v5539
        %v5684 = vunpack.c.l.b16 %v5540
        %v5685 = vunpack.c.l.b16 %v5541
        %v5686 = vunpack.c.l.b16 %v5542
        %v5687 = vunpack.c.l.b16 %v5543
        %v5688 = vunpack.c.l.b16 %v5544
        %v5689 = vunpack.c.l.b16 %v5545
        %v5690 = vunpack.c.l.b16 %v5546
        %v5691 = vunpack.c.l.b16 %v5547
        %v5692 = vunpack.c.l.b16 %v5548
        %v5693 = vunpack.c.l.b16 %v5549
        %v5694 = vunpack.c.l.b16 %v5550
        %v5695 = vunpack.c.l.b16 %v5551
        %v5696 = vunpack.c.l.b16 %v5552
        %v5697 = vunpack.c.l.b16 %v5553
        %v5698 = vunpack.c.l.b16 %v5554
        %v5699 = vunpack.c.l.b16 %v5555
        %v5700 = vunpack.c.l.b16 %v5556
        %v5701 = vunpack.c.l.b16 %v5557
        %v5702 = vunpack.c.l.b16 %v5558
        %v5703 = vpack.c.b16 %v5672, %v5671
        %v5704 = vpack.c.b16 %v5674, %v5673
        %v5705 = vpack.c.b16 %v5676, %v5675
        %v5706 = vpack.c.b16 %v5678, %v5677
        %v5707 = vpack.c.b16 %v5680, %v5679
        %v5708 = vpack.c.b16 %v5682, %v5681
        %v5709 = vpack.c.b16 %v5684, %v5683
        %v5710 = vpack.c.b16 %v5686, %v5685
        %v5711 = vpack.c.b16 %v5688, %v5687
        %v5712 = vpack.c.b16 %v5690, %v5689
        %v5713 = vpack.c.b16 %v5692, %v5691
        %v5714 = vpack.c.b16 %v5694, %v5693
        %v5715 = vpack.c.b16 %v5696, %v5695
        %v5716 = vpack.c.b16 %v5698, %v5697
        %v5717 = vpack.c.b16 %v5700, %v5699
        %v5718 = vpack.c.b16 %v5702, %v5701
        %5735 = vmatprep.subr.bf16.mxu0 0
        %5736 = vmatpush1.bf16.msra.mxu0 %v5703
        %5737 = vmatprep.subr.bf16.mxu0 0
        %5738 = vmatpush1.bf16.msra.mxu0 %v5704
        %5739 = vmatprep.subr.bf16.mxu0 0
        %5740 = vmatpush1.bf16.msra.mxu0 %v5705
        %5741 = vmatprep.subr.bf16.mxu0 0
        %5742 = vmatpush1.bf16.msra.mxu0 %v5706
        %5743 = vmatprep.subr.bf16.mxu0 0
        %5744 = vmatpush1.bf16.msra.mxu0 %v5707
        %5745 = vmatprep.subr.bf16.mxu0 0
        %5746 = vmatpush1.bf16.msra.mxu0 %v5708
        %5747 = vmatprep.subr.bf16.mxu0 0
        %5748 = vmatpush1.bf16.msra.mxu0 %v5709
        %5749 = vmatprep.subr.bf16.mxu0 0
        %5750 = vmatpush1.bf16.msra.mxu0 %v5710
        %5751 = vmatprep.subr.bf16.mxu0 0
        %5752 = vmatpush1.bf16.msra.mxu0 %v5711
        %5753 = vmatprep.subr.bf16.mxu0 0
        %5754 = vmatpush1.bf16.msra.mxu0 %v5712
        %5755 = vmatprep.subr.bf16.mxu0 0
        %5756 = vmatpush1.bf16.msra.mxu0 %v5713
        %5757 = vmatprep.subr.bf16.mxu0 0
        %5758 = vmatpush1.bf16.msra.mxu0 %v5714
        %5759 = vmatprep.subr.bf16.mxu0 0
        %5760 = vmatpush1.bf16.msra.mxu0 %v5715
        %5761 = vmatprep.subr.bf16.mxu0 0
        %5762 = vmatpush1.bf16.msra.mxu0 %v5716
        %5763 = vmatprep.subr.bf16.mxu0 0
        %5764 = vmatpush1.bf16.msra.mxu0 %v5717
        %5765 = vmatprep.subr.bf16.mxu0 0
        %5766 = vmatpush1.bf16.msra.mxu0 %v5718
        %5767 = vmatprep.mubr.bf16.mxu0 %v5600
        %5768 = vmatmul.mubr.bf16.gmra.mrb[0].mxu0 %v5599
        %v5769 = vpop.f32.mrb[0].mxu0
        %v5770 = vadd.f32 0.0, %v5769
        %v5771 = vpop.f32.mrb[0].mxu0
        %v5772 = vpop.f32.mrb[0].mxu0
        %v5773 = vadd.f32 0.0, %v5772
        %v5774 = vpop.f32.mrb[0].mxu0
        %5775 = vmatprep.mubr.bf16.mxu0 %v5602
        %5776 = vmatmul.mubr.bf16.gmra.mrb[0].mxu0 %v5601
        %v5777 = vpop.f32.mrb[0].mxu0
        %v5778 = vadd.f32 0.0, %v5777
        %v5779 = vpop.f32.mrb[0].mxu0
        %v5780 = vpop.f32.mrb[0].mxu0
        %v5781 = vadd.f32 0.0, %v5780
        %v5782 = vpop.f32.mrb[0].mxu0
        %5783 = vmatprep.mubr.bf16.mxu0 %v5604
        %5784 = vmatmul.mubr.bf16.gmra.mrb[0].mxu0 %v5603
        %v5785 = vpop.f32.mrb[0].mxu0
        %v5786 = vadd.f32 0.0, %v5785
        %v5787 = vpop.f32.mrb[0].mxu0
        %v5788 = vpop.f32.mrb[0].mxu0
        %v5789 = vadd.f32 0.0, %v5788
        %v5790 = vpop.f32.mrb[0].mxu0
        %5791 = vmatprep.mubr.bf16.mxu0 %v5606
        %5792 = vmatmul.mubr.bf16.gmra.mrb[0].mxu0 %v5605
        %v5793 = vpop.f32.mrb[0].mxu0
        %v5794 = vadd.f32 0.0, %v5793
        %v5795 = vpop.f32.mrb[0].mxu0
        %v5796 = vpop.f32.mrb[0].mxu0
        %v5797 = vadd.f32 0.0, %v5796
        %v5798 = vpop.f32.mrb[0].mxu0
        %5799 = vmatprep.mubr.bf16.mxu0 %v5608
        %5800 = vmatmul.mubr.bf16.gmra.mrb[0].mxu0 %v5607
        %v5801 = vpop.f32.mrb[0].mxu0
        %v5802 = vadd.f32 0.0, %v5801
        %v5803 = vpop.f32.mrb[0].mxu0
        %v5804 = vpop.f32.mrb[0].mxu0
        %v5805 = vadd.f32 0.0, %v5804
        %v5806 = vpop.f32.mrb[0].mxu0
        %5807 = vmatprep.mubr.bf16.mxu0 %v5610
        %5808 = vmatmul.mubr.bf16.gmra.mrb[0].mxu0 %v5609
        %v5809 = vpop.f32.mrb[0].mxu0
        %v5810 = vadd.f32 0.0, %v5809
        %v5811 = vpop.f32.mrb[0].mxu0
        %v5812 = vpop.f32.mrb[0].mxu0
        %v5813 = vadd.f32 0.0, %v5812
        %v5814 = vpop.f32.mrb[0].mxu0
        %5815 = vmatprep.mubr.bf16.mxu0 %v5612
        %5816 = vmatmul.mubr.bf16.gmra.mrb[0].mxu0 %v5611
        %v5817 = vpop.f32.mrb[0].mxu0
        %v5818 = vadd.f32 0.0, %v5817
        %v5819 = vpop.f32.mrb[0].mxu0
        %v5820 = vpop.f32.mrb[0].mxu0
        %v5821 = vadd.f32 0.0, %v5820
        %v5822 = vpop.f32.mrb[0].mxu0
        %5823 = vmatprep.mubr.bf16.mxu0 %v5614
        %5824 = vmatmul.mubr.bf16.gmra.mrb[0].mxu0 %v5613
        %v5825 = vpop.f32.mrb[0].mxu0
        %v5826 = vadd.f32 0.0, %v5825
        %v5827 = vpop.f32.mrb[0].mxu0
        %v5828 = vpop.f32.mrb[0].mxu0
        %v5829 = vadd.f32 0.0, %v5828
        %v5830 = vpop.f32.mrb[0].mxu0
        %5831 = vmatprep.mubr.bf16.mxu0 %v5616
        %5832 = vmatmul.mubr.bf16.gmra.mrb[0].mxu0 %v5615
        %v5833 = vpop.f32.mrb[0].mxu0
        %v5834 = vadd.f32 0.0, %v5833
        %v5835 = vpop.f32.mrb[0].mxu0
        %v5836 = vpop.f32.mrb[0].mxu0
        %v5837 = vadd.f32 0.0, %v5836
        %v5838 = vpop.f32.mrb[0].mxu0
        %5839 = vmatprep.mubr.bf16.mxu0 %v5618
        %5840 = vmatmul.mubr.bf16.gmra.mrb[0].mxu0 %v5617
        %v5841 = vpop.f32.mrb[0].mxu0
        %v5842 = vadd.f32 0.0, %v5841
        %v5843 = vpop.f32.mrb[0].mxu0
        %v5844 = vpop.f32.mrb[0].mxu0
        %v5845 = vadd.f32 0.0, %v5844
        %v5846 = vpop.f32.mrb[0].mxu0
        %5847 = vdwg.mxu0
        %v5848 = vadd.f32 %v5236, %v5770
        %v5849 = vadd.f32 %v5237, %v5773
        %v5850 = vadd.f32 %v5238, %v5778
        %v5851 = vadd.f32 %v5239, %v5781
        %v5852 = vadd.f32 %v5240, %v5786
        %v5853 = vadd.f32 %v5241, %v5789
        %v5854 = vadd.f32 %v5242, %v5794
        %v5855 = vadd.f32 %v5243, %v5797
        %v5856 = vadd.f32 %v5244, %v5802
        %v5857 = vadd.f32 %v5245, %v5805
        %v5858 = vadd.f32 %v5246, %v5810
        %v5859 = vadd.f32 %v5247, %v5813
        %v5860 = vadd.f32 %v5248, %v5818
        %v5861 = vadd.f32 %v5249, %v5821
        %v5862 = vadd.f32 %v5250, %v5826
        %v5863 = vadd.f32 %v5251, %v5829
        %v5864 = vadd.f32 %v5252, %v5834
        %v5865 = vadd.f32 %v5253, %v5837
        %v5866 = vadd.f32 %v5254, %v5842
        %v5867 = vadd.f32 %v5255, %v5845
        %v5868 = vld [vmem:[%s7] sm:$0x1]
        %v5870 = vlaneseq
        %v5871 = vshrl.u32 %v5870, 7
        %v5872 = vsub.s32 0, %v5871
        %v5873 = vrot.slane %v5868, %v5872
        %v5875 = vmul.f32 %v5848, %v5873
        %v5876 = vmul.f32 %v5849, %v5873
        %v5877 = vmul.f32 %v5850, %v5873
        %v5878 = vmul.f32 %v5851, %v5873
        %v5879 = vmul.f32 %v5852, %v5873
        %v5880 = vmul.f32 %v5853, %v5873
        %v5881 = vmul.f32 %v5854, %v5873
        %v5882 = vmul.f32 %v5855, %v5873
        %v5883 = vmul.f32 %v5856, %v5873
        %v5884 = vmul.f32 %v5857, %v5873
        %v5885 = vmul.f32 %v5858, %v5873
        %v5886 = vmul.f32 %v5859, %v5873
        %v5887 = vmul.f32 %v5860, %v5873
        %v5888 = vmul.f32 %v5861, %v5873
        %v5889 = vmul.f32 %v5862, %v5873
        %v5890 = vmul.f32 %v5863, %v5873
        %v5891 = vmul.f32 %v5864, %v5873
        %v5892 = vmul.f32 %v5865, %v5873
        %v5893 = vmul.f32 %v5866, %v5873
        %v5894 = vmul.f32 %v5867, %v5873
        %v5895 = vld [vmem:[%s8] sm:$0x1]
        %v5897 = vlaneseq
        %v5898 = vshrl.u32 %v5897, 7
        %v5899 = vsub.s32 0, %v5898
        %v5900 = vrot.slane %v5895, %v5899
        %v5902 = vadd.f32 %v5875, %v5900
        %v5903 = vadd.f32 %v5876, %v5900
        %v5904 = vadd.f32 %v5877, %v5900
        %v5905 = vadd.f32 %v5878, %v5900
        %v5906 = vadd.f32 %v5879, %v5900
        %v5907 = vadd.f32 %v5880, %v5900
        %v5908 = vadd.f32 %v5881, %v5900
        %v5909 = vadd.f32 %v5882, %v5900
        %v5910 = vadd.f32 %v5883, %v5900
        %v5911 = vadd.f32 %v5884, %v5900
        %v5912 = vadd.f32 %v5885, %v5900
        %v5913 = vadd.f32 %v5886, %v5900
        %v5914 = vadd.f32 %v5887, %v5900
        %v5915 = vadd.f32 %v5888, %v5900
        %v5916 = vadd.f32 %v5889, %v5900
        %v5917 = vadd.f32 %v5890, %v5900
        %v5918 = vadd.f32 %v5891, %v5900
        %v5919 = vadd.f32 %v5892, %v5900
        %v5920 = vadd.f32 %v5893, %v5900
        %v5921 = vadd.f32 %v5894, %v5900
        %v5922 = vmax.f32 %v5902, 0.0
        %v5923 = vmax.f32 %v5903, 0.0
        %v5924 = vmax.f32 %v5904, 0.0
        %v5925 = vmax.f32 %v5905, 0.0
        %v5926 = vmax.f32 %v5906, 0.0
        %v5927 = vmax.f32 %v5907, 0.0
        %v5928 = vmax.f32 %v5908, 0.0
        %v5929 = vmax.f32 %v5909, 0.0
        %v5930 = vmax.f32 %v5910, 0.0
        %v5931 = vmax.f32 %v5911, 0.0
        %v5932 = vmax.f32 %v5912, 0.0
        %v5933 = vmax.f32 %v5913, 0.0
        %v5934 = vmax.f32 %v5914, 0.0
        %v5935 = vmax.f32 %v5915, 0.0
        %v5936 = vmax.f32 %v5916, 0.0
        %v5937 = vmax.f32 %v5917, 0.0
        %v5938 = vmax.f32 %v5918, 0.0
        %v5939 = vmax.f32 %v5919, 0.0
        %v5940 = vmax.f32 %v5920, 0.0
        %v5941 = vmax.f32 %v5921, 0.0
        %v5942 = vpack.c.bf16 %v5923, %v5922
        %v5943 = vpack.c.bf16 %v5925, %v5924
        %v5944 = vpack.c.bf16 %v5927, %v5926
        %v5945 = vpack.c.bf16 %v5929, %v5928
        %v5946 = vpack.c.bf16 %v5931, %v5930
        %v5947 = vpack.c.bf16 %v5933, %v5932
        %v5948 = vpack.c.bf16 %v5935, %v5934
        %v5949 = vpack.c.bf16 %v5937, %v5936
        %v5950 = vpack.c.bf16 %v5939, %v5938
        %v5951 = vpack.c.bf16 %v5941, %v5940
        %v5962 = vunpack.c.l.b16 %v5942
        %v5963 = vunpack.c.h.b16 %v5942
        %v5964 = vunpack.c.l.b16 %v5943
        %v5965 = vunpack.c.h.b16 %v5943
        %v5966 = vunpack.c.l.b16 %v5944
        %v5967 = vunpack.c.h.b16 %v5944
        %v5968 = vunpack.c.l.b16 %v5945
        %v5969 = vunpack.c.h.b16 %v5945
        %v5970 = vunpack.c.l.b16 %v5946
        %v5971 = vunpack.c.h.b16 %v5946
        %v5972 = vunpack.c.l.b16 %v5947
        %v5973 = vunpack.c.h.b16 %v5947
        %v5974 = vunpack.c.l.b16 %v5948
        %v5975 = vunpack.c.h.b16 %v5948
        %v5976 = vunpack.c.l.b16 %v5949
        %v5977 = vunpack.c.h.b16 %v5949
        %v5978 = vunpack.c.l.b16 %v5950
        %v5979 = vunpack.c.h.b16 %v5950
        %v5980 = vunpack.c.l.b16 %v5951
        %v5981 = vunpack.c.h.b16 %v5951
        %v5982 = vpack.c.b16 %v5962, %v5962
        %v5983 = vpack.c.b16 %v5963, %v5963
        %v5984 = vpack.c.b16 %v5964, %v5964
        %v5985 = vpack.c.b16 %v5965, %v5965
        %v5986 = vpack.c.b16 %v5966, %v5966
        %v5987 = vpack.c.b16 %v5967, %v5967
        %v5988 = vpack.c.b16 %v5968, %v5968
        %v5989 = vpack.c.b16 %v5969, %v5969
        %v5990 = vpack.c.b16 %v5970, %v5970
        %v5991 = vpack.c.b16 %v5971, %v5971
        %v5992 = vpack.c.b16 %v5972, %v5972
        %v5993 = vpack.c.b16 %v5973, %v5973
        %v5994 = vpack.c.b16 %v5974, %v5974
        %v5995 = vpack.c.b16 %v5975, %v5975
        %v5996 = vpack.c.b16 %v5976, %v5976
        %v5997 = vpack.c.b16 %v5977, %v5977
        %v5998 = vpack.c.b16 %v5978, %v5978
        %v5999 = vpack.c.b16 %v5979, %v5979
        %v6000 = vpack.c.b16 %v5980, %v5980
        %v6001 = vpack.c.b16 %v5981, %v5981
        %6022 = vst [vmem:[#allocation3 + $0x8] sm:$0xf] %v5982
        %6023 = vst [vmem:[#allocation3 + $0xc] sm:$0xf] %v5983
        %6024 = vst [vmem:[#allocation3 + $0x1c] sm:$0xf] %v5984
        %6025 = vst [vmem:[#allocation3 + $0x20] sm:$0xf] %v5985
        %6026 = vst [vmem:[#allocation3 + $0x30] sm:$0xf] %v5986
        %6027 = vst [vmem:[#allocation3 + $0x34] sm:$0xf] %v5987
        %6028 = vst [vmem:[#allocation3 + $0x44] sm:$0xf] %v5988
        %6029 = vst [vmem:[#allocation3 + $0x48] sm:$0xf] %v5989
        %6030 = vst [vmem:[#allocation3 + $0x58] sm:$0xf] %v5990
        %6031 = vst [vmem:[#allocation3 + $0x5c] sm:$0xf] %v5991
        %6032 = vst [vmem:[#allocation3 + $0x6c] sm:$0xf] %v5992
        %6033 = vst [vmem:[#allocation3 + $0x70] sm:$0xf] %v5993
        %6034 = vst [vmem:[#allocation3 + $0x80] sm:$0xf] %v5994
        %6035 = vst [vmem:[#allocation3 + $0x84] sm:$0xf] %v5995
        %6036 = vst [vmem:[#allocation3 + $0x94] sm:$0xf] %v5996
        %6037 = vst [vmem:[#allocation3 + $0x98] sm:$0xf] %v5997
        %6038 = vst [vmem:[#allocation3 + $0xa8] sm:$0xf] %v5998
        %6039 = vst [vmem:[#allocation3 + $0xac] sm:$0xf] %v5999
        %6040 = vst [vmem:[#allocation3 + $0xbc] sm:$0xf] %v6000
        %6041 = vst [vmem:[#allocation3 + $0xc0] sm:$0xf] %v6001
        %v6042 = vld [vmem:[#allocation3 + $0x4] sm:$0x8]
        %v6043 = vsel %vm1121, 0, %v6042
        %6044 = vst [vmem:[#allocation3 + $0x4] sm:$0x8] %v6043
        %v6045 = vld [vmem:[#allocation3 + $0x18] sm:$0x8]
        %v6046 = vsel %vm1121, 0, %v6045
        %6047 = vst [vmem:[#allocation3 + $0x18] sm:$0x8] %v6046
        %v6048 = vld [vmem:[#allocation3 + $0x2c] sm:$0x8]
        %v6049 = vsel %vm1121, 0, %v6048
        %6050 = vst [vmem:[#allocation3 + $0x2c] sm:$0x8] %v6049
        %v6051 = vld [vmem:[#allocation3 + $0x40] sm:$0x8]
        %v6052 = vsel %vm1121, 0, %v6051
        %6053 = vst [vmem:[#allocation3 + $0x40] sm:$0x8] %v6052
        %v6054 = vld [vmem:[#allocation3 + $0x54] sm:$0x8]
        %v6055 = vsel %vm1121, 0, %v6054
        %6056 = vst [vmem:[#allocation3 + $0x54] sm:$0x8] %v6055
        %v6057 = vld [vmem:[#allocation3 + $0x68] sm:$0x8]
        %v6058 = vsel %vm1121, 0, %v6057
        %6059 = vst [vmem:[#allocation3 + $0x68] sm:$0x8] %v6058
        %v6060 = vld [vmem:[#allocation3 + $0x7c] sm:$0x8]
        %v6061 = vsel %vm1121, 0, %v6060
        %6062 = vst [vmem:[#allocation3 + $0x7c] sm:$0x8] %v6061
        %v6063 = vld [vmem:[#allocation3 + $0x90] sm:$0x8]
        %v6064 = vsel %vm1121, 0, %v6063
        %6065 = vst [vmem:[#allocation3 + $0x90] sm:$0x8] %v6064
        %v6066 = vld [vmem:[#allocation3 + $0xa4] sm:$0x8]
        %v6067 = vsel %vm1121, 0, %v6066
        %6068 = vst [vmem:[#allocation3 + $0xa4] sm:$0x8] %v6067
        %v6069 = vld [vmem:[#allocation3 + $0xb8] sm:$0x8]
        %v6070 = vsel %vm1121, 0, %v6069
        %6071 = vst [vmem:[#allocation3 + $0xb8] sm:$0x8] %v6070
        %v6072 = vld [vmem:[#allocation3 + $0x10] sm:$0x1]
        %v6073 = vsel %vm1164, 0, %v6072
        %6074 = vst [vmem:[#allocation3 + $0x10] sm:$0x1] %v6073
        %v6075 = vld [vmem:[#allocation3 + $0x24] sm:$0x1]
        %v6076 = vsel %vm1164, 0, %v6075
        %6077 = vst [vmem:[#allocation3 + $0x24] sm:$0x1] %v6076
        %v6078 = vld [vmem:[#allocation3 + $0x38] sm:$0x1]
        %v6079 = vsel %vm1164, 0, %v6078
        %6080 = vst [vmem:[#allocation3 + $0x38] sm:$0x1] %v6079
        %v6081 = vld [vmem:[#allocation3 + $0x4c] sm:$0x1]
        %v6082 = vsel %vm1164, 0, %v6081
        %6083 = vst [vmem:[#allocation3 + $0x4c] sm:$0x1] %v6082
        %v6084 = vld [vmem:[#allocation3 + $0x60] sm:$0x1]
        %v6085 = vsel %vm1164, 0, %v6084
        %6086 = vst [vmem:[#allocation3 + $0x60] sm:$0x1] %v6085
        %v6087 = vld [vmem:[#allocation3 + $0x74] sm:$0x1]
        %v6088 = vsel %vm1164, 0, %v6087
        %6089 = vst [vmem:[#allocation3 + $0x74] sm:$0x1] %v6088
        %v6090 = vld [vmem:[#allocation3 + $0x88] sm:$0x1]
        %v6091 = vsel %vm1164, 0, %v6090
        %6092 = vst [vmem:[#allocation3 + $0x88] sm:$0x1] %v6091
        %v6093 = vld [vmem:[#allocation3 + $0x9c] sm:$0x1]
        %v6094 = vsel %vm1164, 0, %v6093
        %6095 = vst [vmem:[#allocation3 + $0x9c] sm:$0x1] %v6094
        %v6096 = vld [vmem:[#allocation3 + $0xb0] sm:$0x1]
        %v6097 = vsel %vm1164, 0, %v6096
        %6098 = vst [vmem:[#allocation3 + $0xb0] sm:$0x1] %v6097
        %v6099 = vld [vmem:[#allocation3 + $0xc4] sm:$0x1]
        %v6100 = vsel %vm1164, 0, %v6099
        %6101 = vst [vmem:[#allocation3 + $0xc4] sm:$0x1] %v6100
        // Predicated region
        $region73: #{tpu_custom_call.1} parent=67 // pred_check
          %p6102 = pneg %p929
        $region74: #{tpu_custom_call.1} parent=67 // pred_check_branch
          %6104 = sbr.rel (%p6102) target = $region76
        $region75: #{tpu_custom_call.1} parent=67 // pred_region
          %6105 = vst [vmem:[#allocation3] sm:$0xf] 0
          %6106 = vst [vmem:[#allocation3 + $0x4] sm:$0xf] 0
          %6107 = vst [vmem:[#allocation3 + $0x8] sm:$0xf] 0
          %6108 = vst [vmem:[#allocation3 + $0xc] sm:$0xf] 0
          %v6109 = vld [vmem:[#allocation3 + $0x10] sm:$0x1]
          %v6110 = vsel %vm1164, 0, %v6109
          %6111 = vst [vmem:[#allocation3 + $0x10] sm:$0x1] %v6110
        $region76: #{tpu_custom_call.1} parent=67 // pred_fallthru
          _
        // Predicated region
        $region77: #{tpu_custom_call.1} parent=67 // pred_check
          %p6112 = pneg %p936
        $region78: #{tpu_custom_call.1} parent=67 // pred_check_branch
          %6114 = sbr.rel (%p6112) target = $region80
        $region79: #{tpu_custom_call.1} parent=67 // pred_region
          %s6115 = scalar_lea.vmem [#allocation3], 180
          %6116 = vst [vmem:[%s6115] sm:$0xf] 0
          %6117 = vst [vmem:[%s6115 + $0x4] sm:$0xf] 0
          %6118 = vst [vmem:[%s6115 + $0x8] sm:$0xf] 0
          %6119 = vst [vmem:[%s6115 + $0xc] sm:$0xf] 0
          %v6120 = vld [vmem:[%s6115 + $0x10] sm:$0x1]
          %v6121 = vsel %vm1164, 0, %v6120
          %6122 = vst [vmem:[%s6115 + $0x10] sm:$0x1] %v6121
        $region80: #{tpu_custom_call.1} parent=67 // pred_fallthru
          _
        %v6123 = vld [vmem:[#allocation3 + $0x4] sm:$0x8]
        %v6124 = vld [vmem:[#allocation3 + $0x8] sm:$0xf]
        %v6125 = vld [vmem:[#allocation3 + $0xc] sm:$0xf]
        %v6126 = vld [vmem:[#allocation3 + $0x18] sm:$0x8]
        %v6127 = vld [vmem:[#allocation3 + $0x1c] sm:$0xf]
        %v6128 = vld [vmem:[#allocation3 + $0x20] sm:$0xf]
        %v6129 = vld [vmem:[#allocation3 + $0x2c] sm:$0x8]
        %v6130 = vld [vmem:[#allocation3 + $0x30] sm:$0xf]
        %v6131 = vld [vmem:[#allocation3 + $0x34] sm:$0xf]
        %v6132 = vld [vmem:[#allocation3 + $0x40] sm:$0x8]
        %v6133 = vld [vmem:[#allocation3 + $0x44] sm:$0xf]
        %v6134 = vld [vmem:[#allocation3 + $0x48] sm:$0xf]
        %v6135 = vld [vmem:[#allocation3 + $0x54] sm:$0x8]
        %v6136 = vld [vmem:[#allocation3 + $0x58] sm:$0xf]
        %v6137 = vld [vmem:[#allocation3 + $0x5c] sm:$0xf]
        %v6138 = vld [vmem:[#allocation3 + $0x68] sm:$0x8]
        %v6139 = vld [vmem:[#allocation3 + $0x6c] sm:$0xf]
        %v6140 = vld [vmem:[#allocation3 + $0x70] sm:$0xf]
        %v6141 = vld [vmem:[#allocation3 + $0x7c] sm:$0x8]
        %v6142 = vld [vmem:[#allocation3 + $0x80] sm:$0xf]
        %v6143 = vld [vmem:[#allocation3 + $0x84] sm:$0xf]
        %v6144 = vld [vmem:[#allocation3 + $0x90] sm:$0x8]
        %v6145 = vld [vmem:[#allocation3 + $0x94] sm:$0xf]
        %v6146 = vld [vmem:[#allocation3 + $0x98] sm:$0xf]
        %v6148 = vshrl.u32 %v6123, 16
        %v6150 = vrot.slane %v6148, 7
        %v6151 = vrot.slane %v6150, 4
        %v6153 = vshrl.u32 %v6124, 16
        %v6155 = vrot.slane %v6153, 7
        %v6156 = vshll.u32 %v6124, 16
        %v6158 = vor.u32 %v6155, %v6156
        %v6159 = vsel %vm1236, %v6151, %v6158
        %v6160 = vrot.slane %v6155, 4
        %v6162 = vshrl.u32 %v6125, 16
        %v6164 = vrot.slane %v6162, 7
        %v6165 = vshll.u32 %v6125, 16
        %v6167 = vor.u32 %v6164, %v6165
        %v6168 = vsel %vm1236, %v6160, %v6167
        %v6170 = vshrl.u32 %v6126, 16
        %v6172 = vrot.slane %v6170, 7
        %v6173 = vrot.slane %v6172, 4
        %v6175 = vshrl.u32 %v6127, 16
        %v6177 = vrot.slane %v6175, 7
        %v6178 = vshll.u32 %v6127, 16
        %v6180 = vor.u32 %v6177, %v6178
        %v6181 = vsel %vm1236, %v6173, %v6180
        %v6182 = vrot.slane %v6177, 4
        %v6184 = vshrl.u32 %v6128, 16
        %v6186 = vrot.slane %v6184, 7
        %v6187 = vshll.u32 %v6128, 16
        %v6189 = vor.u32 %v6186, %v6187
        %v6190 = vsel %vm1236, %v6182, %v6189
        %v6192 = vshrl.u32 %v6129, 16
        %v6194 = vrot.slane %v6192, 7
        %v6195 = vrot.slane %v6194, 4
        %v6197 = vshrl.u32 %v6130, 16
        %v6199 = vrot.slane %v6197, 7
        %v6200 = vshll.u32 %v6130, 16
        %v6202 = vor.u32 %v6199, %v6200
        %v6203 = vsel %vm1236, %v6195, %v6202
        %v6204 = vrot.slane %v6199, 4
        %v6206 = vshrl.u32 %v6131, 16
        %v6208 = vrot.slane %v6206, 7
        %v6209 = vshll.u32 %v6131, 16
        %v6211 = vor.u32 %v6208, %v6209
        %v6212 = vsel %vm1236, %v6204, %v6211
        %v6214 = vshrl.u32 %v6132, 16
        %v6216 = vrot.slane %v6214, 7
        %v6217 = vrot.slane %v6216, 4
        %v6219 = vshrl.u32 %v6133, 16
        %v6221 = vrot.slane %v6219, 7
        %v6222 = vshll.u32 %v6133, 16
        %v6224 = vor.u32 %v6221, %v6222
        %v6225 = vsel %vm1236, %v6217, %v6224
        %v6226 = vrot.slane %v6221, 4
        %v6228 = vshrl.u32 %v6134, 16
        %v6230 = vrot.slane %v6228, 7
        %v6231 = vshll.u32 %v6134, 16
        %v6233 = vor.u32 %v6230, %v6231
        %v6234 = vsel %vm1236, %v6226, %v6233
        %v6236 = vshrl.u32 %v6135, 16
        %v6238 = vrot.slane %v6236, 7
        %v6239 = vrot.slane %v6238, 4
        %v6241 = vshrl.u32 %v6136, 16
        %v6243 = vrot.slane %v6241, 7
        %v6244 = vshll.u32 %v6136, 16
        %v6246 = vor.u32 %v6243, %v6244
        %v6247 = vsel %vm1236, %v6239, %v6246
        %v6248 = vrot.slane %v6243, 4
        %v6250 = vshrl.u32 %v6137, 16
        %v6252 = vrot.slane %v6250, 7
        %v6253 = vshll.u32 %v6137, 16
        %v6255 = vor.u32 %v6252, %v6253
        %v6256 = vsel %vm1236, %v6248, %v6255
        %v6258 = vshrl.u32 %v6138, 16
        %v6260 = vrot.slane %v6258, 7
        %v6261 = vrot.slane %v6260, 4
        %v6263 = vshrl.u32 %v6139, 16
        %v6265 = vrot.slane %v6263, 7
        %v6266 = vshll.u32 %v6139, 16
        %v6268 = vor.u32 %v6265, %v6266
        %v6269 = vsel %vm1236, %v6261, %v6268
        %v6270 = vrot.slane %v6265, 4
        %v6272 = vshrl.u32 %v6140, 16
        %v6274 = vrot.slane %v6272, 7
        %v6275 = vshll.u32 %v6140, 16
        %v6277 = vor.u32 %v6274, %v6275
        %v6278 = vsel %vm1236, %v6270, %v6277
        %v6280 = vshrl.u32 %v6141, 16
        %v6282 = vrot.slane %v6280, 7
        %v6283 = vrot.slane %v6282, 4
        %v6285 = vshrl.u32 %v6142, 16
        %v6287 = vrot.slane %v6285, 7
        %v6288 = vshll.u32 %v6142, 16
        %v6290 = vor.u32 %v6287, %v6288
        %v6291 = vsel %vm1236, %v6283, %v6290
        %v6292 = vrot.slane %v6287, 4
        %v6294 = vshrl.u32 %v6143, 16
        %v6296 = vrot.slane %v6294, 7
        %v6297 = vshll.u32 %v6143, 16
        %v6299 = vor.u32 %v6296, %v6297
        %v6300 = vsel %vm1236, %v6292, %v6299
        %v6302 = vshrl.u32 %v6144, 16
        %v6304 = vrot.slane %v6302, 7
        %v6305 = vrot.slane %v6304, 4
        %v6307 = vshrl.u32 %v6145, 16
        %v6309 = vrot.slane %v6307, 7
        %v6310 = vshll.u32 %v6145, 16
        %v6312 = vor.u32 %v6309, %v6310
        %v6313 = vsel %vm1236, %v6305, %v6312
        %v6314 = vrot.slane %v6309, 4
        %v6316 = vshrl.u32 %v6146, 16
        %v6318 = vrot.slane %v6316, 7
        %v6319 = vshll.u32 %v6146, 16
        %v6321 = vor.u32 %v6318, %v6319
        %v6322 = vsel %vm1236, %v6314, %v6321
        %v6323 = vld [vmem:[#allocation4] sm:$0xf]
        %v6324 = vld [vmem:[#allocation4 + $0x4] sm:$0xf]
        %v6325 = vld [vmem:[#allocation4 + $0x8] sm:$0xf]
        %v6326 = vld [vmem:[#allocation4 + $0xc] sm:$0xf]
        %v6327 = vld [vmem:[#allocation4 + $0x10] sm:$0xf]
        %v6328 = vld [vmem:[#allocation4 + $0x14] sm:$0xf]
        %v6329 = vld [vmem:[#allocation4 + $0x18] sm:$0xf]
        %v6330 = vld [vmem:[#allocation4 + $0x1c] sm:$0xf]
        %v6331 = vld [vmem:[#allocation4 + $0x20] sm:$0xf]
        %v6332 = vld [vmem:[#allocation4 + $0x24] sm:$0xf]
        %v6333 = vld [vmem:[#allocation4 + $0x28] sm:$0xf]
        %v6334 = vld [vmem:[#allocation4 + $0x2c] sm:$0xf]
        %v6335 = vld [vmem:[#allocation4 + $0x30] sm:$0xf]
        %v6336 = vld [vmem:[#allocation4 + $0x34] sm:$0xf]
        %v6337 = vld [vmem:[#allocation4 + $0x38] sm:$0xf]
        %v6338 = vld [vmem:[#allocation4 + $0x3c] sm:$0xf]
        %s6339 = scalar_lea.vmem [#allocation4], 64
        %v6340 = vld [vmem:[%s6339] sm:$0xf]
        %v6341 = vld [vmem:[%s6339 + $0x4] sm:$0xf]
        %v6342 = vld [vmem:[%s6339 + $0x8] sm:$0xf]
        %v6343 = vld [vmem:[%s6339 + $0xc] sm:$0xf]
        %v6344 = vld [vmem:[%s6339 + $0x10] sm:$0xf]
        %v6345 = vld [vmem:[%s6339 + $0x14] sm:$0xf]
        %v6346 = vld [vmem:[%s6339 + $0x18] sm:$0xf]
        %v6347 = vld [vmem:[%s6339 + $0x1c] sm:$0xf]
        %v6348 = vld [vmem:[%s6339 + $0x20] sm:$0xf]
        %v6349 = vld [vmem:[%s6339 + $0x24] sm:$0xf]
        %v6350 = vld [vmem:[%s6339 + $0x28] sm:$0xf]
        %v6351 = vld [vmem:[%s6339 + $0x2c] sm:$0xf]
        %v6352 = vld [vmem:[%s6339 + $0x30] sm:$0xf]
        %v6353 = vld [vmem:[%s6339 + $0x34] sm:$0xf]
        %v6354 = vld [vmem:[%s6339 + $0x38] sm:$0xf]
        %v6355 = vld [vmem:[%s6339 + $0x3c] sm:$0xf]
        %v6372 = vunpack.c.l.b16 %v6124
        %v6373 = vunpack.c.l.b16 %v6125
        %v6374 = vunpack.c.l.b16 %v6127
        %v6375 = vunpack.c.l.b16 %v6128
        %v6376 = vunpack.c.l.b16 %v6130
        %v6377 = vunpack.c.l.b16 %v6131
        %v6378 = vunpack.c.l.b16 %v6133
        %v6379 = vunpack.c.l.b16 %v6134
        %v6380 = vunpack.c.l.b16 %v6136
        %v6381 = vunpack.c.l.b16 %v6137
        %v6382 = vunpack.c.l.b16 %v6139
        %v6383 = vunpack.c.l.b16 %v6140
        %v6384 = vunpack.c.l.b16 %v6142
        %v6385 = vunpack.c.l.b16 %v6143
        %v6386 = vunpack.c.l.b16 %v6145
        %v6387 = vunpack.c.l.b16 %v6146
        %v6388 = vpack.c.b16 %v6373, %v6372
        %v6389 = vpack.c.b16 %v6375, %v6374
        %v6390 = vpack.c.b16 %v6377, %v6376
        %v6391 = vpack.c.b16 %v6379, %v6378
        %v6392 = vpack.c.b16 %v6381, %v6380
        %v6393 = vpack.c.b16 %v6383, %v6382
        %v6394 = vpack.c.b16 %v6385, %v6384
        %v6395 = vpack.c.b16 %v6387, %v6386
        %v6420 = vunpack.c.l.b16 %v6340
        %v6421 = vunpack.c.l.b16 %v6341
        %v6422 = vunpack.c.l.b16 %v6342
        %v6423 = vunpack.c.l.b16 %v6343
        %v6424 = vunpack.c.l.b16 %v6344
        %v6425 = vunpack.c.l.b16 %v6345
        %v6426 = vunpack.c.l.b16 %v6346
        %v6427 = vunpack.c.l.b16 %v6347
        %v6428 = vunpack.c.l.b16 %v6348
        %v6429 = vunpack.c.l.b16 %v6349
        %v6430 = vunpack.c.l.b16 %v6350
        %v6431 = vunpack.c.l.b16 %v6351
        %v6432 = vunpack.c.l.b16 %v6352
        %v6433 = vunpack.c.l.b16 %v6353
        %v6434 = vunpack.c.l.b16 %v6354
        %v6435 = vunpack.c.l.b16 %v6355
        %v6436 = vpack.c.b16 %v6421, %v6420
        %v6437 = vpack.c.b16 %v6423, %v6422
        %v6438 = vpack.c.b16 %v6425, %v6424
        %v6439 = vpack.c.b16 %v6427, %v6426
        %v6440 = vpack.c.b16 %v6429, %v6428
        %v6441 = vpack.c.b16 %v6431, %v6430
        %v6442 = vpack.c.b16 %v6433, %v6432
        %v6443 = vpack.c.b16 %v6435, %v6434
        %6452 = vmatprep.subr.bf16.mxu0 0
        %6453 = vmatpush1.bf16.msra.mxu0 %v6436
        %6454 = vmatprep.subr.bf16.mxu0 0
        %6455 = vmatpush1.bf16.msra.mxu0 %v6437
        %6456 = vmatprep.subr.bf16.mxu0 0
        %6457 = vmatpush1.bf16.msra.mxu0 %v6438
        %6458 = vmatprep.subr.bf16.mxu0 0
        %6459 = vmatpush1.bf16.msra.mxu0 %v6439
        %6460 = vmatprep.subr.bf16.mxu0 0
        %6461 = vmatpush1.bf16.msra.mxu0 %v6440
        %6462 = vmatprep.subr.bf16.mxu0 0
        %6463 = vmatpush1.bf16.msra.mxu0 %v6441
        %6464 = vmatprep.subr.bf16.mxu0 0
        %6465 = vmatpush1.bf16.msra.mxu0 %v6442
        %6466 = vmatprep.subr.bf16.mxu0 0
        %6467 = vmatpush1.bf16.msra.mxu0 %v6443
        %6468 = vmatprep.subr.bf16.mxu0 0
        %6469 = vmatpush1.bf16.msra.mxu0 0
        %6470 = vmatprep.subr.bf16.mxu0 0
        %6471 = vmatpush1.bf16.msra.mxu0 0
        %6472 = vmatprep.subr.bf16.mxu0 0
        %6473 = vmatpush1.bf16.msra.mxu0 0
        %6474 = vmatprep.subr.bf16.mxu0 0
        %6475 = vmatpush1.bf16.msra.mxu0 0
        %6476 = vmatprep.subr.bf16.mxu0 0
        %6477 = vmatpush1.bf16.msra.mxu0 0
        %6478 = vmatprep.subr.bf16.mxu0 0
        %6479 = vmatpush1.bf16.msra.mxu0 0
        %6480 = vmatprep.subr.bf16.mxu0 0
        %6481 = vmatpush1.bf16.msra.mxu0 0
        %6482 = vmatprep.subr.bf16.mxu0 0
        %6483 = vmatpush1.bf16.msra.mxu0 0
        %6484 = vmatprep.mubr.bf16.mxu0 0
        %6485 = vmatmul.mubr.bf16.gmra.mrb[0].mxu0 %v6388
        %v6486 = vpop.f32.mrb[0].mxu0
        %v6487 = vadd.f32 0.0, %v6486
        %v6488 = vpop.f32.mrb[0].mxu0
        %v6489 = vpop.f32.mrb[0].mxu0
        %v6490 = vadd.f32 0.0, %v6489
        %v6491 = vpop.f32.mrb[0].mxu0
        %6492 = vmatprep.mubr.bf16.mxu0 0
        %6493 = vmatmul.mubr.bf16.gmra.mrb[0].mxu0 %v6389
        %v6494 = vpop.f32.mrb[0].mxu0
        %v6495 = vadd.f32 0.0, %v6494
        %v6496 = vpop.f32.mrb[0].mxu0
        %v6497 = vpop.f32.mrb[0].mxu0
        %v6498 = vadd.f32 0.0, %v6497
        %v6499 = vpop.f32.mrb[0].mxu0
        %6500 = vmatprep.mubr.bf16.mxu0 0
        %6501 = vmatmul.mubr.bf16.gmra.mrb[0].mxu0 %v6390
        %v6502 = vpop.f32.mrb[0].mxu0
        %v6503 = vadd.f32 0.0, %v6502
        %v6504 = vpop.f32.mrb[0].mxu0
        %v6505 = vpop.f32.mrb[0].mxu0
        %v6506 = vadd.f32 0.0, %v6505
        %v6507 = vpop.f32.mrb[0].mxu0
        %6508 = vmatprep.mubr.bf16.mxu0 0
        %6509 = vmatmul.mubr.bf16.gmra.mrb[0].mxu0 %v6391
        %v6510 = vpop.f32.mrb[0].mxu0
        %v6511 = vadd.f32 0.0, %v6510
        %v6512 = vpop.f32.mrb[0].mxu0
        %v6513 = vpop.f32.mrb[0].mxu0
        %v6514 = vadd.f32 0.0, %v6513
        %v6515 = vpop.f32.mrb[0].mxu0
        %6516 = vmatprep.mubr.bf16.mxu0 0
        %6517 = vmatmul.mubr.bf16.gmra.mrb[0].mxu0 %v6392
        %v6518 = vpop.f32.mrb[0].mxu0
        %v6519 = vadd.f32 0.0, %v6518
        %v6520 = vpop.f32.mrb[0].mxu0
        %v6521 = vpop.f32.mrb[0].mxu0
        %v6522 = vadd.f32 0.0, %v6521
        %v6523 = vpop.f32.mrb[0].mxu0
        %6524 = vmatprep.mubr.bf16.mxu0 0
        %6525 = vmatmul.mubr.bf16.gmra.mrb[0].mxu0 %v6393
        %v6526 = vpop.f32.mrb[0].mxu0
        %v6527 = vadd.f32 0.0, %v6526
        %v6528 = vpop.f32.mrb[0].mxu0
        %v6529 = vpop.f32.mrb[0].mxu0
        %v6530 = vadd.f32 0.0, %v6529
        %v6531 = vpop.f32.mrb[0].mxu0
        %6532 = vmatprep.mubr.bf16.mxu0 0
        %6533 = vmatmul.mubr.bf16.gmra.mrb[0].mxu0 %v6394
        %v6534 = vpop.f32.mrb[0].mxu0
        %v6535 = vadd.f32 0.0, %v6534
        %v6536 = vpop.f32.mrb[0].mxu0
        %v6537 = vpop.f32.mrb[0].mxu0
        %v6538 = vadd.f32 0.0, %v6537
        %v6539 = vpop.f32.mrb[0].mxu0
        %6540 = vmatprep.mubr.bf16.mxu0 0
        %6541 = vmatmul.mubr.bf16.gmra.mrb[0].mxu0 %v6395
        %v6542 = vpop.f32.mrb[0].mxu0
        %v6543 = vadd.f32 0.0, %v6542
        %v6544 = vpop.f32.mrb[0].mxu0
        %v6545 = vpop.f32.mrb[0].mxu0
        %v6546 = vadd.f32 0.0, %v6545
        %v6547 = vpop.f32.mrb[0].mxu0
        %6548 = vdwg.mxu0
        %v6549 = vunpack.c.l.b16 %v6159
        %v6550 = vunpack.c.l.b16 %v6168
        %v6551 = vunpack.c.l.b16 %v6181
        %v6552 = vunpack.c.l.b16 %v6190
        %v6553 = vunpack.c.l.b16 %v6203
        %v6554 = vunpack.c.l.b16 %v6212
        %v6555 = vunpack.c.l.b16 %v6225
        %v6556 = vunpack.c.l.b16 %v6234
        %v6557 = vunpack.c.l.b16 %v6247
        %v6558 = vunpack.c.l.b16 %v6256
        %v6559 = vunpack.c.l.b16 %v6269
        %v6560 = vunpack.c.l.b16 %v6278
        %v6561 = vunpack.c.l.b16 %v6291
        %v6562 = vunpack.c.l.b16 %v6300
        %v6563 = vunpack.c.l.b16 %v6313
        %v6564 = vunpack.c.l.b16 %v6322
        %v6565 = vpack.c.b16 %v6550, %v6549
        %v6566 = vpack.c.b16 %v6552, %v6551
        %v6567 = vpack.c.b16 %v6554, %v6553
        %v6568 = vpack.c.b16 %v6556, %v6555
        %v6569 = vpack.c.b16 %v6558, %v6557
        %v6570 = vpack.c.b16 %v6560, %v6559
        %v6571 = vpack.c.b16 %v6562, %v6561
        %v6572 = vpack.c.b16 %v6564, %v6563
        %v6597 = vunpack.c.l.b16 %v6323
        %v6598 = vunpack.c.l.b16 %v6324
        %v6599 = vunpack.c.l.b16 %v6325
        %v6600 = vunpack.c.l.b16 %v6326
        %v6601 = vunpack.c.l.b16 %v6327
        %v6602 = vunpack.c.l.b16 %v6328
        %v6603 = vunpack.c.l.b16 %v6329
        %v6604 = vunpack.c.l.b16 %v6330
        %v6605 = vunpack.c.l.b16 %v6331
        %v6606 = vunpack.c.l.b16 %v6332
        %v6607 = vunpack.c.l.b16 %v6333
        %v6608 = vunpack.c.l.b16 %v6334
        %v6609 = vunpack.c.l.b16 %v6335
        %v6610 = vunpack.c.l.b16 %v6336
        %v6611 = vunpack.c.l.b16 %v6337
        %v6612 = vunpack.c.l.b16 %v6338
        %v6613 = vpack.c.b16 %v6598, %v6597
        %v6614 = vpack.c.b16 %v6600, %v6599
        %v6615 = vpack.c.b16 %v6602, %v6601
        %v6616 = vpack.c.b16 %v6604, %v6603
        %v6617 = vpack.c.b16 %v6606, %v6605
        %v6618 = vpack.c.b16 %v6608, %v6607
        %v6619 = vpack.c.b16 %v6610, %v6609
        %v6620 = vpack.c.b16 %v6612, %v6611
        %6629 = vmatprep.subr.bf16.mxu0 0
        %6630 = vmatpush1.bf16.msra.mxu0 %v6613
        %6631 = vmatprep.subr.bf16.mxu0 0
        %6632 = vmatpush1.bf16.msra.mxu0 %v6614
        %6633 = vmatprep.subr.bf16.mxu0 0
        %6634 = vmatpush1.bf16.msra.mxu0 %v6615
        %6635 = vmatprep.subr.bf16.mxu0 0
        %6636 = vmatpush1.bf16.msra.mxu0 %v6616
        %6637 = vmatprep.subr.bf16.mxu0 0
        %6638 = vmatpush1.bf16.msra.mxu0 %v6617
        %6639 = vmatprep.subr.bf16.mxu0 0
        %6640 = vmatpush1.bf16.msra.mxu0 %v6618
        %6641 = vmatprep.subr.bf16.mxu0 0
        %6642 = vmatpush1.bf16.msra.mxu0 %v6619
        %6643 = vmatprep.subr.bf16.mxu0 0
        %6644 = vmatpush1.bf16.msra.mxu0 %v6620
        %6645 = vmatprep.subr.bf16.mxu0 0
        %6646 = vmatpush1.bf16.msra.mxu0 0
        %6647 = vmatprep.subr.bf16.mxu0 0
        %6648 = vmatpush1.bf16.msra.mxu0 0
        %6649 = vmatprep.subr.bf16.mxu0 0
        %6650 = vmatpush1.bf16.msra.mxu0 0
        %6651 = vmatprep.subr.bf16.mxu0 0
        %6652 = vmatpush1.bf16.msra.mxu0 0
        %6653 = vmatprep.subr.bf16.mxu0 0
        %6654 = vmatpush1.bf16.msra.mxu0 0
        %6655 = vmatprep.subr.bf16.mxu0 0
        %6656 = vmatpush1.bf16.msra.mxu0 0
        %6657 = vmatprep.subr.bf16.mxu0 0
        %6658 = vmatpush1.bf16.msra.mxu0 0
        %6659 = vmatprep.subr.bf16.mxu0 0
        %6660 = vmatpush1.bf16.msra.mxu0 0
        %6661 = vmatprep.mubr.bf16.mxu0 0
        %6662 = vmatmul.mubr.bf16.gmra.mrb[0].mxu0 %v6565
        %v6663 = vpop.f32.mrb[0].mxu0
        %v6664 = vadd.f32 %v6487, %v6663
        %v6665 = vpop.f32.mrb[0].mxu0
        %v6666 = vpop.f32.mrb[0].mxu0
        %v6667 = vadd.f32 %v6490, %v6666
        %v6668 = vpop.f32.mrb[0].mxu0
        %6669 = vmatprep.mubr.bf16.mxu0 0
        %6670 = vmatmul.mubr.bf16.gmra.mrb[0].mxu0 %v6566
        %v6671 = vpop.f32.mrb[0].mxu0
        %v6672 = vadd.f32 %v6495, %v6671
        %v6673 = vpop.f32.mrb[0].mxu0
        %v6674 = vpop.f32.mrb[0].mxu0
        %v6675 = vadd.f32 %v6498, %v6674
        %v6676 = vpop.f32.mrb[0].mxu0
        %6677 = vmatprep.mubr.bf16.mxu0 0
        %6678 = vmatmul.mubr.bf16.gmra.mrb[0].mxu0 %v6567
        %v6679 = vpop.f32.mrb[0].mxu0
        %v6680 = vadd.f32 %v6503, %v6679
        %v6681 = vpop.f32.mrb[0].mxu0
        %v6682 = vpop.f32.mrb[0].mxu0
        %v6683 = vadd.f32 %v6506, %v6682
        %v6684 = vpop.f32.mrb[0].mxu0
        %6685 = vmatprep.mubr.bf16.mxu0 0
        %6686 = vmatmul.mubr.bf16.gmra.mrb[0].mxu0 %v6568
        %v6687 = vpop.f32.mrb[0].mxu0
        %v6688 = vadd.f32 %v6511, %v6687
        %v6689 = vpop.f32.mrb[0].mxu0
        %v6690 = vpop.f32.mrb[0].mxu0
        %v6691 = vadd.f32 %v6514, %v6690
        %v6692 = vpop.f32.mrb[0].mxu0
        %6693 = vmatprep.mubr.bf16.mxu0 0
        %6694 = vmatmul.mubr.bf16.gmra.mrb[0].mxu0 %v6569
        %v6695 = vpop.f32.mrb[0].mxu0
        %v6696 = vadd.f32 %v6519, %v6695
        %v6697 = vpop.f32.mrb[0].mxu0
        %v6698 = vpop.f32.mrb[0].mxu0
        %v6699 = vadd.f32 %v6522, %v6698
        %v6700 = vpop.f32.mrb[0].mxu0
        %6701 = vmatprep.mubr.bf16.mxu0 0
        %6702 = vmatmul.mubr.bf16.gmra.mrb[0].mxu0 %v6570
        %v6703 = vpop.f32.mrb[0].mxu0
        %v6704 = vadd.f32 %v6527, %v6703
        %v6705 = vpop.f32.mrb[0].mxu0
        %v6706 = vpop.f32.mrb[0].mxu0
        %v6707 = vadd.f32 %v6530, %v6706
        %v6708 = vpop.f32.mrb[0].mxu0
        %6709 = vmatprep.mubr.bf16.mxu0 0
        %6710 = vmatmul.mubr.bf16.gmra.mrb[0].mxu0 %v6571
        %v6711 = vpop.f32.mrb[0].mxu0
        %v6712 = vadd.f32 %v6535, %v6711
        %v6713 = vpop.f32.mrb[0].mxu0
        %v6714 = vpop.f32.mrb[0].mxu0
        %v6715 = vadd.f32 %v6538, %v6714
        %v6716 = vpop.f32.mrb[0].mxu0
        %6717 = vmatprep.mubr.bf16.mxu0 0
        %6718 = vmatmul.mubr.bf16.gmra.mrb[0].mxu0 %v6572
        %v6719 = vpop.f32.mrb[0].mxu0
        %v6720 = vadd.f32 %v6543, %v6719
        %v6721 = vpop.f32.mrb[0].mxu0
        %v6722 = vpop.f32.mrb[0].mxu0
        %v6723 = vadd.f32 %v6546, %v6722
        %v6724 = vpop.f32.mrb[0].mxu0
        %6725 = vdwg.mxu0
        %v6726 = vld [vmem:[#allocation3 + $0x8] sm:$0xf]
        %v6727 = vld [vmem:[#allocation3 + $0xc] sm:$0xf]
        %v6728 = vld [vmem:[#allocation3 + $0x10] sm:$0x1]
        %v6729 = vld [vmem:[#allocation3 + $0x1c] sm:$0xf]
        %v6730 = vld [vmem:[#allocation3 + $0x20] sm:$0xf]
        %v6731 = vld [vmem:[#allocation3 + $0x24] sm:$0x1]
        %v6732 = vld [vmem:[#allocation3 + $0x30] sm:$0xf]
        %v6733 = vld [vmem:[#allocation3 + $0x34] sm:$0xf]
        %v6734 = vld [vmem:[#allocation3 + $0x38] sm:$0x1]
        %v6735 = vld [vmem:[#allocation3 + $0x44] sm:$0xf]
        %v6736 = vld [vmem:[#allocation3 + $0x48] sm:$0xf]
        %v6737 = vld [vmem:[#allocation3 + $0x4c] sm:$0x1]
        %v6738 = vld [vmem:[#allocation3 + $0x58] sm:$0xf]
        %v6739 = vld [vmem:[#allocation3 + $0x5c] sm:$0xf]
        %v6740 = vld [vmem:[#allocation3 + $0x60] sm:$0x1]
        %v6741 = vld [vmem:[#allocation3 + $0x6c] sm:$0xf]
        %v6742 = vld [vmem:[#allocation3 + $0x70] sm:$0xf]
        %v6743 = vld [vmem:[#allocation3 + $0x74] sm:$0x1]
        %v6744 = vld [vmem:[#allocation3 + $0x80] sm:$0xf]
        %v6745 = vld [vmem:[#allocation3 + $0x84] sm:$0xf]
        %v6746 = vld [vmem:[#allocation3 + $0x88] sm:$0x1]
        %v6747 = vld [vmem:[#allocation3 + $0x94] sm:$0xf]
        %v6748 = vld [vmem:[#allocation3 + $0x98] sm:$0xf]
        %v6749 = vld [vmem:[#allocation3 + $0x9c] sm:$0x1]
        %v6751 = vshrl.u32 %v6726, 16
        %v6753 = vrot.slane %v6751, 4
        %v6754 = vshll.u32 %v6726, 16
        %v6756 = vrot.slane %v6754, 5
        %v6757 = vor.u32 %v6753, %v6756
        %v6758 = vrot.slane %v6757, 4
        %v6760 = vshll.u32 %v6727, 16
        %v6762 = vrot.slane %v6760, 5
        %v6763 = vsel %vm2152, %v6758, %v6762
        %v6764 = vshrl.u32 %v6727, 16
        %v6766 = vrot.slane %v6764, 4
        %v6767 = vor.u32 %v6766, %v6762
        %v6768 = vrot.slane %v6767, 4
        %v6770 = vshll.u32 %v6728, 16
        %v6772 = vrot.slane %v6770, 5
        %v6773 = vsel %vm2152, %v6768, %v6772
        %v6775 = vshrl.u32 %v6729, 16
        %v6777 = vrot.slane %v6775, 4
        %v6778 = vshll.u32 %v6729, 16
        %v6780 = vrot.slane %v6778, 5
        %v6781 = vor.u32 %v6777, %v6780
        %v6782 = vrot.slane %v6781, 4
        %v6784 = vshll.u32 %v6730, 16
        %v6786 = vrot.slane %v6784, 5
        %v6787 = vsel %vm2152, %v6782, %v6786
        %v6788 = vshrl.u32 %v6730, 16
        %v6790 = vrot.slane %v6788, 4
        %v6791 = vor.u32 %v6790, %v6786
        %v6792 = vrot.slane %v6791, 4
        %v6794 = vshll.u32 %v6731, 16
        %v6796 = vrot.slane %v6794, 5
        %v6797 = vsel %vm2152, %v6792, %v6796
        %v6799 = vshrl.u32 %v6732, 16
        %v6801 = vrot.slane %v6799, 4
        %v6802 = vshll.u32 %v6732, 16
        %v6804 = vrot.slane %v6802, 5
        %v6805 = vor.u32 %v6801, %v6804
        %v6806 = vrot.slane %v6805, 4
        %v6808 = vshll.u32 %v6733, 16
        %v6810 = vrot.slane %v6808, 5
        %v6811 = vsel %vm2152, %v6806, %v6810
        %v6812 = vshrl.u32 %v6733, 16
        %v6814 = vrot.slane %v6812, 4
        %v6815 = vor.u32 %v6814, %v6810
        %v6816 = vrot.slane %v6815, 4
        %v6818 = vshll.u32 %v6734, 16
        %v6820 = vrot.slane %v6818, 5
        %v6821 = vsel %vm2152, %v6816, %v6820
        %v6823 = vshrl.u32 %v6735, 16
        %v6825 = vrot.slane %v6823, 4
        %v6826 = vshll.u32 %v6735, 16
        %v6828 = vrot.slane %v6826, 5
        %v6829 = vor.u32 %v6825, %v6828
        %v6830 = vrot.slane %v6829, 4
        %v6832 = vshll.u32 %v6736, 16
        %v6834 = vrot.slane %v6832, 5
        %v6835 = vsel %vm2152, %v6830, %v6834
        %v6836 = vshrl.u32 %v6736, 16
        %v6838 = vrot.slane %v6836, 4
        %v6839 = vor.u32 %v6838, %v6834
        %v6840 = vrot.slane %v6839, 4
        %v6842 = vshll.u32 %v6737, 16
        %v6844 = vrot.slane %v6842, 5
        %v6845 = vsel %vm2152, %v6840, %v6844
        %v6847 = vshrl.u32 %v6738, 16
        %v6849 = vrot.slane %v6847, 4
        %v6850 = vshll.u32 %v6738, 16
        %v6852 = vrot.slane %v6850, 5
        %v6853 = vor.u32 %v6849, %v6852
        %v6854 = vrot.slane %v6853, 4
        %v6856 = vshll.u32 %v6739, 16
        %v6858 = vrot.slane %v6856, 5
        %v6859 = vsel %vm2152, %v6854, %v6858
        %v6860 = vshrl.u32 %v6739, 16
        %v6862 = vrot.slane %v6860, 4
        %v6863 = vor.u32 %v6862, %v6858
        %v6864 = vrot.slane %v6863, 4
        %v6866 = vshll.u32 %v6740, 16
        %v6868 = vrot.slane %v6866, 5
        %v6869 = vsel %vm2152, %v6864, %v6868
        %v6871 = vshrl.u32 %v6741, 16
        %v6873 = vrot.slane %v6871, 4
        %v6874 = vshll.u32 %v6741, 16
        %v6876 = vrot.slane %v6874, 5
        %v6877 = vor.u32 %v6873, %v6876
        %v6878 = vrot.slane %v6877, 4
        %v6880 = vshll.u32 %v6742, 16
        %v6882 = vrot.slane %v6880, 5
        %v6883 = vsel %vm2152, %v6878, %v6882
        %v6884 = vshrl.u32 %v6742, 16
        %v6886 = vrot.slane %v6884, 4
        %v6887 = vor.u32 %v6886, %v6882
        %v6888 = vrot.slane %v6887, 4
        %v6890 = vshll.u32 %v6743, 16
        %v6892 = vrot.slane %v6890, 5
        %v6893 = vsel %vm2152, %v6888, %v6892
        %v6895 = vshrl.u32 %v6744, 16
        %v6897 = vrot.slane %v6895, 4
        %v6898 = vshll.u32 %v6744, 16
        %v6900 = vrot.slane %v6898, 5
        %v6901 = vor.u32 %v6897, %v6900
        %v6902 = vrot.slane %v6901, 4
        %v6904 = vshll.u32 %v6745, 16
        %v6906 = vrot.slane %v6904, 5
        %v6907 = vsel %vm2152, %v6902, %v6906
        %v6908 = vshrl.u32 %v6745, 16
        %v6910 = vrot.slane %v6908, 4
        %v6911 = vor.u32 %v6910, %v6906
        %v6912 = vrot.slane %v6911, 4
        %v6914 = vshll.u32 %v6746, 16
        %v6916 = vrot.slane %v6914, 5
        %v6917 = vsel %vm2152, %v6912, %v6916
        %v6919 = vshrl.u32 %v6747, 16
        %v6921 = vrot.slane %v6919, 4
        %v6922 = vshll.u32 %v6747, 16
        %v6924 = vrot.slane %v6922, 5
        %v6925 = vor.u32 %v6921, %v6924
        %v6926 = vrot.slane %v6925, 4
        %v6928 = vshll.u32 %v6748, 16
        %v6930 = vrot.slane %v6928, 5
        %v6931 = vsel %vm2152, %v6926, %v6930
        %v6932 = vshrl.u32 %v6748, 16
        %v6934 = vrot.slane %v6932, 4
        %v6935 = vor.u32 %v6934, %v6930
        %v6936 = vrot.slane %v6935, 4
        %v6938 = vshll.u32 %v6749, 16
        %v6940 = vrot.slane %v6938, 5
        %v6941 = vsel %vm2152, %v6936, %v6940
        %s6942 = scalar_lea.vmem [#allocation4], 128
        %v6943 = vld [vmem:[%s6942] sm:$0xf]
        %v6944 = vld [vmem:[%s6942 + $0x4] sm:$0xf]
        %v6945 = vld [vmem:[%s6942 + $0x8] sm:$0xf]
        %v6946 = vld [vmem:[%s6942 + $0xc] sm:$0xf]
        %v6947 = vld [vmem:[%s6942 + $0x10] sm:$0xf]
        %v6948 = vld [vmem:[%s6942 + $0x14] sm:$0xf]
        %v6949 = vld [vmem:[%s6942 + $0x18] sm:$0xf]
        %v6950 = vld [vmem:[%s6942 + $0x1c] sm:$0xf]
        %v6951 = vld [vmem:[%s6942 + $0x20] sm:$0xf]
        %v6952 = vld [vmem:[%s6942 + $0x24] sm:$0xf]
        %v6953 = vld [vmem:[%s6942 + $0x28] sm:$0xf]
        %v6954 = vld [vmem:[%s6942 + $0x2c] sm:$0xf]
        %v6955 = vld [vmem:[%s6942 + $0x30] sm:$0xf]
        %v6956 = vld [vmem:[%s6942 + $0x34] sm:$0xf]
        %v6957 = vld [vmem:[%s6942 + $0x38] sm:$0xf]
        %v6958 = vld [vmem:[%s6942 + $0x3c] sm:$0xf]
        %v6959 = vunpack.c.l.b16 %v6763
        %v6960 = vunpack.c.l.b16 %v6773
        %v6961 = vunpack.c.l.b16 %v6787
        %v6962 = vunpack.c.l.b16 %v6797
        %v6963 = vunpack.c.l.b16 %v6811
        %v6964 = vunpack.c.l.b16 %v6821
        %v6965 = vunpack.c.l.b16 %v6835
        %v6966 = vunpack.c.l.b16 %v6845
        %v6967 = vunpack.c.l.b16 %v6859
        %v6968 = vunpack.c.l.b16 %v6869
        %v6969 = vunpack.c.l.b16 %v6883
        %v6970 = vunpack.c.l.b16 %v6893
        %v6971 = vunpack.c.l.b16 %v6907
        %v6972 = vunpack.c.l.b16 %v6917
        %v6973 = vunpack.c.l.b16 %v6931
        %v6974 = vunpack.c.l.b16 %v6941
        %v6975 = vpack.c.b16 %v6960, %v6959
        %v6976 = vpack.c.b16 %v6962, %v6961
        %v6977 = vpack.c.b16 %v6964, %v6963
        %v6978 = vpack.c.b16 %v6966, %v6965
        %v6979 = vpack.c.b16 %v6968, %v6967
        %v6980 = vpack.c.b16 %v6970, %v6969
        %v6981 = vpack.c.b16 %v6972, %v6971
        %v6982 = vpack.c.b16 %v6974, %v6973
        %v7007 = vunpack.c.l.b16 %v6943
        %v7008 = vunpack.c.l.b16 %v6944
        %v7009 = vunpack.c.l.b16 %v6945
        %v7010 = vunpack.c.l.b16 %v6946
        %v7011 = vunpack.c.l.b16 %v6947
        %v7012 = vunpack.c.l.b16 %v6948
        %v7013 = vunpack.c.l.b16 %v6949
        %v7014 = vunpack.c.l.b16 %v6950
        %v7015 = vunpack.c.l.b16 %v6951
        %v7016 = vunpack.c.l.b16 %v6952
        %v7017 = vunpack.c.l.b16 %v6953
        %v7018 = vunpack.c.l.b16 %v6954
        %v7019 = vunpack.c.l.b16 %v6955
        %v7020 = vunpack.c.l.b16 %v6956
        %v7021 = vunpack.c.l.b16 %v6957
        %v7022 = vunpack.c.l.b16 %v6958
        %v7023 = vpack.c.b16 %v7008, %v7007
        %v7024 = vpack.c.b16 %v7010, %v7009
        %v7025 = vpack.c.b16 %v7012, %v7011
        %v7026 = vpack.c.b16 %v7014, %v7013
        %v7027 = vpack.c.b16 %v7016, %v7015
        %v7028 = vpack.c.b16 %v7018, %v7017
        %v7029 = vpack.c.b16 %v7020, %v7019
        %v7030 = vpack.c.b16 %v7022, %v7021
        %7039 = vmatprep.subr.bf16.mxu0 0
        %7040 = vmatpush1.bf16.msra.mxu0 %v7023
        %7041 = vmatprep.subr.bf16.mxu0 0
        %7042 = vmatpush1.bf16.msra.mxu0 %v7024
        %7043 = vmatprep.subr.bf16.mxu0 0
        %7044 = vmatpush1.bf16.msra.mxu0 %v7025
        %7045 = vmatprep.subr.bf16.mxu0 0
        %7046 = vmatpush1.bf16.msra.mxu0 %v7026
        %7047 = vmatprep.subr.bf16.mxu0 0
        %7048 = vmatpush1.bf16.msra.mxu0 %v7027
        %7049 = vmatprep.subr.bf16.mxu0 0
        %7050 = vmatpush1.bf16.msra.mxu0 %v7028
        %7051 = vmatprep.subr.bf16.mxu0 0
        %7052 = vmatpush1.bf16.msra.mxu0 %v7029
        %7053 = vmatprep.subr.bf16.mxu0 0
        %7054 = vmatpush1.bf16.msra.mxu0 %v7030
        %7055 = vmatprep.subr.bf16.mxu0 0
        %7056 = vmatpush1.bf16.msra.mxu0 0
        %7057 = vmatprep.subr.bf16.mxu0 0
        %7058 = vmatpush1.bf16.msra.mxu0 0
        %7059 = vmatprep.subr.bf16.mxu0 0
        %7060 = vmatpush1.bf16.msra.mxu0 0
        %7061 = vmatprep.subr.bf16.mxu0 0
        %7062 = vmatpush1.bf16.msra.mxu0 0
        %7063 = vmatprep.subr.bf16.mxu0 0
        %7064 = vmatpush1.bf16.msra.mxu0 0
        %7065 = vmatprep.subr.bf16.mxu0 0
        %7066 = vmatpush1.bf16.msra.mxu0 0
        %7067 = vmatprep.subr.bf16.mxu0 0
        %7068 = vmatpush1.bf16.msra.mxu0 0
        %7069 = vmatprep.subr.bf16.mxu0 0
        %7070 = vmatpush1.bf16.msra.mxu0 0
        %7071 = vmatprep.mubr.bf16.mxu0 0
        %7072 = vmatmul.mubr.bf16.gmra.mrb[0].mxu0 %v6975
        %v7073 = vpop.f32.mrb[0].mxu0
        %v7074 = vadd.f32 0.0, %v7073
        %v7075 = vpop.f32.mrb[0].mxu0
        %v7076 = vpop.f32.mrb[0].mxu0
        %v7077 = vadd.f32 0.0, %v7076
        %v7078 = vpop.f32.mrb[0].mxu0
        %7079 = vmatprep.mubr.bf16.mxu0 0
        %7080 = vmatmul.mubr.bf16.gmra.mrb[0].mxu0 %v6976
        %v7081 = vpop.f32.mrb[0].mxu0
        %v7082 = vadd.f32 0.0, %v7081
        %v7083 = vpop.f32.mrb[0].mxu0
        %v7084 = vpop.f32.mrb[0].mxu0
        %v7085 = vadd.f32 0.0, %v7084
        %v7086 = vpop.f32.mrb[0].mxu0
        %7087 = vmatprep.mubr.bf16.mxu0 0
        %7088 = vmatmul.mubr.bf16.gmra.mrb[0].mxu0 %v6977
        %v7089 = vpop.f32.mrb[0].mxu0
        %v7090 = vadd.f32 0.0, %v7089
        %v7091 = vpop.f32.mrb[0].mxu0
        %v7092 = vpop.f32.mrb[0].mxu0
        %v7093 = vadd.f32 0.0, %v7092
        %v7094 = vpop.f32.mrb[0].mxu0
        %7095 = vmatprep.mubr.bf16.mxu0 0
        %7096 = vmatmul.mubr.bf16.gmra.mrb[0].mxu0 %v6978
        %v7097 = vpop.f32.mrb[0].mxu0
        %v7098 = vadd.f32 0.0, %v7097
        %v7099 = vpop.f32.mrb[0].mxu0
        %v7100 = vpop.f32.mrb[0].mxu0
        %v7101 = vadd.f32 0.0, %v7100
        %v7102 = vpop.f32.mrb[0].mxu0
        %7103 = vmatprep.mubr.bf16.mxu0 0
        %7104 = vmatmul.mubr.bf16.gmra.mrb[0].mxu0 %v6979
        %v7105 = vpop.f32.mrb[0].mxu0
        %v7106 = vadd.f32 0.0, %v7105
        %v7107 = vpop.f32.mrb[0].mxu0
        %v7108 = vpop.f32.mrb[0].mxu0
        %v7109 = vadd.f32 0.0, %v7108
        %v7110 = vpop.f32.mrb[0].mxu0
        %7111 = vmatprep.mubr.bf16.mxu0 0
        %7112 = vmatmul.mubr.bf16.gmra.mrb[0].mxu0 %v6980
        %v7113 = vpop.f32.mrb[0].mxu0
        %v7114 = vadd.f32 0.0, %v7113
        %v7115 = vpop.f32.mrb[0].mxu0
        %v7116 = vpop.f32.mrb[0].mxu0
        %v7117 = vadd.f32 0.0, %v7116
        %v7118 = vpop.f32.mrb[0].mxu0
        %7119 = vmatprep.mubr.bf16.mxu0 0
        %7120 = vmatmul.mubr.bf16.gmra.mrb[0].mxu0 %v6981
        %v7121 = vpop.f32.mrb[0].mxu0
        %v7122 = vadd.f32 0.0, %v7121
        %v7123 = vpop.f32.mrb[0].mxu0
        %v7124 = vpop.f32.mrb[0].mxu0
        %v7125 = vadd.f32 0.0, %v7124
        %v7126 = vpop.f32.mrb[0].mxu0
        %7127 = vmatprep.mubr.bf16.mxu0 0
        %7128 = vmatmul.mubr.bf16.gmra.mrb[0].mxu0 %v6982
        %v7129 = vpop.f32.mrb[0].mxu0
        %v7130 = vadd.f32 0.0, %v7129
        %v7131 = vpop.f32.mrb[0].mxu0
        %v7132 = vpop.f32.mrb[0].mxu0
        %v7133 = vadd.f32 0.0, %v7132
        %v7134 = vpop.f32.mrb[0].mxu0
        %7135 = vdwg.mxu0
        %v7136 = vadd.f32 %v6664, %v7074
        %v7137 = vadd.f32 %v6667, %v7077
        %v7138 = vadd.f32 %v6672, %v7082
        %v7139 = vadd.f32 %v6675, %v7085
        %v7140 = vadd.f32 %v6680, %v7090
        %v7141 = vadd.f32 %v6683, %v7093
        %v7142 = vadd.f32 %v6688, %v7098
        %v7143 = vadd.f32 %v6691, %v7101
        %v7144 = vadd.f32 %v6696, %v7106
        %v7145 = vadd.f32 %v6699, %v7109
        %v7146 = vadd.f32 %v6704, %v7114
        %v7147 = vadd.f32 %v6707, %v7117
        %v7148 = vadd.f32 %v6712, %v7122
        %v7149 = vadd.f32 %v6715, %v7125
        %v7150 = vadd.f32 %v6720, %v7130
        %v7151 = vadd.f32 %v6723, %v7133
        %s7152 = scalar_lea.vmem [#allocation3], 20
        %v7153 = vld [vmem:[%s7152 + $0x4] sm:$0x8]
        %v7154 = vld [vmem:[%s7152 + $0x8] sm:$0xf]
        %v7155 = vld [vmem:[%s7152 + $0xc] sm:$0xf]
        %v7156 = vld [vmem:[%s7152 + $0x18] sm:$0x8]
        %v7157 = vld [vmem:[%s7152 + $0x1c] sm:$0xf]
        %v7158 = vld [vmem:[%s7152 + $0x20] sm:$0xf]
        %v7159 = vld [vmem:[%s7152 + $0x2c] sm:$0x8]
        %v7160 = vld [vmem:[%s7152 + $0x30] sm:$0xf]
        %v7161 = vld [vmem:[%s7152 + $0x34] sm:$0xf]
        %v7162 = vld [vmem:[%s7152 + $0x40] sm:$0x8]
        %v7163 = vld [vmem:[%s7152 + $0x44] sm:$0xf]
        %v7164 = vld [vmem:[%s7152 + $0x48] sm:$0xf]
        %v7165 = vld [vmem:[%s7152 + $0x54] sm:$0x8]
        %v7166 = vld [vmem:[%s7152 + $0x58] sm:$0xf]
        %v7167 = vld [vmem:[%s7152 + $0x5c] sm:$0xf]
        %v7168 = vld [vmem:[%s7152 + $0x68] sm:$0x8]
        %v7169 = vld [vmem:[%s7152 + $0x6c] sm:$0xf]
        %v7170 = vld [vmem:[%s7152 + $0x70] sm:$0xf]
        %v7171 = vld [vmem:[%s7152 + $0x7c] sm:$0x8]
        %v7172 = vld [vmem:[%s7152 + $0x80] sm:$0xf]
        %v7173 = vld [vmem:[%s7152 + $0x84] sm:$0xf]
        %v7174 = vld [vmem:[%s7152 + $0x90] sm:$0x8]
        %v7175 = vld [vmem:[%s7152 + $0x94] sm:$0xf]
        %v7176 = vld [vmem:[%s7152 + $0x98] sm:$0xf]
        %v7178 = vshrl.u32 %v7153, 16
        %v7180 = vrot.slane %v7178, 7
        %v7181 = vrot.slane %v7180, 4
        %v7183 = vshrl.u32 %v7154, 16
        %v7185 = vrot.slane %v7183, 7
        %v7186 = vshll.u32 %v7154, 16
        %v7188 = vor.u32 %v7185, %v7186
        %v7189 = vsel %vm1236, %v7181, %v7188
        %v7190 = vrot.slane %v7185, 4
        %v7192 = vshrl.u32 %v7155, 16
        %v7194 = vrot.slane %v7192, 7
        %v7195 = vshll.u32 %v7155, 16
        %v7197 = vor.u32 %v7194, %v7195
        %v7198 = vsel %vm1236, %v7190, %v7197
        %v7200 = vshrl.u32 %v7156, 16
        %v7202 = vrot.slane %v7200, 7
        %v7203 = vrot.slane %v7202, 4
        %v7205 = vshrl.u32 %v7157, 16
        %v7207 = vrot.slane %v7205, 7
        %v7208 = vshll.u32 %v7157, 16
        %v7210 = vor.u32 %v7207, %v7208
        %v7211 = vsel %vm1236, %v7203, %v7210
        %v7212 = vrot.slane %v7207, 4
        %v7214 = vshrl.u32 %v7158, 16
        %v7216 = vrot.slane %v7214, 7
        %v7217 = vshll.u32 %v7158, 16
        %v7219 = vor.u32 %v7216, %v7217
        %v7220 = vsel %vm1236, %v7212, %v7219
        %v7222 = vshrl.u32 %v7159, 16
        %v7224 = vrot.slane %v7222, 7
        %v7225 = vrot.slane %v7224, 4
        %v7227 = vshrl.u32 %v7160, 16
        %v7229 = vrot.slane %v7227, 7
        %v7230 = vshll.u32 %v7160, 16
        %v7232 = vor.u32 %v7229, %v7230
        %v7233 = vsel %vm1236, %v7225, %v7232
        %v7234 = vrot.slane %v7229, 4
        %v7236 = vshrl.u32 %v7161, 16
        %v7238 = vrot.slane %v7236, 7
        %v7239 = vshll.u32 %v7161, 16
        %v7241 = vor.u32 %v7238, %v7239
        %v7242 = vsel %vm1236, %v7234, %v7241
        %v7244 = vshrl.u32 %v7162, 16
        %v7246 = vrot.slane %v7244, 7
        %v7247 = vrot.slane %v7246, 4
        %v7249 = vshrl.u32 %v7163, 16
        %v7251 = vrot.slane %v7249, 7
        %v7252 = vshll.u32 %v7163, 16
        %v7254 = vor.u32 %v7251, %v7252
        %v7255 = vsel %vm1236, %v7247, %v7254
        %v7256 = vrot.slane %v7251, 4
        %v7258 = vshrl.u32 %v7164, 16
        %v7260 = vrot.slane %v7258, 7
        %v7261 = vshll.u32 %v7164, 16
        %v7263 = vor.u32 %v7260, %v7261
        %v7264 = vsel %vm1236, %v7256, %v7263
        %v7266 = vshrl.u32 %v7165, 16
        %v7268 = vrot.slane %v7266, 7
        %v7269 = vrot.slane %v7268, 4
        %v7271 = vshrl.u32 %v7166, 16
        %v7273 = vrot.slane %v7271, 7
        %v7274 = vshll.u32 %v7166, 16
        %v7276 = vor.u32 %v7273, %v7274
        %v7277 = vsel %vm1236, %v7269, %v7276
        %v7278 = vrot.slane %v7273, 4
        %v7280 = vshrl.u32 %v7167, 16
        %v7282 = vrot.slane %v7280, 7
        %v7283 = vshll.u32 %v7167, 16
        %v7285 = vor.u32 %v7282, %v7283
        %v7286 = vsel %vm1236, %v7278, %v7285
        %v7288 = vshrl.u32 %v7168, 16
        %v7290 = vrot.slane %v7288, 7
        %v7291 = vrot.slane %v7290, 4
        %v7293 = vshrl.u32 %v7169, 16
        %v7295 = vrot.slane %v7293, 7
        %v7296 = vshll.u32 %v7169, 16
        %v7298 = vor.u32 %v7295, %v7296
        %v7299 = vsel %vm1236, %v7291, %v7298
        %v7300 = vrot.slane %v7295, 4
        %v7302 = vshrl.u32 %v7170, 16
        %v7304 = vrot.slane %v7302, 7
        %v7305 = vshll.u32 %v7170, 16
        %v7307 = vor.u32 %v7304, %v7305
        %v7308 = vsel %vm1236, %v7300, %v7307
        %v7310 = vshrl.u32 %v7171, 16
        %v7312 = vrot.slane %v7310, 7
        %v7313 = vrot.slane %v7312, 4
        %v7315 = vshrl.u32 %v7172, 16
        %v7317 = vrot.slane %v7315, 7
        %v7318 = vshll.u32 %v7172, 16
        %v7320 = vor.u32 %v7317, %v7318
        %v7321 = vsel %vm1236, %v7313, %v7320
        %v7322 = vrot.slane %v7317, 4
        %v7324 = vshrl.u32 %v7173, 16
        %v7326 = vrot.slane %v7324, 7
        %v7327 = vshll.u32 %v7173, 16
        %v7329 = vor.u32 %v7326, %v7327
        %v7330 = vsel %vm1236, %v7322, %v7329
        %v7332 = vshrl.u32 %v7174, 16
        %v7334 = vrot.slane %v7332, 7
        %v7335 = vrot.slane %v7334, 4
        %v7337 = vshrl.u32 %v7175, 16
        %v7339 = vrot.slane %v7337, 7
        %v7340 = vshll.u32 %v7175, 16
        %v7342 = vor.u32 %v7339, %v7340
        %v7343 = vsel %vm1236, %v7335, %v7342
        %v7344 = vrot.slane %v7339, 4
        %v7346 = vshrl.u32 %v7176, 16
        %v7348 = vrot.slane %v7346, 7
        %v7349 = vshll.u32 %v7176, 16
        %v7351 = vor.u32 %v7348, %v7349
        %v7352 = vsel %vm1236, %v7344, %v7351
        %s7353 = scalar_lea.vmem [#allocation4], 192
        %v7354 = vld [vmem:[%s7353] sm:$0xf]
        %v7355 = vld [vmem:[%s7353 + $0x4] sm:$0xf]
        %v7356 = vld [vmem:[%s7353 + $0x8] sm:$0xf]
        %v7357 = vld [vmem:[%s7353 + $0xc] sm:$0xf]
        %v7358 = vld [vmem:[%s7353 + $0x10] sm:$0xf]
        %v7359 = vld [vmem:[%s7353 + $0x14] sm:$0xf]
        %v7360 = vld [vmem:[%s7353 + $0x18] sm:$0xf]
        %v7361 = vld [vmem:[%s7353 + $0x1c] sm:$0xf]
        %v7362 = vld [vmem:[%s7353 + $0x20] sm:$0xf]
        %v7363 = vld [vmem:[%s7353 + $0x24] sm:$0xf]
        %v7364 = vld [vmem:[%s7353 + $0x28] sm:$0xf]
        %v7365 = vld [vmem:[%s7353 + $0x2c] sm:$0xf]
        %v7366 = vld [vmem:[%s7353 + $0x30] sm:$0xf]
        %v7367 = vld [vmem:[%s7353 + $0x34] sm:$0xf]
        %v7368 = vld [vmem:[%s7353 + $0x38] sm:$0xf]
        %v7369 = vld [vmem:[%s7353 + $0x3c] sm:$0xf]
        %v7370 = vunpack.c.l.b16 %v7189
        %v7371 = vunpack.c.l.b16 %v7198
        %v7372 = vunpack.c.l.b16 %v7211
        %v7373 = vunpack.c.l.b16 %v7220
        %v7374 = vunpack.c.l.b16 %v7233
        %v7375 = vunpack.c.l.b16 %v7242
        %v7376 = vunpack.c.l.b16 %v7255
        %v7377 = vunpack.c.l.b16 %v7264
        %v7378 = vunpack.c.l.b16 %v7277
        %v7379 = vunpack.c.l.b16 %v7286
        %v7380 = vunpack.c.l.b16 %v7299
        %v7381 = vunpack.c.l.b16 %v7308
        %v7382 = vunpack.c.l.b16 %v7321
        %v7383 = vunpack.c.l.b16 %v7330
        %v7384 = vunpack.c.l.b16 %v7343
        %v7385 = vunpack.c.l.b16 %v7352
        %v7386 = vpack.c.b16 %v7371, %v7370
        %v7387 = vpack.c.b16 %v7373, %v7372
        %v7388 = vpack.c.b16 %v7375, %v7374
        %v7389 = vpack.c.b16 %v7377, %v7376
        %v7390 = vpack.c.b16 %v7379, %v7378
        %v7391 = vpack.c.b16 %v7381, %v7380
        %v7392 = vpack.c.b16 %v7383, %v7382
        %v7393 = vpack.c.b16 %v7385, %v7384
        %v7418 = vunpack.c.l.b16 %v7354
        %v7419 = vunpack.c.l.b16 %v7355
        %v7420 = vunpack.c.l.b16 %v7356
        %v7421 = vunpack.c.l.b16 %v7357
        %v7422 = vunpack.c.l.b16 %v7358
        %v7423 = vunpack.c.l.b16 %v7359
        %v7424 = vunpack.c.l.b16 %v7360
        %v7425 = vunpack.c.l.b16 %v7361
        %v7426 = vunpack.c.l.b16 %v7362
        %v7427 = vunpack.c.l.b16 %v7363
        %v7428 = vunpack.c.l.b16 %v7364
        %v7429 = vunpack.c.l.b16 %v7365
        %v7430 = vunpack.c.l.b16 %v7366
        %v7431 = vunpack.c.l.b16 %v7367
        %v7432 = vunpack.c.l.b16 %v7368
        %v7433 = vunpack.c.l.b16 %v7369
        %v7434 = vpack.c.b16 %v7419, %v7418
        %v7435 = vpack.c.b16 %v7421, %v7420
        %v7436 = vpack.c.b16 %v7423, %v7422
        %v7437 = vpack.c.b16 %v7425, %v7424
        %v7438 = vpack.c.b16 %v7427, %v7426
        %v7439 = vpack.c.b16 %v7429, %v7428
        %v7440 = vpack.c.b16 %v7431, %v7430
        %v7441 = vpack.c.b16 %v7433, %v7432
        %7450 = vmatprep.subr.bf16.mxu0 0
        %7451 = vmatpush1.bf16.msra.mxu0 %v7434
        %7452 = vmatprep.subr.bf16.mxu0 0
        %7453 = vmatpush1.bf16.msra.mxu0 %v7435
        %7454 = vmatprep.subr.bf16.mxu0 0
        %7455 = vmatpush1.bf16.msra.mxu0 %v7436
        %7456 = vmatprep.subr.bf16.mxu0 0
        %7457 = vmatpush1.bf16.msra.mxu0 %v7437
        %7458 = vmatprep.subr.bf16.mxu0 0
        %7459 = vmatpush1.bf16.msra.mxu0 %v7438
        %7460 = vmatprep.subr.bf16.mxu0 0
        %7461 = vmatpush1.bf16.msra.mxu0 %v7439
        %7462 = vmatprep.subr.bf16.mxu0 0
        %7463 = vmatpush1.bf16.msra.mxu0 %v7440
        %7464 = vmatprep.subr.bf16.mxu0 0
        %7465 = vmatpush1.bf16.msra.mxu0 %v7441
        %7466 = vmatprep.subr.bf16.mxu0 0
        %7467 = vmatpush1.bf16.msra.mxu0 0
        %7468 = vmatprep.subr.bf16.mxu0 0
        %7469 = vmatpush1.bf16.msra.mxu0 0
        %7470 = vmatprep.subr.bf16.mxu0 0
        %7471 = vmatpush1.bf16.msra.mxu0 0
        %7472 = vmatprep.subr.bf16.mxu0 0
        %7473 = vmatpush1.bf16.msra.mxu0 0
        %7474 = vmatprep.subr.bf16.mxu0 0
        %7475 = vmatpush1.bf16.msra.mxu0 0
        %7476 = vmatprep.subr.bf16.mxu0 0
        %7477 = vmatpush1.bf16.msra.mxu0 0
        %7478 = vmatprep.subr.bf16.mxu0 0
        %7479 = vmatpush1.bf16.msra.mxu0 0
        %7480 = vmatprep.subr.bf16.mxu0 0
        %7481 = vmatpush1.bf16.msra.mxu0 0
        %7482 = vmatprep.mubr.bf16.mxu0 0
        %7483 = vmatmul.mubr.bf16.gmra.mrb[0].mxu0 %v7386
        %v7484 = vpop.f32.mrb[0].mxu0
        %v7485 = vadd.f32 0.0, %v7484
        %v7486 = vpop.f32.mrb[0].mxu0
        %v7487 = vpop.f32.mrb[0].mxu0
        %v7488 = vadd.f32 0.0, %v7487
        %v7489 = vpop.f32.mrb[0].mxu0
        %7490 = vmatprep.mubr.bf16.mxu0 0
        %7491 = vmatmul.mubr.bf16.gmra.mrb[0].mxu0 %v7387
        %v7492 = vpop.f32.mrb[0].mxu0
        %v7493 = vadd.f32 0.0, %v7492
        %v7494 = vpop.f32.mrb[0].mxu0
        %v7495 = vpop.f32.mrb[0].mxu0
        %v7496 = vadd.f32 0.0, %v7495
        %v7497 = vpop.f32.mrb[0].mxu0
        %7498 = vmatprep.mubr.bf16.mxu0 0
        %7499 = vmatmul.mubr.bf16.gmra.mrb[0].mxu0 %v7388
        %v7500 = vpop.f32.mrb[0].mxu0
        %v7501 = vadd.f32 0.0, %v7500
        %v7502 = vpop.f32.mrb[0].mxu0
        %v7503 = vpop.f32.mrb[0].mxu0
        %v7504 = vadd.f32 0.0, %v7503
        %v7505 = vpop.f32.mrb[0].mxu0
        %7506 = vmatprep.mubr.bf16.mxu0 0
        %7507 = vmatmul.mubr.bf16.gmra.mrb[0].mxu0 %v7389
        %v7508 = vpop.f32.mrb[0].mxu0
        %v7509 = vadd.f32 0.0, %v7508
        %v7510 = vpop.f32.mrb[0].mxu0
        %v7511 = vpop.f32.mrb[0].mxu0
        %v7512 = vadd.f32 0.0, %v7511
        %v7513 = vpop.f32.mrb[0].mxu0
        %7514 = vmatprep.mubr.bf16.mxu0 0
        %7515 = vmatmul.mubr.bf16.gmra.mrb[0].mxu0 %v7390
        %v7516 = vpop.f32.mrb[0].mxu0
        %v7517 = vadd.f32 0.0, %v7516
        %v7518 = vpop.f32.mrb[0].mxu0
        %v7519 = vpop.f32.mrb[0].mxu0
        %v7520 = vadd.f32 0.0, %v7519
        %v7521 = vpop.f32.mrb[0].mxu0
        %7522 = vmatprep.mubr.bf16.mxu0 0
        %7523 = vmatmul.mubr.bf16.gmra.mrb[0].mxu0 %v7391
        %v7524 = vpop.f32.mrb[0].mxu0
        %v7525 = vadd.f32 0.0, %v7524
        %v7526 = vpop.f32.mrb[0].mxu0
        %v7527 = vpop.f32.mrb[0].mxu0
        %v7528 = vadd.f32 0.0, %v7527
        %v7529 = vpop.f32.mrb[0].mxu0
        %7530 = vmatprep.mubr.bf16.mxu0 0
        %7531 = vmatmul.mubr.bf16.gmra.mrb[0].mxu0 %v7392
        %v7532 = vpop.f32.mrb[0].mxu0
        %v7533 = vadd.f32 0.0, %v7532
        %v7534 = vpop.f32.mrb[0].mxu0
        %v7535 = vpop.f32.mrb[0].mxu0
        %v7536 = vadd.f32 0.0, %v7535
        %v7537 = vpop.f32.mrb[0].mxu0
        %7538 = vmatprep.mubr.bf16.mxu0 0
        %7539 = vmatmul.mubr.bf16.gmra.mrb[0].mxu0 %v7393
        %v7540 = vpop.f32.mrb[0].mxu0
        %v7541 = vadd.f32 0.0, %v7540
        %v7542 = vpop.f32.mrb[0].mxu0
        %v7543 = vpop.f32.mrb[0].mxu0
        %v7544 = vadd.f32 0.0, %v7543
        %v7545 = vpop.f32.mrb[0].mxu0
        %7546 = vdwg.mxu0
        %v7547 = vadd.f32 %v7136, %v7485
        %v7548 = vadd.f32 %v7137, %v7488
        %v7549 = vadd.f32 %v7138, %v7493
        %v7550 = vadd.f32 %v7139, %v7496
        %v7551 = vadd.f32 %v7140, %v7501
        %v7552 = vadd.f32 %v7141, %v7504
        %v7553 = vadd.f32 %v7142, %v7509
        %v7554 = vadd.f32 %v7143, %v7512
        %v7555 = vadd.f32 %v7144, %v7517
        %v7556 = vadd.f32 %v7145, %v7520
        %v7557 = vadd.f32 %v7146, %v7525
        %v7558 = vadd.f32 %v7147, %v7528
        %v7559 = vadd.f32 %v7148, %v7533
        %v7560 = vadd.f32 %v7149, %v7536
        %v7561 = vadd.f32 %v7150, %v7541
        %v7562 = vadd.f32 %v7151, %v7544
        %s7563 = scalar_lea.vmem [#allocation4], 256
        %v7564 = vld [vmem:[%s7563] sm:$0xf]
        %v7565 = vld [vmem:[%s7563 + $0x4] sm:$0xf]
        %v7566 = vld [vmem:[%s7563 + $0x8] sm:$0xf]
        %v7567 = vld [vmem:[%s7563 + $0xc] sm:$0xf]
        %v7568 = vld [vmem:[%s7563 + $0x10] sm:$0xf]
        %v7569 = vld [vmem:[%s7563 + $0x14] sm:$0xf]
        %v7570 = vld [vmem:[%s7563 + $0x18] sm:$0xf]
        %v7571 = vld [vmem:[%s7563 + $0x1c] sm:$0xf]
        %v7572 = vld [vmem:[%s7563 + $0x20] sm:$0xf]
        %v7573 = vld [vmem:[%s7563 + $0x24] sm:$0xf]
        %v7574 = vld [vmem:[%s7563 + $0x28] sm:$0xf]
        %v7575 = vld [vmem:[%s7563 + $0x2c] sm:$0xf]
        %v7576 = vld [vmem:[%s7563 + $0x30] sm:$0xf]
        %v7577 = vld [vmem:[%s7563 + $0x34] sm:$0xf]
        %v7578 = vld [vmem:[%s7563 + $0x38] sm:$0xf]
        %v7579 = vld [vmem:[%s7563 + $0x3c] sm:$0xf]
        %v7596 = vunpack.c.l.b16 %v7154
        %v7597 = vunpack.c.l.b16 %v7155
        %v7598 = vunpack.c.l.b16 %v7157
        %v7599 = vunpack.c.l.b16 %v7158
        %v7600 = vunpack.c.l.b16 %v7160
        %v7601 = vunpack.c.l.b16 %v7161
        %v7602 = vunpack.c.l.b16 %v7163
        %v7603 = vunpack.c.l.b16 %v7164
        %v7604 = vunpack.c.l.b16 %v7166
        %v7605 = vunpack.c.l.b16 %v7167
        %v7606 = vunpack.c.l.b16 %v7169
        %v7607 = vunpack.c.l.b16 %v7170
        %v7608 = vunpack.c.l.b16 %v7172
        %v7609 = vunpack.c.l.b16 %v7173
        %v7610 = vunpack.c.l.b16 %v7175
        %v7611 = vunpack.c.l.b16 %v7176
        %v7612 = vpack.c.b16 %v7597, %v7596
        %v7613 = vpack.c.b16 %v7599, %v7598
        %v7614 = vpack.c.b16 %v7601, %v7600
        %v7615 = vpack.c.b16 %v7603, %v7602
        %v7616 = vpack.c.b16 %v7605, %v7604
        %v7617 = vpack.c.b16 %v7607, %v7606
        %v7618 = vpack.c.b16 %v7609, %v7608
        %v7619 = vpack.c.b16 %v7611, %v7610
        %v7644 = vunpack.c.l.b16 %v7564
        %v7645 = vunpack.c.l.b16 %v7565
        %v7646 = vunpack.c.l.b16 %v7566
        %v7647 = vunpack.c.l.b16 %v7567
        %v7648 = vunpack.c.l.b16 %v7568
        %v7649 = vunpack.c.l.b16 %v7569
        %v7650 = vunpack.c.l.b16 %v7570
        %v7651 = vunpack.c.l.b16 %v7571
        %v7652 = vunpack.c.l.b16 %v7572
        %v7653 = vunpack.c.l.b16 %v7573
        %v7654 = vunpack.c.l.b16 %v7574
        %v7655 = vunpack.c.l.b16 %v7575
        %v7656 = vunpack.c.l.b16 %v7576
        %v7657 = vunpack.c.l.b16 %v7577
        %v7658 = vunpack.c.l.b16 %v7578
        %v7659 = vunpack.c.l.b16 %v7579
        %v7660 = vpack.c.b16 %v7645, %v7644
        %v7661 = vpack.c.b16 %v7647, %v7646
        %v7662 = vpack.c.b16 %v7649, %v7648
        %v7663 = vpack.c.b16 %v7651, %v7650
        %v7664 = vpack.c.b16 %v7653, %v7652
        %v7665 = vpack.c.b16 %v7655, %v7654
        %v7666 = vpack.c.b16 %v7657, %v7656
        %v7667 = vpack.c.b16 %v7659, %v7658
        %7676 = vmatprep.subr.bf16.mxu0 0
        %7677 = vmatpush1.bf16.msra.mxu0 %v7660
        %7678 = vmatprep.subr.bf16.mxu0 0
        %7679 = vmatpush1.bf16.msra.mxu0 %v7661
        %7680 = vmatprep.subr.bf16.mxu0 0
        %7681 = vmatpush1.bf16.msra.mxu0 %v7662
        %7682 = vmatprep.subr.bf16.mxu0 0
        %7683 = vmatpush1.bf16.msra.mxu0 %v7663
        %7684 = vmatprep.subr.bf16.mxu0 0
        %7685 = vmatpush1.bf16.msra.mxu0 %v7664
        %7686 = vmatprep.subr.bf16.mxu0 0
        %7687 = vmatpush1.bf16.msra.mxu0 %v7665
        %7688 = vmatprep.subr.bf16.mxu0 0
        %7689 = vmatpush1.bf16.msra.mxu0 %v7666
        %7690 = vmatprep.subr.bf16.mxu0 0
        %7691 = vmatpush1.bf16.msra.mxu0 %v7667
        %7692 = vmatprep.subr.bf16.mxu0 0
        %7693 = vmatpush1.bf16.msra.mxu0 0
        %7694 = vmatprep.subr.bf16.mxu0 0
        %7695 = vmatpush1.bf16.msra.mxu0 0
        %7696 = vmatprep.subr.bf16.mxu0 0
        %7697 = vmatpush1.bf16.msra.mxu0 0
        %7698 = vmatprep.subr.bf16.mxu0 0
        %7699 = vmatpush1.bf16.msra.mxu0 0
        %7700 = vmatprep.subr.bf16.mxu0 0
        %7701 = vmatpush1.bf16.msra.mxu0 0
        %7702 = vmatprep.subr.bf16.mxu0 0
        %7703 = vmatpush1.bf16.msra.mxu0 0
        %7704 = vmatprep.subr.bf16.mxu0 0
        %7705 = vmatpush1.bf16.msra.mxu0 0
        %7706 = vmatprep.subr.bf16.mxu0 0
        %7707 = vmatpush1.bf16.msra.mxu0 0
        %7708 = vmatprep.mubr.bf16.mxu0 0
        %7709 = vmatmul.mubr.bf16.gmra.mrb[0].mxu0 %v7612
        %v7710 = vpop.f32.mrb[0].mxu0
        %v7711 = vadd.f32 0.0, %v7710
        %v7712 = vpop.f32.mrb[0].mxu0
        %v7713 = vpop.f32.mrb[0].mxu0
        %v7714 = vadd.f32 0.0, %v7713
        %v7715 = vpop.f32.mrb[0].mxu0
        %7716 = vmatprep.mubr.bf16.mxu0 0
        %7717 = vmatmul.mubr.bf16.gmra.mrb[0].mxu0 %v7613
        %v7718 = vpop.f32.mrb[0].mxu0
        %v7719 = vadd.f32 0.0, %v7718
        %v7720 = vpop.f32.mrb[0].mxu0
        %v7721 = vpop.f32.mrb[0].mxu0
        %v7722 = vadd.f32 0.0, %v7721
        %v7723 = vpop.f32.mrb[0].mxu0
        %7724 = vmatprep.mubr.bf16.mxu0 0
        %7725 = vmatmul.mubr.bf16.gmra.mrb[0].mxu0 %v7614
        %v7726 = vpop.f32.mrb[0].mxu0
        %v7727 = vadd.f32 0.0, %v7726
        %v7728 = vpop.f32.mrb[0].mxu0
        %v7729 = vpop.f32.mrb[0].mxu0
        %v7730 = vadd.f32 0.0, %v7729
        %v7731 = vpop.f32.mrb[0].mxu0
        %7732 = vmatprep.mubr.bf16.mxu0 0
        %7733 = vmatmul.mubr.bf16.gmra.mrb[0].mxu0 %v7615
        %v7734 = vpop.f32.mrb[0].mxu0
        %v7735 = vadd.f32 0.0, %v7734
        %v7736 = vpop.f32.mrb[0].mxu0
        %v7737 = vpop.f32.mrb[0].mxu0
        %v7738 = vadd.f32 0.0, %v7737
        %v7739 = vpop.f32.mrb[0].mxu0
        %7740 = vmatprep.mubr.bf16.mxu0 0
        %7741 = vmatmul.mubr.bf16.gmra.mrb[0].mxu0 %v7616
        %v7742 = vpop.f32.mrb[0].mxu0
        %v7743 = vadd.f32 0.0, %v7742
        %v7744 = vpop.f32.mrb[0].mxu0
        %v7745 = vpop.f32.mrb[0].mxu0
        %v7746 = vadd.f32 0.0, %v7745
        %v7747 = vpop.f32.mrb[0].mxu0
        %7748 = vmatprep.mubr.bf16.mxu0 0
        %7749 = vmatmul.mubr.bf16.gmra.mrb[0].mxu0 %v7617
        %v7750 = vpop.f32.mrb[0].mxu0
        %v7751 = vadd.f32 0.0, %v7750
        %v7752 = vpop.f32.mrb[0].mxu0
        %v7753 = vpop.f32.mrb[0].mxu0
        %v7754 = vadd.f32 0.0, %v7753
        %v7755 = vpop.f32.mrb[0].mxu0
        %7756 = vmatprep.mubr.bf16.mxu0 0
        %7757 = vmatmul.mubr.bf16.gmra.mrb[0].mxu0 %v7618
        %v7758 = vpop.f32.mrb[0].mxu0
        %v7759 = vadd.f32 0.0, %v7758
        %v7760 = vpop.f32.mrb[0].mxu0
        %v7761 = vpop.f32.mrb[0].mxu0
        %v7762 = vadd.f32 0.0, %v7761
        %v7763 = vpop.f32.mrb[0].mxu0
        %7764 = vmatprep.mubr.bf16.mxu0 0
        %7765 = vmatmul.mubr.bf16.gmra.mrb[0].mxu0 %v7619
        %v7766 = vpop.f32.mrb[0].mxu0
        %v7767 = vadd.f32 0.0, %v7766
        %v7768 = vpop.f32.mrb[0].mxu0
        %v7769 = vpop.f32.mrb[0].mxu0
        %v7770 = vadd.f32 0.0, %v7769
        %v7771 = vpop.f32.mrb[0].mxu0
        %7772 = vdwg.mxu0
        %v7773 = vadd.f32 %v7547, %v7711
        %v7774 = vadd.f32 %v7548, %v7714
        %v7775 = vadd.f32 %v7549, %v7719
        %v7776 = vadd.f32 %v7550, %v7722
        %v7777 = vadd.f32 %v7551, %v7727
        %v7778 = vadd.f32 %v7552, %v7730
        %v7779 = vadd.f32 %v7553, %v7735
        %v7780 = vadd.f32 %v7554, %v7738
        %v7781 = vadd.f32 %v7555, %v7743
        %v7782 = vadd.f32 %v7556, %v7746
        %v7783 = vadd.f32 %v7557, %v7751
        %v7784 = vadd.f32 %v7558, %v7754
        %v7785 = vadd.f32 %v7559, %v7759
        %v7786 = vadd.f32 %v7560, %v7762
        %v7787 = vadd.f32 %v7561, %v7767
        %v7788 = vadd.f32 %v7562, %v7770
        %v7789 = vld [vmem:[%s7152 + $0x8] sm:$0xf]
        %v7790 = vld [vmem:[%s7152 + $0xc] sm:$0xf]
        %v7791 = vld [vmem:[%s7152 + $0x10] sm:$0x1]
        %v7792 = vld [vmem:[%s7152 + $0x1c] sm:$0xf]
        %v7793 = vld [vmem:[%s7152 + $0x20] sm:$0xf]
        %v7794 = vld [vmem:[%s7152 + $0x24] sm:$0x1]
        %v7795 = vld [vmem:[%s7152 + $0x30] sm:$0xf]
        %v7796 = vld [vmem:[%s7152 + $0x34] sm:$0xf]
        %v7797 = vld [vmem:[%s7152 + $0x38] sm:$0x1]
        %v7798 = vld [vmem:[%s7152 + $0x44] sm:$0xf]
        %v7799 = vld [vmem:[%s7152 + $0x48] sm:$0xf]
        %v7800 = vld [vmem:[%s7152 + $0x4c] sm:$0x1]
        %v7801 = vld [vmem:[%s7152 + $0x58] sm:$0xf]
        %v7802 = vld [vmem:[%s7152 + $0x5c] sm:$0xf]
        %v7803 = vld [vmem:[%s7152 + $0x60] sm:$0x1]
        %v7804 = vld [vmem:[%s7152 + $0x6c] sm:$0xf]
        %v7805 = vld [vmem:[%s7152 + $0x70] sm:$0xf]
        %v7806 = vld [vmem:[%s7152 + $0x74] sm:$0x1]
        %v7807 = vld [vmem:[%s7152 + $0x80] sm:$0xf]
        %v7808 = vld [vmem:[%s7152 + $0x84] sm:$0xf]
        %v7809 = vld [vmem:[%s7152 + $0x88] sm:$0x1]
        %v7810 = vld [vmem:[%s7152 + $0x94] sm:$0xf]
        %v7811 = vld [vmem:[%s7152 + $0x98] sm:$0xf]
        %v7812 = vld [vmem:[%s7152 + $0x9c] sm:$0x1]
        %v7814 = vshrl.u32 %v7789, 16
        %v7816 = vrot.slane %v7814, 4
        %v7817 = vshll.u32 %v7789, 16
        %v7819 = vrot.slane %v7817, 5
        %v7820 = vor.u32 %v7816, %v7819
        %v7821 = vrot.slane %v7820, 4
        %v7823 = vshll.u32 %v7790, 16
        %v7825 = vrot.slane %v7823, 5
        %v7826 = vsel %vm2152, %v7821, %v7825
        %v7827 = vshrl.u32 %v7790, 16
        %v7829 = vrot.slane %v7827, 4
        %v7830 = vor.u32 %v7829, %v7825
        %v7831 = vrot.slane %v7830, 4
        %v7833 = vshll.u32 %v7791, 16
        %v7835 = vrot.slane %v7833, 5
        %v7836 = vsel %vm2152, %v7831, %v7835
        %v7838 = vshrl.u32 %v7792, 16
        %v7840 = vrot.slane %v7838, 4
        %v7841 = vshll.u32 %v7792, 16
        %v7843 = vrot.slane %v7841, 5
        %v7844 = vor.u32 %v7840, %v7843
        %v7845 = vrot.slane %v7844, 4
        %v7847 = vshll.u32 %v7793, 16
        %v7849 = vrot.slane %v7847, 5
        %v7850 = vsel %vm2152, %v7845, %v7849
        %v7851 = vshrl.u32 %v7793, 16
        %v7853 = vrot.slane %v7851, 4
        %v7854 = vor.u32 %v7853, %v7849
        %v7855 = vrot.slane %v7854, 4
        %v7857 = vshll.u32 %v7794, 16
        %v7859 = vrot.slane %v7857, 5
        %v7860 = vsel %vm2152, %v7855, %v7859
        %v7862 = vshrl.u32 %v7795, 16
        %v7864 = vrot.slane %v7862, 4
        %v7865 = vshll.u32 %v7795, 16
        %v7867 = vrot.slane %v7865, 5
        %v7868 = vor.u32 %v7864, %v7867
        %v7869 = vrot.slane %v7868, 4
        %v7871 = vshll.u32 %v7796, 16
        %v7873 = vrot.slane %v7871, 5
        %v7874 = vsel %vm2152, %v7869, %v7873
        %v7875 = vshrl.u32 %v7796, 16
        %v7877 = vrot.slane %v7875, 4
        %v7878 = vor.u32 %v7877, %v7873
        %v7879 = vrot.slane %v7878, 4
        %v7881 = vshll.u32 %v7797, 16
        %v7883 = vrot.slane %v7881, 5
        %v7884 = vsel %vm2152, %v7879, %v7883
        %v7886 = vshrl.u32 %v7798, 16
        %v7888 = vrot.slane %v7886, 4
        %v7889 = vshll.u32 %v7798, 16
        %v7891 = vrot.slane %v7889, 5
        %v7892 = vor.u32 %v7888, %v7891
        %v7893 = vrot.slane %v7892, 4
        %v7895 = vshll.u32 %v7799, 16
        %v7897 = vrot.slane %v7895, 5
        %v7898 = vsel %vm2152, %v7893, %v7897
        %v7899 = vshrl.u32 %v7799, 16
        %v7901 = vrot.slane %v7899, 4
        %v7902 = vor.u32 %v7901, %v7897
        %v7903 = vrot.slane %v7902, 4
        %v7905 = vshll.u32 %v7800, 16
        %v7907 = vrot.slane %v7905, 5
        %v7908 = vsel %vm2152, %v7903, %v7907
        %v7910 = vshrl.u32 %v7801, 16
        %v7912 = vrot.slane %v7910, 4
        %v7913 = vshll.u32 %v7801, 16
        %v7915 = vrot.slane %v7913, 5
        %v7916 = vor.u32 %v7912, %v7915
        %v7917 = vrot.slane %v7916, 4
        %v7919 = vshll.u32 %v7802, 16
        %v7921 = vrot.slane %v7919, 5
        %v7922 = vsel %vm2152, %v7917, %v7921
        %v7923 = vshrl.u32 %v7802, 16
        %v7925 = vrot.slane %v7923, 4
        %v7926 = vor.u32 %v7925, %v7921
        %v7927 = vrot.slane %v7926, 4
        %v7929 = vshll.u32 %v7803, 16
        %v7931 = vrot.slane %v7929, 5
        %v7932 = vsel %vm2152, %v7927, %v7931
        %v7934 = vshrl.u32 %v7804, 16
        %v7936 = vrot.slane %v7934, 4
        %v7937 = vshll.u32 %v7804, 16
        %v7939 = vrot.slane %v7937, 5
        %v7940 = vor.u32 %v7936, %v7939
        %v7941 = vrot.slane %v7940, 4
        %v7943 = vshll.u32 %v7805, 16
        %v7945 = vrot.slane %v7943, 5
        %v7946 = vsel %vm2152, %v7941, %v7945
        %v7947 = vshrl.u32 %v7805, 16
        %v7949 = vrot.slane %v7947, 4
        %v7950 = vor.u32 %v7949, %v7945
        %v7951 = vrot.slane %v7950, 4
        %v7953 = vshll.u32 %v7806, 16
        %v7955 = vrot.slane %v7953, 5
        %v7956 = vsel %vm2152, %v7951, %v7955
        %v7958 = vshrl.u32 %v7807, 16
        %v7960 = vrot.slane %v7958, 4
        %v7961 = vshll.u32 %v7807, 16
        %v7963 = vrot.slane %v7961, 5
        %v7964 = vor.u32 %v7960, %v7963
        %v7965 = vrot.slane %v7964, 4
        %v7967 = vshll.u32 %v7808, 16
        %v7969 = vrot.slane %v7967, 5
        %v7970 = vsel %vm2152, %v7965, %v7969
        %v7971 = vshrl.u32 %v7808, 16
        %v7973 = vrot.slane %v7971, 4
        %v7974 = vor.u32 %v7973, %v7969
        %v7975 = vrot.slane %v7974, 4
        %v7977 = vshll.u32 %v7809, 16
        %v7979 = vrot.slane %v7977, 5
        %v7980 = vsel %vm2152, %v7975, %v7979
        %v7982 = vshrl.u32 %v7810, 16
        %v7984 = vrot.slane %v7982, 4
        %v7985 = vshll.u32 %v7810, 16
        %v7987 = vrot.slane %v7985, 5
        %v7988 = vor.u32 %v7984, %v7987
        %v7989 = vrot.slane %v7988, 4
        %v7991 = vshll.u32 %v7811, 16
        %v7993 = vrot.slane %v7991, 5
        %v7994 = vsel %vm2152, %v7989, %v7993
        %v7995 = vshrl.u32 %v7811, 16
        %v7997 = vrot.slane %v7995, 4
        %v7998 = vor.u32 %v7997, %v7993
        %v7999 = vrot.slane %v7998, 4
        %v8001 = vshll.u32 %v7812, 16
        %v8003 = vrot.slane %v8001, 5
        %v8004 = vsel %vm2152, %v7999, %v8003
        %s8005 = scalar_lea.vmem [#allocation4], 320
        %v8006 = vld [vmem:[%s8005] sm:$0xf]
        %v8007 = vld [vmem:[%s8005 + $0x4] sm:$0xf]
        %v8008 = vld [vmem:[%s8005 + $0x8] sm:$0xf]
        %v8009 = vld [vmem:[%s8005 + $0xc] sm:$0xf]
        %v8010 = vld [vmem:[%s8005 + $0x10] sm:$0xf]
        %v8011 = vld [vmem:[%s8005 + $0x14] sm:$0xf]
        %v8012 = vld [vmem:[%s8005 + $0x18] sm:$0xf]
        %v8013 = vld [vmem:[%s8005 + $0x1c] sm:$0xf]
        %v8014 = vld [vmem:[%s8005 + $0x20] sm:$0xf]
        %v8015 = vld [vmem:[%s8005 + $0x24] sm:$0xf]
        %v8016 = vld [vmem:[%s8005 + $0x28] sm:$0xf]
        %v8017 = vld [vmem:[%s8005 + $0x2c] sm:$0xf]
        %v8018 = vld [vmem:[%s8005 + $0x30] sm:$0xf]
        %v8019 = vld [vmem:[%s8005 + $0x34] sm:$0xf]
        %v8020 = vld [vmem:[%s8005 + $0x38] sm:$0xf]
        %v8021 = vld [vmem:[%s8005 + $0x3c] sm:$0xf]
        %v8022 = vunpack.c.l.b16 %v7826
        %v8023 = vunpack.c.l.b16 %v7836
        %v8024 = vunpack.c.l.b16 %v7850
        %v8025 = vunpack.c.l.b16 %v7860
        %v8026 = vunpack.c.l.b16 %v7874
        %v8027 = vunpack.c.l.b16 %v7884
        %v8028 = vunpack.c.l.b16 %v7898
        %v8029 = vunpack.c.l.b16 %v7908
        %v8030 = vunpack.c.l.b16 %v7922
        %v8031 = vunpack.c.l.b16 %v7932
        %v8032 = vunpack.c.l.b16 %v7946
        %v8033 = vunpack.c.l.b16 %v7956
        %v8034 = vunpack.c.l.b16 %v7970
        %v8035 = vunpack.c.l.b16 %v7980
        %v8036 = vunpack.c.l.b16 %v7994
        %v8037 = vunpack.c.l.b16 %v8004
        %v8038 = vpack.c.b16 %v8023, %v8022
        %v8039 = vpack.c.b16 %v8025, %v8024
        %v8040 = vpack.c.b16 %v8027, %v8026
        %v8041 = vpack.c.b16 %v8029, %v8028
        %v8042 = vpack.c.b16 %v8031, %v8030
        %v8043 = vpack.c.b16 %v8033, %v8032
        %v8044 = vpack.c.b16 %v8035, %v8034
        %v8045 = vpack.c.b16 %v8037, %v8036
        %v8070 = vunpack.c.l.b16 %v8006
        %v8071 = vunpack.c.l.b16 %v8007
        %v8072 = vunpack.c.l.b16 %v8008
        %v8073 = vunpack.c.l.b16 %v8009
        %v8074 = vunpack.c.l.b16 %v8010
        %v8075 = vunpack.c.l.b16 %v8011
        %v8076 = vunpack.c.l.b16 %v8012
        %v8077 = vunpack.c.l.b16 %v8013
        %v8078 = vunpack.c.l.b16 %v8014
        %v8079 = vunpack.c.l.b16 %v8015
        %v8080 = vunpack.c.l.b16 %v8016
        %v8081 = vunpack.c.l.b16 %v8017
        %v8082 = vunpack.c.l.b16 %v8018
        %v8083 = vunpack.c.l.b16 %v8019
        %v8084 = vunpack.c.l.b16 %v8020
        %v8085 = vunpack.c.l.b16 %v8021
        %v8086 = vpack.c.b16 %v8071, %v8070
        %v8087 = vpack.c.b16 %v8073, %v8072
        %v8088 = vpack.c.b16 %v8075, %v8074
        %v8089 = vpack.c.b16 %v8077, %v8076
        %v8090 = vpack.c.b16 %v8079, %v8078
        %v8091 = vpack.c.b16 %v8081, %v8080
        %v8092 = vpack.c.b16 %v8083, %v8082
        %v8093 = vpack.c.b16 %v8085, %v8084
        %8102 = vmatprep.subr.bf16.mxu0 0
        %8103 = vmatpush1.bf16.msra.mxu0 %v8086
        %8104 = vmatprep.subr.bf16.mxu0 0
        %8105 = vmatpush1.bf16.msra.mxu0 %v8087
        %8106 = vmatprep.subr.bf16.mxu0 0
        %8107 = vmatpush1.bf16.msra.mxu0 %v8088
        %8108 = vmatprep.subr.bf16.mxu0 0
        %8109 = vmatpush1.bf16.msra.mxu0 %v8089
        %8110 = vmatprep.subr.bf16.mxu0 0
        %8111 = vmatpush1.bf16.msra.mxu0 %v8090
        %8112 = vmatprep.subr.bf16.mxu0 0
        %8113 = vmatpush1.bf16.msra.mxu0 %v8091
        %8114 = vmatprep.subr.bf16.mxu0 0
        %8115 = vmatpush1.bf16.msra.mxu0 %v8092
        %8116 = vmatprep.subr.bf16.mxu0 0
        %8117 = vmatpush1.bf16.msra.mxu0 %v8093
        %8118 = vmatprep.subr.bf16.mxu0 0
        %8119 = vmatpush1.bf16.msra.mxu0 0
        %8120 = vmatprep.subr.bf16.mxu0 0
        %8121 = vmatpush1.bf16.msra.mxu0 0
        %8122 = vmatprep.subr.bf16.mxu0 0
        %8123 = vmatpush1.bf16.msra.mxu0 0
        %8124 = vmatprep.subr.bf16.mxu0 0
        %8125 = vmatpush1.bf16.msra.mxu0 0
        %8126 = vmatprep.subr.bf16.mxu0 0
        %8127 = vmatpush1.bf16.msra.mxu0 0
        %8128 = vmatprep.subr.bf16.mxu0 0
        %8129 = vmatpush1.bf16.msra.mxu0 0
        %8130 = vmatprep.subr.bf16.mxu0 0
        %8131 = vmatpush1.bf16.msra.mxu0 0
        %8132 = vmatprep.subr.bf16.mxu0 0
        %8133 = vmatpush1.bf16.msra.mxu0 0
        %8134 = vmatprep.mubr.bf16.mxu0 0
        %8135 = vmatmul.mubr.bf16.gmra.mrb[0].mxu0 %v8038
        %v8136 = vpop.f32.mrb[0].mxu0
        %v8137 = vadd.f32 0.0, %v8136
        %v8138 = vpop.f32.mrb[0].mxu0
        %v8139 = vpop.f32.mrb[0].mxu0
        %v8140 = vadd.f32 0.0, %v8139
        %v8141 = vpop.f32.mrb[0].mxu0
        %8142 = vmatprep.mubr.bf16.mxu0 0
        %8143 = vmatmul.mubr.bf16.gmra.mrb[0].mxu0 %v8039
        %v8144 = vpop.f32.mrb[0].mxu0
        %v8145 = vadd.f32 0.0, %v8144
        %v8146 = vpop.f32.mrb[0].mxu0
        %v8147 = vpop.f32.mrb[0].mxu0
        %v8148 = vadd.f32 0.0, %v8147
        %v8149 = vpop.f32.mrb[0].mxu0
        %8150 = vmatprep.mubr.bf16.mxu0 0
        %8151 = vmatmul.mubr.bf16.gmra.mrb[0].mxu0 %v8040
        %v8152 = vpop.f32.mrb[0].mxu0
        %v8153 = vadd.f32 0.0, %v8152
        %v8154 = vpop.f32.mrb[0].mxu0
        %v8155 = vpop.f32.mrb[0].mxu0
        %v8156 = vadd.f32 0.0, %v8155
        %v8157 = vpop.f32.mrb[0].mxu0
        %8158 = vmatprep.mubr.bf16.mxu0 0
        %8159 = vmatmul.mubr.bf16.gmra.mrb[0].mxu0 %v8041
        %v8160 = vpop.f32.mrb[0].mxu0
        %v8161 = vadd.f32 0.0, %v8160
        %v8162 = vpop.f32.mrb[0].mxu0
        %v8163 = vpop.f32.mrb[0].mxu0
        %v8164 = vadd.f32 0.0, %v8163
        %v8165 = vpop.f32.mrb[0].mxu0
        %8166 = vmatprep.mubr.bf16.mxu0 0
        %8167 = vmatmul.mubr.bf16.gmra.mrb[0].mxu0 %v8042
        %v8168 = vpop.f32.mrb[0].mxu0
        %v8169 = vadd.f32 0.0, %v8168
        %v8170 = vpop.f32.mrb[0].mxu0
        %v8171 = vpop.f32.mrb[0].mxu0
        %v8172 = vadd.f32 0.0, %v8171
        %v8173 = vpop.f32.mrb[0].mxu0
        %8174 = vmatprep.mubr.bf16.mxu0 0
        %8175 = vmatmul.mubr.bf16.gmra.mrb[0].mxu0 %v8043
        %v8176 = vpop.f32.mrb[0].mxu0
        %v8177 = vadd.f32 0.0, %v8176
        %v8178 = vpop.f32.mrb[0].mxu0
        %v8179 = vpop.f32.mrb[0].mxu0
        %v8180 = vadd.f32 0.0, %v8179
        %v8181 = vpop.f32.mrb[0].mxu0
        %8182 = vmatprep.mubr.bf16.mxu0 0
        %8183 = vmatmul.mubr.bf16.gmra.mrb[0].mxu0 %v8044
        %v8184 = vpop.f32.mrb[0].mxu0
        %v8185 = vadd.f32 0.0, %v8184
        %v8186 = vpop.f32.mrb[0].mxu0
        %v8187 = vpop.f32.mrb[0].mxu0
        %v8188 = vadd.f32 0.0, %v8187
        %v8189 = vpop.f32.mrb[0].mxu0
        %8190 = vmatprep.mubr.bf16.mxu0 0
        %8191 = vmatmul.mubr.bf16.gmra.mrb[0].mxu0 %v8045
        %v8192 = vpop.f32.mrb[0].mxu0
        %v8193 = vadd.f32 0.0, %v8192
        %v8194 = vpop.f32.mrb[0].mxu0
        %v8195 = vpop.f32.mrb[0].mxu0
        %v8196 = vadd.f32 0.0, %v8195
        %v8197 = vpop.f32.mrb[0].mxu0
        %8198 = vdwg.mxu0
        %v8199 = vadd.f32 %v7773, %v8137
        %v8200 = vadd.f32 %v7774, %v8140
        %v8201 = vadd.f32 %v7775, %v8145
        %v8202 = vadd.f32 %v7776, %v8148
        %v8203 = vadd.f32 %v7777, %v8153
        %v8204 = vadd.f32 %v7778, %v8156
        %v8205 = vadd.f32 %v7779, %v8161
        %v8206 = vadd.f32 %v7780, %v8164
        %v8207 = vadd.f32 %v7781, %v8169
        %v8208 = vadd.f32 %v7782, %v8172
        %v8209 = vadd.f32 %v7783, %v8177
        %v8210 = vadd.f32 %v7784, %v8180
        %v8211 = vadd.f32 %v7785, %v8185
        %v8212 = vadd.f32 %v7786, %v8188
        %v8213 = vadd.f32 %v7787, %v8193
        %v8214 = vadd.f32 %v7788, %v8196
        %s8215 = scalar_lea.vmem [#allocation3], 40
        %v8216 = vld [vmem:[%s8215 + $0x4] sm:$0x8]
        %v8217 = vld [vmem:[%s8215 + $0x8] sm:$0xf]
        %v8218 = vld [vmem:[%s8215 + $0xc] sm:$0xf]
        %v8219 = vld [vmem:[%s8215 + $0x18] sm:$0x8]
        %v8220 = vld [vmem:[%s8215 + $0x1c] sm:$0xf]
        %v8221 = vld [vmem:[%s8215 + $0x20] sm:$0xf]
        %v8222 = vld [vmem:[%s8215 + $0x2c] sm:$0x8]
        %v8223 = vld [vmem:[%s8215 + $0x30] sm:$0xf]
        %v8224 = vld [vmem:[%s8215 + $0x34] sm:$0xf]
        %v8225 = vld [vmem:[%s8215 + $0x40] sm:$0x8]
        %v8226 = vld [vmem:[%s8215 + $0x44] sm:$0xf]
        %v8227 = vld [vmem:[%s8215 + $0x48] sm:$0xf]
        %v8228 = vld [vmem:[%s8215 + $0x54] sm:$0x8]
        %v8229 = vld [vmem:[%s8215 + $0x58] sm:$0xf]
        %v8230 = vld [vmem:[%s8215 + $0x5c] sm:$0xf]
        %v8231 = vld [vmem:[%s8215 + $0x68] sm:$0x8]
        %v8232 = vld [vmem:[%s8215 + $0x6c] sm:$0xf]
        %v8233 = vld [vmem:[%s8215 + $0x70] sm:$0xf]
        %v8234 = vld [vmem:[%s8215 + $0x7c] sm:$0x8]
        %v8235 = vld [vmem:[%s8215 + $0x80] sm:$0xf]
        %v8236 = vld [vmem:[%s8215 + $0x84] sm:$0xf]
        %v8237 = vld [vmem:[%s8215 + $0x90] sm:$0x8]
        %v8238 = vld [vmem:[%s8215 + $0x94] sm:$0xf]
        %v8239 = vld [vmem:[%s8215 + $0x98] sm:$0xf]
        %v8241 = vshrl.u32 %v8216, 16
        %v8243 = vrot.slane %v8241, 7
        %v8244 = vrot.slane %v8243, 4
        %v8246 = vshrl.u32 %v8217, 16
        %v8248 = vrot.slane %v8246, 7
        %v8249 = vshll.u32 %v8217, 16
        %v8251 = vor.u32 %v8248, %v8249
        %v8252 = vsel %vm1236, %v8244, %v8251
        %v8253 = vrot.slane %v8248, 4
        %v8255 = vshrl.u32 %v8218, 16
        %v8257 = vrot.slane %v8255, 7
        %v8258 = vshll.u32 %v8218, 16
        %v8260 = vor.u32 %v8257, %v8258
        %v8261 = vsel %vm1236, %v8253, %v8260
        %v8263 = vshrl.u32 %v8219, 16
        %v8265 = vrot.slane %v8263, 7
        %v8266 = vrot.slane %v8265, 4
        %v8268 = vshrl.u32 %v8220, 16
        %v8270 = vrot.slane %v8268, 7
        %v8271 = vshll.u32 %v8220, 16
        %v8273 = vor.u32 %v8270, %v8271
        %v8274 = vsel %vm1236, %v8266, %v8273
        %v8275 = vrot.slane %v8270, 4
        %v8277 = vshrl.u32 %v8221, 16
        %v8279 = vrot.slane %v8277, 7
        %v8280 = vshll.u32 %v8221, 16
        %v8282 = vor.u32 %v8279, %v8280
        %v8283 = vsel %vm1236, %v8275, %v8282
        %v8285 = vshrl.u32 %v8222, 16
        %v8287 = vrot.slane %v8285, 7
        %v8288 = vrot.slane %v8287, 4
        %v8290 = vshrl.u32 %v8223, 16
        %v8292 = vrot.slane %v8290, 7
        %v8293 = vshll.u32 %v8223, 16
        %v8295 = vor.u32 %v8292, %v8293
        %v8296 = vsel %vm1236, %v8288, %v8295
        %v8297 = vrot.slane %v8292, 4
        %v8299 = vshrl.u32 %v8224, 16
        %v8301 = vrot.slane %v8299, 7
        %v8302 = vshll.u32 %v8224, 16
        %v8304 = vor.u32 %v8301, %v8302
        %v8305 = vsel %vm1236, %v8297, %v8304
        %v8307 = vshrl.u32 %v8225, 16
        %v8309 = vrot.slane %v8307, 7
        %v8310 = vrot.slane %v8309, 4
        %v8312 = vshrl.u32 %v8226, 16
        %v8314 = vrot.slane %v8312, 7
        %v8315 = vshll.u32 %v8226, 16
        %v8317 = vor.u32 %v8314, %v8315
        %v8318 = vsel %vm1236, %v8310, %v8317
        %v8319 = vrot.slane %v8314, 4
        %v8321 = vshrl.u32 %v8227, 16
        %v8323 = vrot.slane %v8321, 7
        %v8324 = vshll.u32 %v8227, 16
        %v8326 = vor.u32 %v8323, %v8324
        %v8327 = vsel %vm1236, %v8319, %v8326
        %v8329 = vshrl.u32 %v8228, 16
        %v8331 = vrot.slane %v8329, 7
        %v8332 = vrot.slane %v8331, 4
        %v8334 = vshrl.u32 %v8229, 16
        %v8336 = vrot.slane %v8334, 7
        %v8337 = vshll.u32 %v8229, 16
        %v8339 = vor.u32 %v8336, %v8337
        %v8340 = vsel %vm1236, %v8332, %v8339
        %v8341 = vrot.slane %v8336, 4
        %v8343 = vshrl.u32 %v8230, 16
        %v8345 = vrot.slane %v8343, 7
        %v8346 = vshll.u32 %v8230, 16
        %v8348 = vor.u32 %v8345, %v8346
        %v8349 = vsel %vm1236, %v8341, %v8348
        %v8351 = vshrl.u32 %v8231, 16
        %v8353 = vrot.slane %v8351, 7
        %v8354 = vrot.slane %v8353, 4
        %v8356 = vshrl.u32 %v8232, 16
        %v8358 = vrot.slane %v8356, 7
        %v8359 = vshll.u32 %v8232, 16
        %v8361 = vor.u32 %v8358, %v8359
        %v8362 = vsel %vm1236, %v8354, %v8361
        %v8363 = vrot.slane %v8358, 4
        %v8365 = vshrl.u32 %v8233, 16
        %v8367 = vrot.slane %v8365, 7
        %v8368 = vshll.u32 %v8233, 16
        %v8370 = vor.u32 %v8367, %v8368
        %v8371 = vsel %vm1236, %v8363, %v8370
        %v8373 = vshrl.u32 %v8234, 16
        %v8375 = vrot.slane %v8373, 7
        %v8376 = vrot.slane %v8375, 4
        %v8378 = vshrl.u32 %v8235, 16
        %v8380 = vrot.slane %v8378, 7
        %v8381 = vshll.u32 %v8235, 16
        %v8383 = vor.u32 %v8380, %v8381
        %v8384 = vsel %vm1236, %v8376, %v8383
        %v8385 = vrot.slane %v8380, 4
        %v8387 = vshrl.u32 %v8236, 16
        %v8389 = vrot.slane %v8387, 7
        %v8390 = vshll.u32 %v8236, 16
        %v8392 = vor.u32 %v8389, %v8390
        %v8393 = vsel %vm1236, %v8385, %v8392
        %v8395 = vshrl.u32 %v8237, 16
        %v8397 = vrot.slane %v8395, 7
        %v8398 = vrot.slane %v8397, 4
        %v8400 = vshrl.u32 %v8238, 16
        %v8402 = vrot.slane %v8400, 7
        %v8403 = vshll.u32 %v8238, 16
        %v8405 = vor.u32 %v8402, %v8403
        %v8406 = vsel %vm1236, %v8398, %v8405
        %v8407 = vrot.slane %v8402, 4
        %v8409 = vshrl.u32 %v8239, 16
        %v8411 = vrot.slane %v8409, 7
        %v8412 = vshll.u32 %v8239, 16
        %v8414 = vor.u32 %v8411, %v8412
        %v8415 = vsel %vm1236, %v8407, %v8414
        %s8416 = scalar_lea.vmem [#allocation4], 384
        %v8417 = vld [vmem:[%s8416] sm:$0xf]
        %v8418 = vld [vmem:[%s8416 + $0x4] sm:$0xf]
        %v8419 = vld [vmem:[%s8416 + $0x8] sm:$0xf]
        %v8420 = vld [vmem:[%s8416 + $0xc] sm:$0xf]
        %v8421 = vld [vmem:[%s8416 + $0x10] sm:$0xf]
        %v8422 = vld [vmem:[%s8416 + $0x14] sm:$0xf]
        %v8423 = vld [vmem:[%s8416 + $0x18] sm:$0xf]
        %v8424 = vld [vmem:[%s8416 + $0x1c] sm:$0xf]
        %v8425 = vld [vmem:[%s8416 + $0x20] sm:$0xf]
        %v8426 = vld [vmem:[%s8416 + $0x24] sm:$0xf]
        %v8427 = vld [vmem:[%s8416 + $0x28] sm:$0xf]
        %v8428 = vld [vmem:[%s8416 + $0x2c] sm:$0xf]
        %v8429 = vld [vmem:[%s8416 + $0x30] sm:$0xf]
        %v8430 = vld [vmem:[%s8416 + $0x34] sm:$0xf]
        %v8431 = vld [vmem:[%s8416 + $0x38] sm:$0xf]
        %v8432 = vld [vmem:[%s8416 + $0x3c] sm:$0xf]
        %v8433 = vunpack.c.l.b16 %v8252
        %v8434 = vunpack.c.l.b16 %v8261
        %v8435 = vunpack.c.l.b16 %v8274
        %v8436 = vunpack.c.l.b16 %v8283
        %v8437 = vunpack.c.l.b16 %v8296
        %v8438 = vunpack.c.l.b16 %v8305
        %v8439 = vunpack.c.l.b16 %v8318
        %v8440 = vunpack.c.l.b16 %v8327
        %v8441 = vunpack.c.l.b16 %v8340
        %v8442 = vunpack.c.l.b16 %v8349
        %v8443 = vunpack.c.l.b16 %v8362
        %v8444 = vunpack.c.l.b16 %v8371
        %v8445 = vunpack.c.l.b16 %v8384
        %v8446 = vunpack.c.l.b16 %v8393
        %v8447 = vunpack.c.l.b16 %v8406
        %v8448 = vunpack.c.l.b16 %v8415
        %v8449 = vpack.c.b16 %v8434, %v8433
        %v8450 = vpack.c.b16 %v8436, %v8435
        %v8451 = vpack.c.b16 %v8438, %v8437
        %v8452 = vpack.c.b16 %v8440, %v8439
        %v8453 = vpack.c.b16 %v8442, %v8441
        %v8454 = vpack.c.b16 %v8444, %v8443
        %v8455 = vpack.c.b16 %v8446, %v8445
        %v8456 = vpack.c.b16 %v8448, %v8447
        %v8481 = vunpack.c.l.b16 %v8417
        %v8482 = vunpack.c.l.b16 %v8418
        %v8483 = vunpack.c.l.b16 %v8419
        %v8484 = vunpack.c.l.b16 %v8420
        %v8485 = vunpack.c.l.b16 %v8421
        %v8486 = vunpack.c.l.b16 %v8422
        %v8487 = vunpack.c.l.b16 %v8423
        %v8488 = vunpack.c.l.b16 %v8424
        %v8489 = vunpack.c.l.b16 %v8425
        %v8490 = vunpack.c.l.b16 %v8426
        %v8491 = vunpack.c.l.b16 %v8427
        %v8492 = vunpack.c.l.b16 %v8428
        %v8493 = vunpack.c.l.b16 %v8429
        %v8494 = vunpack.c.l.b16 %v8430
        %v8495 = vunpack.c.l.b16 %v8431
        %v8496 = vunpack.c.l.b16 %v8432
        %v8497 = vpack.c.b16 %v8482, %v8481
        %v8498 = vpack.c.b16 %v8484, %v8483
        %v8499 = vpack.c.b16 %v8486, %v8485
        %v8500 = vpack.c.b16 %v8488, %v8487
        %v8501 = vpack.c.b16 %v8490, %v8489
        %v8502 = vpack.c.b16 %v8492, %v8491
        %v8503 = vpack.c.b16 %v8494, %v8493
        %v8504 = vpack.c.b16 %v8496, %v8495
        %8513 = vmatprep.subr.bf16.mxu0 0
        %8514 = vmatpush1.bf16.msra.mxu0 %v8497
        %8515 = vmatprep.subr.bf16.mxu0 0
        %8516 = vmatpush1.bf16.msra.mxu0 %v8498
        %8517 = vmatprep.subr.bf16.mxu0 0
        %8518 = vmatpush1.bf16.msra.mxu0 %v8499
        %8519 = vmatprep.subr.bf16.mxu0 0
        %8520 = vmatpush1.bf16.msra.mxu0 %v8500
        %8521 = vmatprep.subr.bf16.mxu0 0
        %8522 = vmatpush1.bf16.msra.mxu0 %v8501
        %8523 = vmatprep.subr.bf16.mxu0 0
        %8524 = vmatpush1.bf16.msra.mxu0 %v8502
        %8525 = vmatprep.subr.bf16.mxu0 0
        %8526 = vmatpush1.bf16.msra.mxu0 %v8503
        %8527 = vmatprep.subr.bf16.mxu0 0
        %8528 = vmatpush1.bf16.msra.mxu0 %v8504
        %8529 = vmatprep.subr.bf16.mxu0 0
        %8530 = vmatpush1.bf16.msra.mxu0 0
        %8531 = vmatprep.subr.bf16.mxu0 0
        %8532 = vmatpush1.bf16.msra.mxu0 0
        %8533 = vmatprep.subr.bf16.mxu0 0
        %8534 = vmatpush1.bf16.msra.mxu0 0
        %8535 = vmatprep.subr.bf16.mxu0 0
        %8536 = vmatpush1.bf16.msra.mxu0 0
        %8537 = vmatprep.subr.bf16.mxu0 0
        %8538 = vmatpush1.bf16.msra.mxu0 0
        %8539 = vmatprep.subr.bf16.mxu0 0
        %8540 = vmatpush1.bf16.msra.mxu0 0
        %8541 = vmatprep.subr.bf16.mxu0 0
        %8542 = vmatpush1.bf16.msra.mxu0 0
        %8543 = vmatprep.subr.bf16.mxu0 0
        %8544 = vmatpush1.bf16.msra.mxu0 0
        %8545 = vmatprep.mubr.bf16.mxu0 0
        %8546 = vmatmul.mubr.bf16.gmra.mrb[0].mxu0 %v8449
        %v8547 = vpop.f32.mrb[0].mxu0
        %v8548 = vadd.f32 0.0, %v8547
        %v8549 = vpop.f32.mrb[0].mxu0
        %v8550 = vpop.f32.mrb[0].mxu0
        %v8551 = vadd.f32 0.0, %v8550
        %v8552 = vpop.f32.mrb[0].mxu0
        %8553 = vmatprep.mubr.bf16.mxu0 0
        %8554 = vmatmul.mubr.bf16.gmra.mrb[0].mxu0 %v8450
        %v8555 = vpop.f32.mrb[0].mxu0
        %v8556 = vadd.f32 0.0, %v8555
        %v8557 = vpop.f32.mrb[0].mxu0
        %v8558 = vpop.f32.mrb[0].mxu0
        %v8559 = vadd.f32 0.0, %v8558
        %v8560 = vpop.f32.mrb[0].mxu0
        %8561 = vmatprep.mubr.bf16.mxu0 0
        %8562 = vmatmul.mubr.bf16.gmra.mrb[0].mxu0 %v8451
        %v8563 = vpop.f32.mrb[0].mxu0
        %v8564 = vadd.f32 0.0, %v8563
        %v8565 = vpop.f32.mrb[0].mxu0
        %v8566 = vpop.f32.mrb[0].mxu0
        %v8567 = vadd.f32 0.0, %v8566
        %v8568 = vpop.f32.mrb[0].mxu0
        %8569 = vmatprep.mubr.bf16.mxu0 0
        %8570 = vmatmul.mubr.bf16.gmra.mrb[0].mxu0 %v8452
        %v8571 = vpop.f32.mrb[0].mxu0
        %v8572 = vadd.f32 0.0, %v8571
        %v8573 = vpop.f32.mrb[0].mxu0
        %v8574 = vpop.f32.mrb[0].mxu0
        %v8575 = vadd.f32 0.0, %v8574
        %v8576 = vpop.f32.mrb[0].mxu0
        %8577 = vmatprep.mubr.bf16.mxu0 0
        %8578 = vmatmul.mubr.bf16.gmra.mrb[0].mxu0 %v8453
        %v8579 = vpop.f32.mrb[0].mxu0
        %v8580 = vadd.f32 0.0, %v8579
        %v8581 = vpop.f32.mrb[0].mxu0
        %v8582 = vpop.f32.mrb[0].mxu0
        %v8583 = vadd.f32 0.0, %v8582
        %v8584 = vpop.f32.mrb[0].mxu0
        %8585 = vmatprep.mubr.bf16.mxu0 0
        %8586 = vmatmul.mubr.bf16.gmra.mrb[0].mxu0 %v8454
        %v8587 = vpop.f32.mrb[0].mxu0
        %v8588 = vadd.f32 0.0, %v8587
        %v8589 = vpop.f32.mrb[0].mxu0
        %v8590 = vpop.f32.mrb[0].mxu0
        %v8591 = vadd.f32 0.0, %v8590
        %v8592 = vpop.f32.mrb[0].mxu0
        %8593 = vmatprep.mubr.bf16.mxu0 0
        %8594 = vmatmul.mubr.bf16.gmra.mrb[0].mxu0 %v8455
        %v8595 = vpop.f32.mrb[0].mxu0
        %v8596 = vadd.f32 0.0, %v8595
        %v8597 = vpop.f32.mrb[0].mxu0
        %v8598 = vpop.f32.mrb[0].mxu0
        %v8599 = vadd.f32 0.0, %v8598
        %v8600 = vpop.f32.mrb[0].mxu0
        %8601 = vmatprep.mubr.bf16.mxu0 0
        %8602 = vmatmul.mubr.bf16.gmra.mrb[0].mxu0 %v8456
        %v8603 = vpop.f32.mrb[0].mxu0
        %v8604 = vadd.f32 0.0, %v8603
        %v8605 = vpop.f32.mrb[0].mxu0
        %v8606 = vpop.f32.mrb[0].mxu0
        %v8607 = vadd.f32 0.0, %v8606
        %v8608 = vpop.f32.mrb[0].mxu0
        %8609 = vdwg.mxu0
        %v8610 = vadd.f32 %v8199, %v8548
        %v8611 = vadd.f32 %v8200, %v8551
        %v8612 = vadd.f32 %v8201, %v8556
        %v8613 = vadd.f32 %v8202, %v8559
        %v8614 = vadd.f32 %v8203, %v8564
        %v8615 = vadd.f32 %v8204, %v8567
        %v8616 = vadd.f32 %v8205, %v8572
        %v8617 = vadd.f32 %v8206, %v8575
        %v8618 = vadd.f32 %v8207, %v8580
        %v8619 = vadd.f32 %v8208, %v8583
        %v8620 = vadd.f32 %v8209, %v8588
        %v8621 = vadd.f32 %v8210, %v8591
        %v8622 = vadd.f32 %v8211, %v8596
        %v8623 = vadd.f32 %v8212, %v8599
        %v8624 = vadd.f32 %v8213, %v8604
        %v8625 = vadd.f32 %v8214, %v8607
        %s8626 = scalar_lea.vmem [#allocation4], 448
        %v8627 = vld [vmem:[%s8626] sm:$0xf]
        %v8628 = vld [vmem:[%s8626 + $0x4] sm:$0xf]
        %v8629 = vld [vmem:[%s8626 + $0x8] sm:$0xf]
        %v8630 = vld [vmem:[%s8626 + $0xc] sm:$0xf]
        %v8631 = vld [vmem:[%s8626 + $0x10] sm:$0xf]
        %v8632 = vld [vmem:[%s8626 + $0x14] sm:$0xf]
        %v8633 = vld [vmem:[%s8626 + $0x18] sm:$0xf]
        %v8634 = vld [vmem:[%s8626 + $0x1c] sm:$0xf]
        %v8635 = vld [vmem:[%s8626 + $0x20] sm:$0xf]
        %v8636 = vld [vmem:[%s8626 + $0x24] sm:$0xf]
        %v8637 = vld [vmem:[%s8626 + $0x28] sm:$0xf]
        %v8638 = vld [vmem:[%s8626 + $0x2c] sm:$0xf]
        %v8639 = vld [vmem:[%s8626 + $0x30] sm:$0xf]
        %v8640 = vld [vmem:[%s8626 + $0x34] sm:$0xf]
        %v8641 = vld [vmem:[%s8626 + $0x38] sm:$0xf]
        %v8642 = vld [vmem:[%s8626 + $0x3c] sm:$0xf]
        %v8659 = vunpack.c.l.b16 %v8217
        %v8660 = vunpack.c.l.b16 %v8218
        %v8661 = vunpack.c.l.b16 %v8220
        %v8662 = vunpack.c.l.b16 %v8221
        %v8663 = vunpack.c.l.b16 %v8223
        %v8664 = vunpack.c.l.b16 %v8224
        %v8665 = vunpack.c.l.b16 %v8226
        %v8666 = vunpack.c.l.b16 %v8227
        %v8667 = vunpack.c.l.b16 %v8229
        %v8668 = vunpack.c.l.b16 %v8230
        %v8669 = vunpack.c.l.b16 %v8232
        %v8670 = vunpack.c.l.b16 %v8233
        %v8671 = vunpack.c.l.b16 %v8235
        %v8672 = vunpack.c.l.b16 %v8236
        %v8673 = vunpack.c.l.b16 %v8238
        %v8674 = vunpack.c.l.b16 %v8239
        %v8675 = vpack.c.b16 %v8660, %v8659
        %v8676 = vpack.c.b16 %v8662, %v8661
        %v8677 = vpack.c.b16 %v8664, %v8663
        %v8678 = vpack.c.b16 %v8666, %v8665
        %v8679 = vpack.c.b16 %v8668, %v8667
        %v8680 = vpack.c.b16 %v8670, %v8669
        %v8681 = vpack.c.b16 %v8672, %v8671
        %v8682 = vpack.c.b16 %v8674, %v8673
        %v8707 = vunpack.c.l.b16 %v8627
        %v8708 = vunpack.c.l.b16 %v8628
        %v8709 = vunpack.c.l.b16 %v8629
        %v8710 = vunpack.c.l.b16 %v8630
        %v8711 = vunpack.c.l.b16 %v8631
        %v8712 = vunpack.c.l.b16 %v8632
        %v8713 = vunpack.c.l.b16 %v8633
        %v8714 = vunpack.c.l.b16 %v8634
        %v8715 = vunpack.c.l.b16 %v8635
        %v8716 = vunpack.c.l.b16 %v8636
        %v8717 = vunpack.c.l.b16 %v8637
        %v8718 = vunpack.c.l.b16 %v8638
        %v8719 = vunpack.c.l.b16 %v8639
        %v8720 = vunpack.c.l.b16 %v8640
        %v8721 = vunpack.c.l.b16 %v8641
        %v8722 = vunpack.c.l.b16 %v8642
        %v8723 = vpack.c.b16 %v8708, %v8707
        %v8724 = vpack.c.b16 %v8710, %v8709
        %v8725 = vpack.c.b16 %v8712, %v8711
        %v8726 = vpack.c.b16 %v8714, %v8713
        %v8727 = vpack.c.b16 %v8716, %v8715
        %v8728 = vpack.c.b16 %v8718, %v8717
        %v8729 = vpack.c.b16 %v8720, %v8719
        %v8730 = vpack.c.b16 %v8722, %v8721
        %8739 = vmatprep.subr.bf16.mxu0 0
        %8740 = vmatpush1.bf16.msra.mxu0 %v8723
        %8741 = vmatprep.subr.bf16.mxu0 0
        %8742 = vmatpush1.bf16.msra.mxu0 %v8724
        %8743 = vmatprep.subr.bf16.mxu0 0
        %8744 = vmatpush1.bf16.msra.mxu0 %v8725
        %8745 = vmatprep.subr.bf16.mxu0 0
        %8746 = vmatpush1.bf16.msra.mxu0 %v8726
        %8747 = vmatprep.subr.bf16.mxu0 0
        %8748 = vmatpush1.bf16.msra.mxu0 %v8727
        %8749 = vmatprep.subr.bf16.mxu0 0
        %8750 = vmatpush1.bf16.msra.mxu0 %v8728
        %8751 = vmatprep.subr.bf16.mxu0 0
        %8752 = vmatpush1.bf16.msra.mxu0 %v8729
        %8753 = vmatprep.subr.bf16.mxu0 0
        %8754 = vmatpush1.bf16.msra.mxu0 %v8730
        %8755 = vmatprep.subr.bf16.mxu0 0
        %8756 = vmatpush1.bf16.msra.mxu0 0
        %8757 = vmatprep.subr.bf16.mxu0 0
        %8758 = vmatpush1.bf16.msra.mxu0 0
        %8759 = vmatprep.subr.bf16.mxu0 0
        %8760 = vmatpush1.bf16.msra.mxu0 0
        %8761 = vmatprep.subr.bf16.mxu0 0
        %8762 = vmatpush1.bf16.msra.mxu0 0
        %8763 = vmatprep.subr.bf16.mxu0 0
        %8764 = vmatpush1.bf16.msra.mxu0 0
        %8765 = vmatprep.subr.bf16.mxu0 0
        %8766 = vmatpush1.bf16.msra.mxu0 0
        %8767 = vmatprep.subr.bf16.mxu0 0
        %8768 = vmatpush1.bf16.msra.mxu0 0
        %8769 = vmatprep.subr.bf16.mxu0 0
        %8770 = vmatpush1.bf16.msra.mxu0 0
        %8771 = vmatprep.mubr.bf16.mxu0 0
        %8772 = vmatmul.mubr.bf16.gmra.mrb[0].mxu0 %v8675
        %v8773 = vpop.f32.mrb[0].mxu0
        %v8774 = vadd.f32 0.0, %v8773
        %v8775 = vpop.f32.mrb[0].mxu0
        %v8776 = vpop.f32.mrb[0].mxu0
        %v8777 = vadd.f32 0.0, %v8776
        %v8778 = vpop.f32.mrb[0].mxu0
        %8779 = vmatprep.mubr.bf16.mxu0 0
        %8780 = vmatmul.mubr.bf16.gmra.mrb[0].mxu0 %v8676
        %v8781 = vpop.f32.mrb[0].mxu0
        %v8782 = vadd.f32 0.0, %v8781
        %v8783 = vpop.f32.mrb[0].mxu0
        %v8784 = vpop.f32.mrb[0].mxu0
        %v8785 = vadd.f32 0.0, %v8784
        %v8786 = vpop.f32.mrb[0].mxu0
        %8787 = vmatprep.mubr.bf16.mxu0 0
        %8788 = vmatmul.mubr.bf16.gmra.mrb[0].mxu0 %v8677
        %v8789 = vpop.f32.mrb[0].mxu0
        %v8790 = vadd.f32 0.0, %v8789
        %v8791 = vpop.f32.mrb[0].mxu0
        %v8792 = vpop.f32.mrb[0].mxu0
        %v8793 = vadd.f32 0.0, %v8792
        %v8794 = vpop.f32.mrb[0].mxu0
        %8795 = vmatprep.mubr.bf16.mxu0 0
        %8796 = vmatmul.mubr.bf16.gmra.mrb[0].mxu0 %v8678
        %v8797 = vpop.f32.mrb[0].mxu0
        %v8798 = vadd.f32 0.0, %v8797
        %v8799 = vpop.f32.mrb[0].mxu0
        %v8800 = vpop.f32.mrb[0].mxu0
        %v8801 = vadd.f32 0.0, %v8800
        %v8802 = vpop.f32.mrb[0].mxu0
        %8803 = vmatprep.mubr.bf16.mxu0 0
        %8804 = vmatmul.mubr.bf16.gmra.mrb[0].mxu0 %v8679
        %v8805 = vpop.f32.mrb[0].mxu0
        %v8806 = vadd.f32 0.0, %v8805
        %v8807 = vpop.f32.mrb[0].mxu0
        %v8808 = vpop.f32.mrb[0].mxu0
        %v8809 = vadd.f32 0.0, %v8808
        %v8810 = vpop.f32.mrb[0].mxu0
        %8811 = vmatprep.mubr.bf16.mxu0 0
        %8812 = vmatmul.mubr.bf16.gmra.mrb[0].mxu0 %v8680
        %v8813 = vpop.f32.mrb[0].mxu0
        %v8814 = vadd.f32 0.0, %v8813
        %v8815 = vpop.f32.mrb[0].mxu0
        %v8816 = vpop.f32.mrb[0].mxu0
        %v8817 = vadd.f32 0.0, %v8816
        %v8818 = vpop.f32.mrb[0].mxu0
        %8819 = vmatprep.mubr.bf16.mxu0 0
        %8820 = vmatmul.mubr.bf16.gmra.mrb[0].mxu0 %v8681
        %v8821 = vpop.f32.mrb[0].mxu0
        %v8822 = vadd.f32 0.0, %v8821
        %v8823 = vpop.f32.mrb[0].mxu0
        %v8824 = vpop.f32.mrb[0].mxu0
        %v8825 = vadd.f32 0.0, %v8824
        %v8826 = vpop.f32.mrb[0].mxu0
        %8827 = vmatprep.mubr.bf16.mxu0 0
        %8828 = vmatmul.mubr.bf16.gmra.mrb[0].mxu0 %v8682
        %v8829 = vpop.f32.mrb[0].mxu0
        %v8830 = vadd.f32 0.0, %v8829
        %v8831 = vpop.f32.mrb[0].mxu0
        %v8832 = vpop.f32.mrb[0].mxu0
        %v8833 = vadd.f32 0.0, %v8832
        %v8834 = vpop.f32.mrb[0].mxu0
        %8835 = vdwg.mxu0
        %v8836 = vadd.f32 %v8610, %v8774
        %v8837 = vadd.f32 %v8611, %v8777
        %v8838 = vadd.f32 %v8612, %v8782
        %v8839 = vadd.f32 %v8613, %v8785
        %v8840 = vadd.f32 %v8614, %v8790
        %v8841 = vadd.f32 %v8615, %v8793
        %v8842 = vadd.f32 %v8616, %v8798
        %v8843 = vadd.f32 %v8617, %v8801
        %v8844 = vadd.f32 %v8618, %v8806
        %v8845 = vadd.f32 %v8619, %v8809
        %v8846 = vadd.f32 %v8620, %v8814
        %v8847 = vadd.f32 %v8621, %v8817
        %v8848 = vadd.f32 %v8622, %v8822
        %v8849 = vadd.f32 %v8623, %v8825
        %v8850 = vadd.f32 %v8624, %v8830
        %v8851 = vadd.f32 %v8625, %v8833
        %v8852 = vld [vmem:[%s8215 + $0x8] sm:$0xf]
        %v8853 = vld [vmem:[%s8215 + $0xc] sm:$0xf]
        %v8854 = vld [vmem:[%s8215 + $0x10] sm:$0x1]
        %v8855 = vld [vmem:[%s8215 + $0x1c] sm:$0xf]
        %v8856 = vld [vmem:[%s8215 + $0x20] sm:$0xf]
        %v8857 = vld [vmem:[%s8215 + $0x24] sm:$0x1]
        %v8858 = vld [vmem:[%s8215 + $0x30] sm:$0xf]
        %v8859 = vld [vmem:[%s8215 + $0x34] sm:$0xf]
        %v8860 = vld [vmem:[%s8215 + $0x38] sm:$0x1]
        %v8861 = vld [vmem:[%s8215 + $0x44] sm:$0xf]
        %v8862 = vld [vmem:[%s8215 + $0x48] sm:$0xf]
        %v8863 = vld [vmem:[%s8215 + $0x4c] sm:$0x1]
        %v8864 = vld [vmem:[%s8215 + $0x58] sm:$0xf]
        %v8865 = vld [vmem:[%s8215 + $0x5c] sm:$0xf]
        %v8866 = vld [vmem:[%s8215 + $0x60] sm:$0x1]
        %v8867 = vld [vmem:[%s8215 + $0x6c] sm:$0xf]
        %v8868 = vld [vmem:[%s8215 + $0x70] sm:$0xf]
        %v8869 = vld [vmem:[%s8215 + $0x74] sm:$0x1]
        %v8870 = vld [vmem:[%s8215 + $0x80] sm:$0xf]
        %v8871 = vld [vmem:[%s8215 + $0x84] sm:$0xf]
        %v8872 = vld [vmem:[%s8215 + $0x88] sm:$0x1]
        %v8873 = vld [vmem:[%s8215 + $0x94] sm:$0xf]
        %v8874 = vld [vmem:[%s8215 + $0x98] sm:$0xf]
        %v8875 = vld [vmem:[%s8215 + $0x9c] sm:$0x1]
        %v8877 = vshrl.u32 %v8852, 16
        %v8879 = vrot.slane %v8877, 4
        %v8880 = vshll.u32 %v8852, 16
        %v8882 = vrot.slane %v8880, 5
        %v8883 = vor.u32 %v8879, %v8882
        %v8884 = vrot.slane %v8883, 4
        %v8886 = vshll.u32 %v8853, 16
        %v8888 = vrot.slane %v8886, 5
        %v8889 = vsel %vm2152, %v8884, %v8888
        %v8890 = vshrl.u32 %v8853, 16
        %v8892 = vrot.slane %v8890, 4
        %v8893 = vor.u32 %v8892, %v8888
        %v8894 = vrot.slane %v8893, 4
        %v8896 = vshll.u32 %v8854, 16
        %v8898 = vrot.slane %v8896, 5
        %v8899 = vsel %vm2152, %v8894, %v8898
        %v8901 = vshrl.u32 %v8855, 16
        %v8903 = vrot.slane %v8901, 4
        %v8904 = vshll.u32 %v8855, 16
        %v8906 = vrot.slane %v8904, 5
        %v8907 = vor.u32 %v8903, %v8906
        %v8908 = vrot.slane %v8907, 4
        %v8910 = vshll.u32 %v8856, 16
        %v8912 = vrot.slane %v8910, 5
        %v8913 = vsel %vm2152, %v8908, %v8912
        %v8914 = vshrl.u32 %v8856, 16
        %v8916 = vrot.slane %v8914, 4
        %v8917 = vor.u32 %v8916, %v8912
        %v8918 = vrot.slane %v8917, 4
        %v8920 = vshll.u32 %v8857, 16
        %v8922 = vrot.slane %v8920, 5
        %v8923 = vsel %vm2152, %v8918, %v8922
        %v8925 = vshrl.u32 %v8858, 16
        %v8927 = vrot.slane %v8925, 4
        %v8928 = vshll.u32 %v8858, 16
        %v8930 = vrot.slane %v8928, 5
        %v8931 = vor.u32 %v8927, %v8930
        %v8932 = vrot.slane %v8931, 4
        %v8934 = vshll.u32 %v8859, 16
        %v8936 = vrot.slane %v8934, 5
        %v8937 = vsel %vm2152, %v8932, %v8936
        %v8938 = vshrl.u32 %v8859, 16
        %v8940 = vrot.slane %v8938, 4
        %v8941 = vor.u32 %v8940, %v8936
        %v8942 = vrot.slane %v8941, 4
        %v8944 = vshll.u32 %v8860, 16
        %v8946 = vrot.slane %v8944, 5
        %v8947 = vsel %vm2152, %v8942, %v8946
        %v8949 = vshrl.u32 %v8861, 16
        %v8951 = vrot.slane %v8949, 4
        %v8952 = vshll.u32 %v8861, 16
        %v8954 = vrot.slane %v8952, 5
        %v8955 = vor.u32 %v8951, %v8954
        %v8956 = vrot.slane %v8955, 4
        %v8958 = vshll.u32 %v8862, 16
        %v8960 = vrot.slane %v8958, 5
        %v8961 = vsel %vm2152, %v8956, %v8960
        %v8962 = vshrl.u32 %v8862, 16
        %v8964 = vrot.slane %v8962, 4
        %v8965 = vor.u32 %v8964, %v8960
        %v8966 = vrot.slane %v8965, 4
        %v8968 = vshll.u32 %v8863, 16
        %v8970 = vrot.slane %v8968, 5
        %v8971 = vsel %vm2152, %v8966, %v8970
        %v8973 = vshrl.u32 %v8864, 16
        %v8975 = vrot.slane %v8973, 4
        %v8976 = vshll.u32 %v8864, 16
        %v8978 = vrot.slane %v8976, 5
        %v8979 = vor.u32 %v8975, %v8978
        %v8980 = vrot.slane %v8979, 4
        %v8982 = vshll.u32 %v8865, 16
        %v8984 = vrot.slane %v8982, 5
        %v8985 = vsel %vm2152, %v8980, %v8984
        %v8986 = vshrl.u32 %v8865, 16
        %v8988 = vrot.slane %v8986, 4
        %v8989 = vor.u32 %v8988, %v8984
        %v8990 = vrot.slane %v8989, 4
        %v8992 = vshll.u32 %v8866, 16
        %v8994 = vrot.slane %v8992, 5
        %v8995 = vsel %vm2152, %v8990, %v8994
        %v8997 = vshrl.u32 %v8867, 16
        %v8999 = vrot.slane %v8997, 4
        %v9000 = vshll.u32 %v8867, 16
        %v9002 = vrot.slane %v9000, 5
        %v9003 = vor.u32 %v8999, %v9002
        %v9004 = vrot.slane %v9003, 4
        %v9006 = vshll.u32 %v8868, 16
        %v9008 = vrot.slane %v9006, 5
        %v9009 = vsel %vm2152, %v9004, %v9008
        %v9010 = vshrl.u32 %v8868, 16
        %v9012 = vrot.slane %v9010, 4
        %v9013 = vor.u32 %v9012, %v9008
        %v9014 = vrot.slane %v9013, 4
        %v9016 = vshll.u32 %v8869, 16
        %v9018 = vrot.slane %v9016, 5
        %v9019 = vsel %vm2152, %v9014, %v9018
        %v9021 = vshrl.u32 %v8870, 16
        %v9023 = vrot.slane %v9021, 4
        %v9024 = vshll.u32 %v8870, 16
        %v9026 = vrot.slane %v9024, 5
        %v9027 = vor.u32 %v9023, %v9026
        %v9028 = vrot.slane %v9027, 4
        %v9030 = vshll.u32 %v8871, 16
        %v9032 = vrot.slane %v9030, 5
        %v9033 = vsel %vm2152, %v9028, %v9032
        %v9034 = vshrl.u32 %v8871, 16
        %v9036 = vrot.slane %v9034, 4
        %v9037 = vor.u32 %v9036, %v9032
        %v9038 = vrot.slane %v9037, 4
        %v9040 = vshll.u32 %v8872, 16
        %v9042 = vrot.slane %v9040, 5
        %v9043 = vsel %vm2152, %v9038, %v9042
        %v9045 = vshrl.u32 %v8873, 16
        %v9047 = vrot.slane %v9045, 4
        %v9048 = vshll.u32 %v8873, 16
        %v9050 = vrot.slane %v9048, 5
        %v9051 = vor.u32 %v9047, %v9050
        %v9052 = vrot.slane %v9051, 4
        %v9054 = vshll.u32 %v8874, 16
        %v9056 = vrot.slane %v9054, 5
        %v9057 = vsel %vm2152, %v9052, %v9056
        %v9058 = vshrl.u32 %v8874, 16
        %v9060 = vrot.slane %v9058, 4
        %v9061 = vor.u32 %v9060, %v9056
        %v9062 = vrot.slane %v9061, 4
        %v9064 = vshll.u32 %v8875, 16
        %v9066 = vrot.slane %v9064, 5
        %v9067 = vsel %vm2152, %v9062, %v9066
        %s9068 = scalar_lea.vmem [#allocation4], 512
        %v9069 = vld [vmem:[%s9068] sm:$0xf]
        %v9070 = vld [vmem:[%s9068 + $0x4] sm:$0xf]
        %v9071 = vld [vmem:[%s9068 + $0x8] sm:$0xf]
        %v9072 = vld [vmem:[%s9068 + $0xc] sm:$0xf]
        %v9073 = vld [vmem:[%s9068 + $0x10] sm:$0xf]
        %v9074 = vld [vmem:[%s9068 + $0x14] sm:$0xf]
        %v9075 = vld [vmem:[%s9068 + $0x18] sm:$0xf]
        %v9076 = vld [vmem:[%s9068 + $0x1c] sm:$0xf]
        %v9077 = vld [vmem:[%s9068 + $0x20] sm:$0xf]
        %v9078 = vld [vmem:[%s9068 + $0x24] sm:$0xf]
        %v9079 = vld [vmem:[%s9068 + $0x28] sm:$0xf]
        %v9080 = vld [vmem:[%s9068 + $0x2c] sm:$0xf]
        %v9081 = vld [vmem:[%s9068 + $0x30] sm:$0xf]
        %v9082 = vld [vmem:[%s9068 + $0x34] sm:$0xf]
        %v9083 = vld [vmem:[%s9068 + $0x38] sm:$0xf]
        %v9084 = vld [vmem:[%s9068 + $0x3c] sm:$0xf]
        %v9085 = vunpack.c.l.b16 %v8889
        %v9086 = vunpack.c.l.b16 %v8899
        %v9087 = vunpack.c.l.b16 %v8913
        %v9088 = vunpack.c.l.b16 %v8923
        %v9089 = vunpack.c.l.b16 %v8937
        %v9090 = vunpack.c.l.b16 %v8947
        %v9091 = vunpack.c.l.b16 %v8961
        %v9092 = vunpack.c.l.b16 %v8971
        %v9093 = vunpack.c.l.b16 %v8985
        %v9094 = vunpack.c.l.b16 %v8995
        %v9095 = vunpack.c.l.b16 %v9009
        %v9096 = vunpack.c.l.b16 %v9019
        %v9097 = vunpack.c.l.b16 %v9033
        %v9098 = vunpack.c.l.b16 %v9043
        %v9099 = vunpack.c.l.b16 %v9057
        %v9100 = vunpack.c.l.b16 %v9067
        %v9101 = vpack.c.b16 %v9086, %v9085
        %v9102 = vpack.c.b16 %v9088, %v9087
        %v9103 = vpack.c.b16 %v9090, %v9089
        %v9104 = vpack.c.b16 %v9092, %v9091
        %v9105 = vpack.c.b16 %v9094, %v9093
        %v9106 = vpack.c.b16 %v9096, %v9095
        %v9107 = vpack.c.b16 %v9098, %v9097
        %v9108 = vpack.c.b16 %v9100, %v9099
        %v9133 = vunpack.c.l.b16 %v9069
        %v9134 = vunpack.c.l.b16 %v9070
        %v9135 = vunpack.c.l.b16 %v9071
        %v9136 = vunpack.c.l.b16 %v9072
        %v9137 = vunpack.c.l.b16 %v9073
        %v9138 = vunpack.c.l.b16 %v9074
        %v9139 = vunpack.c.l.b16 %v9075
        %v9140 = vunpack.c.l.b16 %v9076
        %v9141 = vunpack.c.l.b16 %v9077
        %v9142 = vunpack.c.l.b16 %v9078
        %v9143 = vunpack.c.l.b16 %v9079
        %v9144 = vunpack.c.l.b16 %v9080
        %v9145 = vunpack.c.l.b16 %v9081
        %v9146 = vunpack.c.l.b16 %v9082
        %v9147 = vunpack.c.l.b16 %v9083
        %v9148 = vunpack.c.l.b16 %v9084
        %v9149 = vpack.c.b16 %v9134, %v9133
        %v9150 = vpack.c.b16 %v9136, %v9135
        %v9151 = vpack.c.b16 %v9138, %v9137
        %v9152 = vpack.c.b16 %v9140, %v9139
        %v9153 = vpack.c.b16 %v9142, %v9141
        %v9154 = vpack.c.b16 %v9144, %v9143
        %v9155 = vpack.c.b16 %v9146, %v9145
        %v9156 = vpack.c.b16 %v9148, %v9147
        %9165 = vmatprep.subr.bf16.mxu0 0
        %9166 = vmatpush1.bf16.msra.mxu0 %v9149
        %9167 = vmatprep.subr.bf16.mxu0 0
        %9168 = vmatpush1.bf16.msra.mxu0 %v9150
        %9169 = vmatprep.subr.bf16.mxu0 0
        %9170 = vmatpush1.bf16.msra.mxu0 %v9151
        %9171 = vmatprep.subr.bf16.mxu0 0
        %9172 = vmatpush1.bf16.msra.mxu0 %v9152
        %9173 = vmatprep.subr.bf16.mxu0 0
        %9174 = vmatpush1.bf16.msra.mxu0 %v9153
        %9175 = vmatprep.subr.bf16.mxu0 0
        %9176 = vmatpush1.bf16.msra.mxu0 %v9154
        %9177 = vmatprep.subr.bf16.mxu0 0
        %9178 = vmatpush1.bf16.msra.mxu0 %v9155
        %9179 = vmatprep.subr.bf16.mxu0 0
        %9180 = vmatpush1.bf16.msra.mxu0 %v9156
        %9181 = vmatprep.subr.bf16.mxu0 0
        %9182 = vmatpush1.bf16.msra.mxu0 0
        %9183 = vmatprep.subr.bf16.mxu0 0
        %9184 = vmatpush1.bf16.msra.mxu0 0
        %9185 = vmatprep.subr.bf16.mxu0 0
        %9186 = vmatpush1.bf16.msra.mxu0 0
        %9187 = vmatprep.subr.bf16.mxu0 0
        %9188 = vmatpush1.bf16.msra.mxu0 0
        %9189 = vmatprep.subr.bf16.mxu0 0
        %9190 = vmatpush1.bf16.msra.mxu0 0
        %9191 = vmatprep.subr.bf16.mxu0 0
        %9192 = vmatpush1.bf16.msra.mxu0 0
        %9193 = vmatprep.subr.bf16.mxu0 0
        %9194 = vmatpush1.bf16.msra.mxu0 0
        %9195 = vmatprep.subr.bf16.mxu0 0
        %9196 = vmatpush1.bf16.msra.mxu0 0
        %9197 = vmatprep.mubr.bf16.mxu0 0
        %9198 = vmatmul.mubr.bf16.gmra.mrb[0].mxu0 %v9101
        %v9199 = vpop.f32.mrb[0].mxu0
        %v9200 = vadd.f32 0.0, %v9199
        %v9201 = vpop.f32.mrb[0].mxu0
        %v9202 = vpop.f32.mrb[0].mxu0
        %v9203 = vadd.f32 0.0, %v9202
        %v9204 = vpop.f32.mrb[0].mxu0
        %9205 = vmatprep.mubr.bf16.mxu0 0
        %9206 = vmatmul.mubr.bf16.gmra.mrb[0].mxu0 %v9102
        %v9207 = vpop.f32.mrb[0].mxu0
        %v9208 = vadd.f32 0.0, %v9207
        %v9209 = vpop.f32.mrb[0].mxu0
        %v9210 = vpop.f32.mrb[0].mxu0
        %v9211 = vadd.f32 0.0, %v9210
        %v9212 = vpop.f32.mrb[0].mxu0
        %9213 = vmatprep.mubr.bf16.mxu0 0
        %9214 = vmatmul.mubr.bf16.gmra.mrb[0].mxu0 %v9103
        %v9215 = vpop.f32.mrb[0].mxu0
        %v9216 = vadd.f32 0.0, %v9215
        %v9217 = vpop.f32.mrb[0].mxu0
        %v9218 = vpop.f32.mrb[0].mxu0
        %v9219 = vadd.f32 0.0, %v9218
        %v9220 = vpop.f32.mrb[0].mxu0
        %9221 = vmatprep.mubr.bf16.mxu0 0
        %9222 = vmatmul.mubr.bf16.gmra.mrb[0].mxu0 %v9104
        %v9223 = vpop.f32.mrb[0].mxu0
        %v9224 = vadd.f32 0.0, %v9223
        %v9225 = vpop.f32.mrb[0].mxu0
        %v9226 = vpop.f32.mrb[0].mxu0
        %v9227 = vadd.f32 0.0, %v9226
        %v9228 = vpop.f32.mrb[0].mxu0
        %9229 = vmatprep.mubr.bf16.mxu0 0
        %9230 = vmatmul.mubr.bf16.gmra.mrb[0].mxu0 %v9105
        %v9231 = vpop.f32.mrb[0].mxu0
        %v9232 = vadd.f32 0.0, %v9231
        %v9233 = vpop.f32.mrb[0].mxu0
        %v9234 = vpop.f32.mrb[0].mxu0
        %v9235 = vadd.f32 0.0, %v9234
        %v9236 = vpop.f32.mrb[0].mxu0
        %9237 = vmatprep.mubr.bf16.mxu0 0
        %9238 = vmatmul.mubr.bf16.gmra.mrb[0].mxu0 %v9106
        %v9239 = vpop.f32.mrb[0].mxu0
        %v9240 = vadd.f32 0.0, %v9239
        %v9241 = vpop.f32.mrb[0].mxu0
        %v9242 = vpop.f32.mrb[0].mxu0
        %v9243 = vadd.f32 0.0, %v9242
        %v9244 = vpop.f32.mrb[0].mxu0
        %9245 = vmatprep.mubr.bf16.mxu0 0
        %9246 = vmatmul.mubr.bf16.gmra.mrb[0].mxu0 %v9107
        %v9247 = vpop.f32.mrb[0].mxu0
        %v9248 = vadd.f32 0.0, %v9247
        %v9249 = vpop.f32.mrb[0].mxu0
        %v9250 = vpop.f32.mrb[0].mxu0
        %v9251 = vadd.f32 0.0, %v9250
        %v9252 = vpop.f32.mrb[0].mxu0
        %9253 = vmatprep.mubr.bf16.mxu0 0
        %9254 = vmatmul.mubr.bf16.gmra.mrb[0].mxu0 %v9108
        %v9255 = vpop.f32.mrb[0].mxu0
        %v9256 = vadd.f32 0.0, %v9255
        %v9257 = vpop.f32.mrb[0].mxu0
        %v9258 = vpop.f32.mrb[0].mxu0
        %v9259 = vadd.f32 0.0, %v9258
        %v9260 = vpop.f32.mrb[0].mxu0
        %9261 = vdwg.mxu0
        %v9262 = vadd.f32 %v8836, %v9200
        %v9263 = vadd.f32 %v8837, %v9203
        %v9264 = vadd.f32 %v8838, %v9208
        %v9265 = vadd.f32 %v8839, %v9211
        %v9266 = vadd.f32 %v8840, %v9216
        %v9267 = vadd.f32 %v8841, %v9219
        %v9268 = vadd.f32 %v8842, %v9224
        %v9269 = vadd.f32 %v8843, %v9227
        %v9270 = vadd.f32 %v8844, %v9232
        %v9271 = vadd.f32 %v8845, %v9235
        %v9272 = vadd.f32 %v8846, %v9240
        %v9273 = vadd.f32 %v8847, %v9243
        %v9274 = vadd.f32 %v8848, %v9248
        %v9275 = vadd.f32 %v8849, %v9251
        %v9276 = vadd.f32 %v8850, %v9256
        %v9277 = vadd.f32 %v8851, %v9259
        %v9278 = vld [vmem:[%s10] sm:$0x1]
        %v9280 = vlaneseq
        %v9281 = vshrl.u32 %v9280, 7
        %v9282 = vsub.s32 0, %v9281
        %v9283 = vrot.slane %v9278, %v9282
        %v9285 = vmul.f32 %v9262, %v9283
        %v9286 = vmul.f32 %v9263, %v9283
        %v9287 = vmul.f32 %v9264, %v9283
        %v9288 = vmul.f32 %v9265, %v9283
        %v9289 = vmul.f32 %v9266, %v9283
        %v9290 = vmul.f32 %v9267, %v9283
        %v9291 = vmul.f32 %v9268, %v9283
        %v9292 = vmul.f32 %v9269, %v9283
        %v9293 = vmul.f32 %v9270, %v9283
        %v9294 = vmul.f32 %v9271, %v9283
        %v9295 = vmul.f32 %v9272, %v9283
        %v9296 = vmul.f32 %v9273, %v9283
        %v9297 = vmul.f32 %v9274, %v9283
        %v9298 = vmul.f32 %v9275, %v9283
        %v9299 = vmul.f32 %v9276, %v9283
        %v9300 = vmul.f32 %v9277, %v9283
        %v9301 = vld [vmem:[%s11] sm:$0x1]
        %v9303 = vlaneseq
        %v9304 = vshrl.u32 %v9303, 7
        %v9305 = vsub.s32 0, %v9304
        %v9306 = vrot.slane %v9301, %v9305
        %v9308 = vadd.f32 %v9285, %v9306
        %v9309 = vadd.f32 %v9286, %v9306
        %v9310 = vadd.f32 %v9287, %v9306
        %v9311 = vadd.f32 %v9288, %v9306
        %v9312 = vadd.f32 %v9289, %v9306
        %v9313 = vadd.f32 %v9290, %v9306
        %v9314 = vadd.f32 %v9291, %v9306
        %v9315 = vadd.f32 %v9292, %v9306
        %v9316 = vadd.f32 %v9293, %v9306
        %v9317 = vadd.f32 %v9294, %v9306
        %v9318 = vadd.f32 %v9295, %v9306
        %v9319 = vadd.f32 %v9296, %v9306
        %v9320 = vadd.f32 %v9297, %v9306
        %v9321 = vadd.f32 %v9298, %v9306
        %v9322 = vadd.f32 %v9299, %v9306
        %v9323 = vadd.f32 %v9300, %v9306
        %v9324 = vmax.f32 %v9308, 0.0
        %v9325 = vmax.f32 %v9309, 0.0
        %v9326 = vmax.f32 %v9310, 0.0
        %v9327 = vmax.f32 %v9311, 0.0
        %v9328 = vmax.f32 %v9312, 0.0
        %v9329 = vmax.f32 %v9313, 0.0
        %v9330 = vmax.f32 %v9314, 0.0
        %v9331 = vmax.f32 %v9315, 0.0
        %v9332 = vmax.f32 %v9316, 0.0
        %v9333 = vmax.f32 %v9317, 0.0
        %v9334 = vmax.f32 %v9318, 0.0
        %v9335 = vmax.f32 %v9319, 0.0
        %v9336 = vmax.f32 %v9320, 0.0
        %v9337 = vmax.f32 %v9321, 0.0
        %v9338 = vmax.f32 %v9322, 0.0
        %v9339 = vmax.f32 %v9323, 0.0
        %v9340 = vpack.c.bf16 %v9325, %v9324
        %v9341 = vpack.c.bf16 %v9327, %v9326
        %v9342 = vpack.c.bf16 %v9329, %v9328
        %v9343 = vpack.c.bf16 %v9331, %v9330
        %v9344 = vpack.c.bf16 %v9333, %v9332
        %v9345 = vpack.c.bf16 %v9335, %v9334
        %v9346 = vpack.c.bf16 %v9337, %v9336
        %v9347 = vpack.c.bf16 %v9339, %v9338
        %v9356 = vunpack.c.l.b16 %v9340
        %v9357 = vunpack.c.h.b16 %v9340
        %v9358 = vunpack.c.l.b16 %v9341
        %v9359 = vunpack.c.h.b16 %v9341
        %v9360 = vunpack.c.l.b16 %v9342
        %v9361 = vunpack.c.h.b16 %v9342
        %v9362 = vunpack.c.l.b16 %v9343
        %v9363 = vunpack.c.h.b16 %v9343
        %v9364 = vunpack.c.l.b16 %v9344
        %v9365 = vunpack.c.h.b16 %v9344
        %v9366 = vunpack.c.l.b16 %v9345
        %v9367 = vunpack.c.h.b16 %v9345
        %v9368 = vunpack.c.l.b16 %v9346
        %v9369 = vunpack.c.h.b16 %v9346
        %v9370 = vunpack.c.l.b16 %v9347
        %v9371 = vunpack.c.h.b16 %v9347
        %v9372 = vpack.c.b16 %v9356, %v9356
        %v9373 = vpack.c.b16 %v9357, %v9357
        %v9374 = vpack.c.b16 %v9358, %v9358
        %v9375 = vpack.c.b16 %v9359, %v9359
        %v9376 = vpack.c.b16 %v9360, %v9360
        %v9377 = vpack.c.b16 %v9361, %v9361
        %v9378 = vpack.c.b16 %v9362, %v9362
        %v9379 = vpack.c.b16 %v9363, %v9363
        %v9380 = vpack.c.b16 %v9364, %v9364
        %v9381 = vpack.c.b16 %v9365, %v9365
        %v9382 = vpack.c.b16 %v9366, %v9366
        %v9383 = vpack.c.b16 %v9367, %v9367
        %v9384 = vpack.c.b16 %v9368, %v9368
        %v9385 = vpack.c.b16 %v9369, %v9369
        %v9386 = vpack.c.b16 %v9370, %v9370
        %v9387 = vpack.c.b16 %v9371, %v9371
        %9404 = vst [vmem:[%s662] sm:$0xf] %v9372
        %9405 = vst [vmem:[%s662 + $0x4] sm:$0xf] %v9373
        %9406 = vst [vmem:[%s662 + $0x8] sm:$0xf] %v9374
        %9407 = vst [vmem:[%s662 + $0xc] sm:$0xf] %v9375
        %9408 = vst [vmem:[%s662 + $0x10] sm:$0xf] %v9376
        %9409 = vst [vmem:[%s662 + $0x14] sm:$0xf] %v9377
        %9410 = vst [vmem:[%s662 + $0x18] sm:$0xf] %v9378
        %9411 = vst [vmem:[%s662 + $0x1c] sm:$0xf] %v9379
        %9412 = vst [vmem:[%s662 + $0x20] sm:$0xf] %v9380
        %9413 = vst [vmem:[%s662 + $0x24] sm:$0xf] %v9381
        %9414 = vst [vmem:[%s662 + $0x28] sm:$0xf] %v9382
        %9415 = vst [vmem:[%s662 + $0x2c] sm:$0xf] %v9383
        %9416 = vst [vmem:[%s662 + $0x30] sm:$0xf] %v9384
        %9417 = vst [vmem:[%s662 + $0x34] sm:$0xf] %v9385
        %9418 = vst [vmem:[%s662 + $0x38] sm:$0xf] %v9386
        %9419 = vst [vmem:[%s662 + $0x3c] sm:$0xf] %v9387
        %s9420 = sand.u32 %s375, 1
        %s9421 = scalar_lea.sflag [#allocation6], %s9420
        %s9422 = sand.u32 %s375, 1
        %s9423 = smul.addr %s9422, 64
        %s9424 = scalar_lea.vmem [#allocation7], %s9423
        // Predicated region
        $region81: #{tpu_custom_call.1} parent=67 // pred_check
          %p9425 = pneg %p385
        $region82: #{tpu_custom_call.1} parent=67 // pred_check_branch
          %9427 = sbr.rel (%p9425) target = $region84
        $region83: #{tpu_custom_call.1} parent=67 // pred_region
          %s9428 = smul.u32 8, %s32
          %s9430 = ssub.s32 1024, 1024
          %9431 = vsyncadd %s9421, %s9430
          %s9432 = smul.addr %s9428, 2
          %s9433 = smul.addr %s31, 32
          %s9434 = sadd.s32 %s9432, %s9433
          %s9435 = smul.addr %s9434, 64
          %s9436 = scalar_lea.hbm %s12, %s9435
          %s9437 = sshll.u32 %s9424, 4
          %s9438 = int_to_ptr.vmem [resolvable:$true] %s9437
          %9443 = dma.vmem_to_hbm [thread:$0]  %s9438, 1024, %s9436, %s9421, 64, 64, 4
        $region84: #{tpu_custom_call.1} parent=67 // pred_fallthru
          _
      $region68: #{tpu_custom_call.1} parent=5 // pred_fallthru
        _
      %p9444 = scmp.le.s32.totalorder 2, %s22
      // Predicated region
      $region85: #{tpu_custom_call.1} parent=5 // pred_check
        %p9445 = pneg %p9444
      $region86: #{tpu_custom_call.1} parent=5 // pred_check_branch
        %9447 = sbr.rel (%p9445) target = $region88
      $region87: #{tpu_custom_call.1} parent=5 // pred_region
        %s9448 = ssub.s32 %s22, 2
        // Predicated region
        $region89: #{tpu_custom_call.1} parent=87 // pred_check
          %p9449 = pneg %p391
        $region90: #{tpu_custom_call.1} parent=87 // pred_check_branch
          %9451 = sbr.rel (%p9449) target = $region92
        $region91: #{tpu_custom_call.1} parent=87 // pred_region
          %s9452 = sand.u32 %s376, 1
          %s9453 = scalar_lea.sflag [#allocation6], %s9452
          %s9454 = sand.u32 %s376, 1
          %s9455 = smul.addr %s9454, 64
          %s9456 = scalar_lea.vmem [#allocation7], %s9455
          %9457 = dma.done %s9453, 1024
        $region92: #{tpu_custom_call.1} parent=87 // pred_fallthru
          _
      $region88: #{tpu_custom_call.1} parent=5 // pred_fallthru
        _
    $region6: #{tpu_custom_call.1} parent=1 // loop_footer
      %s26 = sadd.s32 1, %s22
    $region7: #{tpu_custom_call.1} parent=1 // loop_footer_branch
      %21 = sbr.rel target = $region3
    $region8: #{tpu_custom_call.1} parent=1 // loop_exit
      _
    %9458 = vsyncpa [#allocation5], 1
    %s9459 = scalar_lea.sflag [#allocation5], 1
    %9460 = vsyncpa %s9459, 1
    %9461 = vsyncpa [#allocation6], 1
    %s9462 = scalar_lea.sflag [#allocation6], 1
    %9463 = vsyncpa %s9462, 1

</llo_original>
